<compile_context>
chip_gen: v7x
topology: tpu7x:2x2x1
jax: 0.10.0
libtpu: 0.0.40
codegen_flags: <defaults>
</compile_context>

<pallas_src>
import functools

import jax
import jax.numpy as jnp
from jax import lax
from jax.experimental import pallas as pl
from jax.experimental.pallas import tpu as pltpu


def _round_up(v, m):
    return ((v + m - 1) // m) * m


# ----------------------------- fused kernel --------------------------------


def _layernorm(z, g, b, eps):
    mu = jnp.mean(z, axis=-1, keepdims=True)
    zc = z - mu
    var = jnp.mean(zc * zc, axis=-1, keepdims=True)
    return zc * lax.rsqrt(var + eps) * g + b


def _mxu(a_f32, w_bf16):
    """bf16 MXU matmul with f32 accumulation; activations cast at the call."""
    return jnp.dot(a_f32.astype(w_bf16.dtype), w_bf16,
                   preferred_element_type=jnp.float32)


def _fused_forward_kernel(x_ref, w_in_ref, w_qkv_ref, w_out_ref, w_ff1_ref,
                          w_ff2_ref, w_cls_ref, bvec_ref, ffb1_ref,
                          out_ref, attn_ref,
                          *, num_layers, num_heads, batch, seq, eps):
    # Shapes (N = batch*seq):
    #   x_ref    (N, F_pad)  f32        w_in_ref  (F_pad, D)    bf16
    #   w_qkv    (L, D, 3D)  bf16       w_out     (L, D, D)     bf16
    #   w_ff1    (L, D, FFN) bf16       w_ff2     (L, FFN, D)   bf16
    #   w_cls    (D, V_pad)  bf16
    #   bvec_ref (2 + 9L, max(D, V_pad)) f32  -- packed small vectors
    #   ffb1_ref (L, FFN) f32
    #   out_ref  (N, V_pad)             attn_ref  (N, D) f32 VMEM scratch
    D = w_qkv_ref.shape[1]
    H = num_heads
    dk = D // H
    scale = 1.0 / float(dk) ** 0.5

    bvec = bvec_ref[...]                                         # (R, RW) f32

    # Input projection (x is zero-padded in F, weight rows padded to match).
    h = _mxu(x_ref[...], w_in_ref[...]) + bvec[0, :D]            # (N, D) f32

    row = 1
    for l in range(num_layers):
        qb = bvec[row + 0, :D]
        kb = bvec[row + 1, :D]
        vb = bvec[row + 2, :D]
        ob = bvec[row + 3, :D]
        ln1_g = bvec[row + 4, :D]
        ln1_b = bvec[row + 5, :D]
        ff_b2 = bvec[row + 6, :D]
        ln2_g = bvec[row + 7, :D]
        ln2_b = bvec[row + 8, :D]
        row += 9

        # --- self attention (post-norm, dropout = identity) ---
        qkv = _mxu(h, w_qkv_ref[l])                              # (N, 3D) f32
        q = qkv[:, 0:D] + qb
        k = qkv[:, D:2 * D] + kb
        v = qkv[:, 2 * D:3 * D] + vb

        # Attention never mixes batch elements: static per-(batch, head) loop
        # over tiny (S, dk) tiles; results written straight to lane offsets of
        # the VMEM scratch (no concatenate / relayout).
        for b in range(batch):
            r0 = b * seq
            for hh in range(H):
                c0 = hh * dk
                qh = q[r0:r0 + seq, c0:c0 + dk]
                kh = k[r0:r0 + seq, c0:c0 + dk]
                vh = v[r0:r0 + seq, c0:c0 + dk]
                # q @ k^T without materializing a transpose (kept in f32).
                s = lax.dot_general(qh, kh, (((1,), (1,)), ((), ())),
                                    preferred_element_type=jnp.float32) * scale
                m = jnp.max(s, axis=-1, keepdims=True)
                e = jnp.exp(s - m)
                p = e * pl.reciprocal(jnp.sum(e, axis=-1, keepdims=True),
                                      approx=True)
                attn_ref[r0:r0 + seq, c0:c0 + dk] = jnp.dot(
                    p, vh, preferred_element_type=jnp.float32)

        sa = _mxu(attn_ref[...], w_out_ref[l]) + ob
        h = _layernorm(h + sa, ln1_g, ln1_b, eps)

        # --- feed forward (fused; h never leaves VMEM) ---
        ff = jnp.maximum(_mxu(h, w_ff1_ref[l]) + ffb1_ref[l], 0.0)
        ff = _mxu(ff, w_ff2_ref[l]) + ff_b2
        h = _layernorm(h + ff, ln2_g, ln2_b, eps)

    # --- classifier, lane-dense (V padded to a multiple of 128) ---
    v_pad = out_ref.shape[1]
    logits = _mxu(h, w_cls_ref[...]) + bvec[row, :v_pad]
    out_ref[...] = logits.astype(out_ref.dtype)


# --------------------- one-time parameter preparation -----------------------


def prepare_params(params, weight_dtype=jnp.bfloat16):
    """Pack / pad / dtype-convert the params ONCE, outside the hot path."""
    in_w = params["input_proj_w"]
    F, D = in_w.shape
    V = params["cls_w"].shape[1]
    layers = params["layers"]
    L = len(layers)
    FFN = layers[0]["ffn_w1"].shape[1]
    F_pad = _round_up(F, 128)
    V_pad = _round_up(V, 128)
    RW = max(D, V_pad)                      # packed small-vector row width

    # Lane/contraction-aligned matmul weights in bf16.
    w_in = jnp.zeros((F_pad, D), weight_dtype).at[:F, :].set(
        in_w.astype(weight_dtype))
    w_cls = jnp.zeros((D, V_pad), weight_dtype).at[:, :V].set(
        params["cls_w"].astype(weight_dtype))
    w_qkv = jnp.stack([lp["in_proj_w"] for lp in layers]).astype(weight_dtype)
    w_out = jnp.stack([lp["out_proj_w"] for lp in layers]).astype(weight_dtype)
    w_ff1 = jnp.stack([lp["ffn_w1"] for lp in layers]).astype(weight_dtype)
    w_ff2 = jnp.stack([lp["ffn_w2"] for lp in layers]).astype(weight_dtype)

    # Wide FFN biases kept f32, stacked: one DMA for all layers.
    ffb1 = jnp.stack([lp["ffn_b1"] for lp in layers]).astype(jnp.float32)

    # Pack every remaining 1-row parameter into a single (rows, RW) array.
    def _row(vec):
        vec = vec.astype(jnp.float32)
        return jnp.zeros((RW,), jnp.float32).at[:vec.shape[0]].set(vec)

    rows = [_row(params["input_proj_b"])]
    for lp in layers:
        b3 = lp["in_proj_b"]
        rows += [_row(b3[0:D]), _row(b3[D:2 * D]), _row(b3[2 * D:3 * D]),
                 _row(lp["out_proj_b"]),
                 _row(lp["ln1_g"]), _row(lp["ln1_b"]),
                 _row(lp["ffn_b2"]),
                 _row(lp["ln2_g"]), _row(lp["ln2_b"])]
    rows.append(_row(params["cls_b"]))
    bvec = jnp.stack(rows)                                       # (2 + 9L, RW)

    return dict(
        w_in=w_in, w_qkv=w_qkv, w_out=w_out, w_ff1=w_ff1, w_ff2=w_ff2,
        w_cls=w_cls, bvec=bvec, ffb1=ffb1,
        num_heads=int(params["num_heads"]), num_layers=L,
        model_dim=D, ffn_dim=FFN, input_dim=F, f_pad=F_pad,
        vocab=V, v_pad=V_pad,
    )


# ------------------------------ forward wrapper ------------------------------


def tiny_speech_transformer(x, pk):
    """x: (B, S, input_dim) f32 -> logits (B, S, vocab_size) f32."""
    B, S, F = x.shape
    assert F == pk["input_dim"]
    D, FFN = pk["model_dim"], pk["ffn_dim"]
    F_pad, V, V_pad = pk["f_pad"], pk["vocab"], pk["v_pad"]
    L, H = pk["num_layers"], pk["num_heads"]
    N = B * S

    # Fold the batch into the matmul M dimension; pad F to a lane multiple.
    x2 = x.reshape(N, F)
    if F_pad != F:
        x2 = jnp.pad(x2, ((0, 0), (0, F_pad - F)))

    arrays = [x2, pk["w_in"], pk["w_qkv"], pk["w_out"], pk["w_ff1"],
              pk["w_ff2"], pk["w_cls"], pk["bvec"], pk["ffb1"]]

    # Whole-array VMEM-resident blocks; a single grid step (batch is folded).
    in_specs = [pl.BlockSpec(a.shape, lambda i, nd=a.ndim: (0,) * nd)
                for a in arrays]
    out_specs = pl.BlockSpec((N, V_pad), lambda i: (0, 0))

    # Advisory cost estimate so XLA can schedule around the tiny custom call.
    dk = D // H
    flops = 2 * N * F_pad * D                                   # input proj
    flops += L * (2 * N * D * 3 * D + 2 * N * D * D + 4 * N * D * FFN)
    flops += L * B * H * 4 * S * S * dk                         # attention
    flops += 2 * N * D * V_pad                                  # classifier
    transcendentals = L * B * H * S * S + 4 * L * N + L * B * H * S
    bytes_accessed = sum(int(a.size) * a.dtype.itemsize for a in arrays)
    bytes_accessed += N * V_pad * 4
    cost = pl.CostEstimate(flops=int(flops),
                           transcendentals=int(transcendentals),
                           bytes_accessed=int(bytes_accessed))

    out_flat = pl.pallas_call(
        functools.partial(_fused_forward_kernel,
                          num_layers=L, num_heads=H,
                          batch=B, seq=S, eps=1e-5),
        out_shape=jax.ShapeDtypeStruct((N, V_pad), jnp.float32),
        grid=(1,),
        in_specs=in_specs,
        out_specs=out_specs,
        scratch_shapes=[pltpu.VMEM((N, D), jnp.float32)],
        compiler_params=pltpu.CompilerParams(
            dimension_semantics=("arbitrary",),
            vmem_limit_bytes=32 * 1024 * 1024),
        cost_estimate=cost,
    )(*arrays)

    return out_flat.reshape(B, S, V_pad)[:, :, :V]


# --------------------------- deterministic init -----------------------------


def init_params(key, input_dim=80, model_dim=128, num_heads=2, num_layers=2,
                vocab_size=30, ffn_dim=2048):
    def dense(k, fan_in, fan_out):
        kw, kb = jax.random.split(k)
        w = jax.random.normal(kw, (fan_in, fan_out), jnp.float32) / jnp.sqrt(
            jnp.float32(fan_in))
        b = jax.random.normal(kb, (fan_out,), jnp.float32) * 0.01
        return w, b

    keys = jax.random.split(key, 2 + num_layers)
    in_w, in_b = dense(keys[0], input_dim, model_dim)
    cls_w, cls_b = dense(keys[1], model_dim, vocab_size)

    layers = []
    for i in range(num_layers):
        ks = jax.random.split(keys[2 + i], 4)
        qkv_w, qkv_b = dense(ks[0], model_dim, 3 * model_dim)
        out_w, out_b = dense(ks[1], model_dim, model_dim)
        w1, b1 = dense(ks[2], model_dim, ffn_dim)
        w2, b2 = dense(ks[3], ffn_dim, model_dim)
        layers.append(dict(
            in_proj_w=qkv_w, in_proj_b=qkv_b,
            out_proj_w=out_w, out_proj_b=out_b,
            ffn_w1=w1, ffn_b1=b1, ffn_w2=w2, ffn_b2=b2,
            ln1_g=jnp.ones((model_dim,), jnp.float32),
            ln1_b=jnp.zeros((model_dim,), jnp.float32),
            ln2_g=jnp.ones((model_dim,), jnp.float32),
            ln2_b=jnp.zeros((model_dim,), jnp.float32),
        ))

    return dict(
        num_heads=num_heads,
        input_proj_w=in_w, input_proj_b=in_b,
        cls_w=cls_w, cls_b=cls_b,
        layers=layers,
    )


# --------------------------------- main -------------------------------------

if __name__ == "__main__":
    key = jax.random.PRNGKey(0)
    pkey, xkey = jax.random.split(key)

    B, S, INPUT_DIM, VOCAB = 2, 8, 80, 30
    params = init_params(pkey, input_dim=INPUT_DIM, model_dim=128,
                         num_heads=2, num_layers=2, vocab_size=VOCAB)
    packed = prepare_params(params)            # one-time pack/pad/bf16-convert
    x = jax.random.normal(xkey, (B, S, INPUT_DIM), jnp.float32)

    out = tiny_speech_transformer(x, packed)
    out = jax.block_until_ready(out)
    assert out.shape == (B, S, VOCAB), out.shape
    assert bool(jnp.all(jnp.isfinite(out)))
    print("KERNEL_OK")
</pallas_src>

<mosaic_0001>
module attributes {stable_mosaic.version = 11 : i64} {
  func.func @_fused_forward_kernel(%arg0: i32, %arg1: memref<16x128xf32, #tpu.memory_space<vmem>>, %arg2: memref<128x128xbf16, #tpu.memory_space<vmem>>, %arg3: memref<2x128x384xbf16, #tpu.memory_space<vmem>>, %arg4: memref<2x128x128xbf16, #tpu.memory_space<vmem>>, %arg5: memref<2x128x2048xbf16, #tpu.memory_space<vmem>>, %arg6: memref<2x2048x128xbf16, #tpu.memory_space<vmem>>, %arg7: memref<128x128xbf16, #tpu.memory_space<vmem>>, %arg8: memref<20x128xf32, #tpu.memory_space<vmem>>, %arg9: memref<2x2048xf32, #tpu.memory_space<vmem>>, %arg10: memref<16x128xf32, #tpu.memory_space<vmem>>, %arg11: memref<16x128xf32, #tpu.memory_space<vmem>>) attributes {dimension_semantics = [#tpu.dimension_semantics<arbitrary>], iteration_bounds = array<i64: 1>, scalar_prefetch = 0 : i64, scratch_operands = 1 : i64, tpu.core_type = #tpu.core_type<tc>, window_params = [{pipeline_mode = #tpu.pipeline_mode<synchronous>, transform_indices = @transform_0, window_bounds = array<i64: 16, 128>}, {pipeline_mode = #tpu.pipeline_mode<synchronous>, transform_indices = @transform_1, window_bounds = array<i64: 128, 128>}, {pipeline_mode = #tpu.pipeline_mode<synchronous>, transform_indices = @transform_2, window_bounds = array<i64: 2, 128, 384>}, {pipeline_mode = #tpu.pipeline_mode<synchronous>, transform_indices = @transform_3, window_bounds = array<i64: 2, 128, 128>}, {pipeline_mode = #tpu.pipeline_mode<synchronous>, transform_indices = @transform_4, window_bounds = array<i64: 2, 128, 2048>}, {pipeline_mode = #tpu.pipeline_mode<synchronous>, transform_indices = @transform_5, window_bounds = array<i64: 2, 2048, 128>}, {pipeline_mode = #tpu.pipeline_mode<synchronous>, transform_indices = @transform_6, window_bounds = array<i64: 128, 128>}, {pipeline_mode = #tpu.pipeline_mode<synchronous>, transform_indices = @transform_7, window_bounds = array<i64: 20, 128>}, {pipeline_mode = #tpu.pipeline_mode<synchronous>, transform_indices = @transform_8, window_bounds = array<i64: 2, 2048>}, {pipeline_mode = #tpu.pipeline_mode<synchronous>, transform_indices = @transform_9, window_bounds = array<i64: 16, 128>}]} {
    %c0 = arith.constant 0 : index
    %c0_0 = arith.constant 0 : index
    %0 = vector.load %arg8[%c0, %c0_0] : memref<20x128xf32, #tpu.memory_space<vmem>>, vector<20x128xf32>
    %c0_1 = arith.constant 0 : index
    %c0_2 = arith.constant 0 : index
    %1 = vector.load %arg1[%c0_1, %c0_2] : memref<16x128xf32, #tpu.memory_space<vmem>>, vector<16x128xf32>
    %c0_3 = arith.constant 0 : index
    %c0_4 = arith.constant 0 : index
    %2 = vector.load %arg2[%c0_3, %c0_4] : memref<128x128xbf16, #tpu.memory_space<vmem>>, vector<128x128xbf16>
    %3 = arith.truncf %1 : vector<16x128xf32> to vector<16x128xbf16>
    %cst = arith.constant dense<0.000000e+00> : vector<16x128xf32>
    %4 = tpu.matmul %3, %2, %cst {dimension_numbers = #tpu.dot_dimension_numbers<[1], [0], [0], [1], [0, 0, 1, 1], [], []>} : vector<16x128xbf16>, vector<128x128xbf16>, vector<16x128xf32> -> vector<16x128xf32>
    %5 = vector.extract_strided_slice %0 {offsets = [0, 0], sizes = [1, 128], strides = [1, 1]} : vector<20x128xf32> to vector<1x128xf32>
    %6 = vector.shape_cast %5 : vector<1x128xf32> to vector<128xf32>
    %7 = vector.shape_cast %6 : vector<128xf32> to vector<1x128xf32>
    %8 = vector.broadcast %7 : vector<1x128xf32> to vector<16x128xf32>
    %9 = arith.addf %4, %8 : vector<16x128xf32>
    %10 = vector.extract_strided_slice %0 {offsets = [1, 0], sizes = [1, 128], strides = [1, 1]} : vector<20x128xf32> to vector<1x128xf32>
    %11 = vector.shape_cast %10 : vector<1x128xf32> to vector<128xf32>
    %12 = vector.extract_strided_slice %0 {offsets = [2, 0], sizes = [1, 128], strides = [1, 1]} : vector<20x128xf32> to vector<1x128xf32>
    %13 = vector.shape_cast %12 : vector<1x128xf32> to vector<128xf32>
    %14 = vector.extract_strided_slice %0 {offsets = [3, 0], sizes = [1, 128], strides = [1, 1]} : vector<20x128xf32> to vector<1x128xf32>
    %15 = vector.shape_cast %14 : vector<1x128xf32> to vector<128xf32>
    %16 = vector.extract_strided_slice %0 {offsets = [4, 0], sizes = [1, 128], strides = [1, 1]} : vector<20x128xf32> to vector<1x128xf32>
    %17 = vector.shape_cast %16 : vector<1x128xf32> to vector<128xf32>
    %18 = vector.extract_strided_slice %0 {offsets = [5, 0], sizes = [1, 128], strides = [1, 1]} : vector<20x128xf32> to vector<1x128xf32>
    %19 = vector.shape_cast %18 : vector<1x128xf32> to vector<128xf32>
    %20 = vector.extract_strided_slice %0 {offsets = [6, 0], sizes = [1, 128], strides = [1, 1]} : vector<20x128xf32> to vector<1x128xf32>
    %21 = vector.shape_cast %20 : vector<1x128xf32> to vector<128xf32>
    %22 = vector.extract_strided_slice %0 {offsets = [7, 0], sizes = [1, 128], strides = [1, 1]} : vector<20x128xf32> to vector<1x128xf32>
    %23 = vector.shape_cast %22 : vector<1x128xf32> to vector<128xf32>
    %24 = vector.extract_strided_slice %0 {offsets = [8, 0], sizes = [1, 128], strides = [1, 1]} : vector<20x128xf32> to vector<1x128xf32>
    %25 = vector.shape_cast %24 : vector<1x128xf32> to vector<128xf32>
    %26 = vector.extract_strided_slice %0 {offsets = [9, 0], sizes = [1, 128], strides = [1, 1]} : vector<20x128xf32> to vector<1x128xf32>
    %27 = vector.shape_cast %26 : vector<1x128xf32> to vector<128xf32>
    %c0_5 = arith.constant 0 : index
    %c0_6 = arith.constant 0 : index
    %c0_7 = arith.constant 0 : index
    %28 = vector.load %arg3[%c0_5, %c0_6, %c0_7] : memref<2x128x384xbf16, #tpu.memory_space<vmem>>, vector<1x128x384xbf16>
    %29 = vector.shape_cast %28 : vector<1x128x384xbf16> to vector<128x384xbf16>
    %30 = arith.truncf %9 : vector<16x128xf32> to vector<16x128xbf16>
    %cst_8 = arith.constant dense<0.000000e+00> : vector<16x384xf32>
    %31 = tpu.matmul %30, %29, %cst_8 {dimension_numbers = #tpu.dot_dimension_numbers<[1], [0], [0], [1], [0, 0, 1, 1], [], []>} : vector<16x128xbf16>, vector<128x384xbf16>, vector<16x384xf32> -> vector<16x384xf32>
    %32 = vector.extract_strided_slice %31 {offsets = [0, 0], sizes = [16, 128], strides = [1, 1]} : vector<16x384xf32> to vector<16x128xf32>
    %33 = vector.shape_cast %11 : vector<128xf32> to vector<1x128xf32>
    %34 = vector.broadcast %33 : vector<1x128xf32> to vector<16x128xf32>
    %35 = arith.addf %32, %34 : vector<16x128xf32>
    %36 = vector.extract_strided_slice %31 {offsets = [0, 128], sizes = [16, 128], strides = [1, 1]} : vector<16x384xf32> to vector<16x128xf32>
    %37 = vector.shape_cast %13 : vector<128xf32> to vector<1x128xf32>
    %38 = vector.broadcast %37 : vector<1x128xf32> to vector<16x128xf32>
    %39 = arith.addf %36, %38 : vector<16x128xf32>
    %40 = vector.extract_strided_slice %31 {offsets = [0, 256], sizes = [16, 128], strides = [1, 1]} : vector<16x384xf32> to vector<16x128xf32>
    %41 = vector.shape_cast %15 : vector<128xf32> to vector<1x128xf32>
    %42 = vector.broadcast %41 : vector<1x128xf32> to vector<16x128xf32>
    %43 = arith.addf %40, %42 : vector<16x128xf32>
    %44 = vector.extract_strided_slice %35 {offsets = [0, 0], sizes = [8, 64], strides = [1, 1]} : vector<16x128xf32> to vector<8x64xf32>
    %45 = vector.extract_strided_slice %39 {offsets = [0, 0], sizes = [8, 64], strides = [1, 1]} : vector<16x128xf32> to vector<8x64xf32>
    %46 = vector.extract_strided_slice %43 {offsets = [0, 0], sizes = [8, 64], strides = [1, 1]} : vector<16x128xf32> to vector<8x64xf32>
    %cst_9 = arith.constant dense<0.000000e+00> : vector<8x8xf32>
    %47 = tpu.matmul %44, %45, %cst_9 {dimension_numbers = #tpu.dot_dimension_numbers<[1], [1], [0], [0], [0, 0, 1, 0], [], []>} : vector<8x64xf32>, vector<8x64xf32>, vector<8x8xf32> -> vector<8x8xf32>
    %cst_10 = arith.constant 1.250000e-01 : f32
    %48 = vector.broadcast %cst_10 : f32 to vector<8x8xf32>
    %49 = arith.mulf %47, %48 : vector<8x8xf32>
    %cst_11 = arith.constant dense<0xFF800000> : vector<8xf32>
    %50 = vector.multi_reduction <maximumf>, %49, %cst_11 [1] : vector<8x8xf32> to vector<8xf32>
    %51 = vector.shape_cast %50 : vector<8xf32> to vector<8x1xf32>
    %52 = vector.broadcast %51 : vector<8x1xf32> to vector<8x8xf32>
    %53 = arith.subf %49, %52 : vector<8x8xf32>
    %54 = math.exp %53 : vector<8x8xf32>
    %cst_12 = arith.constant dense<0.000000e+00> : vector<8xf32>
    %55 = vector.multi_reduction <add>, %54, %cst_12 [1] : vector<8x8xf32> to vector<8xf32>
    %56 = vector.shape_cast %55 : vector<8xf32> to vector<8x1xf32>
    %57 = tpu.reciprocal %56 {approx = true} : vector<8x1xf32> -> vector<8x1xf32>
    %58 = vector.broadcast %57 : vector<8x1xf32> to vector<8x8xf32>
    %59 = arith.mulf %54, %58 : vector<8x8xf32>
    %cst_13 = arith.constant dense<0.000000e+00> : vector<8x64xf32>
    %60 = tpu.matmul %59, %46, %cst_13 {dimension_numbers = #tpu.dot_dimension_numbers<[1], [0], [0], [1], [0, 0, 1, 1], [], []>} : vector<8x8xf32>, vector<8x64xf32>, vector<8x64xf32> -> vector<8x64xf32>
    %c0_14 = arith.constant 0 : index
    %c0_15 = arith.constant 0 : index
    %61 = vector.load %arg11[%c0_14, %c0_15] : memref<16x128xf32, #tpu.memory_space<vmem>>, vector<8x64xf32>
    tpu.vector_store %arg11[%c0_14, %c0_15], %60 {strides = array<i32>} : memref<16x128xf32, #tpu.memory_space<vmem>>, vector<8x64xf32>,
    %62 = vector.extract_strided_slice %35 {offsets = [0, 64], sizes = [8, 64], strides = [1, 1]} : vector<16x128xf32> to vector<8x64xf32>
    %63 = vector.extract_strided_slice %39 {offsets = [0, 64], sizes = [8, 64], strides = [1, 1]} : vector<16x128xf32> to vector<8x64xf32>
    %64 = vector.extract_strided_slice %43 {offsets = [0, 64], sizes = [8, 64], strides = [1, 1]} : vector<16x128xf32> to vector<8x64xf32>
    %cst_16 = arith.constant dense<0.000000e+00> : vector<8x8xf32>
    %65 = tpu.matmul %62, %63, %cst_16 {dimension_numbers = #tpu.dot_dimension_numbers<[1], [1], [0], [0], [0, 0, 1, 0], [], []>} : vector<8x64xf32>, vector<8x64xf32>, vector<8x8xf32> -> vector<8x8xf32>
    %cst_17 = arith.constant 1.250000e-01 : f32
    %66 = vector.broadcast %cst_17 : f32 to vector<8x8xf32>
    %67 = arith.mulf %65, %66 : vector<8x8xf32>
    %cst_18 = arith.constant dense<0xFF800000> : vector<8xf32>
    %68 = vector.multi_reduction <maximumf>, %67, %cst_18 [1] : vector<8x8xf32> to vector<8xf32>
    %69 = vector.shape_cast %68 : vector<8xf32> to vector<8x1xf32>
    %70 = vector.broadcast %69 : vector<8x1xf32> to vector<8x8xf32>
    %71 = arith.subf %67, %70 : vector<8x8xf32>
    %72 = math.exp %71 : vector<8x8xf32>
    %cst_19 = arith.constant dense<0.000000e+00> : vector<8xf32>
    %73 = vector.multi_reduction <add>, %72, %cst_19 [1] : vector<8x8xf32> to vector<8xf32>
    %74 = vector.shape_cast %73 : vector<8xf32> to vector<8x1xf32>
    %75 = tpu.reciprocal %74 {approx = true} : vector<8x1xf32> -> vector<8x1xf32>
    %76 = vector.broadcast %75 : vector<8x1xf32> to vector<8x8xf32>
    %77 = arith.mulf %72, %76 : vector<8x8xf32>
    %cst_20 = arith.constant dense<0.000000e+00> : vector<8x64xf32>
    %78 = tpu.matmul %77, %64, %cst_20 {dimension_numbers = #tpu.dot_dimension_numbers<[1], [0], [0], [1], [0, 0, 1, 1], [], []>} : vector<8x8xf32>, vector<8x64xf32>, vector<8x64xf32> -> vector<8x64xf32>
    %c0_21 = arith.constant 0 : index
    %c64 = arith.constant 64 : index
    %79 = vector.load %arg11[%c0_21, %c64] : memref<16x128xf32, #tpu.memory_space<vmem>>, vector<8x64xf32>
    tpu.vector_store %arg11[%c0_21, %c64], %78 {strides = array<i32>} : memref<16x128xf32, #tpu.memory_space<vmem>>, vector<8x64xf32>,
    %80 = vector.extract_strided_slice %35 {offsets = [8, 0], sizes = [8, 64], strides = [1, 1]} : vector<16x128xf32> to vector<8x64xf32>
    %81 = vector.extract_strided_slice %39 {offsets = [8, 0], sizes = [8, 64], strides = [1, 1]} : vector<16x128xf32> to vector<8x64xf32>
    %82 = vector.extract_strided_slice %43 {offsets = [8, 0], sizes = [8, 64], strides = [1, 1]} : vector<16x128xf32> to vector<8x64xf32>
    %cst_22 = arith.constant dense<0.000000e+00> : vector<8x8xf32>
    %83 = tpu.matmul %80, %81, %cst_22 {dimension_numbers = #tpu.dot_dimension_numbers<[1], [1], [0], [0], [0, 0, 1, 0], [], []>} : vector<8x64xf32>, vector<8x64xf32>, vector<8x8xf32> -> vector<8x8xf32>
    %cst_23 = arith.constant 1.250000e-01 : f32
    %84 = vector.broadcast %cst_23 : f32 to vector<8x8xf32>
    %85 = arith.mulf %83, %84 : vector<8x8xf32>
    %cst_24 = arith.constant dense<0xFF800000> : vector<8xf32>
    %86 = vector.multi_reduction <maximumf>, %85, %cst_24 [1] : vector<8x8xf32> to vector<8xf32>
    %87 = vector.shape_cast %86 : vector<8xf32> to vector<8x1xf32>
    %88 = vector.broadcast %87 : vector<8x1xf32> to vector<8x8xf32>
    %89 = arith.subf %85, %88 : vector<8x8xf32>
    %90 = math.exp %89 : vector<8x8xf32>
    %cst_25 = arith.constant dense<0.000000e+00> : vector<8xf32>
    %91 = vector.multi_reduction <add>, %90, %cst_25 [1] : vector<8x8xf32> to vector<8xf32>
    %92 = vector.shape_cast %91 : vector<8xf32> to vector<8x1xf32>
    %93 = tpu.reciprocal %92 {approx = true} : vector<8x1xf32> -> vector<8x1xf32>
    %94 = vector.broadcast %93 : vector<8x1xf32> to vector<8x8xf32>
    %95 = arith.mulf %90, %94 : vector<8x8xf32>
    %cst_26 = arith.constant dense<0.000000e+00> : vector<8x64xf32>
    %96 = tpu.matmul %95, %82, %cst_26 {dimension_numbers = #tpu.dot_dimension_numbers<[1], [0], [0], [1], [0, 0, 1, 1], [], []>} : vector<8x8xf32>, vector<8x64xf32>, vector<8x64xf32> -> vector<8x64xf32>
    %c8 = arith.constant 8 : index
    %c0_27 = arith.constant 0 : index
    %97 = vector.load %arg11[%c8, %c0_27] : memref<16x128xf32, #tpu.memory_space<vmem>>, vector<8x64xf32>
    tpu.vector_store %arg11[%c8, %c0_27], %96 {strides = array<i32>} : memref<16x128xf32, #tpu.memory_space<vmem>>, vector<8x64xf32>,
    %98 = vector.extract_strided_slice %35 {offsets = [8, 64], sizes = [8, 64], strides = [1, 1]} : vector<16x128xf32> to vector<8x64xf32>
    %99 = vector.extract_strided_slice %39 {offsets = [8, 64], sizes = [8, 64], strides = [1, 1]} : vector<16x128xf32> to vector<8x64xf32>
    %100 = vector.extract_strided_slice %43 {offsets = [8, 64], sizes = [8, 64], strides = [1, 1]} : vector<16x128xf32> to vector<8x64xf32>
    %cst_28 = arith.constant dense<0.000000e+00> : vector<8x8xf32>
    %101 = tpu.matmul %98, %99, %cst_28 {dimension_numbers = #tpu.dot_dimension_numbers<[1], [1], [0], [0], [0, 0, 1, 0], [], []>} : vector<8x64xf32>, vector<8x64xf32>, vector<8x8xf32> -> vector<8x8xf32>
    %cst_29 = arith.constant 1.250000e-01 : f32
    %102 = vector.broadcast %cst_29 : f32 to vector<8x8xf32>
    %103 = arith.mulf %101, %102 : vector<8x8xf32>
    %cst_30 = arith.constant dense<0xFF800000> : vector<8xf32>
    %104 = vector.multi_reduction <maximumf>, %103, %cst_30 [1] : vector<8x8xf32> to vector<8xf32>
    %105 = vector.shape_cast %104 : vector<8xf32> to vector<8x1xf32>
    %106 = vector.broadcast %105 : vector<8x1xf32> to vector<8x8xf32>
    %107 = arith.subf %103, %106 : vector<8x8xf32>
    %108 = math.exp %107 : vector<8x8xf32>
    %cst_31 = arith.constant dense<0.000000e+00> : vector<8xf32>
    %109 = vector.multi_reduction <add>, %108, %cst_31 [1] : vector<8x8xf32> to vector<8xf32>
    %110 = vector.shape_cast %109 : vector<8xf32> to vector<8x1xf32>
    %111 = tpu.reciprocal %110 {approx = true} : vector<8x1xf32> -> vector<8x1xf32>
    %112 = vector.broadcast %111 : vector<8x1xf32> to vector<8x8xf32>
    %113 = arith.mulf %108, %112 : vector<8x8xf32>
    %cst_32 = arith.constant dense<0.000000e+00> : vector<8x64xf32>
    %114 = tpu.matmul %113, %100, %cst_32 {dimension_numbers = #tpu.dot_dimension_numbers<[1], [0], [0], [1], [0, 0, 1, 1], [], []>} : vector<8x8xf32>, vector<8x64xf32>, vector<8x64xf32> -> vector<8x64xf32>
    %c8_33 = arith.constant 8 : index
    %c64_34 = arith.constant 64 : index
    %115 = vector.load %arg11[%c8_33, %c64_34] : memref<16x128xf32, #tpu.memory_space<vmem>>, vector<8x64xf32>
    tpu.vector_store %arg11[%c8_33, %c64_34], %114 {strides = array<i32>} : memref<16x128xf32, #tpu.memory_space<vmem>>, vector<8x64xf32>,
    %c0_35 = arith.constant 0 : index
    %c0_36 = arith.constant 0 : index
    %116 = vector.load %arg11[%c0_35, %c0_36] : memref<16x128xf32, #tpu.memory_space<vmem>>, vector<16x128xf32>
    %c0_37 = arith.constant 0 : index
    %c0_38 = arith.constant 0 : index
    %c0_39 = arith.constant 0 : index
    %117 = vector.load %arg4[%c0_37, %c0_38, %c0_39] : memref<2x128x128xbf16, #tpu.memory_space<vmem>>, vector<1x128x128xbf16>
    %118 = vector.shape_cast %117 : vector<1x128x128xbf16> to vector<128x128xbf16>
    %119 = arith.truncf %116 : vector<16x128xf32> to vector<16x128xbf16>
    %cst_40 = arith.constant dense<0.000000e+00> : vector<16x128xf32>
    %120 = tpu.matmul %119, %118, %cst_40 {dimension_numbers = #tpu.dot_dimension_numbers<[1], [0], [0], [1], [0, 0, 1, 1], [], []>} : vector<16x128xbf16>, vector<128x128xbf16>, vector<16x128xf32> -> vector<16x128xf32>
    %121 = vector.shape_cast %17 : vector<128xf32> to vector<1x128xf32>
    %122 = vector.broadcast %121 : vector<1x128xf32> to vector<16x128xf32>
    %123 = arith.addf %120, %122 : vector<16x128xf32>
    %124 = arith.addf %9, %123 : vector<16x128xf32>
    %cst_41 = arith.constant dense<0.000000e+00> : vector<16xf32>
    %125 = vector.multi_reduction <add>, %124, %cst_41 [1] : vector<16x128xf32> to vector<16xf32>
    %126 = vector.shape_cast %125 : vector<16xf32> to vector<16x1xf32>
    %cst_42 = arith.constant 1.280000e+02 : f32
    %127 = vector.broadcast %cst_42 : f32 to vector<16x1xf32>
    %128 = arith.divf %126, %127 : vector<16x1xf32>
    %129 = vector.broadcast %128 : vector<16x1xf32> to vector<16x128xf32>
    %130 = arith.subf %124, %129 : vector<16x128xf32>
    %131 = arith.mulf %130, %130 : vector<16x128xf32>
    %cst_43 = arith.constant dense<0.000000e+00> : vector<16xf32>
    %132 = vector.multi_reduction <add>, %131, %cst_43 [1] : vector<16x128xf32> to vector<16xf32>
    %133 = vector.shape_cast %132 : vector<16xf32> to vector<16x1xf32>
    %cst_44 = arith.constant 1.280000e+02 : f32
    %134 = vector.broadcast %cst_44 : f32 to vector<16x1xf32>
    %135 = arith.divf %133, %134 : vector<16x1xf32>
    %cst_45 = arith.constant 9.99999974E-6 : f32
    %136 = vector.broadcast %cst_45 : f32 to vector<16x1xf32>
    %137 = arith.addf %135, %136 : vector<16x1xf32>
    %138 = math.rsqrt %137 : vector<16x1xf32>
    %139 = vector.broadcast %138 : vector<16x1xf32> to vector<16x128xf32>
    %140 = arith.mulf %130, %139 : vector<16x128xf32>
    %141 = vector.shape_cast %19 : vector<128xf32> to vector<1x128xf32>
    %142 = vector.broadcast %141 : vector<1x128xf32> to vector<16x128xf32>
    %143 = arith.mulf %140, %142 : vector<16x128xf32>
    %144 = vector.shape_cast %21 : vector<128xf32> to vector<1x128xf32>
    %145 = vector.broadcast %144 : vector<1x128xf32> to vector<16x128xf32>
    %146 = arith.addf %143, %145 : vector<16x128xf32>
    %c0_46 = arith.constant 0 : index
    %c0_47 = arith.constant 0 : index
    %c0_48 = arith.constant 0 : index
    %147 = vector.load %arg5[%c0_46, %c0_47, %c0_48] : memref<2x128x2048xbf16, #tpu.memory_space<vmem>>, vector<1x128x2048xbf16>
    %148 = vector.shape_cast %147 : vector<1x128x2048xbf16> to vector<128x2048xbf16>
    %149 = arith.truncf %146 : vector<16x128xf32> to vector<16x128xbf16>
    %cst_49 = arith.constant dense<0.000000e+00> : vector<16x2048xf32>
    %150 = tpu.matmul %149, %148, %cst_49 {dimension_numbers = #tpu.dot_dimension_numbers<[1], [0], [0], [1], [0, 0, 1, 1], [], []>} : vector<16x128xbf16>, vector<128x2048xbf16>, vector<16x2048xf32> -> vector<16x2048xf32>
    %c0_50 = arith.constant 0 : index
    %c0_51 = arith.constant 0 : index
    %151 = vector.load %arg9[%c0_50, %c0_51] : memref<2x2048xf32, #tpu.memory_space<vmem>>, vector<1x2048xf32>
    %152 = vector.shape_cast %151 : vector<1x2048xf32> to vector<2048xf32>
    %153 = vector.shape_cast %152 : vector<2048xf32> to vector<1x2048xf32>
    %154 = vector.broadcast %153 : vector<1x2048xf32> to vector<16x2048xf32>
    %155 = arith.addf %150, %154 : vector<16x2048xf32>
    %cst_52 = arith.constant 0.000000e+00 : f32
    %156 = vector.broadcast %cst_52 : f32 to vector<16x2048xf32>
    %157 = arith.maximumf %155, %156 : vector<16x2048xf32>
    %c0_53 = arith.constant 0 : index
    %c0_54 = arith.constant 0 : index
    %c0_55 = arith.constant 0 : index
    %158 = vector.load %arg6[%c0_53, %c0_54, %c0_55] : memref<2x2048x128xbf16, #tpu.memory_space<vmem>>, vector<1x2048x128xbf16>
    %159 = vector.shape_cast %158 : vector<1x2048x128xbf16> to vector<2048x128xbf16>
    %160 = arith.truncf %157 : vector<16x2048xf32> to vector<16x2048xbf16>
    %cst_56 = arith.constant dense<0.000000e+00> : vector<16x128xf32>
    %161 = tpu.matmul %160, %159, %cst_56 {dimension_numbers = #tpu.dot_dimension_numbers<[1], [0], [0], [1], [0, 0, 1, 1], [], []>} : vector<16x2048xbf16>, vector<2048x128xbf16>, vector<16x128xf32> -> vector<16x128xf32>
    %162 = vector.shape_cast %23 : vector<128xf32> to vector<1x128xf32>
    %163 = vector.broadcast %162 : vector<1x128xf32> to vector<16x128xf32>
    %164 = arith.addf %161, %163 : vector<16x128xf32>
    %165 = arith.addf %146, %164 : vector<16x128xf32>
    %cst_57 = arith.constant dense<0.000000e+00> : vector<16xf32>
    %166 = vector.multi_reduction <add>, %165, %cst_57 [1] : vector<16x128xf32> to vector<16xf32>
    %167 = vector.shape_cast %166 : vector<16xf32> to vector<16x1xf32>
    %cst_58 = arith.constant 1.280000e+02 : f32
    %168 = vector.broadcast %cst_58 : f32 to vector<16x1xf32>
    %169 = arith.divf %167, %168 : vector<16x1xf32>
    %170 = vector.broadcast %169 : vector<16x1xf32> to vector<16x128xf32>
    %171 = arith.subf %165, %170 : vector<16x128xf32>
    %172 = arith.mulf %171, %171 : vector<16x128xf32>
    %cst_59 = arith.constant dense<0.000000e+00> : vector<16xf32>
    %173 = vector.multi_reduction <add>, %172, %cst_59 [1] : vector<16x128xf32> to vector<16xf32>
    %174 = vector.shape_cast %173 : vector<16xf32> to vector<16x1xf32>
    %cst_60 = arith.constant 1.280000e+02 : f32
    %175 = vector.broadcast %cst_60 : f32 to vector<16x1xf32>
    %176 = arith.divf %174, %175 : vector<16x1xf32>
    %cst_61 = arith.constant 9.99999974E-6 : f32
    %177 = vector.broadcast %cst_61 : f32 to vector<16x1xf32>
    %178 = arith.addf %176, %177 : vector<16x1xf32>
    %179 = math.rsqrt %178 : vector<16x1xf32>
    %180 = vector.broadcast %179 : vector<16x1xf32> to vector<16x128xf32>
    %181 = arith.mulf %171, %180 : vector<16x128xf32>
    %182 = vector.shape_cast %25 : vector<128xf32> to vector<1x128xf32>
    %183 = vector.broadcast %182 : vector<1x128xf32> to vector<16x128xf32>
    %184 = arith.mulf %181, %183 : vector<16x128xf32>
    %185 = vector.shape_cast %27 : vector<128xf32> to vector<1x128xf32>
    %186 = vector.broadcast %185 : vector<1x128xf32> to vector<16x128xf32>
    %187 = arith.addf %184, %186 : vector<16x128xf32>
    %188 = vector.extract_strided_slice %0 {offsets = [10, 0], sizes = [1, 128], strides = [1, 1]} : vector<20x128xf32> to vector<1x128xf32>
    %189 = vector.shape_cast %188 : vector<1x128xf32> to vector<128xf32>
    %190 = vector.extract_strided_slice %0 {offsets = [11, 0], sizes = [1, 128], strides = [1, 1]} : vector<20x128xf32> to vector<1x128xf32>
    %191 = vector.shape_cast %190 : vector<1x128xf32> to vector<128xf32>
    %192 = vector.extract_strided_slice %0 {offsets = [12, 0], sizes = [1, 128], strides = [1, 1]} : vector<20x128xf32> to vector<1x128xf32>
    %193 = vector.shape_cast %192 : vector<1x128xf32> to vector<128xf32>
    %194 = vector.extract_strided_slice %0 {offsets = [13, 0], sizes = [1, 128], strides = [1, 1]} : vector<20x128xf32> to vector<1x128xf32>
    %195 = vector.shape_cast %194 : vector<1x128xf32> to vector<128xf32>
    %196 = vector.extract_strided_slice %0 {offsets = [14, 0], sizes = [1, 128], strides = [1, 1]} : vector<20x128xf32> to vector<1x128xf32>
    %197 = vector.shape_cast %196 : vector<1x128xf32> to vector<128xf32>
    %198 = vector.extract_strided_slice %0 {offsets = [15, 0], sizes = [1, 128], strides = [1, 1]} : vector<20x128xf32> to vector<1x128xf32>
    %199 = vector.shape_cast %198 : vector<1x128xf32> to vector<128xf32>
    %200 = vector.extract_strided_slice %0 {offsets = [16, 0], sizes = [1, 128], strides = [1, 1]} : vector<20x128xf32> to vector<1x128xf32>
    %201 = vector.shape_cast %200 : vector<1x128xf32> to vector<128xf32>
    %202 = vector.extract_strided_slice %0 {offsets = [17, 0], sizes = [1, 128], strides = [1, 1]} : vector<20x128xf32> to vector<1x128xf32>
    %203 = vector.shape_cast %202 : vector<1x128xf32> to vector<128xf32>
    %204 = vector.extract_strided_slice %0 {offsets = [18, 0], sizes = [1, 128], strides = [1, 1]} : vector<20x128xf32> to vector<1x128xf32>
    %205 = vector.shape_cast %204 : vector<1x128xf32> to vector<128xf32>
    %c1 = arith.constant 1 : index
    %c0_62 = arith.constant 0 : index
    %c0_63 = arith.constant 0 : index
    %206 = vector.load %arg3[%c1, %c0_62, %c0_63] : memref<2x128x384xbf16, #tpu.memory_space<vmem>>, vector<1x128x384xbf16>
    %207 = vector.shape_cast %206 : vector<1x128x384xbf16> to vector<128x384xbf16>
    %208 = arith.truncf %187 : vector<16x128xf32> to vector<16x128xbf16>
    %cst_64 = arith.constant dense<0.000000e+00> : vector<16x384xf32>
    %209 = tpu.matmul %208, %207, %cst_64 {dimension_numbers = #tpu.dot_dimension_numbers<[1], [0], [0], [1], [0, 0, 1, 1], [], []>} : vector<16x128xbf16>, vector<128x384xbf16>, vector<16x384xf32> -> vector<16x384xf32>
    %210 = vector.extract_strided_slice %209 {offsets = [0, 0], sizes = [16, 128], strides = [1, 1]} : vector<16x384xf32> to vector<16x128xf32>
    %211 = vector.shape_cast %189 : vector<128xf32> to vector<1x128xf32>
    %212 = vector.broadcast %211 : vector<1x128xf32> to vector<16x128xf32>
    %213 = arith.addf %210, %212 : vector<16x128xf32>
    %214 = vector.extract_strided_slice %209 {offsets = [0, 128], sizes = [16, 128], strides = [1, 1]} : vector<16x384xf32> to vector<16x128xf32>
    %215 = vector.shape_cast %191 : vector<128xf32> to vector<1x128xf32>
    %216 = vector.broadcast %215 : vector<1x128xf32> to vector<16x128xf32>
    %217 = arith.addf %214, %216 : vector<16x128xf32>
    %218 = vector.extract_strided_slice %209 {offsets = [0, 256], sizes = [16, 128], strides = [1, 1]} : vector<16x384xf32> to vector<16x128xf32>
    %219 = vector.shape_cast %193 : vector<128xf32> to vector<1x128xf32>
    %220 = vector.broadcast %219 : vector<1x128xf32> to vector<16x128xf32>
    %221 = arith.addf %218, %220 : vector<16x128xf32>
    %222 = vector.extract_strided_slice %213 {offsets = [0, 0], sizes = [8, 64], strides = [1, 1]} : vector<16x128xf32> to vector<8x64xf32>
    %223 = vector.extract_strided_slice %217 {offsets = [0, 0], sizes = [8, 64], strides = [1, 1]} : vector<16x128xf32> to vector<8x64xf32>
    %224 = vector.extract_strided_slice %221 {offsets = [0, 0], sizes = [8, 64], strides = [1, 1]} : vector<16x128xf32> to vector<8x64xf32>
    %cst_65 = arith.constant dense<0.000000e+00> : vector<8x8xf32>
    %225 = tpu.matmul %222, %223, %cst_65 {dimension_numbers = #tpu.dot_dimension_numbers<[1], [1], [0], [0], [0, 0, 1, 0], [], []>} : vector<8x64xf32>, vector<8x64xf32>, vector<8x8xf32> -> vector<8x8xf32>
    %cst_66 = arith.constant 1.250000e-01 : f32
    %226 = vector.broadcast %cst_66 : f32 to vector<8x8xf32>
    %227 = arith.mulf %225, %226 : vector<8x8xf32>
    %cst_67 = arith.constant dense<0xFF800000> : vector<8xf32>
    %228 = vector.multi_reduction <maximumf>, %227, %cst_67 [1] : vector<8x8xf32> to vector<8xf32>
    %229 = vector.shape_cast %228 : vector<8xf32> to vector<8x1xf32>
    %230 = vector.broadcast %229 : vector<8x1xf32> to vector<8x8xf32>
    %231 = arith.subf %227, %230 : vector<8x8xf32>
    %232 = math.exp %231 : vector<8x8xf32>
    %cst_68 = arith.constant dense<0.000000e+00> : vector<8xf32>
    %233 = vector.multi_reduction <add>, %232, %cst_68 [1] : vector<8x8xf32> to vector<8xf32>
    %234 = vector.shape_cast %233 : vector<8xf32> to vector<8x1xf32>
    %235 = tpu.reciprocal %234 {approx = true} : vector<8x1xf32> -> vector<8x1xf32>
    %236 = vector.broadcast %235 : vector<8x1xf32> to vector<8x8xf32>
    %237 = arith.mulf %232, %236 : vector<8x8xf32>
    %cst_69 = arith.constant dense<0.000000e+00> : vector<8x64xf32>
    %238 = tpu.matmul %237, %224, %cst_69 {dimension_numbers = #tpu.dot_dimension_numbers<[1], [0], [0], [1], [0, 0, 1, 1], [], []>} : vector<8x8xf32>, vector<8x64xf32>, vector<8x64xf32> -> vector<8x64xf32>
    %c0_70 = arith.constant 0 : index
    %c0_71 = arith.constant 0 : index
    %239 = vector.load %arg11[%c0_70, %c0_71] : memref<16x128xf32, #tpu.memory_space<vmem>>, vector<8x64xf32>
    tpu.vector_store %arg11[%c0_70, %c0_71], %238 {strides = array<i32>} : memref<16x128xf32, #tpu.memory_space<vmem>>, vector<8x64xf32>,
    %240 = vector.extract_strided_slice %213 {offsets = [0, 64], sizes = [8, 64], strides = [1, 1]} : vector<16x128xf32> to vector<8x64xf32>
    %241 = vector.extract_strided_slice %217 {offsets = [0, 64], sizes = [8, 64], strides = [1, 1]} : vector<16x128xf32> to vector<8x64xf32>
    %242 = vector.extract_strided_slice %221 {offsets = [0, 64], sizes = [8, 64], strides = [1, 1]} : vector<16x128xf32> to vector<8x64xf32>
    %cst_72 = arith.constant dense<0.000000e+00> : vector<8x8xf32>
    %243 = tpu.matmul %240, %241, %cst_72 {dimension_numbers = #tpu.dot_dimension_numbers<[1], [1], [0], [0], [0, 0, 1, 0], [], []>} : vector<8x64xf32>, vector<8x64xf32>, vector<8x8xf32> -> vector<8x8xf32>
    %cst_73 = arith.constant 1.250000e-01 : f32
    %244 = vector.broadcast %cst_73 : f32 to vector<8x8xf32>
    %245 = arith.mulf %243, %244 : vector<8x8xf32>
    %cst_74 = arith.constant dense<0xFF800000> : vector<8xf32>
    %246 = vector.multi_reduction <maximumf>, %245, %cst_74 [1] : vector<8x8xf32> to vector<8xf32>
    %247 = vector.shape_cast %246 : vector<8xf32> to vector<8x1xf32>
    %248 = vector.broadcast %247 : vector<8x1xf32> to vector<8x8xf32>
    %249 = arith.subf %245, %248 : vector<8x8xf32>
    %250 = math.exp %249 : vector<8x8xf32>
    %cst_75 = arith.constant dense<0.000000e+00> : vector<8xf32>
    %251 = vector.multi_reduction <add>, %250, %cst_75 [1] : vector<8x8xf32> to vector<8xf32>
    %252 = vector.shape_cast %251 : vector<8xf32> to vector<8x1xf32>
    %253 = tpu.reciprocal %252 {approx = true} : vector<8x1xf32> -> vector<8x1xf32>
    %254 = vector.broadcast %253 : vector<8x1xf32> to vector<8x8xf32>
    %255 = arith.mulf %250, %254 : vector<8x8xf32>
    %cst_76 = arith.constant dense<0.000000e+00> : vector<8x64xf32>
    %256 = tpu.matmul %255, %242, %cst_76 {dimension_numbers = #tpu.dot_dimension_numbers<[1], [0], [0], [1], [0, 0, 1, 1], [], []>} : vector<8x8xf32>, vector<8x64xf32>, vector<8x64xf32> -> vector<8x64xf32>
    %c0_77 = arith.constant 0 : index
    %c64_78 = arith.constant 64 : index
    %257 = vector.load %arg11[%c0_77, %c64_78] : memref<16x128xf32, #tpu.memory_space<vmem>>, vector<8x64xf32>
    tpu.vector_store %arg11[%c0_77, %c64_78], %256 {strides = array<i32>} : memref<16x128xf32, #tpu.memory_space<vmem>>, vector<8x64xf32>,
    %258 = vector.extract_strided_slice %213 {offsets = [8, 0], sizes = [8, 64], strides = [1, 1]} : vector<16x128xf32> to vector<8x64xf32>
    %259 = vector.extract_strided_slice %217 {offsets = [8, 0], sizes = [8, 64], strides = [1, 1]} : vector<16x128xf32> to vector<8x64xf32>
    %260 = vector.extract_strided_slice %221 {offsets = [8, 0], sizes = [8, 64], strides = [1, 1]} : vector<16x128xf32> to vector<8x64xf32>
    %cst_79 = arith.constant dense<0.000000e+00> : vector<8x8xf32>
    %261 = tpu.matmul %258, %259, %cst_79 {dimension_numbers = #tpu.dot_dimension_numbers<[1], [1], [0], [0], [0, 0, 1, 0], [], []>} : vector<8x64xf32>, vector<8x64xf32>, vector<8x8xf32> -> vector<8x8xf32>
    %cst_80 = arith.constant 1.250000e-01 : f32
    %262 = vector.broadcast %cst_80 : f32 to vector<8x8xf32>
    %263 = arith.mulf %261, %262 : vector<8x8xf32>
    %cst_81 = arith.constant dense<0xFF800000> : vector<8xf32>
    %264 = vector.multi_reduction <maximumf>, %263, %cst_81 [1] : vector<8x8xf32> to vector<8xf32>
    %265 = vector.shape_cast %264 : vector<8xf32> to vector<8x1xf32>
    %266 = vector.broadcast %265 : vector<8x1xf32> to vector<8x8xf32>
    %267 = arith.subf %263, %266 : vector<8x8xf32>
    %268 = math.exp %267 : vector<8x8xf32>
    %cst_82 = arith.constant dense<0.000000e+00> : vector<8xf32>
    %269 = vector.multi_reduction <add>, %268, %cst_82 [1] : vector<8x8xf32> to vector<8xf32>
    %270 = vector.shape_cast %269 : vector<8xf32> to vector<8x1xf32>
    %271 = tpu.reciprocal %270 {approx = true} : vector<8x1xf32> -> vector<8x1xf32>
    %272 = vector.broadcast %271 : vector<8x1xf32> to vector<8x8xf32>
    %273 = arith.mulf %268, %272 : vector<8x8xf32>
    %cst_83 = arith.constant dense<0.000000e+00> : vector<8x64xf32>
    %274 = tpu.matmul %273, %260, %cst_83 {dimension_numbers = #tpu.dot_dimension_numbers<[1], [0], [0], [1], [0, 0, 1, 1], [], []>} : vector<8x8xf32>, vector<8x64xf32>, vector<8x64xf32> -> vector<8x64xf32>
    %c8_84 = arith.constant 8 : index
    %c0_85 = arith.constant 0 : index
    %275 = vector.load %arg11[%c8_84, %c0_85] : memref<16x128xf32, #tpu.memory_space<vmem>>, vector<8x64xf32>
    tpu.vector_store %arg11[%c8_84, %c0_85], %274 {strides = array<i32>} : memref<16x128xf32, #tpu.memory_space<vmem>>, vector<8x64xf32>,
    %276 = vector.extract_strided_slice %213 {offsets = [8, 64], sizes = [8, 64], strides = [1, 1]} : vector<16x128xf32> to vector<8x64xf32>
    %277 = vector.extract_strided_slice %217 {offsets = [8, 64], sizes = [8, 64], strides = [1, 1]} : vector<16x128xf32> to vector<8x64xf32>
    %278 = vector.extract_strided_slice %221 {offsets = [8, 64], sizes = [8, 64], strides = [1, 1]} : vector<16x128xf32> to vector<8x64xf32>
    %cst_86 = arith.constant dense<0.000000e+00> : vector<8x8xf32>
    %279 = tpu.matmul %276, %277, %cst_86 {dimension_numbers = #tpu.dot_dimension_numbers<[1], [1], [0], [0], [0, 0, 1, 0], [], []>} : vector<8x64xf32>, vector<8x64xf32>, vector<8x8xf32> -> vector<8x8xf32>
    %cst_87 = arith.constant 1.250000e-01 : f32
    %280 = vector.broadcast %cst_87 : f32 to vector<8x8xf32>
    %281 = arith.mulf %279, %280 : vector<8x8xf32>
    %cst_88 = arith.constant dense<0xFF800000> : vector<8xf32>
    %282 = vector.multi_reduction <maximumf>, %281, %cst_88 [1] : vector<8x8xf32> to vector<8xf32>
    %283 = vector.shape_cast %282 : vector<8xf32> to vector<8x1xf32>
    %284 = vector.broadcast %283 : vector<8x1xf32> to vector<8x8xf32>
    %285 = arith.subf %281, %284 : vector<8x8xf32>
    %286 = math.exp %285 : vector<8x8xf32>
    %cst_89 = arith.constant dense<0.000000e+00> : vector<8xf32>
    %287 = vector.multi_reduction <add>, %286, %cst_89 [1] : vector<8x8xf32> to vector<8xf32>
    %288 = vector.shape_cast %287 : vector<8xf32> to vector<8x1xf32>
    %289 = tpu.reciprocal %288 {approx = true} : vector<8x1xf32> -> vector<8x1xf32>
    %290 = vector.broadcast %289 : vector<8x1xf32> to vector<8x8xf32>
    %291 = arith.mulf %286, %290 : vector<8x8xf32>
    %cst_90 = arith.constant dense<0.000000e+00> : vector<8x64xf32>
    %292 = tpu.matmul %291, %278, %cst_90 {dimension_numbers = #tpu.dot_dimension_numbers<[1], [0], [0], [1], [0, 0, 1, 1], [], []>} : vector<8x8xf32>, vector<8x64xf32>, vector<8x64xf32> -> vector<8x64xf32>
    %c8_91 = arith.constant 8 : index
    %c64_92 = arith.constant 64 : index
    %293 = vector.load %arg11[%c8_91, %c64_92] : memref<16x128xf32, #tpu.memory_space<vmem>>, vector<8x64xf32>
    tpu.vector_store %arg11[%c8_91, %c64_92], %292 {strides = array<i32>} : memref<16x128xf32, #tpu.memory_space<vmem>>, vector<8x64xf32>,
    %c0_93 = arith.constant 0 : index
    %c0_94 = arith.constant 0 : index
    %294 = vector.load %arg11[%c0_93, %c0_94] : memref<16x128xf32, #tpu.memory_space<vmem>>, vector<16x128xf32>
    %c1_95 = arith.constant 1 : index
    %c0_96 = arith.constant 0 : index
    %c0_97 = arith.constant 0 : index
    %295 = vector.load %arg4[%c1_95, %c0_96, %c0_97] : memref<2x128x128xbf16, #tpu.memory_space<vmem>>, vector<1x128x128xbf16>
    %296 = vector.shape_cast %295 : vector<1x128x128xbf16> to vector<128x128xbf16>
    %297 = arith.truncf %294 : vector<16x128xf32> to vector<16x128xbf16>
    %cst_98 = arith.constant dense<0.000000e+00> : vector<16x128xf32>
    %298 = tpu.matmul %297, %296, %cst_98 {dimension_numbers = #tpu.dot_dimension_numbers<[1], [0], [0], [1], [0, 0, 1, 1], [], []>} : vector<16x128xbf16>, vector<128x128xbf16>, vector<16x128xf32> -> vector<16x128xf32>
    %299 = vector.shape_cast %195 : vector<128xf32> to vector<1x128xf32>
    %300 = vector.broadcast %299 : vector<1x128xf32> to vector<16x128xf32>
    %301 = arith.addf %298, %300 : vector<16x128xf32>
    %302 = arith.addf %187, %301 : vector<16x128xf32>
    %cst_99 = arith.constant dense<0.000000e+00> : vector<16xf32>
    %303 = vector.multi_reduction <add>, %302, %cst_99 [1] : vector<16x128xf32> to vector<16xf32>
    %304 = vector.shape_cast %303 : vector<16xf32> to vector<16x1xf32>
    %cst_100 = arith.constant 1.280000e+02 : f32
    %305 = vector.broadcast %cst_100 : f32 to vector<16x1xf32>
    %306 = arith.divf %304, %305 : vector<16x1xf32>
    %307 = vector.broadcast %306 : vector<16x1xf32> to vector<16x128xf32>
    %308 = arith.subf %302, %307 : vector<16x128xf32>
    %309 = arith.mulf %308, %308 : vector<16x128xf32>
    %cst_101 = arith.constant dense<0.000000e+00> : vector<16xf32>
    %310 = vector.multi_reduction <add>, %309, %cst_101 [1] : vector<16x128xf32> to vector<16xf32>
    %311 = vector.shape_cast %310 : vector<16xf32> to vector<16x1xf32>
    %cst_102 = arith.constant 1.280000e+02 : f32
    %312 = vector.broadcast %cst_102 : f32 to vector<16x1xf32>
    %313 = arith.divf %311, %312 : vector<16x1xf32>
    %cst_103 = arith.constant 9.99999974E-6 : f32
    %314 = vector.broadcast %cst_103 : f32 to vector<16x1xf32>
    %315 = arith.addf %313, %314 : vector<16x1xf32>
    %316 = math.rsqrt %315 : vector<16x1xf32>
    %317 = vector.broadcast %316 : vector<16x1xf32> to vector<16x128xf32>
    %318 = arith.mulf %308, %317 : vector<16x128xf32>
    %319 = vector.shape_cast %197 : vector<128xf32> to vector<1x128xf32>
    %320 = vector.broadcast %319 : vector<1x128xf32> to vector<16x128xf32>
    %321 = arith.mulf %318, %320 : vector<16x128xf32>
    %322 = vector.shape_cast %199 : vector<128xf32> to vector<1x128xf32>
    %323 = vector.broadcast %322 : vector<1x128xf32> to vector<16x128xf32>
    %324 = arith.addf %321, %323 : vector<16x128xf32>
    %c1_104 = arith.constant 1 : index
    %c0_105 = arith.constant 0 : index
    %c0_106 = arith.constant 0 : index
    %325 = vector.load %arg5[%c1_104, %c0_105, %c0_106] : memref<2x128x2048xbf16, #tpu.memory_space<vmem>>, vector<1x128x2048xbf16>
    %326 = vector.shape_cast %325 : vector<1x128x2048xbf16> to vector<128x2048xbf16>
    %327 = arith.truncf %324 : vector<16x128xf32> to vector<16x128xbf16>
    %cst_107 = arith.constant dense<0.000000e+00> : vector<16x2048xf32>
    %328 = tpu.matmul %327, %326, %cst_107 {dimension_numbers = #tpu.dot_dimension_numbers<[1], [0], [0], [1], [0, 0, 1, 1], [], []>} : vector<16x128xbf16>, vector<128x2048xbf16>, vector<16x2048xf32> -> vector<16x2048xf32>
    %c1_108 = arith.constant 1 : index
    %c0_109 = arith.constant 0 : index
    %329 = vector.load %arg9[%c1_108, %c0_109] : memref<2x2048xf32, #tpu.memory_space<vmem>>, vector<1x2048xf32>
    %330 = vector.shape_cast %329 : vector<1x2048xf32> to vector<2048xf32>
    %331 = vector.shape_cast %330 : vector<2048xf32> to vector<1x2048xf32>
    %332 = vector.broadcast %331 : vector<1x2048xf32> to vector<16x2048xf32>
    %333 = arith.addf %328, %332 : vector<16x2048xf32>
    %cst_110 = arith.constant 0.000000e+00 : f32
    %334 = vector.broadcast %cst_110 : f32 to vector<16x2048xf32>
    %335 = arith.maximumf %333, %334 : vector<16x2048xf32>
    %c1_111 = arith.constant 1 : index
    %c0_112 = arith.constant 0 : index
    %c0_113 = arith.constant 0 : index
    %336 = vector.load %arg6[%c1_111, %c0_112, %c0_113] : memref<2x2048x128xbf16, #tpu.memory_space<vmem>>, vector<1x2048x128xbf16>
    %337 = vector.shape_cast %336 : vector<1x2048x128xbf16> to vector<2048x128xbf16>
    %338 = arith.truncf %335 : vector<16x2048xf32> to vector<16x2048xbf16>
    %cst_114 = arith.constant dense<0.000000e+00> : vector<16x128xf32>
    %339 = tpu.matmul %338, %337, %cst_114 {dimension_numbers = #tpu.dot_dimension_numbers<[1], [0], [0], [1], [0, 0, 1, 1], [], []>} : vector<16x2048xbf16>, vector<2048x128xbf16>, vector<16x128xf32> -> vector<16x128xf32>
    %340 = vector.shape_cast %201 : vector<128xf32> to vector<1x128xf32>
    %341 = vector.broadcast %340 : vector<1x128xf32> to vector<16x128xf32>
    %342 = arith.addf %339, %341 : vector<16x128xf32>
    %343 = arith.addf %324, %342 : vector<16x128xf32>
    %cst_115 = arith.constant dense<0.000000e+00> : vector<16xf32>
    %344 = vector.multi_reduction <add>, %343, %cst_115 [1] : vector<16x128xf32> to vector<16xf32>
    %345 = vector.shape_cast %344 : vector<16xf32> to vector<16x1xf32>
    %cst_116 = arith.constant 1.280000e+02 : f32
    %346 = vector.broadcast %cst_116 : f32 to vector<16x1xf32>
    %347 = arith.divf %345, %346 : vector<16x1xf32>
    %348 = vector.broadcast %347 : vector<16x1xf32> to vector<16x128xf32>
    %349 = arith.subf %343, %348 : vector<16x128xf32>
    %350 = arith.mulf %349, %349 : vector<16x128xf32>
    %cst_117 = arith.constant dense<0.000000e+00> : vector<16xf32>
    %351 = vector.multi_reduction <add>, %350, %cst_117 [1] : vector<16x128xf32> to vector<16xf32>
    %352 = vector.shape_cast %351 : vector<16xf32> to vector<16x1xf32>
    %cst_118 = arith.constant 1.280000e+02 : f32
    %353 = vector.broadcast %cst_118 : f32 to vector<16x1xf32>
    %354 = arith.divf %352, %353 : vector<16x1xf32>
    %cst_119 = arith.constant 9.99999974E-6 : f32
    %355 = vector.broadcast %cst_119 : f32 to vector<16x1xf32>
    %356 = arith.addf %354, %355 : vector<16x1xf32>
    %357 = math.rsqrt %356 : vector<16x1xf32>
    %358 = vector.broadcast %357 : vector<16x1xf32> to vector<16x128xf32>
    %359 = arith.mulf %349, %358 : vector<16x128xf32>
    %360 = vector.shape_cast %203 : vector<128xf32> to vector<1x128xf32>
    %361 = vector.broadcast %360 : vector<1x128xf32> to vector<16x128xf32>
    %362 = arith.mulf %359, %361 : vector<16x128xf32>
    %363 = vector.shape_cast %205 : vector<128xf32> to vector<1x128xf32>
    %364 = vector.broadcast %363 : vector<1x128xf32> to vector<16x128xf32>
    %365 = arith.addf %362, %364 : vector<16x128xf32>
    %c0_120 = arith.constant 0 : index
    %c0_121 = arith.constant 0 : index
    %366 = vector.load %arg7[%c0_120, %c0_121] : memref<128x128xbf16, #tpu.memory_space<vmem>>, vector<128x128xbf16>
    %367 = arith.truncf %365 : vector<16x128xf32> to vector<16x128xbf16>
    %cst_122 = arith.constant dense<0.000000e+00> : vector<16x128xf32>
    %368 = tpu.matmul %367, %366, %cst_122 {dimension_numbers = #tpu.dot_dimension_numbers<[1], [0], [0], [1], [0, 0, 1, 1], [], []>} : vector<16x128xbf16>, vector<128x128xbf16>, vector<16x128xf32> -> vector<16x128xf32>
    %369 = vector.extract_strided_slice %0 {offsets = [19, 0], sizes = [1, 128], strides = [1, 1]} : vector<20x128xf32> to vector<1x128xf32>
    %370 = vector.shape_cast %369 : vector<1x128xf32> to vector<128xf32>
    %371 = vector.shape_cast %370 : vector<128xf32> to vector<1x128xf32>
    %372 = vector.broadcast %371 : vector<1x128xf32> to vector<16x128xf32>
    %373 = arith.addf %368, %372 : vector<16x128xf32>
    %c0_123 = arith.constant 0 : index
    %c0_124 = arith.constant 0 : index
    %374 = vector.load %arg10[%c0_123, %c0_124] : memref<16x128xf32, #tpu.memory_space<vmem>>, vector<16x128xf32>
    tpu.vector_store %arg10[%c0_123, %c0_124], %373 {strides = array<i32>} : memref<16x128xf32, #tpu.memory_space<vmem>>, vector<16x128xf32>,
    return
  }
  func.func @transform_0(%arg0: i32) -> (i32, i32) {
    %c0_i32 = arith.constant 0 : i32
    %c0_i32_0 = arith.constant 0 : i32
    %c0_i32_1 = arith.constant 0 : i32
    return %c0_i32, %c0_i32_0 : i32, i32
  }
  func.func @transform_1(%arg0: i32) -> (i32, i32) {
    %c0_i32 = arith.constant 0 : i32
    %c0_i32_0 = arith.constant 0 : i32
    %c0_i32_1 = arith.constant 0 : i32
    return %c0_i32, %c0_i32_0 : i32, i32
  }
  func.func @transform_2(%arg0: i32) -> (i32, i32, i32) {
    %c0_i32 = arith.constant 0 : i32
    %c0_i32_0 = arith.constant 0 : i32
    %c0_i32_1 = arith.constant 0 : i32
    %c0_i32_2 = arith.constant 0 : i32
    return %c0_i32, %c0_i32_0, %c0_i32_1 : i32, i32, i32
  }
  func.func @transform_3(%arg0: i32) -> (i32, i32, i32) {
    %c0_i32 = arith.constant 0 : i32
    %c0_i32_0 = arith.constant 0 : i32
    %c0_i32_1 = arith.constant 0 : i32
    %c0_i32_2 = arith.constant 0 : i32
    return %c0_i32, %c0_i32_0, %c0_i32_1 : i32, i32, i32
  }
  func.func @transform_4(%arg0: i32) -> (i32, i32, i32) {
    %c0_i32 = arith.constant 0 : i32
    %c0_i32_0 = arith.constant 0 : i32
    %c0_i32_1 = arith.constant 0 : i32
    %c0_i32_2 = arith.constant 0 : i32
    return %c0_i32, %c0_i32_0, %c0_i32_1 : i32, i32, i32
  }
  func.func @transform_5(%arg0: i32) -> (i32, i32, i32) {
    %c0_i32 = arith.constant 0 : i32
    %c0_i32_0 = arith.constant 0 : i32
    %c0_i32_1 = arith.constant 0 : i32
    %c0_i32_2 = arith.constant 0 : i32
    return %c0_i32, %c0_i32_0, %c0_i32_1 : i32, i32, i32
  }
  func.func @transform_6(%arg0: i32) -> (i32, i32) {
    %c0_i32 = arith.constant 0 : i32
    %c0_i32_0 = arith.constant 0 : i32
    %c0_i32_1 = arith.constant 0 : i32
    return %c0_i32, %c0_i32_0 : i32, i32
  }
  func.func @transform_7(%arg0: i32) -> (i32, i32) {
    %c0_i32 = arith.constant 0 : i32
    %c0_i32_0 = arith.constant 0 : i32
    %c0_i32_1 = arith.constant 0 : i32
    return %c0_i32, %c0_i32_0 : i32, i32
  }
  func.func @transform_8(%arg0: i32) -> (i32, i32) {
    %c0_i32 = arith.constant 0 : i32
    %c0_i32_0 = arith.constant 0 : i32
    %c0_i32_1 = arith.constant 0 : i32
    return %c0_i32, %c0_i32_0 : i32, i32
  }
  func.func @transform_9(%arg0: i32) -> (i32, i32) {
    %c0_i32 = arith.constant 0 : i32
    %c0_i32_0 = arith.constant 0 : i32
    %c0_i32_1 = arith.constant 0 : i32
    return %c0_i32, %c0_i32_0 : i32, i32
  }
}

</mosaic_0001>

<llo_original>
// kernel: tpu_custom_call.1
$region0: #{tpu_custom_call.1}
  #allocation0 [shape = 'u32[]', space=smem, size = 0x4, offset = 0x4, fixed_abs, tag = 'smem constant byte address 0x4 - core index']
  #allocation1 [shape = 'u32[144,128]{1,0:T(1,128)}', space=vmem, size = 0x12000, scoped, tag = 'internal scratch']
  #allocation2 [shape = 'f32[16,128]{1,0:T(8,128)}', space=vmem, size = 0x2000, scoped, tag = 'scratch operand']
  %s0 = inlined_call_operand.hbm [shape: f32[16,128], index: 0, kind: input, shape index: {}]
  %s1 = inlined_call_operand.hbm [shape: bf16[128,128], index: 1, kind: input, shape index: {}]
  %s2 = inlined_call_operand.hbm [shape: bf16[2,128,384], index: 2, kind: input, shape index: {}]
  %s3 = inlined_call_operand.hbm [shape: bf16[2,128,128], index: 3, kind: input, shape index: {}]
  %s4 = inlined_call_operand.hbm [shape: bf16[2,128,2048], index: 4, kind: input, shape index: {}]
  %s5 = inlined_call_operand.hbm [shape: bf16[2,2048,128], index: 5, kind: input, shape index: {}]
  %s6 = inlined_call_operand.hbm [shape: bf16[128,128], index: 6, kind: input, shape index: {}]
  %s7 = inlined_call_operand.vmem [shape: f32[20,128], index: 7, kind: input, shape index: {}]
  %s8 = inlined_call_operand.hbm [shape: f32[2,2048], index: 8, kind: input, shape index: {}]
  %s9 = inlined_call_operand.hbm [shape: f32[16,128], index: 9, kind: output, shape index: {}]
  %s10 = sld [smem:[#allocation0]]
  $region78: #{tpu_custom_call.1} parent=0
    _
  %s12 = ssub.s32 1, %s10
  %s13 = scalar_select 0, %s12, %s10
  $region1: #{tpu_custom_call.1} parent=0
    #allocation3 [shape = 'u8[8192]{0}', space=vmem, size = 0x2000, scoped, tag = 'input window, operand 0, single buffered']
    #allocation4 [shape = 's32[1]{0}', space=sflag, size = 0x4, scoped, tag = 'scoped memory for tpu_custom_call.1']
    #allocation5 [shape = 's32[1]{0}', space=sflag, size = 0x4, scoped, tag = 'scoped memory for tpu_custom_call.1']
    #allocation6 [shape = 'u8[32768]{0}', space=vmem, size = 0x8000, scoped, tag = 'input window, operand 1, single buffered']
    #allocation7 [shape = 's32[1]{0}', space=sflag, size = 0x4, scoped, tag = 'scoped memory for tpu_custom_call.1']
    #allocation8 [shape = 'u8[196608]{0}', space=vmem, size = 0x30000, scoped, tag = 'input window, operand 2, single buffered']
    #allocation9 [shape = 'u8[65536]{0}', space=vmem, size = 0x10000, scoped, tag = 'input window, operand 3, single buffered']
    #allocation10 [shape = 's32[1]{0}', space=sflag, size = 0x4, scoped, tag = 'scoped memory for tpu_custom_call.1']
    #allocation11 [shape = 'u8[1048576]{0}', space=vmem, size = 0x100000, scoped, tag = 'input window, operand 4, single buffered']
    #allocation12 [shape = 'u8[1048576]{0}', space=vmem, size = 0x100000, scoped, tag = 'input window, operand 5, single buffered']
    #allocation13 [shape = 's32[1]{0}', space=sflag, size = 0x4, scoped, tag = 'scoped memory for tpu_custom_call.1']
    #allocation14 [shape = 'u8[32768]{0}', space=vmem, size = 0x8000, scoped, tag = 'input window, operand 6, single buffered']
    #allocation15 [shape = 'u8[16384]{0}', space=vmem, size = 0x4000, scoped, tag = 'input window, operand 8, single buffered']
    #allocation16 [shape = 's32[1]{0}', space=sflag, size = 0x4, scoped, tag = 'scoped memory for tpu_custom_call.1']
    #allocation17 [shape = 'u8[8192]{0}', space=vmem, size = 0x2000, scoped, tag = 'output window, operand 0, single buffered']
    %14 = vsyncpa [#allocation4], 0
    %15 = vsyncpa [#allocation7], 0
    %16 = vsyncpa [#allocation10], 0
    %17 = vsyncpa [#allocation13], 0
    %18 = vsyncpa [#allocation16], 0
    %19 = vsyncpa [#allocation5], 0
    // Predicated region
    $region2: #{tpu_custom_call.1} parent=1 // pred_check
      _
    $region3: #{tpu_custom_call.1} parent=1 // pred_check_branch
      %21 = sbr.rel (0) target = $region5
    $region4: #{tpu_custom_call.1} parent=1 // pred_region
      %s23 = ssub.s32 256, 256
      %24 = vsyncadd [#allocation4], %s23
      %s25 = sshll.u32 [#allocation3], 4
      %s26 = int_to_ptr.vmem [resolvable:$true] %s25
      %31 = dma.hbm_to_vmem [thread:$0]  %s0, 256, %s26, [#allocation4], 128, 128, 8
    $region5: #{tpu_custom_call.1} parent=1 // pred_fallthru
      _
    // Predicated region
    $region6: #{tpu_custom_call.1} parent=1 // pred_check
      _
    $region7: #{tpu_custom_call.1} parent=1 // pred_check_branch
      %33 = sbr.rel (0) target = $region9
    $region8: #{tpu_custom_call.1} parent=1 // pred_region
      %s35 = ssub.s32 1024, 1024
      %36 = vsyncadd [#allocation7], %s35
      %s37 = sshll.u32 [#allocation6], 4
      %s38 = int_to_ptr.vmem [resolvable:$true] %s37
      %43 = dma.hbm_to_vmem [thread:$0]  %s1, 1024, %s38, [#allocation7], 64, 64, 4
    $region9: #{tpu_custom_call.1} parent=1 // pred_fallthru
      _
    // Predicated region
    $region10: #{tpu_custom_call.1} parent=1 // pred_check
      _
    $region11: #{tpu_custom_call.1} parent=1 // pred_check_branch
      %45 = sbr.rel (0) target = $region13
    $region12: #{tpu_custom_call.1} parent=1 // pred_region
      %s47 = ssub.s32 6144, 6144
      %48 = vsyncadd [#allocation7], %s47
      %s49 = sshll.u32 [#allocation8], 4
      %s50 = int_to_ptr.vmem [resolvable:$true] %s49
      %55 = dma.hbm_to_vmem [thread:$0]  %s2, 6144, %s50, [#allocation7], 192, 192, 12
    $region13: #{tpu_custom_call.1} parent=1 // pred_fallthru
      _
    // Predicated region
    $region14: #{tpu_custom_call.1} parent=1 // pred_check
      _
    $region15: #{tpu_custom_call.1} parent=1 // pred_check_branch
      %57 = sbr.rel (0) target = $region17
    $region16: #{tpu_custom_call.1} parent=1 // pred_region
      %s59 = ssub.s32 2048, 2048
      %60 = vsyncadd [#allocation10], %s59
      %s61 = sshll.u32 [#allocation9], 4
      %s62 = int_to_ptr.vmem [resolvable:$true] %s61
      %67 = dma.hbm_to_vmem [thread:$0]  %s3, 2048, %s62, [#allocation10], 64, 64, 4
    $region17: #{tpu_custom_call.1} parent=1 // pred_fallthru
      _
    // Predicated region
    $region18: #{tpu_custom_call.1} parent=1 // pred_check
      _
    $region19: #{tpu_custom_call.1} parent=1 // pred_check_branch
      %69 = sbr.rel (0) target = $region21
    $region20: #{tpu_custom_call.1} parent=1 // pred_region
      %s71 = ssub.s32 32768, 32768
      %72 = vsyncadd [#allocation10], %s71
      %s73 = sshll.u32 [#allocation11], 4
      %s74 = int_to_ptr.vmem [resolvable:$true] %s73
      %79 = dma.hbm_to_vmem [thread:$0]  %s4, 32768, %s74, [#allocation10], 1024, 1024, 64
    $region21: #{tpu_custom_call.1} parent=1 // pred_fallthru
      _
    // Predicated region
    $region22: #{tpu_custom_call.1} parent=1 // pred_check
      _
    $region23: #{tpu_custom_call.1} parent=1 // pred_check_branch
      %81 = sbr.rel (0) target = $region25
    $region24: #{tpu_custom_call.1} parent=1 // pred_region
      %s83 = ssub.s32 32768, 32768
      %84 = vsyncadd [#allocation13], %s83
      %s85 = sshll.u32 [#allocation12], 4
      %s86 = int_to_ptr.vmem [resolvable:$true] %s85
      %91 = dma.hbm_to_vmem [thread:$0]  %s5, 32768, %s86, [#allocation13], 64, 64, 4
    $region25: #{tpu_custom_call.1} parent=1 // pred_fallthru
      _
    // Predicated region
    $region26: #{tpu_custom_call.1} parent=1 // pred_check
      _
    $region27: #{tpu_custom_call.1} parent=1 // pred_check_branch
      %93 = sbr.rel (0) target = $region29
    $region28: #{tpu_custom_call.1} parent=1 // pred_region
      %s95 = ssub.s32 1024, 1024
      %96 = vsyncadd [#allocation13], %s95
      %s97 = sshll.u32 [#allocation14], 4
      %s98 = int_to_ptr.vmem [resolvable:$true] %s97
      %103 = dma.hbm_to_vmem [thread:$0]  %s6, 1024, %s98, [#allocation13], 64, 64, 4
    $region29: #{tpu_custom_call.1} parent=1 // pred_fallthru
      _
    // Predicated region
    $region30: #{tpu_custom_call.1} parent=1 // pred_check
      _
    $region31: #{tpu_custom_call.1} parent=1 // pred_check_branch
      %105 = sbr.rel (0) target = $region33
    $region32: #{tpu_custom_call.1} parent=1 // pred_region
      _
    $region33: #{tpu_custom_call.1} parent=1 // pred_fallthru
      _
    // Predicated region
    $region34: #{tpu_custom_call.1} parent=1 // pred_check
      _
    $region35: #{tpu_custom_call.1} parent=1 // pred_check_branch
      %107 = sbr.rel (0) target = $region37
    $region36: #{tpu_custom_call.1} parent=1 // pred_region
      %s109 = ssub.s32 512, 512
      %110 = vsyncadd [#allocation16], %s109
      %s112 = sshll.u32 [#allocation15], 4
      %s113 = int_to_ptr.vmem [resolvable:$true] %s112
      %115 = dma.hbm_to_vmem [thread:$0]  %s8, 512, %s113, [#allocation16]
    $region37: #{tpu_custom_call.1} parent=1 // pred_fallthru
      _
    // Predicated region
    $region38: #{tpu_custom_call.1} parent=1 // pred_check
      _
    $region39: #{tpu_custom_call.1} parent=1 // pred_check_branch
      %117 = sbr.rel (0) target = $region41
    $region40: #{tpu_custom_call.1} parent=1 // pred_region
      %118 = dma.done [#allocation4], 256
    $region41: #{tpu_custom_call.1} parent=1 // pred_fallthru
      _
    // Predicated region
    $region42: #{tpu_custom_call.1} parent=1 // pred_check
      _
    $region43: #{tpu_custom_call.1} parent=1 // pred_check_branch
      %120 = sbr.rel (0) target = $region45
    $region44: #{tpu_custom_call.1} parent=1 // pred_region
      %121 = dma.done [#allocation7], 1024
    $region45: #{tpu_custom_call.1} parent=1 // pred_fallthru
      _
    // Predicated region
    $region46: #{tpu_custom_call.1} parent=1 // pred_check
      _
    $region47: #{tpu_custom_call.1} parent=1 // pred_check_branch
      %123 = sbr.rel (0) target = $region49
    $region48: #{tpu_custom_call.1} parent=1 // pred_region
      %124 = dma.done [#allocation7], 6144
    $region49: #{tpu_custom_call.1} parent=1 // pred_fallthru
      _
    // Predicated region
    $region50: #{tpu_custom_call.1} parent=1 // pred_check
      _
    $region51: #{tpu_custom_call.1} parent=1 // pred_check_branch
      %126 = sbr.rel (0) target = $region53
    $region52: #{tpu_custom_call.1} parent=1 // pred_region
      %127 = dma.done [#allocation10], 2048
    $region53: #{tpu_custom_call.1} parent=1 // pred_fallthru
      _
    // Predicated region
    $region54: #{tpu_custom_call.1} parent=1 // pred_check
      _
    $region55: #{tpu_custom_call.1} parent=1 // pred_check_branch
      %129 = sbr.rel (0) target = $region57
    $region56: #{tpu_custom_call.1} parent=1 // pred_region
      %130 = dma.done [#allocation10], 32768
    $region57: #{tpu_custom_call.1} parent=1 // pred_fallthru
      _
    // Predicated region
    $region58: #{tpu_custom_call.1} parent=1 // pred_check
      _
    $region59: #{tpu_custom_call.1} parent=1 // pred_check_branch
      %132 = sbr.rel (0) target = $region61
    $region60: #{tpu_custom_call.1} parent=1 // pred_region
      %133 = dma.done [#allocation13], 32768
    $region61: #{tpu_custom_call.1} parent=1 // pred_fallthru
      _
    // Predicated region
    $region62: #{tpu_custom_call.1} parent=1 // pred_check
      _
    $region63: #{tpu_custom_call.1} parent=1 // pred_check_branch
      %135 = sbr.rel (0) target = $region65
    $region64: #{tpu_custom_call.1} parent=1 // pred_region
      %136 = dma.done [#allocation13], 1024
    $region65: #{tpu_custom_call.1} parent=1 // pred_fallthru
      _
    // Predicated region
    $region66: #{tpu_custom_call.1} parent=1 // pred_check
      _
    $region67: #{tpu_custom_call.1} parent=1 // pred_check_branch
      %138 = sbr.rel (0) target = $region69
    $region68: #{tpu_custom_call.1} parent=1 // pred_region
      %139 = dma.done [#allocation16], 512
    $region69: #{tpu_custom_call.1} parent=1 // pred_fallthru
      _
    %v141 = vld [vmem:[%s7] sm:$0xff]
    %v142 = vld [vmem:[%s7 + $0x8] sm:$0xff]
    %v143 = vld [vmem:[%s7 + $0x10] sm:$0xf]
    %v144 = vld [vmem:[#allocation3] sm:$0xff]
    %v145 = vld [vmem:[#allocation3 + $0x8] sm:$0xff]
    %v146 = vld [vmem:[#allocation6] sm:$0xf]
    %v147 = vld [vmem:[#allocation6 + $0x4] sm:$0xf]
    %v148 = vld [vmem:[#allocation6 + $0x8] sm:$0xf]
    %v149 = vld [vmem:[#allocation6 + $0xc] sm:$0xf]
    %v150 = vld [vmem:[#allocation6 + $0x10] sm:$0xf]
    %v151 = vld [vmem:[#allocation6 + $0x14] sm:$0xf]
    %v152 = vld [vmem:[#allocation6 + $0x18] sm:$0xf]
    %v153 = vld [vmem:[#allocation6 + $0x1c] sm:$0xf]
    %v154 = vld [vmem:[#allocation6 + $0x20] sm:$0xf]
    %v155 = vld [vmem:[#allocation6 + $0x24] sm:$0xf]
    %v156 = vld [vmem:[#allocation6 + $0x28] sm:$0xf]
    %v157 = vld [vmem:[#allocation6 + $0x2c] sm:$0xf]
    %v158 = vld [vmem:[#allocation6 + $0x30] sm:$0xf]
    %v159 = vld [vmem:[#allocation6 + $0x34] sm:$0xf]
    %v160 = vld [vmem:[#allocation6 + $0x38] sm:$0xf]
    %v161 = vld [vmem:[#allocation6 + $0x3c] sm:$0xf]
    %v162 = vpack.c.bf16 %v145, %v144
    %v163 = vlaneseq
    %v164 = vshrl.u32 %v163, 7
    %v165 = vsub.s32 0, %v164
    %v166 = vrot.slane %v141, %v165
    %v183 = vunpack.c.l.b16 %v146
    %v184 = vunpack.c.l.b16 %v147
    %v185 = vunpack.c.l.b16 %v148
    %v186 = vunpack.c.l.b16 %v149
    %v187 = vunpack.c.l.b16 %v150
    %v188 = vunpack.c.l.b16 %v151
    %v189 = vunpack.c.l.b16 %v152
    %v190 = vunpack.c.l.b16 %v153
    %v191 = vunpack.c.l.b16 %v154
    %v192 = vunpack.c.l.b16 %v155
    %v193 = vunpack.c.l.b16 %v156
    %v194 = vunpack.c.l.b16 %v157
    %v195 = vunpack.c.l.b16 %v158
    %v196 = vunpack.c.l.b16 %v159
    %v197 = vunpack.c.l.b16 %v160
    %v198 = vunpack.c.l.b16 %v161
    %v199 = vpack.c.b16 %v184, %v183
    %v200 = vpack.c.b16 %v186, %v185
    %v201 = vpack.c.b16 %v188, %v187
    %v202 = vpack.c.b16 %v190, %v189
    %v203 = vpack.c.b16 %v192, %v191
    %v204 = vpack.c.b16 %v194, %v193
    %v205 = vpack.c.b16 %v196, %v195
    %v206 = vpack.c.b16 %v198, %v197
    %215 = vmatprep.subr.bf16.mxu0 0
    %216 = vmatpush1.bf16.msra.mxu0 %v199
    %217 = vmatprep.subr.bf16.mxu0 0
    %218 = vmatpush1.bf16.msra.mxu0 %v200
    %219 = vmatprep.subr.bf16.mxu0 0
    %220 = vmatpush1.bf16.msra.mxu0 %v201
    %221 = vmatprep.subr.bf16.mxu0 0
    %222 = vmatpush1.bf16.msra.mxu0 %v202
    %223 = vmatprep.subr.bf16.mxu0 0
    %224 = vmatpush1.bf16.msra.mxu0 %v203
    %225 = vmatprep.subr.bf16.mxu0 0
    %226 = vmatpush1.bf16.msra.mxu0 %v204
    %227 = vmatprep.subr.bf16.mxu0 0
    %228 = vmatpush1.bf16.msra.mxu0 %v205
    %229 = vmatprep.subr.bf16.mxu0 0
    %230 = vmatpush1.bf16.msra.mxu0 %v206
    %231 = vmatprep.subr.bf16.mxu0 0
    %232 = vmatpush1.bf16.msra.mxu0 0
    %233 = vmatprep.subr.bf16.mxu0 0
    %234 = vmatpush1.bf16.msra.mxu0 0
    %235 = vmatprep.subr.bf16.mxu0 0
    %236 = vmatpush1.bf16.msra.mxu0 0
    %237 = vmatprep.subr.bf16.mxu0 0
    %238 = vmatpush1.bf16.msra.mxu0 0
    %239 = vmatprep.subr.bf16.mxu0 0
    %240 = vmatpush1.bf16.msra.mxu0 0
    %241 = vmatprep.subr.bf16.mxu0 0
    %242 = vmatpush1.bf16.msra.mxu0 0
    %243 = vmatprep.subr.bf16.mxu0 0
    %244 = vmatpush1.bf16.msra.mxu0 0
    %245 = vmatprep.subr.bf16.mxu0 0
    %246 = vmatpush1.bf16.msra.mxu0 0
    %247 = vmatprep.mubr.bf16.mxu0 0
    %248 = vmatmul.mubr.bf16.gmra.mrb[0].mxu0 %v162
    %v249 = vpop.f32.mrb[0].mxu0
    %v250 = vadd.f32 %v166, %v249
    %v251 = vpop.f32.mrb[0].mxu0
    %v252 = vpop.f32.mrb[0].mxu0
    %v253 = vadd.f32 %v166, %v252
    %v254 = vpop.f32.mrb[0].mxu0
    %255 = vdwg.mxu0
    %v256 = vld [vmem:[#allocation8] sm:$0xff]
    %v257 = vld [vmem:[#allocation8 + $0x8] sm:$0xf]
    %v258 = vld [vmem:[#allocation8 + $0xc] sm:$0xff]
    %v259 = vld [vmem:[#allocation8 + $0x14] sm:$0xf]
    %v260 = vld [vmem:[#allocation8 + $0x18] sm:$0xff]
    %v261 = vld [vmem:[#allocation8 + $0x20] sm:$0xf]
    %v262 = vld [vmem:[#allocation8 + $0x24] sm:$0xff]
    %v263 = vld [vmem:[#allocation8 + $0x2c] sm:$0xf]
    %v264 = vld [vmem:[#allocation8 + $0x30] sm:$0xff]
    %v265 = vld [vmem:[#allocation8 + $0x38] sm:$0xf]
    %v266 = vld [vmem:[#allocation8 + $0x3c] sm:$0xff]
    %v267 = vld [vmem:[#allocation8 + $0x44] sm:$0xf]
    %v268 = vld [vmem:[#allocation8 + $0x48] sm:$0xff]
    %v269 = vld [vmem:[#allocation8 + $0x50] sm:$0xf]
    %v270 = vld [vmem:[#allocation8 + $0x54] sm:$0xff]
    %v271 = vld [vmem:[#allocation8 + $0x5c] sm:$0xf]
    %v272 = vld [vmem:[#allocation8 + $0x60] sm:$0xff]
    %v273 = vld [vmem:[#allocation8 + $0x68] sm:$0xf]
    %v274 = vld [vmem:[#allocation8 + $0x6c] sm:$0xff]
    %v275 = vld [vmem:[#allocation8 + $0x74] sm:$0xf]
    %v276 = vld [vmem:[#allocation8 + $0x78] sm:$0xff]
    %v277 = vld [vmem:[#allocation8 + $0x80] sm:$0xf]
    %v278 = vld [vmem:[#allocation8 + $0x84] sm:$0xff]
    %v279 = vld [vmem:[#allocation8 + $0x8c] sm:$0xf]
    %v280 = vld [vmem:[#allocation8 + $0x90] sm:$0xff]
    %v281 = vld [vmem:[#allocation8 + $0x98] sm:$0xf]
    %v282 = vld [vmem:[#allocation8 + $0x9c] sm:$0xff]
    %v283 = vld [vmem:[#allocation8 + $0xa4] sm:$0xf]
    %v284 = vld [vmem:[#allocation8 + $0xa8] sm:$0xff]
    %v285 = vld [vmem:[#allocation8 + $0xb0] sm:$0xf]
    %v286 = vld [vmem:[#allocation8 + $0xb4] sm:$0xff]
    %v287 = vld [vmem:[#allocation8 + $0xbc] sm:$0xf]
    %v288 = vpack.c.bf16 %v253, %v250
    %v321 = vunpack.c.l.b16 %v256
    %v322 = vunpack.c.h.b16 %v256
    %v323 = vunpack.c.l.b16 %v257
    %v324 = vunpack.c.l.b16 %v258
    %v325 = vunpack.c.h.b16 %v258
    %v326 = vunpack.c.l.b16 %v259
    %v327 = vunpack.c.l.b16 %v260
    %v328 = vunpack.c.h.b16 %v260
    %v329 = vunpack.c.l.b16 %v261
    %v330 = vunpack.c.l.b16 %v262
    %v331 = vunpack.c.h.b16 %v262
    %v332 = vunpack.c.l.b16 %v263
    %v333 = vunpack.c.l.b16 %v264
    %v334 = vunpack.c.h.b16 %v264
    %v335 = vunpack.c.l.b16 %v265
    %v336 = vunpack.c.l.b16 %v266
    %v337 = vunpack.c.h.b16 %v266
    %v338 = vunpack.c.l.b16 %v267
    %v339 = vunpack.c.l.b16 %v268
    %v340 = vunpack.c.h.b16 %v268
    %v341 = vunpack.c.l.b16 %v269
    %v342 = vunpack.c.l.b16 %v270
    %v343 = vunpack.c.h.b16 %v270
    %v344 = vunpack.c.l.b16 %v271
    %v345 = vunpack.c.l.b16 %v272
    %v346 = vunpack.c.h.b16 %v272
    %v347 = vunpack.c.l.b16 %v273
    %v348 = vunpack.c.l.b16 %v274
    %v349 = vunpack.c.h.b16 %v274
    %v350 = vunpack.c.l.b16 %v275
    %v351 = vunpack.c.l.b16 %v276
    %v352 = vunpack.c.h.b16 %v276
    %v353 = vunpack.c.l.b16 %v277
    %v354 = vunpack.c.l.b16 %v278
    %v355 = vunpack.c.h.b16 %v278
    %v356 = vunpack.c.l.b16 %v279
    %v357 = vunpack.c.l.b16 %v280
    %v358 = vunpack.c.h.b16 %v280
    %v359 = vunpack.c.l.b16 %v281
    %v360 = vunpack.c.l.b16 %v282
    %v361 = vunpack.c.h.b16 %v282
    %v362 = vunpack.c.l.b16 %v283
    %v363 = vunpack.c.l.b16 %v284
    %v364 = vunpack.c.h.b16 %v284
    %v365 = vunpack.c.l.b16 %v285
    %v366 = vunpack.c.l.b16 %v286
    %v367 = vunpack.c.h.b16 %v286
    %v368 = vunpack.c.l.b16 %v287
    %v369 = vpack.c.b16 %v324, %v321
    %v370 = vpack.c.b16 %v325, %v322
    %v371 = vpack.c.b16 %v326, %v323
    %v372 = vpack.c.b16 %v330, %v327
    %v373 = vpack.c.b16 %v331, %v328
    %v374 = vpack.c.b16 %v332, %v329
    %v375 = vpack.c.b16 %v336, %v333
    %v376 = vpack.c.b16 %v337, %v334
    %v377 = vpack.c.b16 %v338, %v335
    %v378 = vpack.c.b16 %v342, %v339
    %v379 = vpack.c.b16 %v343, %v340
    %v380 = vpack.c.b16 %v344, %v341
    %v381 = vpack.c.b16 %v348, %v345
    %v382 = vpack.c.b16 %v349, %v346
    %v383 = vpack.c.b16 %v350, %v347
    %v384 = vpack.c.b16 %v354, %v351
    %v385 = vpack.c.b16 %v355, %v352
    %v386 = vpack.c.b16 %v356, %v353
    %v387 = vpack.c.b16 %v360, %v357
    %v388 = vpack.c.b16 %v361, %v358
    %v389 = vpack.c.b16 %v362, %v359
    %v390 = vpack.c.b16 %v366, %v363
    %v391 = vpack.c.b16 %v367, %v364
    %v392 = vpack.c.b16 %v368, %v365
    %417 = vmatprep.subr.bf16.mxu0 %v370
    %418 = vmatpush1.bf16.msra.mxu0 %v369
    %419 = vmatprep.subr.bf16.mxu0 %v373
    %420 = vmatpush1.bf16.msra.mxu0 %v372
    %421 = vmatprep.subr.bf16.mxu0 %v376
    %422 = vmatpush1.bf16.msra.mxu0 %v375
    %423 = vmatprep.subr.bf16.mxu0 %v379
    %424 = vmatpush1.bf16.msra.mxu0 %v378
    %425 = vmatprep.subr.bf16.mxu0 %v382
    %426 = vmatpush1.bf16.msra.mxu0 %v381
    %427 = vmatprep.subr.bf16.mxu0 %v385
    %428 = vmatpush1.bf16.msra.mxu0 %v384
    %429 = vmatprep.subr.bf16.mxu0 %v388
    %430 = vmatpush1.bf16.msra.mxu0 %v387
    %431 = vmatprep.subr.bf16.mxu0 %v391
    %432 = vmatpush1.bf16.msra.mxu0 %v390
    %433 = vmatprep.subr.bf16.mxu0 0
    %434 = vmatpush1.bf16.msra.mxu0 0
    %435 = vmatprep.subr.bf16.mxu0 0
    %436 = vmatpush1.bf16.msra.mxu0 0
    %437 = vmatprep.subr.bf16.mxu0 0
    %438 = vmatpush1.bf16.msra.mxu0 0
    %439 = vmatprep.subr.bf16.mxu0 0
    %440 = vmatpush1.bf16.msra.mxu0 0
    %441 = vmatprep.subr.bf16.mxu0 0
    %442 = vmatpush1.bf16.msra.mxu0 0
    %443 = vmatprep.subr.bf16.mxu0 0
    %444 = vmatpush1.bf16.msra.mxu0 0
    %445 = vmatprep.subr.bf16.mxu0 0
    %446 = vmatpush1.bf16.msra.mxu0 0
    %447 = vmatprep.subr.bf16.mxu0 0
    %448 = vmatpush1.bf16.msra.mxu0 0
    %449 = vmatprep.mubr.bf16.mxu0 0
    %450 = vmatmul.mubr.bf16.gmra.mrb[0].mxu0 %v288
    %v451 = vpop.f32.mrb[0].mxu0
    %v452 = vadd.f32 0.0, %v451
    %v453 = vpop.f32.mrb[0].mxu0
    %v454 = vadd.f32 0.0, %v453
    %v455 = vpop.f32.mrb[0].mxu0
    %v456 = vadd.f32 0.0, %v455
    %v457 = vpop.f32.mrb[0].mxu0
    %v458 = vadd.f32 0.0, %v457
    %459 = vdwg.mxu0
    %460 = vmatprep.subr.bf16.mxu0 0
    %461 = vmatpush1.bf16.msra.mxu0 %v371
    %462 = vmatprep.subr.bf16.mxu0 0
    %463 = vmatpush1.bf16.msra.mxu0 %v374
    %464 = vmatprep.subr.bf16.mxu0 0
    %465 = vmatpush1.bf16.msra.mxu0 %v377
    %466 = vmatprep.subr.bf16.mxu0 0
    %467 = vmatpush1.bf16.msra.mxu0 %v380
    %468 = vmatprep.subr.bf16.mxu0 0
    %469 = vmatpush1.bf16.msra.mxu0 %v383
    %470 = vmatprep.subr.bf16.mxu0 0
    %471 = vmatpush1.bf16.msra.mxu0 %v386
    %472 = vmatprep.subr.bf16.mxu0 0
    %473 = vmatpush1.bf16.msra.mxu0 %v389
    %474 = vmatprep.subr.bf16.mxu0 0
    %475 = vmatpush1.bf16.msra.mxu0 %v392
    %476 = vmatprep.subr.bf16.mxu0 0
    %477 = vmatpush1.bf16.msra.mxu0 0
    %478 = vmatprep.subr.bf16.mxu0 0
    %479 = vmatpush1.bf16.msra.mxu0 0
    %480 = vmatprep.subr.bf16.mxu0 0
    %481 = vmatpush1.bf16.msra.mxu0 0
    %482 = vmatprep.subr.bf16.mxu0 0
    %483 = vmatpush1.bf16.msra.mxu0 0
    %484 = vmatprep.subr.bf16.mxu0 0
    %485 = vmatpush1.bf16.msra.mxu0 0
    %486 = vmatprep.subr.bf16.mxu0 0
    %487 = vmatpush1.bf16.msra.mxu0 0
    %488 = vmatprep.subr.bf16.mxu0 0
    %489 = vmatpush1.bf16.msra.mxu0 0
    %490 = vmatprep.subr.bf16.mxu0 0
    %491 = vmatpush1.bf16.msra.mxu0 0
    %492 = vmatprep.mubr.bf16.mxu0 0
    %493 = vmatmul.mubr.bf16.gmra.mrb[0].mxu0 %v288
    %v494 = vpop.f32.mrb[0].mxu0
    %v495 = vadd.f32 0.0, %v494
    %v496 = vpop.f32.mrb[0].mxu0
    %v497 = vpop.f32.mrb[0].mxu0
    %v498 = vadd.f32 0.0, %v497
    %v499 = vpop.f32.mrb[0].mxu0
    %500 = vdwg.mxu0
    %v501 = vlaneseq
    %v502 = vshrl.u32 %v501, 7
    %v503 = vsub.s32 1, %v502
    %v504 = vrot.slane %v141, %v503
    %v505 = vadd.f32 %v452, %v504
    %v506 = vadd.f32 %v456, %v504
    %v507 = vlaneseq
    %v508 = vshrl.u32 %v507, 7
    %v509 = vsub.s32 2, %v508
    %v510 = vrot.slane %v141, %v509
    %v511 = vadd.f32 %v454, %v510
    %v512 = vadd.f32 %v458, %v510
    %v513 = vlaneseq
    %v514 = vshrl.u32 %v513, 7
    %v515 = vsub.s32 3, %v514
    %v516 = vrot.slane %v141, %v515
    %v517 = vadd.f32 %v495, %v516
    %v518 = vadd.f32 %v498, %v516
    %vm519 = vcmask 523264
    %v521 = vsel %vm519, %v505, 0
    %v524 = vsel %vm519, %v511, 0
    %526 = vmatprep.subr.mxu0 0.0
    %527 = vmatpush1.xpose.msra.mxu0 %v524
    %528 = vmatprep.subr.mxu0 0.0
    %529 = vmatpush1.xpose.msra.mxu0 0.0
    %530 = vmatprep.subr.mxu0 0.0
    %531 = vmatpush1.xpose.msra.mxu0 0.0
    %532 = vmatprep.subr.mxu0 0.0
    %533 = vmatpush1.xpose.msra.mxu0 0.0
    %534 = vmatprep.subr.mxu0 0.0
    %535 = vmatpush1.xpose.msra.mxu0 0.0
    %536 = vmatprep.subr.mxu0 0.0
    %537 = vmatpush1.xpose.msra.mxu0 0.0
    %538 = vmatprep.subr.mxu0 0.0
    %539 = vmatpush1.xpose.msra.mxu0 0.0
    %540 = vmatprep.subr.mxu0 0.0
    %541 = vmatpush1.xpose.msra.mxu0 0.0
    %542 = vmatprep.subr.mxu0 0.0
    %543 = vmatpush1.xpose.msra.mxu0 0.0
    %544 = vmatprep.subr.mxu0 0.0
    %545 = vmatpush1.xpose.msra.mxu0 0.0
    %546 = vmatprep.subr.mxu0 0.0
    %547 = vmatpush1.xpose.msra.mxu0 0.0
    %548 = vmatprep.subr.mxu0 0.0
    %549 = vmatpush1.xpose.msra.mxu0 0.0
    %550 = vmatprep.subr.mxu0 0.0
    %551 = vmatpush1.xpose.msra.mxu0 0.0
    %552 = vmatprep.subr.mxu0 0.0
    %553 = vmatpush1.xpose.msra.mxu0 0.0
    %554 = vmatprep.subr.mxu0 0.0
    %555 = vmatpush1.xpose.msra.mxu0 0.0
    %556 = vmatprep.subr.mxu0 0.0
    %557 = vmatpush1.xpose.msra.mxu0 0.0
    %558 = vmatprep.subr.mxu0 0.0
    %559 = vmatpush1.xpose.msra.mxu0 0.0
    %560 = vmatprep.subr.mxu0 0.0
    %561 = vmatpush1.xpose.msra.mxu0 0.0
    %562 = vmatprep.subr.mxu0 0.0
    %563 = vmatpush1.xpose.msra.mxu0 0.0
    %564 = vmatprep.subr.mxu0 0.0
    %565 = vmatpush1.xpose.msra.mxu0 0.0
    %566 = vmatprep.subr.mxu0 0.0
    %567 = vmatpush1.xpose.msra.mxu0 0.0
    %568 = vmatprep.subr.mxu0 0.0
    %569 = vmatpush1.xpose.msra.mxu0 0.0
    %570 = vmatprep.subr.mxu0 0.0
    %571 = vmatpush1.xpose.msra.mxu0 0.0
    %572 = vmatprep.subr.mxu0 0.0
    %573 = vmatpush1.xpose.msra.mxu0 0.0
    %574 = vmatprep.subr.mxu0 0.0
    %575 = vmatpush1.xpose.msra.mxu0 0.0
    %576 = vmatprep.subr.mxu0 0.0
    %577 = vmatpush1.xpose.msra.mxu0 0.0
    %578 = vmatprep.subr.mxu0 0.0
    %579 = vmatpush1.xpose.msra.mxu0 0.0
    %580 = vmatprep.subr.mxu0 0.0
    %581 = vmatpush1.xpose.msra.mxu0 0.0
    %582 = vmatprep.subr.mxu0 0.0
    %583 = vmatpush1.xpose.msra.mxu0 0.0
    %584 = vmatprep.subr.mxu0 0.0
    %585 = vmatpush1.xpose.msra.mxu0 0.0
    %586 = vmatprep.subr.mxu0 0.0
    %587 = vmatpush1.xpose.msra.mxu0 0.0
    %588 = vmatprep.subr.mxu0 0.0
    %589 = vmatpush1.xpose.msra.mxu0 0.0
    %590 = vmatprep.mubr.f32.mxu0 0.0
    %591 = vmatmul.mubr.f32.gmra.mrb[0].mxu0 %v521
    %v592 = vpop.f32.mrb[0].mxu0
    %v593 = vadd.f32 0.0, %v592
    %v594 = vpop.f32.mrb[0].mxu0
    %595 = vdwg.mxu0
    %v596 = vmul.f32 %v593, 0.125
    %vm597 = vcmask 64512
    %v598 = vsel %vm597, %v596, -inf
    %599 = vmax.xlane.f32.xlu0 %v598
    %v600 = vpop.xlane.xlu0 %599
    %v601 = vsub.f32 %v596, %v600
    %v602 = vmul.f32 %v601, 1.442695
    %v603 = vpow.pop %v602
    %v604 = vsel %vm597, %v603, 0.0
    %605 = vadd.xlane.f32.xlu0 %v604
    %v606 = vpop.xlane.xlu0 %605
    %v607 = vrcp.pop %v606
    %v608 = vmul.f32 %v603, %v607
    %v610 = vsel %vm597, %v608, 0
    %612 = vmatprep.subr.mxu0 0.0
    %613 = vmatpush1.msra.mxu0 %v517
    %614 = vmatprep.subr.mxu0 0.0
    %615 = vmatpush1.msra.mxu0 0.0
    %616 = vmatprep.subr.mxu0 0.0
    %617 = vmatpush1.msra.mxu0 0.0
    %618 = vmatprep.subr.mxu0 0.0
    %619 = vmatpush1.msra.mxu0 0.0
    %620 = vmatprep.subr.mxu0 0.0
    %621 = vmatpush1.msra.mxu0 0.0
    %622 = vmatprep.subr.mxu0 0.0
    %623 = vmatpush1.msra.mxu0 0.0
    %624 = vmatprep.subr.mxu0 0.0
    %625 = vmatpush1.msra.mxu0 0.0
    %626 = vmatprep.subr.mxu0 0.0
    %627 = vmatpush1.msra.mxu0 0.0
    %628 = vmatprep.subr.mxu0 0.0
    %629 = vmatpush1.msra.mxu0 0.0
    %630 = vmatprep.subr.mxu0 0.0
    %631 = vmatpush1.msra.mxu0 0.0
    %632 = vmatprep.subr.mxu0 0.0
    %633 = vmatpush1.msra.mxu0 0.0
    %634 = vmatprep.subr.mxu0 0.0
    %635 = vmatpush1.msra.mxu0 0.0
    %636 = vmatprep.subr.mxu0 0.0
    %637 = vmatpush1.msra.mxu0 0.0
    %638 = vmatprep.subr.mxu0 0.0
    %639 = vmatpush1.msra.mxu0 0.0
    %640 = vmatprep.subr.mxu0 0.0
    %641 = vmatpush1.msra.mxu0 0.0
    %642 = vmatprep.subr.mxu0 0.0
    %643 = vmatpush1.msra.mxu0 0.0
    %644 = vmatprep.subr.mxu0 0.0
    %645 = vmatpush1.msra.mxu0 0.0
    %646 = vmatprep.subr.mxu0 0.0
    %647 = vmatpush1.msra.mxu0 0.0
    %648 = vmatprep.subr.mxu0 0.0
    %649 = vmatpush1.msra.mxu0 0.0
    %650 = vmatprep.subr.mxu0 0.0
    %651 = vmatpush1.msra.mxu0 0.0
    %652 = vmatprep.subr.mxu0 0.0
    %653 = vmatpush1.msra.mxu0 0.0
    %654 = vmatprep.subr.mxu0 0.0
    %655 = vmatpush1.msra.mxu0 0.0
    %656 = vmatprep.subr.mxu0 0.0
    %657 = vmatpush1.msra.mxu0 0.0
    %658 = vmatprep.subr.mxu0 0.0
    %659 = vmatpush1.msra.mxu0 0.0
    %660 = vmatprep.subr.mxu0 0.0
    %661 = vmatpush1.msra.mxu0 0.0
    %662 = vmatprep.subr.mxu0 0.0
    %663 = vmatpush1.msra.mxu0 0.0
    %664 = vmatprep.subr.mxu0 0.0
    %665 = vmatpush1.msra.mxu0 0.0
    %666 = vmatprep.subr.mxu0 0.0
    %667 = vmatpush1.msra.mxu0 0.0
    %668 = vmatprep.subr.mxu0 0.0
    %669 = vmatpush1.msra.mxu0 0.0
    %670 = vmatprep.subr.mxu0 0.0
    %671 = vmatpush1.msra.mxu0 0.0
    %672 = vmatprep.subr.mxu0 0.0
    %673 = vmatpush1.msra.mxu0 0.0
    %674 = vmatprep.subr.mxu0 0.0
    %675 = vmatpush1.msra.mxu0 0.0
    %676 = vmatprep.mubr.f32.mxu0 0.0
    %677 = vmatmul.mubr.f32.gmra.mrb[0].mxu0 %v610
    %v678 = vpop.f32.mrb[0].mxu0
    %v679 = vadd.f32 0.0, %v678
    %v680 = vpop.f32.mrb[0].mxu0
    %681 = vdwg.mxu0
    %682 = vst.msk [vmem:[#allocation2] sm:$0xff] %vm519, %v679
    %683 = vrot.lane.b32.xlu0 %v505, 64
    %v684 = vpop.permute.xlu0 %683
    %685 = vrot.lane.b32.xlu0 %v511, 64
    %v686 = vpop.permute.xlu0 %685
    %v687 = vsel %vm519, %v684, 0
    %v689 = vsel %vm519, %v686, 0
    %691 = vmatprep.subr.mxu0 0.0
    %692 = vmatpush1.xpose.msra.mxu0 %v689
    %693 = vmatprep.subr.mxu0 0.0
    %694 = vmatpush1.xpose.msra.mxu0 0.0
    %695 = vmatprep.subr.mxu0 0.0
    %696 = vmatpush1.xpose.msra.mxu0 0.0
    %697 = vmatprep.subr.mxu0 0.0
    %698 = vmatpush1.xpose.msra.mxu0 0.0
    %699 = vmatprep.subr.mxu0 0.0
    %700 = vmatpush1.xpose.msra.mxu0 0.0
    %701 = vmatprep.subr.mxu0 0.0
    %702 = vmatpush1.xpose.msra.mxu0 0.0
    %703 = vmatprep.subr.mxu0 0.0
    %704 = vmatpush1.xpose.msra.mxu0 0.0
    %705 = vmatprep.subr.mxu0 0.0
    %706 = vmatpush1.xpose.msra.mxu0 0.0
    %707 = vmatprep.subr.mxu0 0.0
    %708 = vmatpush1.xpose.msra.mxu0 0.0
    %709 = vmatprep.subr.mxu0 0.0
    %710 = vmatpush1.xpose.msra.mxu0 0.0
    %711 = vmatprep.subr.mxu0 0.0
    %712 = vmatpush1.xpose.msra.mxu0 0.0
    %713 = vmatprep.subr.mxu0 0.0
    %714 = vmatpush1.xpose.msra.mxu0 0.0
    %715 = vmatprep.subr.mxu0 0.0
    %716 = vmatpush1.xpose.msra.mxu0 0.0
    %717 = vmatprep.subr.mxu0 0.0
    %718 = vmatpush1.xpose.msra.mxu0 0.0
    %719 = vmatprep.subr.mxu0 0.0
    %720 = vmatpush1.xpose.msra.mxu0 0.0
    %721 = vmatprep.subr.mxu0 0.0
    %722 = vmatpush1.xpose.msra.mxu0 0.0
    %723 = vmatprep.subr.mxu0 0.0
    %724 = vmatpush1.xpose.msra.mxu0 0.0
    %725 = vmatprep.subr.mxu0 0.0
    %726 = vmatpush1.xpose.msra.mxu0 0.0
    %727 = vmatprep.subr.mxu0 0.0
    %728 = vmatpush1.xpose.msra.mxu0 0.0
    %729 = vmatprep.subr.mxu0 0.0
    %730 = vmatpush1.xpose.msra.mxu0 0.0
    %731 = vmatprep.subr.mxu0 0.0
    %732 = vmatpush1.xpose.msra.mxu0 0.0
    %733 = vmatprep.subr.mxu0 0.0
    %734 = vmatpush1.xpose.msra.mxu0 0.0
    %735 = vmatprep.subr.mxu0 0.0
    %736 = vmatpush1.xpose.msra.mxu0 0.0
    %737 = vmatprep.subr.mxu0 0.0
    %738 = vmatpush1.xpose.msra.mxu0 0.0
    %739 = vmatprep.subr.mxu0 0.0
    %740 = vmatpush1.xpose.msra.mxu0 0.0
    %741 = vmatprep.subr.mxu0 0.0
    %742 = vmatpush1.xpose.msra.mxu0 0.0
    %743 = vmatprep.subr.mxu0 0.0
    %744 = vmatpush1.xpose.msra.mxu0 0.0
    %745 = vmatprep.subr.mxu0 0.0
    %746 = vmatpush1.xpose.msra.mxu0 0.0
    %747 = vmatprep.subr.mxu0 0.0
    %748 = vmatpush1.xpose.msra.mxu0 0.0
    %749 = vmatprep.subr.mxu0 0.0
    %750 = vmatpush1.xpose.msra.mxu0 0.0
    %751 = vmatprep.subr.mxu0 0.0
    %752 = vmatpush1.xpose.msra.mxu0 0.0
    %753 = vmatprep.subr.mxu0 0.0
    %754 = vmatpush1.xpose.msra.mxu0 0.0
    %755 = vmatprep.mubr.f32.mxu0 0.0
    %756 = vmatmul.mubr.f32.gmra.mrb[0].mxu0 %v687
    %v757 = vpop.f32.mrb[0].mxu0
    %v758 = vadd.f32 0.0, %v757
    %v759 = vpop.f32.mrb[0].mxu0
    %760 = vdwg.mxu0
    %v761 = vmul.f32 %v758, 0.125
    %v762 = vsel %vm597, %v761, -inf
    %763 = vmax.xlane.f32.xlu0 %v762
    %v764 = vpop.xlane.xlu0 %763
    %v765 = vsub.f32 %v761, %v764
    %v766 = vmul.f32 %v765, 1.442695
    %v767 = vpow.pop %v766
    %v768 = vsel %vm597, %v767, 0.0
    %769 = vadd.xlane.f32.xlu0 %v768
    %v770 = vpop.xlane.xlu0 %769
    %v771 = vrcp.pop %v770
    %v772 = vmul.f32 %v767, %v771
    %774 = vrot.lane.b32.xlu0 %v517, 64
    %v775 = vpop.permute.xlu0 %774
    %v778 = vsel %vm597, %v772, 0
    %780 = vmatprep.subr.mxu0 0.0
    %781 = vmatpush1.msra.mxu0 %v775
    %782 = vmatprep.subr.mxu0 0.0
    %783 = vmatpush1.msra.mxu0 0.0
    %784 = vmatprep.subr.mxu0 0.0
    %785 = vmatpush1.msra.mxu0 0.0
    %786 = vmatprep.subr.mxu0 0.0
    %787 = vmatpush1.msra.mxu0 0.0
    %788 = vmatprep.subr.mxu0 0.0
    %789 = vmatpush1.msra.mxu0 0.0
    %790 = vmatprep.subr.mxu0 0.0
    %791 = vmatpush1.msra.mxu0 0.0
    %792 = vmatprep.subr.mxu0 0.0
    %793 = vmatpush1.msra.mxu0 0.0
    %794 = vmatprep.subr.mxu0 0.0
    %795 = vmatpush1.msra.mxu0 0.0
    %796 = vmatprep.subr.mxu0 0.0
    %797 = vmatpush1.msra.mxu0 0.0
    %798 = vmatprep.subr.mxu0 0.0
    %799 = vmatpush1.msra.mxu0 0.0
    %800 = vmatprep.subr.mxu0 0.0
    %801 = vmatpush1.msra.mxu0 0.0
    %802 = vmatprep.subr.mxu0 0.0
    %803 = vmatpush1.msra.mxu0 0.0
    %804 = vmatprep.subr.mxu0 0.0
    %805 = vmatpush1.msra.mxu0 0.0
    %806 = vmatprep.subr.mxu0 0.0
    %807 = vmatpush1.msra.mxu0 0.0
    %808 = vmatprep.subr.mxu0 0.0
    %809 = vmatpush1.msra.mxu0 0.0
    %810 = vmatprep.subr.mxu0 0.0
    %811 = vmatpush1.msra.mxu0 0.0
    %812 = vmatprep.subr.mxu0 0.0
    %813 = vmatpush1.msra.mxu0 0.0
    %814 = vmatprep.subr.mxu0 0.0
    %815 = vmatpush1.msra.mxu0 0.0
    %816 = vmatprep.subr.mxu0 0.0
    %817 = vmatpush1.msra.mxu0 0.0
    %818 = vmatprep.subr.mxu0 0.0
    %819 = vmatpush1.msra.mxu0 0.0
    %820 = vmatprep.subr.mxu0 0.0
    %821 = vmatpush1.msra.mxu0 0.0
    %822 = vmatprep.subr.mxu0 0.0
    %823 = vmatpush1.msra.mxu0 0.0
    %824 = vmatprep.subr.mxu0 0.0
    %825 = vmatpush1.msra.mxu0 0.0
    %826 = vmatprep.subr.mxu0 0.0
    %827 = vmatpush1.msra.mxu0 0.0
    %828 = vmatprep.subr.mxu0 0.0
    %829 = vmatpush1.msra.mxu0 0.0
    %830 = vmatprep.subr.mxu0 0.0
    %831 = vmatpush1.msra.mxu0 0.0
    %832 = vmatprep.subr.mxu0 0.0
    %833 = vmatpush1.msra.mxu0 0.0
    %834 = vmatprep.subr.mxu0 0.0
    %835 = vmatpush1.msra.mxu0 0.0
    %836 = vmatprep.subr.mxu0 0.0
    %837 = vmatpush1.msra.mxu0 0.0
    %838 = vmatprep.subr.mxu0 0.0
    %839 = vmatpush1.msra.mxu0 0.0
    %840 = vmatprep.subr.mxu0 0.0
    %841 = vmatpush1.msra.mxu0 0.0
    %842 = vmatprep.subr.mxu0 0.0
    %843 = vmatpush1.msra.mxu0 0.0
    %844 = vmatprep.mubr.f32.mxu0 0.0
    %845 = vmatmul.mubr.f32.gmra.mrb[0].mxu0 %v778
    %v846 = vpop.f32.mrb[0].mxu0
    %v847 = vadd.f32 0.0, %v846
    %v848 = vpop.f32.mrb[0].mxu0
    %849 = vdwg.mxu0
    %851 = vrot.lane.b32.xlu0 %v847, 64
    %v852 = vpop.permute.xlu0 %851
    %vm854 = vcmask 1048064
    %855 = vst.msk [vmem:[#allocation2] sm:$0xff] %vm854, %v852
    %v857 = vsel %vm519, %v506, 0
    %v860 = vsel %vm519, %v512, 0
    %862 = vmatprep.subr.mxu0 0.0
    %863 = vmatpush1.xpose.msra.mxu0 %v860
    %864 = vmatprep.subr.mxu0 0.0
    %865 = vmatpush1.xpose.msra.mxu0 0.0
    %866 = vmatprep.subr.mxu0 0.0
    %867 = vmatpush1.xpose.msra.mxu0 0.0
    %868 = vmatprep.subr.mxu0 0.0
    %869 = vmatpush1.xpose.msra.mxu0 0.0
    %870 = vmatprep.subr.mxu0 0.0
    %871 = vmatpush1.xpose.msra.mxu0 0.0
    %872 = vmatprep.subr.mxu0 0.0
    %873 = vmatpush1.xpose.msra.mxu0 0.0
    %874 = vmatprep.subr.mxu0 0.0
    %875 = vmatpush1.xpose.msra.mxu0 0.0
    %876 = vmatprep.subr.mxu0 0.0
    %877 = vmatpush1.xpose.msra.mxu0 0.0
    %878 = vmatprep.subr.mxu0 0.0
    %879 = vmatpush1.xpose.msra.mxu0 0.0
    %880 = vmatprep.subr.mxu0 0.0
    %881 = vmatpush1.xpose.msra.mxu0 0.0
    %882 = vmatprep.subr.mxu0 0.0
    %883 = vmatpush1.xpose.msra.mxu0 0.0
    %884 = vmatprep.subr.mxu0 0.0
    %885 = vmatpush1.xpose.msra.mxu0 0.0
    %886 = vmatprep.subr.mxu0 0.0
    %887 = vmatpush1.xpose.msra.mxu0 0.0
    %888 = vmatprep.subr.mxu0 0.0
    %889 = vmatpush1.xpose.msra.mxu0 0.0
    %890 = vmatprep.subr.mxu0 0.0
    %891 = vmatpush1.xpose.msra.mxu0 0.0
    %892 = vmatprep.subr.mxu0 0.0
    %893 = vmatpush1.xpose.msra.mxu0 0.0
    %894 = vmatprep.subr.mxu0 0.0
    %895 = vmatpush1.xpose.msra.mxu0 0.0
    %896 = vmatprep.subr.mxu0 0.0
    %897 = vmatpush1.xpose.msra.mxu0 0.0
    %898 = vmatprep.subr.mxu0 0.0
    %899 = vmatpush1.xpose.msra.mxu0 0.0
    %900 = vmatprep.subr.mxu0 0.0
    %901 = vmatpush1.xpose.msra.mxu0 0.0
    %902 = vmatprep.subr.mxu0 0.0
    %903 = vmatpush1.xpose.msra.mxu0 0.0
    %904 = vmatprep.subr.mxu0 0.0
    %905 = vmatpush1.xpose.msra.mxu0 0.0
    %906 = vmatprep.subr.mxu0 0.0
    %907 = vmatpush1.xpose.msra.mxu0 0.0
    %908 = vmatprep.subr.mxu0 0.0
    %909 = vmatpush1.xpose.msra.mxu0 0.0
    %910 = vmatprep.subr.mxu0 0.0
    %911 = vmatpush1.xpose.msra.mxu0 0.0
    %912 = vmatprep.subr.mxu0 0.0
    %913 = vmatpush1.xpose.msra.mxu0 0.0
    %914 = vmatprep.subr.mxu0 0.0
    %915 = vmatpush1.xpose.msra.mxu0 0.0
    %916 = vmatprep.subr.mxu0 0.0
    %917 = vmatpush1.xpose.msra.mxu0 0.0
    %918 = vmatprep.subr.mxu0 0.0
    %919 = vmatpush1.xpose.msra.mxu0 0.0
    %920 = vmatprep.subr.mxu0 0.0
    %921 = vmatpush1.xpose.msra.mxu0 0.0
    %922 = vmatprep.subr.mxu0 0.0
    %923 = vmatpush1.xpose.msra.mxu0 0.0
    %924 = vmatprep.subr.mxu0 0.0
    %925 = vmatpush1.xpose.msra.mxu0 0.0
    %926 = vmatprep.mubr.f32.mxu0 0.0
    %927 = vmatmul.mubr.f32.gmra.mrb[0].mxu0 %v857
    %v928 = vpop.f32.mrb[0].mxu0
    %v929 = vadd.f32 0.0, %v928
    %v930 = vpop.f32.mrb[0].mxu0
    %931 = vdwg.mxu0
    %v932 = vmul.f32 %v929, 0.125
    %v933 = vsel %vm597, %v932, -inf
    %934 = vmax.xlane.f32.xlu0 %v933
    %v935 = vpop.xlane.xlu0 %934
    %v936 = vsub.f32 %v932, %v935
    %v937 = vmul.f32 %v936, 1.442695
    %v938 = vpow.pop %v937
    %v939 = vsel %vm597, %v938, 0.0
    %940 = vadd.xlane.f32.xlu0 %v939
    %v941 = vpop.xlane.xlu0 %940
    %v942 = vrcp.pop %v941
    %v943 = vmul.f32 %v938, %v942
    %v945 = vsel %vm597, %v943, 0
    %947 = vmatprep.subr.mxu0 0.0
    %948 = vmatpush1.msra.mxu0 %v518
    %949 = vmatprep.subr.mxu0 0.0
    %950 = vmatpush1.msra.mxu0 0.0
    %951 = vmatprep.subr.mxu0 0.0
    %952 = vmatpush1.msra.mxu0 0.0
    %953 = vmatprep.subr.mxu0 0.0
    %954 = vmatpush1.msra.mxu0 0.0
    %955 = vmatprep.subr.mxu0 0.0
    %956 = vmatpush1.msra.mxu0 0.0
    %957 = vmatprep.subr.mxu0 0.0
    %958 = vmatpush1.msra.mxu0 0.0
    %959 = vmatprep.subr.mxu0 0.0
    %960 = vmatpush1.msra.mxu0 0.0
    %961 = vmatprep.subr.mxu0 0.0
    %962 = vmatpush1.msra.mxu0 0.0
    %963 = vmatprep.subr.mxu0 0.0
    %964 = vmatpush1.msra.mxu0 0.0
    %965 = vmatprep.subr.mxu0 0.0
    %966 = vmatpush1.msra.mxu0 0.0
    %967 = vmatprep.subr.mxu0 0.0
    %968 = vmatpush1.msra.mxu0 0.0
    %969 = vmatprep.subr.mxu0 0.0
    %970 = vmatpush1.msra.mxu0 0.0
    %971 = vmatprep.subr.mxu0 0.0
    %972 = vmatpush1.msra.mxu0 0.0
    %973 = vmatprep.subr.mxu0 0.0
    %974 = vmatpush1.msra.mxu0 0.0
    %975 = vmatprep.subr.mxu0 0.0
    %976 = vmatpush1.msra.mxu0 0.0
    %977 = vmatprep.subr.mxu0 0.0
    %978 = vmatpush1.msra.mxu0 0.0
    %979 = vmatprep.subr.mxu0 0.0
    %980 = vmatpush1.msra.mxu0 0.0
    %981 = vmatprep.subr.mxu0 0.0
    %982 = vmatpush1.msra.mxu0 0.0
    %983 = vmatprep.subr.mxu0 0.0
    %984 = vmatpush1.msra.mxu0 0.0
    %985 = vmatprep.subr.mxu0 0.0
    %986 = vmatpush1.msra.mxu0 0.0
    %987 = vmatprep.subr.mxu0 0.0
    %988 = vmatpush1.msra.mxu0 0.0
    %989 = vmatprep.subr.mxu0 0.0
    %990 = vmatpush1.msra.mxu0 0.0
    %991 = vmatprep.subr.mxu0 0.0
    %992 = vmatpush1.msra.mxu0 0.0
    %993 = vmatprep.subr.mxu0 0.0
    %994 = vmatpush1.msra.mxu0 0.0
    %995 = vmatprep.subr.mxu0 0.0
    %996 = vmatpush1.msra.mxu0 0.0
    %997 = vmatprep.subr.mxu0 0.0
    %998 = vmatpush1.msra.mxu0 0.0
    %999 = vmatprep.subr.mxu0 0.0
    %1000 = vmatpush1.msra.mxu0 0.0
    %1001 = vmatprep.subr.mxu0 0.0
    %1002 = vmatpush1.msra.mxu0 0.0
    %1003 = vmatprep.subr.mxu0 0.0
    %1004 = vmatpush1.msra.mxu0 0.0
    %1005 = vmatprep.subr.mxu0 0.0
    %1006 = vmatpush1.msra.mxu0 0.0
    %1007 = vmatprep.subr.mxu0 0.0
    %1008 = vmatpush1.msra.mxu0 0.0
    %1009 = vmatprep.subr.mxu0 0.0
    %1010 = vmatpush1.msra.mxu0 0.0
    %1011 = vmatprep.mubr.f32.mxu0 0.0
    %1012 = vmatmul.mubr.f32.gmra.mrb[0].mxu0 %v945
    %v1013 = vpop.f32.mrb[0].mxu0
    %v1014 = vadd.f32 0.0, %v1013
    %v1015 = vpop.f32.mrb[0].mxu0
    %1016 = vdwg.mxu0
    %1017 = vst.msk [vmem:[#allocation2 + $0x8] sm:$0xff] %vm519, %v1014
    %1018 = vrot.lane.b32.xlu0 %v506, 64
    %v1019 = vpop.permute.xlu0 %1018
    %1020 = vrot.lane.b32.xlu0 %v512, 64
    %v1021 = vpop.permute.xlu0 %1020
    %v1022 = vsel %vm519, %v1019, 0
    %v1024 = vsel %vm519, %v1021, 0
    %1026 = vmatprep.subr.mxu0 0.0
    %1027 = vmatpush1.xpose.msra.mxu0 %v1024
    %1028 = vmatprep.subr.mxu0 0.0
    %1029 = vmatpush1.xpose.msra.mxu0 0.0
    %1030 = vmatprep.subr.mxu0 0.0
    %1031 = vmatpush1.xpose.msra.mxu0 0.0
    %1032 = vmatprep.subr.mxu0 0.0
    %1033 = vmatpush1.xpose.msra.mxu0 0.0
    %1034 = vmatprep.subr.mxu0 0.0
    %1035 = vmatpush1.xpose.msra.mxu0 0.0
    %1036 = vmatprep.subr.mxu0 0.0
    %1037 = vmatpush1.xpose.msra.mxu0 0.0
    %1038 = vmatprep.subr.mxu0 0.0
    %1039 = vmatpush1.xpose.msra.mxu0 0.0
    %1040 = vmatprep.subr.mxu0 0.0
    %1041 = vmatpush1.xpose.msra.mxu0 0.0
    %1042 = vmatprep.subr.mxu0 0.0
    %1043 = vmatpush1.xpose.msra.mxu0 0.0
    %1044 = vmatprep.subr.mxu0 0.0
    %1045 = vmatpush1.xpose.msra.mxu0 0.0
    %1046 = vmatprep.subr.mxu0 0.0
    %1047 = vmatpush1.xpose.msra.mxu0 0.0
    %1048 = vmatprep.subr.mxu0 0.0
    %1049 = vmatpush1.xpose.msra.mxu0 0.0
    %1050 = vmatprep.subr.mxu0 0.0
    %1051 = vmatpush1.xpose.msra.mxu0 0.0
    %1052 = vmatprep.subr.mxu0 0.0
    %1053 = vmatpush1.xpose.msra.mxu0 0.0
    %1054 = vmatprep.subr.mxu0 0.0
    %1055 = vmatpush1.xpose.msra.mxu0 0.0
    %1056 = vmatprep.subr.mxu0 0.0
    %1057 = vmatpush1.xpose.msra.mxu0 0.0
    %1058 = vmatprep.subr.mxu0 0.0
    %1059 = vmatpush1.xpose.msra.mxu0 0.0
    %1060 = vmatprep.subr.mxu0 0.0
    %1061 = vmatpush1.xpose.msra.mxu0 0.0
    %1062 = vmatprep.subr.mxu0 0.0
    %1063 = vmatpush1.xpose.msra.mxu0 0.0
    %1064 = vmatprep.subr.mxu0 0.0
    %1065 = vmatpush1.xpose.msra.mxu0 0.0
    %1066 = vmatprep.subr.mxu0 0.0
    %1067 = vmatpush1.xpose.msra.mxu0 0.0
    %1068 = vmatprep.subr.mxu0 0.0
    %1069 = vmatpush1.xpose.msra.mxu0 0.0
    %1070 = vmatprep.subr.mxu0 0.0
    %1071 = vmatpush1.xpose.msra.mxu0 0.0
    %1072 = vmatprep.subr.mxu0 0.0
    %1073 = vmatpush1.xpose.msra.mxu0 0.0
    %1074 = vmatprep.subr.mxu0 0.0
    %1075 = vmatpush1.xpose.msra.mxu0 0.0
    %1076 = vmatprep.subr.mxu0 0.0
    %1077 = vmatpush1.xpose.msra.mxu0 0.0
    %1078 = vmatprep.subr.mxu0 0.0
    %1079 = vmatpush1.xpose.msra.mxu0 0.0
    %1080 = vmatprep.subr.mxu0 0.0
    %1081 = vmatpush1.xpose.msra.mxu0 0.0
    %1082 = vmatprep.subr.mxu0 0.0
    %1083 = vmatpush1.xpose.msra.mxu0 0.0
    %1084 = vmatprep.subr.mxu0 0.0
    %1085 = vmatpush1.xpose.msra.mxu0 0.0
    %1086 = vmatprep.subr.mxu0 0.0
    %1087 = vmatpush1.xpose.msra.mxu0 0.0
    %1088 = vmatprep.subr.mxu0 0.0
    %1089 = vmatpush1.xpose.msra.mxu0 0.0
    %1090 = vmatprep.mubr.f32.mxu0 0.0
    %1091 = vmatmul.mubr.f32.gmra.mrb[0].mxu0 %v1022
    %v1092 = vpop.f32.mrb[0].mxu0
    %v1093 = vadd.f32 0.0, %v1092
    %v1094 = vpop.f32.mrb[0].mxu0
    %1095 = vdwg.mxu0
    %v1096 = vmul.f32 %v1093, 0.125
    %v1097 = vsel %vm597, %v1096, -inf
    %1098 = vmax.xlane.f32.xlu0 %v1097
    %v1099 = vpop.xlane.xlu0 %1098
    %v1100 = vsub.f32 %v1096, %v1099
    %v1101 = vmul.f32 %v1100, 1.442695
    %v1102 = vpow.pop %v1101
    %v1103 = vsel %vm597, %v1102, 0.0
    %1104 = vadd.xlane.f32.xlu0 %v1103
    %v1105 = vpop.xlane.xlu0 %1104
    %v1106 = vrcp.pop %v1105
    %v1107 = vmul.f32 %v1102, %v1106
    %1109 = vrot.lane.b32.xlu0 %v518, 64
    %v1110 = vpop.permute.xlu0 %1109
    %v1113 = vsel %vm597, %v1107, 0
    %1115 = vmatprep.subr.mxu0 0.0
    %1116 = vmatpush1.msra.mxu0 %v1110
    %1117 = vmatprep.subr.mxu0 0.0
    %1118 = vmatpush1.msra.mxu0 0.0
    %1119 = vmatprep.subr.mxu0 0.0
    %1120 = vmatpush1.msra.mxu0 0.0
    %1121 = vmatprep.subr.mxu0 0.0
    %1122 = vmatpush1.msra.mxu0 0.0
    %1123 = vmatprep.subr.mxu0 0.0
    %1124 = vmatpush1.msra.mxu0 0.0
    %1125 = vmatprep.subr.mxu0 0.0
    %1126 = vmatpush1.msra.mxu0 0.0
    %1127 = vmatprep.subr.mxu0 0.0
    %1128 = vmatpush1.msra.mxu0 0.0
    %1129 = vmatprep.subr.mxu0 0.0
    %1130 = vmatpush1.msra.mxu0 0.0
    %1131 = vmatprep.subr.mxu0 0.0
    %1132 = vmatpush1.msra.mxu0 0.0
    %1133 = vmatprep.subr.mxu0 0.0
    %1134 = vmatpush1.msra.mxu0 0.0
    %1135 = vmatprep.subr.mxu0 0.0
    %1136 = vmatpush1.msra.mxu0 0.0
    %1137 = vmatprep.subr.mxu0 0.0
    %1138 = vmatpush1.msra.mxu0 0.0
    %1139 = vmatprep.subr.mxu0 0.0
    %1140 = vmatpush1.msra.mxu0 0.0
    %1141 = vmatprep.subr.mxu0 0.0
    %1142 = vmatpush1.msra.mxu0 0.0
    %1143 = vmatprep.subr.mxu0 0.0
    %1144 = vmatpush1.msra.mxu0 0.0
    %1145 = vmatprep.subr.mxu0 0.0
    %1146 = vmatpush1.msra.mxu0 0.0
    %1147 = vmatprep.subr.mxu0 0.0
    %1148 = vmatpush1.msra.mxu0 0.0
    %1149 = vmatprep.subr.mxu0 0.0
    %1150 = vmatpush1.msra.mxu0 0.0
    %1151 = vmatprep.subr.mxu0 0.0
    %1152 = vmatpush1.msra.mxu0 0.0
    %1153 = vmatprep.subr.mxu0 0.0
    %1154 = vmatpush1.msra.mxu0 0.0
    %1155 = vmatprep.subr.mxu0 0.0
    %1156 = vmatpush1.msra.mxu0 0.0
    %1157 = vmatprep.subr.mxu0 0.0
    %1158 = vmatpush1.msra.mxu0 0.0
    %1159 = vmatprep.subr.mxu0 0.0
    %1160 = vmatpush1.msra.mxu0 0.0
    %1161 = vmatprep.subr.mxu0 0.0
    %1162 = vmatpush1.msra.mxu0 0.0
    %1163 = vmatprep.subr.mxu0 0.0
    %1164 = vmatpush1.msra.mxu0 0.0
    %1165 = vmatprep.subr.mxu0 0.0
    %1166 = vmatpush1.msra.mxu0 0.0
    %1167 = vmatprep.subr.mxu0 0.0
    %1168 = vmatpush1.msra.mxu0 0.0
    %1169 = vmatprep.subr.mxu0 0.0
    %1170 = vmatpush1.msra.mxu0 0.0
    %1171 = vmatprep.subr.mxu0 0.0
    %1172 = vmatpush1.msra.mxu0 0.0
    %1173 = vmatprep.subr.mxu0 0.0
    %1174 = vmatpush1.msra.mxu0 0.0
    %1175 = vmatprep.subr.mxu0 0.0
    %1176 = vmatpush1.msra.mxu0 0.0
    %1177 = vmatprep.subr.mxu0 0.0
    %1178 = vmatpush1.msra.mxu0 0.0
    %1179 = vmatprep.mubr.f32.mxu0 0.0
    %1180 = vmatmul.mubr.f32.gmra.mrb[0].mxu0 %v1113
    %v1181 = vpop.f32.mrb[0].mxu0
    %v1182 = vadd.f32 0.0, %v1181
    %v1183 = vpop.f32.mrb[0].mxu0
    %1184 = vdwg.mxu0
    %1186 = vrot.lane.b32.xlu0 %v1182, 64
    %v1187 = vpop.permute.xlu0 %1186
    %1189 = vst.msk [vmem:[#allocation2 + $0x8] sm:$0xff] %vm854, %v1187
    %v1190 = vld [vmem:[#allocation2] sm:$0xff]
    %v1191 = vld [vmem:[#allocation2 + $0x8] sm:$0xff]
    %v1192 = vld [vmem:[#allocation9] sm:$0xf]
    %v1193 = vld [vmem:[#allocation9 + $0x4] sm:$0xf]
    %v1194 = vld [vmem:[#allocation9 + $0x8] sm:$0xf]
    %v1195 = vld [vmem:[#allocation9 + $0xc] sm:$0xf]
    %v1196 = vld [vmem:[#allocation9 + $0x10] sm:$0xf]
    %v1197 = vld [vmem:[#allocation9 + $0x14] sm:$0xf]
    %v1198 = vld [vmem:[#allocation9 + $0x18] sm:$0xf]
    %v1199 = vld [vmem:[#allocation9 + $0x1c] sm:$0xf]
    %v1200 = vld [vmem:[#allocation9 + $0x20] sm:$0xf]
    %v1201 = vld [vmem:[#allocation9 + $0x24] sm:$0xf]
    %v1202 = vld [vmem:[#allocation9 + $0x28] sm:$0xf]
    %v1203 = vld [vmem:[#allocation9 + $0x2c] sm:$0xf]
    %v1204 = vld [vmem:[#allocation9 + $0x30] sm:$0xf]
    %v1205 = vld [vmem:[#allocation9 + $0x34] sm:$0xf]
    %v1206 = vld [vmem:[#allocation9 + $0x38] sm:$0xf]
    %v1207 = vld [vmem:[#allocation9 + $0x3c] sm:$0xf]
    %v1208 = vpack.c.bf16 %v1191, %v1190
    %v1209 = vlaneseq
    %v1210 = vshrl.u32 %v1209, 7
    %v1211 = vsub.s32 4, %v1210
    %v1212 = vrot.slane %v141, %v1211
    %v1229 = vunpack.c.l.b16 %v1192
    %v1230 = vunpack.c.l.b16 %v1193
    %v1231 = vunpack.c.l.b16 %v1194
    %v1232 = vunpack.c.l.b16 %v1195
    %v1233 = vunpack.c.l.b16 %v1196
    %v1234 = vunpack.c.l.b16 %v1197
    %v1235 = vunpack.c.l.b16 %v1198
    %v1236 = vunpack.c.l.b16 %v1199
    %v1237 = vunpack.c.l.b16 %v1200
    %v1238 = vunpack.c.l.b16 %v1201
    %v1239 = vunpack.c.l.b16 %v1202
    %v1240 = vunpack.c.l.b16 %v1203
    %v1241 = vunpack.c.l.b16 %v1204
    %v1242 = vunpack.c.l.b16 %v1205
    %v1243 = vunpack.c.l.b16 %v1206
    %v1244 = vunpack.c.l.b16 %v1207
    %v1245 = vpack.c.b16 %v1230, %v1229
    %v1246 = vpack.c.b16 %v1232, %v1231
    %v1247 = vpack.c.b16 %v1234, %v1233
    %v1248 = vpack.c.b16 %v1236, %v1235
    %v1249 = vpack.c.b16 %v1238, %v1237
    %v1250 = vpack.c.b16 %v1240, %v1239
    %v1251 = vpack.c.b16 %v1242, %v1241
    %v1252 = vpack.c.b16 %v1244, %v1243
    %1261 = vmatprep.subr.bf16.mxu0 0
    %1262 = vmatpush1.bf16.msra.mxu0 %v1245
    %1263 = vmatprep.subr.bf16.mxu0 0
    %1264 = vmatpush1.bf16.msra.mxu0 %v1246
    %1265 = vmatprep.subr.bf16.mxu0 0
    %1266 = vmatpush1.bf16.msra.mxu0 %v1247
    %1267 = vmatprep.subr.bf16.mxu0 0
    %1268 = vmatpush1.bf16.msra.mxu0 %v1248
    %1269 = vmatprep.subr.bf16.mxu0 0
    %1270 = vmatpush1.bf16.msra.mxu0 %v1249
    %1271 = vmatprep.subr.bf16.mxu0 0
    %1272 = vmatpush1.bf16.msra.mxu0 %v1250
    %1273 = vmatprep.subr.bf16.mxu0 0
    %1274 = vmatpush1.bf16.msra.mxu0 %v1251
    %1275 = vmatprep.subr.bf16.mxu0 0
    %1276 = vmatpush1.bf16.msra.mxu0 %v1252
    %1277 = vmatprep.subr.bf16.mxu0 0
    %1278 = vmatpush1.bf16.msra.mxu0 0
    %1279 = vmatprep.subr.bf16.mxu0 0
    %1280 = vmatpush1.bf16.msra.mxu0 0
    %1281 = vmatprep.subr.bf16.mxu0 0
    %1282 = vmatpush1.bf16.msra.mxu0 0
    %1283 = vmatprep.subr.bf16.mxu0 0
    %1284 = vmatpush1.bf16.msra.mxu0 0
    %1285 = vmatprep.subr.bf16.mxu0 0
    %1286 = vmatpush1.bf16.msra.mxu0 0
    %1287 = vmatprep.subr.bf16.mxu0 0
    %1288 = vmatpush1.bf16.msra.mxu0 0
    %1289 = vmatprep.subr.bf16.mxu0 0
    %1290 = vmatpush1.bf16.msra.mxu0 0
    %1291 = vmatprep.subr.bf16.mxu0 0
    %1292 = vmatpush1.bf16.msra.mxu0 0
    %1293 = vmatprep.mubr.bf16.mxu0 0
    %1294 = vmatmul.mubr.bf16.gmra.mrb[0].mxu0 %v1208
    %v1295 = vpop.f32.mrb[0].mxu0
    %v1296 = vadd.f32 %v1212, %v1295
    %v1297 = vpop.f32.mrb[0].mxu0
    %v1298 = vpop.f32.mrb[0].mxu0
    %v1299 = vadd.f32 %v1212, %v1298
    %v1300 = vpop.f32.mrb[0].mxu0
    %1301 = vdwg.mxu0
    %v1302 = vadd.f32 %v250, %v1296
    %v1303 = vadd.f32 %v253, %v1299
    %1304 = vadd.xlane.f32.xlu0 %v1302
    %v1305 = vpop.xlane.xlu0 %1304
    %1306 = vadd.xlane.f32.xlu0 %v1303
    %v1307 = vpop.xlane.xlu0 %1306
    %v1308 = vrcp.pop 128.0
    %v1309 = vmul.f32 %v1305, %v1308
    %v1310 = vmul.f32 %v1307, %v1308
    %v1311 = vsub.f32 %v1302, %v1309
    %v1312 = vsub.f32 %v1303, %v1310
    %v1313 = vmul.f32 %v1311, %v1311
    %v1314 = vmul.f32 %v1312, %v1312
    %1315 = vadd.xlane.f32.xlu0 %v1313
    %v1316 = vpop.xlane.xlu0 %1315
    %1317 = vadd.xlane.f32.xlu0 %v1314
    %v1318 = vpop.xlane.xlu0 %1317
    %v1319 = vmul.f32 %v1316, %v1308
    %v1320 = vmul.f32 %v1318, %v1308
    %v1321 = vadd.f32 %v1319, 1e-05
    %v1322 = vadd.f32 %v1320, 1e-05
    %v1323 = vrsqrt.pop %v1321
    %v1324 = vrsqrt.pop %v1322
    %v1325 = vmul.f32 %v1311, %v1323
    %v1326 = vmul.f32 %v1312, %v1324
    %v1327 = vlaneseq
    %v1328 = vshrl.u32 %v1327, 7
    %v1329 = vsub.s32 5, %v1328
    %v1330 = vrot.slane %v141, %v1329
    %v1331 = vmul.f32 %v1325, %v1330
    %v1332 = vmul.f32 %v1326, %v1330
    %v1333 = vlaneseq
    %v1334 = vshrl.u32 %v1333, 7
    %v1335 = vsub.s32 6, %v1334
    %v1336 = vrot.slane %v141, %v1335
    %v1337 = vadd.f32 %v1331, %v1336
    %v1338 = vadd.f32 %v1332, %v1336
    %v1339 = vld [vmem:[#allocation11] sm:$0xff]
    %v1340 = vld [vmem:[#allocation11 + $0x8] sm:$0xff]
    %v1341 = vld [vmem:[#allocation11 + $0x10] sm:$0xff]
    %v1342 = vld [vmem:[#allocation11 + $0x18] sm:$0xff]
    %v1343 = vld [vmem:[#allocation11 + $0x20] sm:$0xff]
    %v1344 = vld [vmem:[#allocation11 + $0x28] sm:$0xff]
    %v1345 = vld [vmem:[#allocation11 + $0x30] sm:$0xff]
    %v1346 = vld [vmem:[#allocation11 + $0x38] sm:$0xff]
    %v1347 = vld [vmem:[#allocation11 + $0x40] sm:$0xff]
    %v1348 = vld [vmem:[#allocation11 + $0x48] sm:$0xff]
    %v1349 = vld [vmem:[#allocation11 + $0x50] sm:$0xff]
    %v1350 = vld [vmem:[#allocation11 + $0x58] sm:$0xff]
    %v1351 = vld [vmem:[#allocation11 + $0x60] sm:$0xff]
    %v1352 = vld [vmem:[#allocation11 + $0x68] sm:$0xff]
    %v1353 = vld [vmem:[#allocation11 + $0x70] sm:$0xff]
    %v1354 = vld [vmem:[#allocation11 + $0x78] sm:$0xff]
    %v1355 = vld [vmem:[#allocation11 + $0x80] sm:$0xff]
    %v1356 = vld [vmem:[#allocation11 + $0x88] sm:$0xff]
    %v1357 = vld [vmem:[#allocation11 + $0x90] sm:$0xff]
    %v1358 = vld [vmem:[#allocation11 + $0x98] sm:$0xff]
    %v1359 = vld [vmem:[#allocation11 + $0xa0] sm:$0xff]
    %v1360 = vld [vmem:[#allocation11 + $0xa8] sm:$0xff]
    %v1361 = vld [vmem:[#allocation11 + $0xb0] sm:$0xff]
    %v1362 = vld [vmem:[#allocation11 + $0xb8] sm:$0xff]
    %v1363 = vld [vmem:[#allocation11 + $0xc0] sm:$0xff]
    %v1364 = vld [vmem:[#allocation11 + $0xc8] sm:$0xff]
    %v1365 = vld [vmem:[#allocation11 + $0xd0] sm:$0xff]
    %v1366 = vld [vmem:[#allocation11 + $0xd8] sm:$0xff]
    %v1367 = vld [vmem:[#allocation11 + $0xe0] sm:$0xff]
    %v1368 = vld [vmem:[#allocation11 + $0xe8] sm:$0xff]
    %v1369 = vld [vmem:[#allocation11 + $0xf0] sm:$0xff]
    %v1370 = vld [vmem:[#allocation11 + $0xf8] sm:$0xff]
    %v1371 = vld [vmem:[#allocation11 + $0x100] sm:$0xff]
    %v1372 = vld [vmem:[#allocation11 + $0x108] sm:$0xff]
    %v1373 = vld [vmem:[#allocation11 + $0x110] sm:$0xff]
    %v1374 = vld [vmem:[#allocation11 + $0x118] sm:$0xff]
    %v1375 = vld [vmem:[#allocation11 + $0x120] sm:$0xff]
    %v1376 = vld [vmem:[#allocation11 + $0x128] sm:$0xff]
    %v1377 = vld [vmem:[#allocation11 + $0x130] sm:$0xff]
    %v1378 = vld [vmem:[#allocation11 + $0x138] sm:$0xff]
    %v1379 = vld [vmem:[#allocation11 + $0x140] sm:$0xff]
    %v1380 = vld [vmem:[#allocation11 + $0x148] sm:$0xff]
    %v1381 = vld [vmem:[#allocation11 + $0x150] sm:$0xff]
    %v1382 = vld [vmem:[#allocation11 + $0x158] sm:$0xff]
    %v1383 = vld [vmem:[#allocation11 + $0x160] sm:$0xff]
    %v1384 = vld [vmem:[#allocation11 + $0x168] sm:$0xff]
    %v1385 = vld [vmem:[#allocation11 + $0x170] sm:$0xff]
    %v1386 = vld [vmem:[#allocation11 + $0x178] sm:$0xff]
    %v1387 = vld [vmem:[#allocation11 + $0x180] sm:$0xff]
    %v1388 = vld [vmem:[#allocation11 + $0x188] sm:$0xff]
    %v1389 = vld [vmem:[#allocation11 + $0x190] sm:$0xff]
    %v1390 = vld [vmem:[#allocation11 + $0x198] sm:$0xff]
    %v1391 = vld [vmem:[#allocation11 + $0x1a0] sm:$0xff]
    %v1392 = vld [vmem:[#allocation11 + $0x1a8] sm:$0xff]
    %v1393 = vld [vmem:[#allocation11 + $0x1b0] sm:$0xff]
    %v1394 = vld [vmem:[#allocation11 + $0x1b8] sm:$0xff]
    %v1395 = vld [vmem:[#allocation11 + $0x1c0] sm:$0xff]
    %v1396 = vld [vmem:[#allocation11 + $0x1c8] sm:$0xff]
    %v1397 = vld [vmem:[#allocation11 + $0x1d0] sm:$0xff]
    %v1398 = vld [vmem:[#allocation11 + $0x1d8] sm:$0xff]
    %v1399 = vld [vmem:[#allocation11 + $0x1e0] sm:$0xff]
    %v1400 = vld [vmem:[#allocation11 + $0x1e8] sm:$0xff]
    %v1401 = vld [vmem:[#allocation11 + $0x1f0] sm:$0xff]
    %v1402 = vld [vmem:[#allocation11 + $0x1f8] sm:$0xff]
    %v1403 = vld [vmem:[#allocation11 + $0x200] sm:$0xff]
    %v1404 = vld [vmem:[#allocation11 + $0x208] sm:$0xff]
    %v1405 = vld [vmem:[#allocation11 + $0x210] sm:$0xff]
    %v1406 = vld [vmem:[#allocation11 + $0x218] sm:$0xff]
    %v1407 = vld [vmem:[#allocation11 + $0x220] sm:$0xff]
    %v1408 = vld [vmem:[#allocation11 + $0x228] sm:$0xff]
    %v1409 = vld [vmem:[#allocation11 + $0x230] sm:$0xff]
    %v1410 = vld [vmem:[#allocation11 + $0x238] sm:$0xff]
    %v1411 = vld [vmem:[#allocation11 + $0x240] sm:$0xff]
    %v1412 = vld [vmem:[#allocation11 + $0x248] sm:$0xff]
    %v1413 = vld [vmem:[#allocation11 + $0x250] sm:$0xff]
    %v1414 = vld [vmem:[#allocation11 + $0x258] sm:$0xff]
    %v1415 = vld [vmem:[#allocation11 + $0x260] sm:$0xff]
    %v1416 = vld [vmem:[#allocation11 + $0x268] sm:$0xff]
    %v1417 = vld [vmem:[#allocation11 + $0x270] sm:$0xff]
    %v1418 = vld [vmem:[#allocation11 + $0x278] sm:$0xff]
    %v1419 = vld [vmem:[#allocation11 + $0x280] sm:$0xff]
    %v1420 = vld [vmem:[#allocation11 + $0x288] sm:$0xff]
    %v1421 = vld [vmem:[#allocation11 + $0x290] sm:$0xff]
    %v1422 = vld [vmem:[#allocation11 + $0x298] sm:$0xff]
    %v1423 = vld [vmem:[#allocation11 + $0x2a0] sm:$0xff]
    %v1424 = vld [vmem:[#allocation11 + $0x2a8] sm:$0xff]
    %v1425 = vld [vmem:[#allocation11 + $0x2b0] sm:$0xff]
    %v1426 = vld [vmem:[#allocation11 + $0x2b8] sm:$0xff]
    %v1427 = vld [vmem:[#allocation11 + $0x2c0] sm:$0xff]
    %v1428 = vld [vmem:[#allocation11 + $0x2c8] sm:$0xff]
    %v1429 = vld [vmem:[#allocation11 + $0x2d0] sm:$0xff]
    %v1430 = vld [vmem:[#allocation11 + $0x2d8] sm:$0xff]
    %v1431 = vld [vmem:[#allocation11 + $0x2e0] sm:$0xff]
    %v1432 = vld [vmem:[#allocation11 + $0x2e8] sm:$0xff]
    %v1433 = vld [vmem:[#allocation11 + $0x2f0] sm:$0xff]
    %v1434 = vld [vmem:[#allocation11 + $0x2f8] sm:$0xff]
    %v1435 = vld [vmem:[#allocation11 + $0x300] sm:$0xff]
    %v1436 = vld [vmem:[#allocation11 + $0x308] sm:$0xff]
    %v1437 = vld [vmem:[#allocation11 + $0x310] sm:$0xff]
    %v1438 = vld [vmem:[#allocation11 + $0x318] sm:$0xff]
    %v1439 = vld [vmem:[#allocation11 + $0x320] sm:$0xff]
    %v1440 = vld [vmem:[#allocation11 + $0x328] sm:$0xff]
    %v1441 = vld [vmem:[#allocation11 + $0x330] sm:$0xff]
    %v1442 = vld [vmem:[#allocation11 + $0x338] sm:$0xff]
    %v1443 = vld [vmem:[#allocation11 + $0x340] sm:$0xff]
    %v1444 = vld [vmem:[#allocation11 + $0x348] sm:$0xff]
    %v1445 = vld [vmem:[#allocation11 + $0x350] sm:$0xff]
    %v1446 = vld [vmem:[#allocation11 + $0x358] sm:$0xff]
    %v1447 = vld [vmem:[#allocation11 + $0x360] sm:$0xff]
    %v1448 = vld [vmem:[#allocation11 + $0x368] sm:$0xff]
    %v1449 = vld [vmem:[#allocation11 + $0x370] sm:$0xff]
    %v1450 = vld [vmem:[#allocation11 + $0x378] sm:$0xff]
    %v1451 = vld [vmem:[#allocation11 + $0x380] sm:$0xff]
    %v1452 = vld [vmem:[#allocation11 + $0x388] sm:$0xff]
    %v1453 = vld [vmem:[#allocation11 + $0x390] sm:$0xff]
    %v1454 = vld [vmem:[#allocation11 + $0x398] sm:$0xff]
    %v1455 = vld [vmem:[#allocation11 + $0x3a0] sm:$0xff]
    %v1456 = vld [vmem:[#allocation11 + $0x3a8] sm:$0xff]
    %v1457 = vld [vmem:[#allocation11 + $0x3b0] sm:$0xff]
    %v1458 = vld [vmem:[#allocation11 + $0x3b8] sm:$0xff]
    %v1459 = vld [vmem:[#allocation11 + $0x3c0] sm:$0xff]
    %v1460 = vld [vmem:[#allocation11 + $0x3c8] sm:$0xff]
    %v1461 = vld [vmem:[#allocation11 + $0x3d0] sm:$0xff]
    %v1462 = vld [vmem:[#allocation11 + $0x3d8] sm:$0xff]
    %v1463 = vld [vmem:[#allocation11 + $0x3e0] sm:$0xff]
    %v1464 = vld [vmem:[#allocation11 + $0x3e8] sm:$0xff]
    %v1465 = vld [vmem:[#allocation11 + $0x3f0] sm:$0xff]
    %v1466 = vld [vmem:[#allocation11 + $0x3f8] sm:$0xff]
    %v1467 = vpack.c.bf16 %v1338, %v1337
    %v1468 = vld [vmem:[#allocation15] ss:$2 sm:$0xff]
    %s1469 = scalar_lea.vmem [#allocation15], 16
    %v1470 = vld [vmem:[%s1469] ss:$2 sm:$0xff]
    %v1473 = vlaneseq
    %v1474 = vshrl.u32 %v1473, 7
    %v1475 = vsub.s32 0, %v1474
    %v1476 = vrot.slane %v1468, %v1475
    %v1477 = vlaneseq
    %v1478 = vshrl.u32 %v1477, 7
    %v1479 = vsub.s32 1, %v1478
    %v1480 = vrot.slane %v1468, %v1479
    %v1481 = vlaneseq
    %v1482 = vshrl.u32 %v1481, 7
    %v1483 = vsub.s32 2, %v1482
    %v1484 = vrot.slane %v1468, %v1483
    %v1485 = vlaneseq
    %v1486 = vshrl.u32 %v1485, 7
    %v1487 = vsub.s32 3, %v1486
    %v1488 = vrot.slane %v1468, %v1487
    %v1489 = vlaneseq
    %v1490 = vshrl.u32 %v1489, 7
    %v1491 = vsub.s32 4, %v1490
    %v1492 = vrot.slane %v1468, %v1491
    %v1493 = vlaneseq
    %v1494 = vshrl.u32 %v1493, 7
    %v1495 = vsub.s32 5, %v1494
    %v1496 = vrot.slane %v1468, %v1495
    %v1497 = vlaneseq
    %v1498 = vshrl.u32 %v1497, 7
    %v1499 = vsub.s32 6, %v1498
    %v1500 = vrot.slane %v1468, %v1499
    %v1501 = vlaneseq
    %v1502 = vshrl.u32 %v1501, 7
    %v1503 = vsub.s32 7, %v1502
    %v1504 = vrot.slane %v1468, %v1503
    %v1505 = vlaneseq
    %v1506 = vshrl.u32 %v1505, 7
    %v1507 = vsub.s32 0, %v1506
    %v1508 = vrot.slane %v1470, %v1507
    %v1509 = vlaneseq
    %v1510 = vshrl.u32 %v1509, 7
    %v1511 = vsub.s32 1, %v1510
    %v1512 = vrot.slane %v1470, %v1511
    %v1513 = vlaneseq
    %v1514 = vshrl.u32 %v1513, 7
    %v1515 = vsub.s32 2, %v1514
    %v1516 = vrot.slane %v1470, %v1515
    %v1517 = vlaneseq
    %v1518 = vshrl.u32 %v1517, 7
    %v1519 = vsub.s32 3, %v1518
    %v1520 = vrot.slane %v1470, %v1519
    %v1521 = vlaneseq
    %v1522 = vshrl.u32 %v1521, 7
    %v1523 = vsub.s32 4, %v1522
    %v1524 = vrot.slane %v1470, %v1523
    %v1525 = vlaneseq
    %v1526 = vshrl.u32 %v1525, 7
    %v1527 = vsub.s32 5, %v1526
    %v1528 = vrot.slane %v1470, %v1527
    %v1529 = vlaneseq
    %v1530 = vshrl.u32 %v1529, 7
    %v1531 = vsub.s32 6, %v1530
    %v1532 = vrot.slane %v1470, %v1531
    %v1533 = vlaneseq
    %v1534 = vshrl.u32 %v1533, 7
    %v1535 = vsub.s32 7, %v1534
    %v1536 = vrot.slane %v1470, %v1535
    %v1681 = vunpack.c.l.b16 %v1339
    %v1682 = vunpack.c.h.b16 %v1339
    %v1683 = vunpack.c.l.b16 %v1340
    %v1684 = vunpack.c.h.b16 %v1340
    %v1685 = vunpack.c.l.b16 %v1341
    %v1686 = vunpack.c.h.b16 %v1341
    %v1687 = vunpack.c.l.b16 %v1342
    %v1688 = vunpack.c.h.b16 %v1342
    %v1689 = vunpack.c.l.b16 %v1343
    %v1690 = vunpack.c.h.b16 %v1343
    %v1691 = vunpack.c.l.b16 %v1344
    %v1692 = vunpack.c.h.b16 %v1344
    %v1693 = vunpack.c.l.b16 %v1345
    %v1694 = vunpack.c.h.b16 %v1345
    %v1695 = vunpack.c.l.b16 %v1346
    %v1696 = vunpack.c.h.b16 %v1346
    %v1697 = vunpack.c.l.b16 %v1347
    %v1698 = vunpack.c.h.b16 %v1347
    %v1699 = vunpack.c.l.b16 %v1348
    %v1700 = vunpack.c.h.b16 %v1348
    %v1701 = vunpack.c.l.b16 %v1349
    %v1702 = vunpack.c.h.b16 %v1349
    %v1703 = vunpack.c.l.b16 %v1350
    %v1704 = vunpack.c.h.b16 %v1350
    %v1705 = vunpack.c.l.b16 %v1351
    %v1706 = vunpack.c.h.b16 %v1351
    %v1707 = vunpack.c.l.b16 %v1352
    %v1708 = vunpack.c.h.b16 %v1352
    %v1709 = vunpack.c.l.b16 %v1353
    %v1710 = vunpack.c.h.b16 %v1353
    %v1711 = vunpack.c.l.b16 %v1354
    %v1712 = vunpack.c.h.b16 %v1354
    %v1713 = vunpack.c.l.b16 %v1355
    %v1714 = vunpack.c.h.b16 %v1355
    %v1715 = vunpack.c.l.b16 %v1356
    %v1716 = vunpack.c.h.b16 %v1356
    %v1717 = vunpack.c.l.b16 %v1357
    %v1718 = vunpack.c.h.b16 %v1357
    %v1719 = vunpack.c.l.b16 %v1358
    %v1720 = vunpack.c.h.b16 %v1358
    %v1721 = vunpack.c.l.b16 %v1359
    %v1722 = vunpack.c.h.b16 %v1359
    %v1723 = vunpack.c.l.b16 %v1360
    %v1724 = vunpack.c.h.b16 %v1360
    %v1725 = vunpack.c.l.b16 %v1361
    %v1726 = vunpack.c.h.b16 %v1361
    %v1727 = vunpack.c.l.b16 %v1362
    %v1728 = vunpack.c.h.b16 %v1362
    %v1729 = vunpack.c.l.b16 %v1363
    %v1730 = vunpack.c.h.b16 %v1363
    %v1731 = vunpack.c.l.b16 %v1364
    %v1732 = vunpack.c.h.b16 %v1364
    %v1733 = vunpack.c.l.b16 %v1365
    %v1734 = vunpack.c.h.b16 %v1365
    %v1735 = vunpack.c.l.b16 %v1366
    %v1736 = vunpack.c.h.b16 %v1366
    %v1737 = vunpack.c.l.b16 %v1367
    %v1738 = vunpack.c.h.b16 %v1367
    %v1739 = vunpack.c.l.b16 %v1368
    %v1740 = vunpack.c.h.b16 %v1368
    %v1741 = vunpack.c.l.b16 %v1369
    %v1742 = vunpack.c.h.b16 %v1369
    %v1743 = vunpack.c.l.b16 %v1370
    %v1744 = vunpack.c.h.b16 %v1370
    %v1745 = vunpack.c.l.b16 %v1371
    %v1746 = vunpack.c.h.b16 %v1371
    %v1747 = vunpack.c.l.b16 %v1372
    %v1748 = vunpack.c.h.b16 %v1372
    %v1749 = vunpack.c.l.b16 %v1373
    %v1750 = vunpack.c.h.b16 %v1373
    %v1751 = vunpack.c.l.b16 %v1374
    %v1752 = vunpack.c.h.b16 %v1374
    %v1753 = vunpack.c.l.b16 %v1375
    %v1754 = vunpack.c.h.b16 %v1375
    %v1755 = vunpack.c.l.b16 %v1376
    %v1756 = vunpack.c.h.b16 %v1376
    %v1757 = vunpack.c.l.b16 %v1377
    %v1758 = vunpack.c.h.b16 %v1377
    %v1759 = vunpack.c.l.b16 %v1378
    %v1760 = vunpack.c.h.b16 %v1378
    %v1761 = vunpack.c.l.b16 %v1379
    %v1762 = vunpack.c.h.b16 %v1379
    %v1763 = vunpack.c.l.b16 %v1380
    %v1764 = vunpack.c.h.b16 %v1380
    %v1765 = vunpack.c.l.b16 %v1381
    %v1766 = vunpack.c.h.b16 %v1381
    %v1767 = vunpack.c.l.b16 %v1382
    %v1768 = vunpack.c.h.b16 %v1382
    %v1769 = vunpack.c.l.b16 %v1383
    %v1770 = vunpack.c.h.b16 %v1383
    %v1771 = vunpack.c.l.b16 %v1384
    %v1772 = vunpack.c.h.b16 %v1384
    %v1773 = vunpack.c.l.b16 %v1385
    %v1774 = vunpack.c.h.b16 %v1385
    %v1775 = vunpack.c.l.b16 %v1386
    %v1776 = vunpack.c.h.b16 %v1386
    %v1777 = vunpack.c.l.b16 %v1387
    %v1778 = vunpack.c.h.b16 %v1387
    %v1779 = vunpack.c.l.b16 %v1388
    %v1780 = vunpack.c.h.b16 %v1388
    %v1781 = vunpack.c.l.b16 %v1389
    %v1782 = vunpack.c.h.b16 %v1389
    %v1783 = vunpack.c.l.b16 %v1390
    %v1784 = vunpack.c.h.b16 %v1390
    %v1785 = vunpack.c.l.b16 %v1391
    %v1786 = vunpack.c.h.b16 %v1391
    %v1787 = vunpack.c.l.b16 %v1392
    %v1788 = vunpack.c.h.b16 %v1392
    %v1789 = vunpack.c.l.b16 %v1393
    %v1790 = vunpack.c.h.b16 %v1393
    %v1791 = vunpack.c.l.b16 %v1394
    %v1792 = vunpack.c.h.b16 %v1394
    %v1793 = vunpack.c.l.b16 %v1395
    %v1794 = vunpack.c.h.b16 %v1395
    %v1795 = vunpack.c.l.b16 %v1396
    %v1796 = vunpack.c.h.b16 %v1396
    %v1797 = vunpack.c.l.b16 %v1397
    %v1798 = vunpack.c.h.b16 %v1397
    %v1799 = vunpack.c.l.b16 %v1398
    %v1800 = vunpack.c.h.b16 %v1398
    %v1801 = vunpack.c.l.b16 %v1399
    %v1802 = vunpack.c.h.b16 %v1399
    %v1803 = vunpack.c.l.b16 %v1400
    %v1804 = vunpack.c.h.b16 %v1400
    %v1805 = vunpack.c.l.b16 %v1401
    %v1806 = vunpack.c.h.b16 %v1401
    %v1807 = vunpack.c.l.b16 %v1402
    %v1808 = vunpack.c.h.b16 %v1402
    %v1809 = vunpack.c.l.b16 %v1403
    %v1810 = vunpack.c.h.b16 %v1403
    %v1811 = vunpack.c.l.b16 %v1404
    %v1812 = vunpack.c.h.b16 %v1404
    %v1813 = vunpack.c.l.b16 %v1405
    %v1814 = vunpack.c.h.b16 %v1405
    %v1815 = vunpack.c.l.b16 %v1406
    %v1816 = vunpack.c.h.b16 %v1406
    %v1817 = vunpack.c.l.b16 %v1407
    %v1818 = vunpack.c.h.b16 %v1407
    %v1819 = vunpack.c.l.b16 %v1408
    %v1820 = vunpack.c.h.b16 %v1408
    %v1821 = vunpack.c.l.b16 %v1409
    %v1822 = vunpack.c.h.b16 %v1409
    %v1823 = vunpack.c.l.b16 %v1410
    %v1824 = vunpack.c.h.b16 %v1410
    %v1825 = vunpack.c.l.b16 %v1411
    %v1826 = vunpack.c.h.b16 %v1411
    %v1827 = vunpack.c.l.b16 %v1412
    %v1828 = vunpack.c.h.b16 %v1412
    %v1829 = vunpack.c.l.b16 %v1413
    %v1830 = vunpack.c.h.b16 %v1413
    %v1831 = vunpack.c.l.b16 %v1414
    %v1832 = vunpack.c.h.b16 %v1414
    %v1833 = vunpack.c.l.b16 %v1415
    %v1834 = vunpack.c.h.b16 %v1415
    %v1835 = vunpack.c.l.b16 %v1416
    %v1836 = vunpack.c.h.b16 %v1416
    %v1837 = vunpack.c.l.b16 %v1417
    %v1838 = vunpack.c.h.b16 %v1417
    %v1839 = vunpack.c.l.b16 %v1418
    %v1840 = vunpack.c.h.b16 %v1418
    %v1841 = vunpack.c.l.b16 %v1419
    %v1842 = vunpack.c.h.b16 %v1419
    %v1843 = vunpack.c.l.b16 %v1420
    %v1844 = vunpack.c.h.b16 %v1420
    %v1845 = vunpack.c.l.b16 %v1421
    %v1846 = vunpack.c.h.b16 %v1421
    %v1847 = vunpack.c.l.b16 %v1422
    %v1848 = vunpack.c.h.b16 %v1422
    %v1849 = vunpack.c.l.b16 %v1423
    %v1850 = vunpack.c.h.b16 %v1423
    %v1851 = vunpack.c.l.b16 %v1424
    %v1852 = vunpack.c.h.b16 %v1424
    %v1853 = vunpack.c.l.b16 %v1425
    %v1854 = vunpack.c.h.b16 %v1425
    %v1855 = vunpack.c.l.b16 %v1426
    %v1856 = vunpack.c.h.b16 %v1426
    %v1857 = vunpack.c.l.b16 %v1427
    %v1858 = vunpack.c.h.b16 %v1427
    %v1859 = vunpack.c.l.b16 %v1428
    %v1860 = vunpack.c.h.b16 %v1428
    %v1861 = vunpack.c.l.b16 %v1429
    %v1862 = vunpack.c.h.b16 %v1429
    %v1863 = vunpack.c.l.b16 %v1430
    %v1864 = vunpack.c.h.b16 %v1430
    %v1865 = vunpack.c.l.b16 %v1431
    %v1866 = vunpack.c.h.b16 %v1431
    %v1867 = vunpack.c.l.b16 %v1432
    %v1868 = vunpack.c.h.b16 %v1432
    %v1869 = vunpack.c.l.b16 %v1433
    %v1870 = vunpack.c.h.b16 %v1433
    %v1871 = vunpack.c.l.b16 %v1434
    %v1872 = vunpack.c.h.b16 %v1434
    %v1873 = vunpack.c.l.b16 %v1435
    %v1874 = vunpack.c.h.b16 %v1435
    %v1875 = vunpack.c.l.b16 %v1436
    %v1876 = vunpack.c.h.b16 %v1436
    %v1877 = vunpack.c.l.b16 %v1437
    %v1878 = vunpack.c.h.b16 %v1437
    %v1879 = vunpack.c.l.b16 %v1438
    %v1880 = vunpack.c.h.b16 %v1438
    %v1881 = vunpack.c.l.b16 %v1439
    %v1882 = vunpack.c.h.b16 %v1439
    %v1883 = vunpack.c.l.b16 %v1440
    %v1884 = vunpack.c.h.b16 %v1440
    %v1885 = vunpack.c.l.b16 %v1441
    %v1886 = vunpack.c.h.b16 %v1441
    %v1887 = vunpack.c.l.b16 %v1442
    %v1888 = vunpack.c.h.b16 %v1442
    %v1889 = vunpack.c.l.b16 %v1443
    %v1890 = vunpack.c.h.b16 %v1443
    %v1891 = vunpack.c.l.b16 %v1444
    %v1892 = vunpack.c.h.b16 %v1444
    %v1893 = vunpack.c.l.b16 %v1445
    %v1894 = vunpack.c.h.b16 %v1445
    %v1895 = vunpack.c.l.b16 %v1446
    %v1896 = vunpack.c.h.b16 %v1446
    %v1897 = vunpack.c.l.b16 %v1447
    %v1898 = vunpack.c.h.b16 %v1447
    %v1899 = vunpack.c.l.b16 %v1448
    %v1900 = vunpack.c.h.b16 %v1448
    %v1901 = vunpack.c.l.b16 %v1449
    %v1902 = vunpack.c.h.b16 %v1449
    %v1903 = vunpack.c.l.b16 %v1450
    %v1904 = vunpack.c.h.b16 %v1450
    %v1905 = vunpack.c.l.b16 %v1451
    %v1906 = vunpack.c.h.b16 %v1451
    %v1907 = vunpack.c.l.b16 %v1452
    %v1908 = vunpack.c.h.b16 %v1452
    %v1909 = vunpack.c.l.b16 %v1453
    %v1910 = vunpack.c.h.b16 %v1453
    %v1911 = vunpack.c.l.b16 %v1454
    %v1912 = vunpack.c.h.b16 %v1454
    %v1913 = vunpack.c.l.b16 %v1455
    %v1914 = vunpack.c.h.b16 %v1455
    %v1915 = vunpack.c.l.b16 %v1456
    %v1916 = vunpack.c.h.b16 %v1456
    %v1917 = vunpack.c.l.b16 %v1457
    %v1918 = vunpack.c.h.b16 %v1457
    %v1919 = vunpack.c.l.b16 %v1458
    %v1920 = vunpack.c.h.b16 %v1458
    %v1921 = vunpack.c.l.b16 %v1459
    %v1922 = vunpack.c.h.b16 %v1459
    %v1923 = vunpack.c.l.b16 %v1460
    %v1924 = vunpack.c.h.b16 %v1460
    %v1925 = vunpack.c.l.b16 %v1461
    %v1926 = vunpack.c.h.b16 %v1461
    %v1927 = vunpack.c.l.b16 %v1462
    %v1928 = vunpack.c.h.b16 %v1462
    %v1929 = vunpack.c.l.b16 %v1463
    %v1930 = vunpack.c.h.b16 %v1463
    %v1931 = vunpack.c.l.b16 %v1464
    %v1932 = vunpack.c.h.b16 %v1464
    %v1933 = vunpack.c.l.b16 %v1465
    %v1934 = vunpack.c.h.b16 %v1465
    %v1935 = vunpack.c.l.b16 %v1466
    %v1936 = vunpack.c.h.b16 %v1466
    %v1937 = vpack.c.b16 %v1697, %v1681
    %v1938 = vpack.c.b16 %v1698, %v1682
    %v1939 = vpack.c.b16 %v1699, %v1683
    %v1940 = vpack.c.b16 %v1700, %v1684
    %v1941 = vpack.c.b16 %v1701, %v1685
    %v1942 = vpack.c.b16 %v1702, %v1686
    %v1943 = vpack.c.b16 %v1703, %v1687
    %v1944 = vpack.c.b16 %v1704, %v1688
    %v1945 = vpack.c.b16 %v1705, %v1689
    %v1946 = vpack.c.b16 %v1706, %v1690
    %v1947 = vpack.c.b16 %v1707, %v1691
    %v1948 = vpack.c.b16 %v1708, %v1692
    %v1949 = vpack.c.b16 %v1709, %v1693
    %v1950 = vpack.c.b16 %v1710, %v1694
    %v1951 = vpack.c.b16 %v1711, %v1695
    %v1952 = vpack.c.b16 %v1712, %v1696
    %v1953 = vpack.c.b16 %v1729, %v1713
    %v1954 = vpack.c.b16 %v1730, %v1714
    %v1955 = vpack.c.b16 %v1731, %v1715
    %v1956 = vpack.c.b16 %v1732, %v1716
    %v1957 = vpack.c.b16 %v1733, %v1717
    %v1958 = vpack.c.b16 %v1734, %v1718
    %v1959 = vpack.c.b16 %v1735, %v1719
    %v1960 = vpack.c.b16 %v1736, %v1720
    %v1961 = vpack.c.b16 %v1737, %v1721
    %v1962 = vpack.c.b16 %v1738, %v1722
    %v1963 = vpack.c.b16 %v1739, %v1723
    %v1964 = vpack.c.b16 %v1740, %v1724
    %v1965 = vpack.c.b16 %v1741, %v1725
    %v1966 = vpack.c.b16 %v1742, %v1726
    %v1967 = vpack.c.b16 %v1743, %v1727
    %v1968 = vpack.c.b16 %v1744, %v1728
    %v1969 = vpack.c.b16 %v1761, %v1745
    %v1970 = vpack.c.b16 %v1762, %v1746
    %v1971 = vpack.c.b16 %v1763, %v1747
    %v1972 = vpack.c.b16 %v1764, %v1748
    %v1973 = vpack.c.b16 %v1765, %v1749
    %v1974 = vpack.c.b16 %v1766, %v1750
    %v1975 = vpack.c.b16 %v1767, %v1751
    %v1976 = vpack.c.b16 %v1768, %v1752
    %v1977 = vpack.c.b16 %v1769, %v1753
    %v1978 = vpack.c.b16 %v1770, %v1754
    %v1979 = vpack.c.b16 %v1771, %v1755
    %v1980 = vpack.c.b16 %v1772, %v1756
    %v1981 = vpack.c.b16 %v1773, %v1757
    %v1982 = vpack.c.b16 %v1774, %v1758
    %v1983 = vpack.c.b16 %v1775, %v1759
    %v1984 = vpack.c.b16 %v1776, %v1760
    %v1985 = vpack.c.b16 %v1793, %v1777
    %v1986 = vpack.c.b16 %v1794, %v1778
    %v1987 = vpack.c.b16 %v1795, %v1779
    %v1988 = vpack.c.b16 %v1796, %v1780
    %v1989 = vpack.c.b16 %v1797, %v1781
    %v1990 = vpack.c.b16 %v1798, %v1782
    %v1991 = vpack.c.b16 %v1799, %v1783
    %v1992 = vpack.c.b16 %v1800, %v1784
    %v1993 = vpack.c.b16 %v1801, %v1785
    %v1994 = vpack.c.b16 %v1802, %v1786
    %v1995 = vpack.c.b16 %v1803, %v1787
    %v1996 = vpack.c.b16 %v1804, %v1788
    %v1997 = vpack.c.b16 %v1805, %v1789
    %v1998 = vpack.c.b16 %v1806, %v1790
    %v1999 = vpack.c.b16 %v1807, %v1791
    %v2000 = vpack.c.b16 %v1808, %v1792
    %v2001 = vpack.c.b16 %v1825, %v1809
    %v2002 = vpack.c.b16 %v1826, %v1810
    %v2003 = vpack.c.b16 %v1827, %v1811
    %v2004 = vpack.c.b16 %v1828, %v1812
    %v2005 = vpack.c.b16 %v1829, %v1813
    %v2006 = vpack.c.b16 %v1830, %v1814
    %v2007 = vpack.c.b16 %v1831, %v1815
    %v2008 = vpack.c.b16 %v1832, %v1816
    %v2009 = vpack.c.b16 %v1833, %v1817
    %v2010 = vpack.c.b16 %v1834, %v1818
    %v2011 = vpack.c.b16 %v1835, %v1819
    %v2012 = vpack.c.b16 %v1836, %v1820
    %v2013 = vpack.c.b16 %v1837, %v1821
    %v2014 = vpack.c.b16 %v1838, %v1822
    %v2015 = vpack.c.b16 %v1839, %v1823
    %v2016 = vpack.c.b16 %v1840, %v1824
    %v2017 = vpack.c.b16 %v1857, %v1841
    %v2018 = vpack.c.b16 %v1858, %v1842
    %v2019 = vpack.c.b16 %v1859, %v1843
    %v2020 = vpack.c.b16 %v1860, %v1844
    %v2021 = vpack.c.b16 %v1861, %v1845
    %v2022 = vpack.c.b16 %v1862, %v1846
    %v2023 = vpack.c.b16 %v1863, %v1847
    %v2024 = vpack.c.b16 %v1864, %v1848
    %v2025 = vpack.c.b16 %v1865, %v1849
    %v2026 = vpack.c.b16 %v1866, %v1850
    %v2027 = vpack.c.b16 %v1867, %v1851
    %v2028 = vpack.c.b16 %v1868, %v1852
    %v2029 = vpack.c.b16 %v1869, %v1853
    %v2030 = vpack.c.b16 %v1870, %v1854
    %v2031 = vpack.c.b16 %v1871, %v1855
    %v2032 = vpack.c.b16 %v1872, %v1856
    %v2033 = vpack.c.b16 %v1889, %v1873
    %v2034 = vpack.c.b16 %v1890, %v1874
    %v2035 = vpack.c.b16 %v1891, %v1875
    %v2036 = vpack.c.b16 %v1892, %v1876
    %v2037 = vpack.c.b16 %v1893, %v1877
    %v2038 = vpack.c.b16 %v1894, %v1878
    %v2039 = vpack.c.b16 %v1895, %v1879
    %v2040 = vpack.c.b16 %v1896, %v1880
    %v2041 = vpack.c.b16 %v1897, %v1881
    %v2042 = vpack.c.b16 %v1898, %v1882
    %v2043 = vpack.c.b16 %v1899, %v1883
    %v2044 = vpack.c.b16 %v1900, %v1884
    %v2045 = vpack.c.b16 %v1901, %v1885
    %v2046 = vpack.c.b16 %v1902, %v1886
    %v2047 = vpack.c.b16 %v1903, %v1887
    %v2048 = vpack.c.b16 %v1904, %v1888
    %v2049 = vpack.c.b16 %v1921, %v1905
    %v2050 = vpack.c.b16 %v1922, %v1906
    %v2051 = vpack.c.b16 %v1923, %v1907
    %v2052 = vpack.c.b16 %v1924, %v1908
    %v2053 = vpack.c.b16 %v1925, %v1909
    %v2054 = vpack.c.b16 %v1926, %v1910
    %v2055 = vpack.c.b16 %v1927, %v1911
    %v2056 = vpack.c.b16 %v1928, %v1912
    %v2057 = vpack.c.b16 %v1929, %v1913
    %v2058 = vpack.c.b16 %v1930, %v1914
    %v2059 = vpack.c.b16 %v1931, %v1915
    %v2060 = vpack.c.b16 %v1932, %v1916
    %v2061 = vpack.c.b16 %v1933, %v1917
    %v2062 = vpack.c.b16 %v1934, %v1918
    %v2063 = vpack.c.b16 %v1935, %v1919
    %v2064 = vpack.c.b16 %v1936, %v1920
    %2193 = vmatprep.subr.bf16.mxu0 %v1938
    %2194 = vmatpush1.bf16.msra.mxu0 %v1937
    %2195 = vmatprep.subr.bf16.mxu0 %v1954
    %2196 = vmatpush1.bf16.msra.mxu0 %v1953
    %2197 = vmatprep.subr.bf16.mxu0 %v1970
    %2198 = vmatpush1.bf16.msra.mxu0 %v1969
    %2199 = vmatprep.subr.bf16.mxu0 %v1986
    %2200 = vmatpush1.bf16.msra.mxu0 %v1985
    %2201 = vmatprep.subr.bf16.mxu0 %v2002
    %2202 = vmatpush1.bf16.msra.mxu0 %v2001
    %2203 = vmatprep.subr.bf16.mxu0 %v2018
    %2204 = vmatpush1.bf16.msra.mxu0 %v2017
    %2205 = vmatprep.subr.bf16.mxu0 %v2034
    %2206 = vmatpush1.bf16.msra.mxu0 %v2033
    %2207 = vmatprep.subr.bf16.mxu0 %v2050
    %2208 = vmatpush1.bf16.msra.mxu0 %v2049
    %2209 = vmatprep.subr.bf16.mxu0 0
    %2210 = vmatpush1.bf16.msra.mxu0 0
    %2211 = vmatprep.subr.bf16.mxu0 0
    %2212 = vmatpush1.bf16.msra.mxu0 0
    %2213 = vmatprep.subr.bf16.mxu0 0
    %2214 = vmatpush1.bf16.msra.mxu0 0
    %2215 = vmatprep.subr.bf16.mxu0 0
    %2216 = vmatpush1.bf16.msra.mxu0 0
    %2217 = vmatprep.subr.bf16.mxu0 0
    %2218 = vmatpush1.bf16.msra.mxu0 0
    %2219 = vmatprep.subr.bf16.mxu0 0
    %2220 = vmatpush1.bf16.msra.mxu0 0
    %2221 = vmatprep.subr.bf16.mxu0 0
    %2222 = vmatpush1.bf16.msra.mxu0 0
    %2223 = vmatprep.subr.bf16.mxu0 0
    %2224 = vmatpush1.bf16.msra.mxu0 0
    %2225 = vmatprep.mubr.bf16.mxu0 0
    %2226 = vmatmul.mubr.bf16.gmra.mrb[0].mxu0 %v1467
    %v2227 = vpop.f32.mrb[0].mxu0
    %v2228 = vadd.f32 %v1476, %v2227
    %v2229 = vpop.f32.mrb[0].mxu0
    %v2230 = vadd.f32 %v1480, %v2229
    %v2231 = vpop.f32.mrb[0].mxu0
    %v2232 = vadd.f32 %v1476, %v2231
    %v2233 = vpop.f32.mrb[0].mxu0
    %v2234 = vadd.f32 %v1480, %v2233
    %2235 = vdwg.mxu0
    %2236 = vmatprep.subr.bf16.mxu0 %v1940
    %2237 = vmatpush1.bf16.msra.mxu0 %v1939
    %2238 = vmatprep.subr.bf16.mxu0 %v1956
    %2239 = vmatpush1.bf16.msra.mxu0 %v1955
    %2240 = vmatprep.subr.bf16.mxu0 %v1972
    %2241 = vmatpush1.bf16.msra.mxu0 %v1971
    %2242 = vmatprep.subr.bf16.mxu0 %v1988
    %2243 = vmatpush1.bf16.msra.mxu0 %v1987
    %2244 = vmatprep.subr.bf16.mxu0 %v2004
    %2245 = vmatpush1.bf16.msra.mxu0 %v2003
    %2246 = vmatprep.subr.bf16.mxu0 %v2020
    %2247 = vmatpush1.bf16.msra.mxu0 %v2019
    %2248 = vmatprep.subr.bf16.mxu0 %v2036
    %2249 = vmatpush1.bf16.msra.mxu0 %v2035
    %2250 = vmatprep.subr.bf16.mxu0 %v2052
    %2251 = vmatpush1.bf16.msra.mxu0 %v2051
    %2252 = vmatprep.subr.bf16.mxu0 0
    %2253 = vmatpush1.bf16.msra.mxu0 0
    %2254 = vmatprep.subr.bf16.mxu0 0
    %2255 = vmatpush1.bf16.msra.mxu0 0
    %2256 = vmatprep.subr.bf16.mxu0 0
    %2257 = vmatpush1.bf16.msra.mxu0 0
    %2258 = vmatprep.subr.bf16.mxu0 0
    %2259 = vmatpush1.bf16.msra.mxu0 0
    %2260 = vmatprep.subr.bf16.mxu0 0
    %2261 = vmatpush1.bf16.msra.mxu0 0
    %2262 = vmatprep.subr.bf16.mxu0 0
    %2263 = vmatpush1.bf16.msra.mxu0 0
    %2264 = vmatprep.subr.bf16.mxu0 0
    %2265 = vmatpush1.bf16.msra.mxu0 0
    %2266 = vmatprep.subr.bf16.mxu0 0
    %2267 = vmatpush1.bf16.msra.mxu0 0
    %2268 = vmatprep.mubr.bf16.mxu0 0
    %2269 = vmatmul.mubr.bf16.gmra.mrb[0].mxu0 %v1467
    %v2270 = vpop.f32.mrb[0].mxu0
    %v2271 = vadd.f32 %v1484, %v2270
    %v2272 = vpop.f32.mrb[0].mxu0
    %v2273 = vadd.f32 %v1488, %v2272
    %v2274 = vpop.f32.mrb[0].mxu0
    %v2275 = vadd.f32 %v1484, %v2274
    %v2276 = vpop.f32.mrb[0].mxu0
    %v2277 = vadd.f32 %v1488, %v2276
    %2278 = vdwg.mxu0
    %2279 = vmatprep.subr.bf16.mxu0 %v1942
    %2280 = vmatpush1.bf16.msra.mxu0 %v1941
    %2281 = vmatprep.subr.bf16.mxu0 %v1958
    %2282 = vmatpush1.bf16.msra.mxu0 %v1957
    %2283 = vmatprep.subr.bf16.mxu0 %v1974
    %2284 = vmatpush1.bf16.msra.mxu0 %v1973
    %2285 = vmatprep.subr.bf16.mxu0 %v1990
    %2286 = vmatpush1.bf16.msra.mxu0 %v1989
    %2287 = vmatprep.subr.bf16.mxu0 %v2006
    %2288 = vmatpush1.bf16.msra.mxu0 %v2005
    %2289 = vmatprep.subr.bf16.mxu0 %v2022
    %2290 = vmatpush1.bf16.msra.mxu0 %v2021
    %2291 = vmatprep.subr.bf16.mxu0 %v2038
    %2292 = vmatpush1.bf16.msra.mxu0 %v2037
    %2293 = vmatprep.subr.bf16.mxu0 %v2054
    %2294 = vmatpush1.bf16.msra.mxu0 %v2053
    %2295 = vmatprep.subr.bf16.mxu0 0
    %2296 = vmatpush1.bf16.msra.mxu0 0
    %2297 = vmatprep.subr.bf16.mxu0 0
    %2298 = vmatpush1.bf16.msra.mxu0 0
    %2299 = vmatprep.subr.bf16.mxu0 0
    %2300 = vmatpush1.bf16.msra.mxu0 0
    %2301 = vmatprep.subr.bf16.mxu0 0
    %2302 = vmatpush1.bf16.msra.mxu0 0
    %2303 = vmatprep.subr.bf16.mxu0 0
    %2304 = vmatpush1.bf16.msra.mxu0 0
    %2305 = vmatprep.subr.bf16.mxu0 0
    %2306 = vmatpush1.bf16.msra.mxu0 0
    %2307 = vmatprep.subr.bf16.mxu0 0
    %2308 = vmatpush1.bf16.msra.mxu0 0
    %2309 = vmatprep.subr.bf16.mxu0 0
    %2310 = vmatpush1.bf16.msra.mxu0 0
    %2311 = vmatprep.mubr.bf16.mxu0 0
    %2312 = vmatmul.mubr.bf16.gmra.mrb[0].mxu0 %v1467
    %v2313 = vpop.f32.mrb[0].mxu0
    %v2314 = vadd.f32 %v1492, %v2313
    %v2315 = vpop.f32.mrb[0].mxu0
    %v2316 = vadd.f32 %v1496, %v2315
    %v2317 = vpop.f32.mrb[0].mxu0
    %v2318 = vadd.f32 %v1492, %v2317
    %v2319 = vpop.f32.mrb[0].mxu0
    %v2320 = vadd.f32 %v1496, %v2319
    %2321 = vdwg.mxu0
    %2322 = vmatprep.subr.bf16.mxu0 %v1944
    %2323 = vmatpush1.bf16.msra.mxu0 %v1943
    %2324 = vmatprep.subr.bf16.mxu0 %v1960
    %2325 = vmatpush1.bf16.msra.mxu0 %v1959
    %2326 = vmatprep.subr.bf16.mxu0 %v1976
    %2327 = vmatpush1.bf16.msra.mxu0 %v1975
    %2328 = vmatprep.subr.bf16.mxu0 %v1992
    %2329 = vmatpush1.bf16.msra.mxu0 %v1991
    %2330 = vmatprep.subr.bf16.mxu0 %v2008
    %2331 = vmatpush1.bf16.msra.mxu0 %v2007
    %2332 = vmatprep.subr.bf16.mxu0 %v2024
    %2333 = vmatpush1.bf16.msra.mxu0 %v2023
    %2334 = vmatprep.subr.bf16.mxu0 %v2040
    %2335 = vmatpush1.bf16.msra.mxu0 %v2039
    %2336 = vmatprep.subr.bf16.mxu0 %v2056
    %2337 = vmatpush1.bf16.msra.mxu0 %v2055
    %2338 = vmatprep.subr.bf16.mxu0 0
    %2339 = vmatpush1.bf16.msra.mxu0 0
    %2340 = vmatprep.subr.bf16.mxu0 0
    %2341 = vmatpush1.bf16.msra.mxu0 0
    %2342 = vmatprep.subr.bf16.mxu0 0
    %2343 = vmatpush1.bf16.msra.mxu0 0
    %2344 = vmatprep.subr.bf16.mxu0 0
    %2345 = vmatpush1.bf16.msra.mxu0 0
    %2346 = vmatprep.subr.bf16.mxu0 0
    %2347 = vmatpush1.bf16.msra.mxu0 0
    %2348 = vmatprep.subr.bf16.mxu0 0
    %2349 = vmatpush1.bf16.msra.mxu0 0
    %2350 = vmatprep.subr.bf16.mxu0 0
    %2351 = vmatpush1.bf16.msra.mxu0 0
    %2352 = vmatprep.subr.bf16.mxu0 0
    %2353 = vmatpush1.bf16.msra.mxu0 0
    %2354 = vmatprep.mubr.bf16.mxu0 0
    %2355 = vmatmul.mubr.bf16.gmra.mrb[0].mxu0 %v1467
    %v2356 = vpop.f32.mrb[0].mxu0
    %v2357 = vadd.f32 %v1500, %v2356
    %v2358 = vpop.f32.mrb[0].mxu0
    %v2359 = vadd.f32 %v1504, %v2358
    %v2360 = vpop.f32.mrb[0].mxu0
    %v2361 = vadd.f32 %v1500, %v2360
    %v2362 = vpop.f32.mrb[0].mxu0
    %v2363 = vadd.f32 %v1504, %v2362
    %2364 = vdwg.mxu0
    %2365 = vmatprep.subr.bf16.mxu0 %v1946
    %2366 = vmatpush1.bf16.msra.mxu0 %v1945
    %2367 = vmatprep.subr.bf16.mxu0 %v1962
    %2368 = vmatpush1.bf16.msra.mxu0 %v1961
    %2369 = vmatprep.subr.bf16.mxu0 %v1978
    %2370 = vmatpush1.bf16.msra.mxu0 %v1977
    %2371 = vmatprep.subr.bf16.mxu0 %v1994
    %2372 = vmatpush1.bf16.msra.mxu0 %v1993
    %2373 = vmatprep.subr.bf16.mxu0 %v2010
    %2374 = vmatpush1.bf16.msra.mxu0 %v2009
    %2375 = vmatprep.subr.bf16.mxu0 %v2026
    %2376 = vmatpush1.bf16.msra.mxu0 %v2025
    %2377 = vmatprep.subr.bf16.mxu0 %v2042
    %2378 = vmatpush1.bf16.msra.mxu0 %v2041
    %2379 = vmatprep.subr.bf16.mxu0 %v2058
    %2380 = vmatpush1.bf16.msra.mxu0 %v2057
    %2381 = vmatprep.subr.bf16.mxu0 0
    %2382 = vmatpush1.bf16.msra.mxu0 0
    %2383 = vmatprep.subr.bf16.mxu0 0
    %2384 = vmatpush1.bf16.msra.mxu0 0
    %2385 = vmatprep.subr.bf16.mxu0 0
    %2386 = vmatpush1.bf16.msra.mxu0 0
    %2387 = vmatprep.subr.bf16.mxu0 0
    %2388 = vmatpush1.bf16.msra.mxu0 0
    %2389 = vmatprep.subr.bf16.mxu0 0
    %2390 = vmatpush1.bf16.msra.mxu0 0
    %2391 = vmatprep.subr.bf16.mxu0 0
    %2392 = vmatpush1.bf16.msra.mxu0 0
    %2393 = vmatprep.subr.bf16.mxu0 0
    %2394 = vmatpush1.bf16.msra.mxu0 0
    %2395 = vmatprep.subr.bf16.mxu0 0
    %2396 = vmatpush1.bf16.msra.mxu0 0
    %2397 = vmatprep.mubr.bf16.mxu0 0
    %2398 = vmatmul.mubr.bf16.gmra.mrb[0].mxu0 %v1467
    %v2399 = vpop.f32.mrb[0].mxu0
    %v2400 = vadd.f32 %v1508, %v2399
    %v2401 = vpop.f32.mrb[0].mxu0
    %v2402 = vadd.f32 %v1512, %v2401
    %v2403 = vpop.f32.mrb[0].mxu0
    %v2404 = vadd.f32 %v1508, %v2403
    %v2405 = vpop.f32.mrb[0].mxu0
    %v2406 = vadd.f32 %v1512, %v2405
    %2407 = vdwg.mxu0
    %2408 = vmatprep.subr.bf16.mxu0 %v1948
    %2409 = vmatpush1.bf16.msra.mxu0 %v1947
    %2410 = vmatprep.subr.bf16.mxu0 %v1964
    %2411 = vmatpush1.bf16.msra.mxu0 %v1963
    %2412 = vmatprep.subr.bf16.mxu0 %v1980
    %2413 = vmatpush1.bf16.msra.mxu0 %v1979
    %2414 = vmatprep.subr.bf16.mxu0 %v1996
    %2415 = vmatpush1.bf16.msra.mxu0 %v1995
    %2416 = vmatprep.subr.bf16.mxu0 %v2012
    %2417 = vmatpush1.bf16.msra.mxu0 %v2011
    %2418 = vmatprep.subr.bf16.mxu0 %v2028
    %2419 = vmatpush1.bf16.msra.mxu0 %v2027
    %2420 = vmatprep.subr.bf16.mxu0 %v2044
    %2421 = vmatpush1.bf16.msra.mxu0 %v2043
    %2422 = vmatprep.subr.bf16.mxu0 %v2060
    %2423 = vmatpush1.bf16.msra.mxu0 %v2059
    %2424 = vmatprep.subr.bf16.mxu0 0
    %2425 = vmatpush1.bf16.msra.mxu0 0
    %2426 = vmatprep.subr.bf16.mxu0 0
    %2427 = vmatpush1.bf16.msra.mxu0 0
    %2428 = vmatprep.subr.bf16.mxu0 0
    %2429 = vmatpush1.bf16.msra.mxu0 0
    %2430 = vmatprep.subr.bf16.mxu0 0
    %2431 = vmatpush1.bf16.msra.mxu0 0
    %2432 = vmatprep.subr.bf16.mxu0 0
    %2433 = vmatpush1.bf16.msra.mxu0 0
    %2434 = vmatprep.subr.bf16.mxu0 0
    %2435 = vmatpush1.bf16.msra.mxu0 0
    %2436 = vmatprep.subr.bf16.mxu0 0
    %2437 = vmatpush1.bf16.msra.mxu0 0
    %2438 = vmatprep.subr.bf16.mxu0 0
    %2439 = vmatpush1.bf16.msra.mxu0 0
    %2440 = vmatprep.mubr.bf16.mxu0 0
    %2441 = vmatmul.mubr.bf16.gmra.mrb[0].mxu0 %v1467
    %v2442 = vpop.f32.mrb[0].mxu0
    %v2443 = vadd.f32 %v1516, %v2442
    %v2444 = vpop.f32.mrb[0].mxu0
    %v2445 = vadd.f32 %v1520, %v2444
    %v2446 = vpop.f32.mrb[0].mxu0
    %v2447 = vadd.f32 %v1516, %v2446
    %v2448 = vpop.f32.mrb[0].mxu0
    %v2449 = vadd.f32 %v1520, %v2448
    %2450 = vdwg.mxu0
    %2451 = vmatprep.subr.bf16.mxu0 %v1950
    %2452 = vmatpush1.bf16.msra.mxu0 %v1949
    %2453 = vmatprep.subr.bf16.mxu0 %v1966
    %2454 = vmatpush1.bf16.msra.mxu0 %v1965
    %2455 = vmatprep.subr.bf16.mxu0 %v1982
    %2456 = vmatpush1.bf16.msra.mxu0 %v1981
    %2457 = vmatprep.subr.bf16.mxu0 %v1998
    %2458 = vmatpush1.bf16.msra.mxu0 %v1997
    %2459 = vmatprep.subr.bf16.mxu0 %v2014
    %2460 = vmatpush1.bf16.msra.mxu0 %v2013
    %2461 = vmatprep.subr.bf16.mxu0 %v2030
    %2462 = vmatpush1.bf16.msra.mxu0 %v2029
    %2463 = vmatprep.subr.bf16.mxu0 %v2046
    %2464 = vmatpush1.bf16.msra.mxu0 %v2045
    %2465 = vmatprep.subr.bf16.mxu0 %v2062
    %2466 = vmatpush1.bf16.msra.mxu0 %v2061
    %2467 = vmatprep.subr.bf16.mxu0 0
    %2468 = vmatpush1.bf16.msra.mxu0 0
    %2469 = vmatprep.subr.bf16.mxu0 0
    %2470 = vmatpush1.bf16.msra.mxu0 0
    %2471 = vmatprep.subr.bf16.mxu0 0
    %2472 = vmatpush1.bf16.msra.mxu0 0
    %2473 = vmatprep.subr.bf16.mxu0 0
    %2474 = vmatpush1.bf16.msra.mxu0 0
    %2475 = vmatprep.subr.bf16.mxu0 0
    %2476 = vmatpush1.bf16.msra.mxu0 0
    %2477 = vmatprep.subr.bf16.mxu0 0
    %2478 = vmatpush1.bf16.msra.mxu0 0
    %2479 = vmatprep.subr.bf16.mxu0 0
    %2480 = vmatpush1.bf16.msra.mxu0 0
    %2481 = vmatprep.subr.bf16.mxu0 0
    %2482 = vmatpush1.bf16.msra.mxu0 0
    %2483 = vmatprep.mubr.bf16.mxu0 0
    %2484 = vmatmul.mubr.bf16.gmra.mrb[0].mxu0 %v1467
    %v2485 = vpop.f32.mrb[0].mxu0
    %v2486 = vadd.f32 %v1524, %v2485
    %v2487 = vpop.f32.mrb[0].mxu0
    %v2488 = vadd.f32 %v1528, %v2487
    %v2489 = vpop.f32.mrb[0].mxu0
    %v2490 = vadd.f32 %v1524, %v2489
    %v2491 = vpop.f32.mrb[0].mxu0
    %v2492 = vadd.f32 %v1528, %v2491
    %2493 = vdwg.mxu0
    %2494 = vmatprep.subr.bf16.mxu0 %v1952
    %2495 = vmatpush1.bf16.msra.mxu0 %v1951
    %2496 = vmatprep.subr.bf16.mxu0 %v1968
    %2497 = vmatpush1.bf16.msra.mxu0 %v1967
    %2498 = vmatprep.subr.bf16.mxu0 %v1984
    %2499 = vmatpush1.bf16.msra.mxu0 %v1983
    %2500 = vmatprep.subr.bf16.mxu0 %v2000
    %2501 = vmatpush1.bf16.msra.mxu0 %v1999
    %2502 = vmatprep.subr.bf16.mxu0 %v2016
    %2503 = vmatpush1.bf16.msra.mxu0 %v2015
    %2504 = vmatprep.subr.bf16.mxu0 %v2032
    %2505 = vmatpush1.bf16.msra.mxu0 %v2031
    %2506 = vmatprep.subr.bf16.mxu0 %v2048
    %2507 = vmatpush1.bf16.msra.mxu0 %v2047
    %2508 = vmatprep.subr.bf16.mxu0 %v2064
    %2509 = vmatpush1.bf16.msra.mxu0 %v2063
    %2510 = vmatprep.subr.bf16.mxu0 0
    %2511 = vmatpush1.bf16.msra.mxu0 0
    %2512 = vmatprep.subr.bf16.mxu0 0
    %2513 = vmatpush1.bf16.msra.mxu0 0
    %2514 = vmatprep.subr.bf16.mxu0 0
    %2515 = vmatpush1.bf16.msra.mxu0 0
    %2516 = vmatprep.subr.bf16.mxu0 0
    %2517 = vmatpush1.bf16.msra.mxu0 0
    %2518 = vmatprep.subr.bf16.mxu0 0
    %2519 = vmatpush1.bf16.msra.mxu0 0
    %2520 = vmatprep.subr.bf16.mxu0 0
    %2521 = vmatpush1.bf16.msra.mxu0 0
    %2522 = vmatprep.subr.bf16.mxu0 0
    %2523 = vmatpush1.bf16.msra.mxu0 0
    %2524 = vmatprep.subr.bf16.mxu0 0
    %2525 = vmatpush1.bf16.msra.mxu0 0
    %2526 = vmatprep.mubr.bf16.mxu0 0
    %2527 = vmatmul.mubr.bf16.gmra.mrb[0].mxu0 %v1467
    %v2528 = vpop.f32.mrb[0].mxu0
    %v2529 = vadd.f32 %v1532, %v2528
    %v2530 = vpop.f32.mrb[0].mxu0
    %v2531 = vadd.f32 %v1536, %v2530
    %v2532 = vpop.f32.mrb[0].mxu0
    %v2533 = vadd.f32 %v1532, %v2532
    %v2534 = vpop.f32.mrb[0].mxu0
    %v2535 = vadd.f32 %v1536, %v2534
    %2536 = vdwg.mxu0
    %v2537 = vmax.f32 %v2228, 0.0
    %v2538 = vmax.f32 %v2230, 0.0
    %v2539 = vmax.f32 %v2271, 0.0
    %v2540 = vmax.f32 %v2273, 0.0
    %v2541 = vmax.f32 %v2314, 0.0
    %v2542 = vmax.f32 %v2316, 0.0
    %v2543 = vmax.f32 %v2357, 0.0
    %v2544 = vmax.f32 %v2359, 0.0
    %v2545 = vmax.f32 %v2400, 0.0
    %v2546 = vmax.f32 %v2402, 0.0
    %v2547 = vmax.f32 %v2443, 0.0
    %v2548 = vmax.f32 %v2445, 0.0
    %v2549 = vmax.f32 %v2486, 0.0
    %v2550 = vmax.f32 %v2488, 0.0
    %v2551 = vmax.f32 %v2529, 0.0
    %v2552 = vmax.f32 %v2531, 0.0
    %v2553 = vmax.f32 %v2232, 0.0
    %v2554 = vmax.f32 %v2234, 0.0
    %v2555 = vmax.f32 %v2275, 0.0
    %v2556 = vmax.f32 %v2277, 0.0
    %v2557 = vmax.f32 %v2318, 0.0
    %v2558 = vmax.f32 %v2320, 0.0
    %v2559 = vmax.f32 %v2361, 0.0
    %v2560 = vmax.f32 %v2363, 0.0
    %v2561 = vmax.f32 %v2404, 0.0
    %v2562 = vmax.f32 %v2406, 0.0
    %v2563 = vmax.f32 %v2447, 0.0
    %v2564 = vmax.f32 %v2449, 0.0
    %v2565 = vmax.f32 %v2490, 0.0
    %v2566 = vmax.f32 %v2492, 0.0
    %v2567 = vmax.f32 %v2533, 0.0
    %v2568 = vmax.f32 %v2535, 0.0
    %v2569 = vld [vmem:[#allocation12] sm:$0xf]
    %v2570 = vld [vmem:[#allocation12 + $0x4] sm:$0xf]
    %v2571 = vld [vmem:[#allocation12 + $0x8] sm:$0xf]
    %v2572 = vld [vmem:[#allocation12 + $0xc] sm:$0xf]
    %v2573 = vld [vmem:[#allocation12 + $0x10] sm:$0xf]
    %v2574 = vld [vmem:[#allocation12 + $0x14] sm:$0xf]
    %v2575 = vld [vmem:[#allocation12 + $0x18] sm:$0xf]
    %v2576 = vld [vmem:[#allocation12 + $0x1c] sm:$0xf]
    %v2577 = vld [vmem:[#allocation12 + $0x20] sm:$0xf]
    %v2578 = vld [vmem:[#allocation12 + $0x24] sm:$0xf]
    %v2579 = vld [vmem:[#allocation12 + $0x28] sm:$0xf]
    %v2580 = vld [vmem:[#allocation12 + $0x2c] sm:$0xf]
    %v2581 = vld [vmem:[#allocation12 + $0x30] sm:$0xf]
    %v2582 = vld [vmem:[#allocation12 + $0x34] sm:$0xf]
    %v2583 = vld [vmem:[#allocation12 + $0x38] sm:$0xf]
    %v2584 = vld [vmem:[#allocation12 + $0x3c] sm:$0xf]
    %v2585 = vld [vmem:[#allocation12 + $0x40] sm:$0xf]
    %v2586 = vld [vmem:[#allocation12 + $0x44] sm:$0xf]
    %v2587 = vld [vmem:[#allocation12 + $0x48] sm:$0xf]
    %v2588 = vld [vmem:[#allocation12 + $0x4c] sm:$0xf]
    %v2589 = vld [vmem:[#allocation12 + $0x50] sm:$0xf]
    %v2590 = vld [vmem:[#allocation12 + $0x54] sm:$0xf]
    %v2591 = vld [vmem:[#allocation12 + $0x58] sm:$0xf]
    %v2592 = vld [vmem:[#allocation12 + $0x5c] sm:$0xf]
    %v2593 = vld [vmem:[#allocation12 + $0x60] sm:$0xf]
    %v2594 = vld [vmem:[#allocation12 + $0x64] sm:$0xf]
    %v2595 = vld [vmem:[#allocation12 + $0x68] sm:$0xf]
    %v2596 = vld [vmem:[#allocation12 + $0x6c] sm:$0xf]
    %v2597 = vld [vmem:[#allocation12 + $0x70] sm:$0xf]
    %v2598 = vld [vmem:[#allocation12 + $0x74] sm:$0xf]
    %v2599 = vld [vmem:[#allocation12 + $0x78] sm:$0xf]
    %v2600 = vld [vmem:[#allocation12 + $0x7c] sm:$0xf]
    %v2601 = vld [vmem:[#allocation12 + $0x80] sm:$0xf]
    %v2602 = vld [vmem:[#allocation12 + $0x84] sm:$0xf]
    %v2603 = vld [vmem:[#allocation12 + $0x88] sm:$0xf]
    %v2604 = vld [vmem:[#allocation12 + $0x8c] sm:$0xf]
    %v2605 = vld [vmem:[#allocation12 + $0x90] sm:$0xf]
    %v2606 = vld [vmem:[#allocation12 + $0x94] sm:$0xf]
    %v2607 = vld [vmem:[#allocation12 + $0x98] sm:$0xf]
    %v2608 = vld [vmem:[#allocation12 + $0x9c] sm:$0xf]
    %v2609 = vld [vmem:[#allocation12 + $0xa0] sm:$0xf]
    %v2610 = vld [vmem:[#allocation12 + $0xa4] sm:$0xf]
    %v2611 = vld [vmem:[#allocation12 + $0xa8] sm:$0xf]
    %v2612 = vld [vmem:[#allocation12 + $0xac] sm:$0xf]
    %v2613 = vld [vmem:[#allocation12 + $0xb0] sm:$0xf]
    %v2614 = vld [vmem:[#allocation12 + $0xb4] sm:$0xf]
    %v2615 = vld [vmem:[#allocation12 + $0xb8] sm:$0xf]
    %v2616 = vld [vmem:[#allocation12 + $0xbc] sm:$0xf]
    %v2617 = vld [vmem:[#allocation12 + $0xc0] sm:$0xf]
    %v2618 = vld [vmem:[#allocation12 + $0xc4] sm:$0xf]
    %v2619 = vld [vmem:[#allocation12 + $0xc8] sm:$0xf]
    %v2620 = vld [vmem:[#allocation12 + $0xcc] sm:$0xf]
    %v2621 = vld [vmem:[#allocation12 + $0xd0] sm:$0xf]
    %v2622 = vld [vmem:[#allocation12 + $0xd4] sm:$0xf]
    %v2623 = vld [vmem:[#allocation12 + $0xd8] sm:$0xf]
    %v2624 = vld [vmem:[#allocation12 + $0xdc] sm:$0xf]
    %v2625 = vld [vmem:[#allocation12 + $0xe0] sm:$0xf]
    %v2626 = vld [vmem:[#allocation12 + $0xe4] sm:$0xf]
    %v2627 = vld [vmem:[#allocation12 + $0xe8] sm:$0xf]
    %v2628 = vld [vmem:[#allocation12 + $0xec] sm:$0xf]
    %v2629 = vld [vmem:[#allocation12 + $0xf0] sm:$0xf]
    %v2630 = vld [vmem:[#allocation12 + $0xf4] sm:$0xf]
    %v2631 = vld [vmem:[#allocation12 + $0xf8] sm:$0xf]
    %v2632 = vld [vmem:[#allocation12 + $0xfc] sm:$0xf]
    %v2633 = vld [vmem:[#allocation12 + $0x100] sm:$0xf]
    %v2634 = vld [vmem:[#allocation12 + $0x104] sm:$0xf]
    %v2635 = vld [vmem:[#allocation12 + $0x108] sm:$0xf]
    %v2636 = vld [vmem:[#allocation12 + $0x10c] sm:$0xf]
    %v2637 = vld [vmem:[#allocation12 + $0x110] sm:$0xf]
    %v2638 = vld [vmem:[#allocation12 + $0x114] sm:$0xf]
    %v2639 = vld [vmem:[#allocation12 + $0x118] sm:$0xf]
    %v2640 = vld [vmem:[#allocation12 + $0x11c] sm:$0xf]
    %v2641 = vld [vmem:[#allocation12 + $0x120] sm:$0xf]
    %v2642 = vld [vmem:[#allocation12 + $0x124] sm:$0xf]
    %v2643 = vld [vmem:[#allocation12 + $0x128] sm:$0xf]
    %v2644 = vld [vmem:[#allocation12 + $0x12c] sm:$0xf]
    %v2645 = vld [vmem:[#allocation12 + $0x130] sm:$0xf]
    %v2646 = vld [vmem:[#allocation12 + $0x134] sm:$0xf]
    %v2647 = vld [vmem:[#allocation12 + $0x138] sm:$0xf]
    %v2648 = vld [vmem:[#allocation12 + $0x13c] sm:$0xf]
    %v2649 = vld [vmem:[#allocation12 + $0x140] sm:$0xf]
    %v2650 = vld [vmem:[#allocation12 + $0x144] sm:$0xf]
    %v2651 = vld [vmem:[#allocation12 + $0x148] sm:$0xf]
    %v2652 = vld [vmem:[#allocation12 + $0x14c] sm:$0xf]
    %v2653 = vld [vmem:[#allocation12 + $0x150] sm:$0xf]
    %v2654 = vld [vmem:[#allocation12 + $0x154] sm:$0xf]
    %v2655 = vld [vmem:[#allocation12 + $0x158] sm:$0xf]
    %v2656 = vld [vmem:[#allocation12 + $0x15c] sm:$0xf]
    %v2657 = vld [vmem:[#allocation12 + $0x160] sm:$0xf]
    %v2658 = vld [vmem:[#allocation12 + $0x164] sm:$0xf]
    %v2659 = vld [vmem:[#allocation12 + $0x168] sm:$0xf]
    %v2660 = vld [vmem:[#allocation12 + $0x16c] sm:$0xf]
    %v2661 = vld [vmem:[#allocation12 + $0x170] sm:$0xf]
    %v2662 = vld [vmem:[#allocation12 + $0x174] sm:$0xf]
    %v2663 = vld [vmem:[#allocation12 + $0x178] sm:$0xf]
    %v2664 = vld [vmem:[#allocation12 + $0x17c] sm:$0xf]
    %v2665 = vld [vmem:[#allocation12 + $0x180] sm:$0xf]
    %v2666 = vld [vmem:[#allocation12 + $0x184] sm:$0xf]
    %v2667 = vld [vmem:[#allocation12 + $0x188] sm:$0xf]
    %v2668 = vld [vmem:[#allocation12 + $0x18c] sm:$0xf]
    %v2669 = vld [vmem:[#allocation12 + $0x190] sm:$0xf]
    %v2670 = vld [vmem:[#allocation12 + $0x194] sm:$0xf]
    %v2671 = vld [vmem:[#allocation12 + $0x198] sm:$0xf]
    %v2672 = vld [vmem:[#allocation12 + $0x19c] sm:$0xf]
    %v2673 = vld [vmem:[#allocation12 + $0x1a0] sm:$0xf]
    %v2674 = vld [vmem:[#allocation12 + $0x1a4] sm:$0xf]
    %v2675 = vld [vmem:[#allocation12 + $0x1a8] sm:$0xf]
    %v2676 = vld [vmem:[#allocation12 + $0x1ac] sm:$0xf]
    %v2677 = vld [vmem:[#allocation12 + $0x1b0] sm:$0xf]
    %v2678 = vld [vmem:[#allocation12 + $0x1b4] sm:$0xf]
    %v2679 = vld [vmem:[#allocation12 + $0x1b8] sm:$0xf]
    %v2680 = vld [vmem:[#allocation12 + $0x1bc] sm:$0xf]
    %v2681 = vld [vmem:[#allocation12 + $0x1c0] sm:$0xf]
    %v2682 = vld [vmem:[#allocation12 + $0x1c4] sm:$0xf]
    %v2683 = vld [vmem:[#allocation12 + $0x1c8] sm:$0xf]
    %v2684 = vld [vmem:[#allocation12 + $0x1cc] sm:$0xf]
    %v2685 = vld [vmem:[#allocation12 + $0x1d0] sm:$0xf]
    %v2686 = vld [vmem:[#allocation12 + $0x1d4] sm:$0xf]
    %v2687 = vld [vmem:[#allocation12 + $0x1d8] sm:$0xf]
    %v2688 = vld [vmem:[#allocation12 + $0x1dc] sm:$0xf]
    %v2689 = vld [vmem:[#allocation12 + $0x1e0] sm:$0xf]
    %v2690 = vld [vmem:[#allocation12 + $0x1e4] sm:$0xf]
    %v2691 = vld [vmem:[#allocation12 + $0x1e8] sm:$0xf]
    %v2692 = vld [vmem:[#allocation12 + $0x1ec] sm:$0xf]
    %v2693 = vld [vmem:[#allocation12 + $0x1f0] sm:$0xf]
    %v2694 = vld [vmem:[#allocation12 + $0x1f4] sm:$0xf]
    %v2695 = vld [vmem:[#allocation12 + $0x1f8] sm:$0xf]
    %v2696 = vld [vmem:[#allocation12 + $0x1fc] sm:$0xf]
    %v2697 = vld [vmem:[#allocation12 + $0x200] sm:$0xf]
    %v2698 = vld [vmem:[#allocation12 + $0x204] sm:$0xf]
    %v2699 = vld [vmem:[#allocation12 + $0x208] sm:$0xf]
    %v2700 = vld [vmem:[#allocation12 + $0x20c] sm:$0xf]
    %v2701 = vld [vmem:[#allocation12 + $0x210] sm:$0xf]
    %v2702 = vld [vmem:[#allocation12 + $0x214] sm:$0xf]
    %v2703 = vld [vmem:[#allocation12 + $0x218] sm:$0xf]
    %v2704 = vld [vmem:[#allocation12 + $0x21c] sm:$0xf]
    %v2705 = vld [vmem:[#allocation12 + $0x220] sm:$0xf]
    %v2706 = vld [vmem:[#allocation12 + $0x224] sm:$0xf]
    %v2707 = vld [vmem:[#allocation12 + $0x228] sm:$0xf]
    %v2708 = vld [vmem:[#allocation12 + $0x22c] sm:$0xf]
    %v2709 = vld [vmem:[#allocation12 + $0x230] sm:$0xf]
    %v2710 = vld [vmem:[#allocation12 + $0x234] sm:$0xf]
    %v2711 = vld [vmem:[#allocation12 + $0x238] sm:$0xf]
    %v2712 = vld [vmem:[#allocation12 + $0x23c] sm:$0xf]
    %v2713 = vld [vmem:[#allocation12 + $0x240] sm:$0xf]
    %v2714 = vld [vmem:[#allocation12 + $0x244] sm:$0xf]
    %v2715 = vld [vmem:[#allocation12 + $0x248] sm:$0xf]
    %v2716 = vld [vmem:[#allocation12 + $0x24c] sm:$0xf]
    %v2717 = vld [vmem:[#allocation12 + $0x250] sm:$0xf]
    %v2718 = vld [vmem:[#allocation12 + $0x254] sm:$0xf]
    %v2719 = vld [vmem:[#allocation12 + $0x258] sm:$0xf]
    %v2720 = vld [vmem:[#allocation12 + $0x25c] sm:$0xf]
    %v2721 = vld [vmem:[#allocation12 + $0x260] sm:$0xf]
    %v2722 = vld [vmem:[#allocation12 + $0x264] sm:$0xf]
    %v2723 = vld [vmem:[#allocation12 + $0x268] sm:$0xf]
    %v2724 = vld [vmem:[#allocation12 + $0x26c] sm:$0xf]
    %v2725 = vld [vmem:[#allocation12 + $0x270] sm:$0xf]
    %v2726 = vld [vmem:[#allocation12 + $0x274] sm:$0xf]
    %v2727 = vld [vmem:[#allocation12 + $0x278] sm:$0xf]
    %v2728 = vld [vmem:[#allocation12 + $0x27c] sm:$0xf]
    %v2729 = vld [vmem:[#allocation12 + $0x280] sm:$0xf]
    %v2730 = vld [vmem:[#allocation12 + $0x284] sm:$0xf]
    %v2731 = vld [vmem:[#allocation12 + $0x288] sm:$0xf]
    %v2732 = vld [vmem:[#allocation12 + $0x28c] sm:$0xf]
    %v2733 = vld [vmem:[#allocation12 + $0x290] sm:$0xf]
    %v2734 = vld [vmem:[#allocation12 + $0x294] sm:$0xf]
    %v2735 = vld [vmem:[#allocation12 + $0x298] sm:$0xf]
    %v2736 = vld [vmem:[#allocation12 + $0x29c] sm:$0xf]
    %v2737 = vld [vmem:[#allocation12 + $0x2a0] sm:$0xf]
    %v2738 = vld [vmem:[#allocation12 + $0x2a4] sm:$0xf]
    %v2739 = vld [vmem:[#allocation12 + $0x2a8] sm:$0xf]
    %v2740 = vld [vmem:[#allocation12 + $0x2ac] sm:$0xf]
    %v2741 = vld [vmem:[#allocation12 + $0x2b0] sm:$0xf]
    %v2742 = vld [vmem:[#allocation12 + $0x2b4] sm:$0xf]
    %v2743 = vld [vmem:[#allocation12 + $0x2b8] sm:$0xf]
    %v2744 = vld [vmem:[#allocation12 + $0x2bc] sm:$0xf]
    %v2745 = vld [vmem:[#allocation12 + $0x2c0] sm:$0xf]
    %v2746 = vld [vmem:[#allocation12 + $0x2c4] sm:$0xf]
    %v2747 = vld [vmem:[#allocation12 + $0x2c8] sm:$0xf]
    %v2748 = vld [vmem:[#allocation12 + $0x2cc] sm:$0xf]
    %v2749 = vld [vmem:[#allocation12 + $0x2d0] sm:$0xf]
    %v2750 = vld [vmem:[#allocation12 + $0x2d4] sm:$0xf]
    %v2751 = vld [vmem:[#allocation12 + $0x2d8] sm:$0xf]
    %v2752 = vld [vmem:[#allocation12 + $0x2dc] sm:$0xf]
    %v2753 = vld [vmem:[#allocation12 + $0x2e0] sm:$0xf]
    %v2754 = vld [vmem:[#allocation12 + $0x2e4] sm:$0xf]
    %v2755 = vld [vmem:[#allocation12 + $0x2e8] sm:$0xf]
    %v2756 = vld [vmem:[#allocation12 + $0x2ec] sm:$0xf]
    %v2757 = vld [vmem:[#allocation12 + $0x2f0] sm:$0xf]
    %v2758 = vld [vmem:[#allocation12 + $0x2f4] sm:$0xf]
    %v2759 = vld [vmem:[#allocation12 + $0x2f8] sm:$0xf]
    %v2760 = vld [vmem:[#allocation12 + $0x2fc] sm:$0xf]
    %v2761 = vld [vmem:[#allocation12 + $0x300] sm:$0xf]
    %v2762 = vld [vmem:[#allocation12 + $0x304] sm:$0xf]
    %v2763 = vld [vmem:[#allocation12 + $0x308] sm:$0xf]
    %v2764 = vld [vmem:[#allocation12 + $0x30c] sm:$0xf]
    %v2765 = vld [vmem:[#allocation12 + $0x310] sm:$0xf]
    %v2766 = vld [vmem:[#allocation12 + $0x314] sm:$0xf]
    %v2767 = vld [vmem:[#allocation12 + $0x318] sm:$0xf]
    %v2768 = vld [vmem:[#allocation12 + $0x31c] sm:$0xf]
    %v2769 = vld [vmem:[#allocation12 + $0x320] sm:$0xf]
    %v2770 = vld [vmem:[#allocation12 + $0x324] sm:$0xf]
    %v2771 = vld [vmem:[#allocation12 + $0x328] sm:$0xf]
    %v2772 = vld [vmem:[#allocation12 + $0x32c] sm:$0xf]
    %v2773 = vld [vmem:[#allocation12 + $0x330] sm:$0xf]
    %v2774 = vld [vmem:[#allocation12 + $0x334] sm:$0xf]
    %v2775 = vld [vmem:[#allocation12 + $0x338] sm:$0xf]
    %v2776 = vld [vmem:[#allocation12 + $0x33c] sm:$0xf]
    %v2777 = vld [vmem:[#allocation12 + $0x340] sm:$0xf]
    %v2778 = vld [vmem:[#allocation12 + $0x344] sm:$0xf]
    %v2779 = vld [vmem:[#allocation12 + $0x348] sm:$0xf]
    %v2780 = vld [vmem:[#allocation12 + $0x34c] sm:$0xf]
    %v2781 = vld [vmem:[#allocation12 + $0x350] sm:$0xf]
    %v2782 = vld [vmem:[#allocation12 + $0x354] sm:$0xf]
    %v2783 = vld [vmem:[#allocation12 + $0x358] sm:$0xf]
    %v2784 = vld [vmem:[#allocation12 + $0x35c] sm:$0xf]
    %v2785 = vld [vmem:[#allocation12 + $0x360] sm:$0xf]
    %v2786 = vld [vmem:[#allocation12 + $0x364] sm:$0xf]
    %v2787 = vld [vmem:[#allocation12 + $0x368] sm:$0xf]
    %v2788 = vld [vmem:[#allocation12 + $0x36c] sm:$0xf]
    %v2789 = vld [vmem:[#allocation12 + $0x370] sm:$0xf]
    %v2790 = vld [vmem:[#allocation12 + $0x374] sm:$0xf]
    %v2791 = vld [vmem:[#allocation12 + $0x378] sm:$0xf]
    %v2792 = vld [vmem:[#allocation12 + $0x37c] sm:$0xf]
    %v2793 = vld [vmem:[#allocation12 + $0x380] sm:$0xf]
    %v2794 = vld [vmem:[#allocation12 + $0x384] sm:$0xf]
    %v2795 = vld [vmem:[#allocation12 + $0x388] sm:$0xf]
    %v2796 = vld [vmem:[#allocation12 + $0x38c] sm:$0xf]
    %v2797 = vld [vmem:[#allocation12 + $0x390] sm:$0xf]
    %v2798 = vld [vmem:[#allocation12 + $0x394] sm:$0xf]
    %v2799 = vld [vmem:[#allocation12 + $0x398] sm:$0xf]
    %v2800 = vld [vmem:[#allocation12 + $0x39c] sm:$0xf]
    %v2801 = vld [vmem:[#allocation12 + $0x3a0] sm:$0xf]
    %v2802 = vld [vmem:[#allocation12 + $0x3a4] sm:$0xf]
    %v2803 = vld [vmem:[#allocation12 + $0x3a8] sm:$0xf]
    %v2804 = vld [vmem:[#allocation12 + $0x3ac] sm:$0xf]
    %v2805 = vld [vmem:[#allocation12 + $0x3b0] sm:$0xf]
    %v2806 = vld [vmem:[#allocation12 + $0x3b4] sm:$0xf]
    %v2807 = vld [vmem:[#allocation12 + $0x3b8] sm:$0xf]
    %v2808 = vld [vmem:[#allocation12 + $0x3bc] sm:$0xf]
    %v2809 = vld [vmem:[#allocation12 + $0x3c0] sm:$0xf]
    %v2810 = vld [vmem:[#allocation12 + $0x3c4] sm:$0xf]
    %v2811 = vld [vmem:[#allocation12 + $0x3c8] sm:$0xf]
    %v2812 = vld [vmem:[#allocation12 + $0x3cc] sm:$0xf]
    %v2813 = vld [vmem:[#allocation12 + $0x3d0] sm:$0xf]
    %v2814 = vld [vmem:[#allocation12 + $0x3d4] sm:$0xf]
    %v2815 = vld [vmem:[#allocation12 + $0x3d8] sm:$0xf]
    %v2816 = vld [vmem:[#allocation12 + $0x3dc] sm:$0xf]
    %v2817 = vld [vmem:[#allocation12 + $0x3e0] sm:$0xf]
    %v2818 = vld [vmem:[#allocation12 + $0x3e4] sm:$0xf]
    %v2819 = vld [vmem:[#allocation12 + $0x3e8] sm:$0xf]
    %v2820 = vld [vmem:[#allocation12 + $0x3ec] sm:$0xf]
    %v2821 = vld [vmem:[#allocation12 + $0x3f0] sm:$0xf]
    %v2822 = vld [vmem:[#allocation12 + $0x3f4] sm:$0xf]
    %v2823 = vld [vmem:[#allocation12 + $0x3f8] sm:$0xf]
    %v2824 = vld [vmem:[#allocation12 + $0x3fc] sm:$0xf]
    %v2825 = vpack.c.bf16 %v2553, %v2537
    %v2826 = vpack.c.bf16 %v2554, %v2538
    %v2827 = vpack.c.bf16 %v2555, %v2539
    %v2828 = vpack.c.bf16 %v2556, %v2540
    %v2829 = vpack.c.bf16 %v2557, %v2541
    %v2830 = vpack.c.bf16 %v2558, %v2542
    %v2831 = vpack.c.bf16 %v2559, %v2543
    %v2832 = vpack.c.bf16 %v2560, %v2544
    %v2833 = vpack.c.bf16 %v2561, %v2545
    %v2834 = vpack.c.bf16 %v2562, %v2546
    %v2835 = vpack.c.bf16 %v2563, %v2547
    %v2836 = vpack.c.bf16 %v2564, %v2548
    %v2837 = vpack.c.bf16 %v2565, %v2549
    %v2838 = vpack.c.bf16 %v2566, %v2550
    %v2839 = vpack.c.bf16 %v2567, %v2551
    %v2840 = vpack.c.bf16 %v2568, %v2552
    %v2841 = vlaneseq
    %v2842 = vshrl.u32 %v2841, 7
    %v2843 = vsub.s32 7, %v2842
    %v2844 = vrot.slane %v141, %v2843
    %v3101 = vunpack.c.l.b16 %v2569
    %v3102 = vunpack.c.l.b16 %v2570
    %v3103 = vunpack.c.l.b16 %v2571
    %v3104 = vunpack.c.l.b16 %v2572
    %v3105 = vunpack.c.l.b16 %v2573
    %v3106 = vunpack.c.l.b16 %v2574
    %v3107 = vunpack.c.l.b16 %v2575
    %v3108 = vunpack.c.l.b16 %v2576
    %v3109 = vunpack.c.l.b16 %v2577
    %v3110 = vunpack.c.l.b16 %v2578
    %v3111 = vunpack.c.l.b16 %v2579
    %v3112 = vunpack.c.l.b16 %v2580
    %v3113 = vunpack.c.l.b16 %v2581
    %v3114 = vunpack.c.l.b16 %v2582
    %v3115 = vunpack.c.l.b16 %v2583
    %v3116 = vunpack.c.l.b16 %v2584
    %v3117 = vunpack.c.l.b16 %v2585
    %v3118 = vunpack.c.l.b16 %v2586
    %v3119 = vunpack.c.l.b16 %v2587
    %v3120 = vunpack.c.l.b16 %v2588
    %v3121 = vunpack.c.l.b16 %v2589
    %v3122 = vunpack.c.l.b16 %v2590
    %v3123 = vunpack.c.l.b16 %v2591
    %v3124 = vunpack.c.l.b16 %v2592
    %v3125 = vunpack.c.l.b16 %v2593
    %v3126 = vunpack.c.l.b16 %v2594
    %v3127 = vunpack.c.l.b16 %v2595
    %v3128 = vunpack.c.l.b16 %v2596
    %v3129 = vunpack.c.l.b16 %v2597
    %v3130 = vunpack.c.l.b16 %v2598
    %v3131 = vunpack.c.l.b16 %v2599
    %v3132 = vunpack.c.l.b16 %v2600
    %v3133 = vunpack.c.l.b16 %v2601
    %v3134 = vunpack.c.l.b16 %v2602
    %v3135 = vunpack.c.l.b16 %v2603
    %v3136 = vunpack.c.l.b16 %v2604
    %v3137 = vunpack.c.l.b16 %v2605
    %v3138 = vunpack.c.l.b16 %v2606
    %v3139 = vunpack.c.l.b16 %v2607
    %v3140 = vunpack.c.l.b16 %v2608
    %v3141 = vunpack.c.l.b16 %v2609
    %v3142 = vunpack.c.l.b16 %v2610
    %v3143 = vunpack.c.l.b16 %v2611
    %v3144 = vunpack.c.l.b16 %v2612
    %v3145 = vunpack.c.l.b16 %v2613
    %v3146 = vunpack.c.l.b16 %v2614
    %v3147 = vunpack.c.l.b16 %v2615
    %v3148 = vunpack.c.l.b16 %v2616
    %v3149 = vunpack.c.l.b16 %v2617
    %v3150 = vunpack.c.l.b16 %v2618
    %v3151 = vunpack.c.l.b16 %v2619
    %v3152 = vunpack.c.l.b16 %v2620
    %v3153 = vunpack.c.l.b16 %v2621
    %v3154 = vunpack.c.l.b16 %v2622
    %v3155 = vunpack.c.l.b16 %v2623
    %v3156 = vunpack.c.l.b16 %v2624
    %v3157 = vunpack.c.l.b16 %v2625
    %v3158 = vunpack.c.l.b16 %v2626
    %v3159 = vunpack.c.l.b16 %v2627
    %v3160 = vunpack.c.l.b16 %v2628
    %v3161 = vunpack.c.l.b16 %v2629
    %v3162 = vunpack.c.l.b16 %v2630
    %v3163 = vunpack.c.l.b16 %v2631
    %v3164 = vunpack.c.l.b16 %v2632
    %v3165 = vunpack.c.l.b16 %v2633
    %v3166 = vunpack.c.l.b16 %v2634
    %v3167 = vunpack.c.l.b16 %v2635
    %v3168 = vunpack.c.l.b16 %v2636
    %v3169 = vunpack.c.l.b16 %v2637
    %v3170 = vunpack.c.l.b16 %v2638
    %v3171 = vunpack.c.l.b16 %v2639
    %v3172 = vunpack.c.l.b16 %v2640
    %v3173 = vunpack.c.l.b16 %v2641
    %v3174 = vunpack.c.l.b16 %v2642
    %v3175 = vunpack.c.l.b16 %v2643
    %v3176 = vunpack.c.l.b16 %v2644
    %v3177 = vunpack.c.l.b16 %v2645
    %v3178 = vunpack.c.l.b16 %v2646
    %v3179 = vunpack.c.l.b16 %v2647
    %v3180 = vunpack.c.l.b16 %v2648
    %v3181 = vunpack.c.l.b16 %v2649
    %v3182 = vunpack.c.l.b16 %v2650
    %v3183 = vunpack.c.l.b16 %v2651
    %v3184 = vunpack.c.l.b16 %v2652
    %v3185 = vunpack.c.l.b16 %v2653
    %v3186 = vunpack.c.l.b16 %v2654
    %v3187 = vunpack.c.l.b16 %v2655
    %v3188 = vunpack.c.l.b16 %v2656
    %v3189 = vunpack.c.l.b16 %v2657
    %v3190 = vunpack.c.l.b16 %v2658
    %v3191 = vunpack.c.l.b16 %v2659
    %v3192 = vunpack.c.l.b16 %v2660
    %v3193 = vunpack.c.l.b16 %v2661
    %v3194 = vunpack.c.l.b16 %v2662
    %v3195 = vunpack.c.l.b16 %v2663
    %v3196 = vunpack.c.l.b16 %v2664
    %v3197 = vunpack.c.l.b16 %v2665
    %v3198 = vunpack.c.l.b16 %v2666
    %v3199 = vunpack.c.l.b16 %v2667
    %v3200 = vunpack.c.l.b16 %v2668
    %v3201 = vunpack.c.l.b16 %v2669
    %v3202 = vunpack.c.l.b16 %v2670
    %v3203 = vunpack.c.l.b16 %v2671
    %v3204 = vunpack.c.l.b16 %v2672
    %v3205 = vunpack.c.l.b16 %v2673
    %v3206 = vunpack.c.l.b16 %v2674
    %v3207 = vunpack.c.l.b16 %v2675
    %v3208 = vunpack.c.l.b16 %v2676
    %v3209 = vunpack.c.l.b16 %v2677
    %v3210 = vunpack.c.l.b16 %v2678
    %v3211 = vunpack.c.l.b16 %v2679
    %v3212 = vunpack.c.l.b16 %v2680
    %v3213 = vunpack.c.l.b16 %v2681
    %v3214 = vunpack.c.l.b16 %v2682
    %v3215 = vunpack.c.l.b16 %v2683
    %v3216 = vunpack.c.l.b16 %v2684
    %v3217 = vunpack.c.l.b16 %v2685
    %v3218 = vunpack.c.l.b16 %v2686
    %v3219 = vunpack.c.l.b16 %v2687
    %v3220 = vunpack.c.l.b16 %v2688
    %v3221 = vunpack.c.l.b16 %v2689
    %v3222 = vunpack.c.l.b16 %v2690
    %v3223 = vunpack.c.l.b16 %v2691
    %v3224 = vunpack.c.l.b16 %v2692
    %v3225 = vunpack.c.l.b16 %v2693
    %v3226 = vunpack.c.l.b16 %v2694
    %v3227 = vunpack.c.l.b16 %v2695
    %v3228 = vunpack.c.l.b16 %v2696
    %v3229 = vunpack.c.l.b16 %v2697
    %v3230 = vunpack.c.l.b16 %v2698
    %v3231 = vunpack.c.l.b16 %v2699
    %v3232 = vunpack.c.l.b16 %v2700
    %v3233 = vunpack.c.l.b16 %v2701
    %v3234 = vunpack.c.l.b16 %v2702
    %v3235 = vunpack.c.l.b16 %v2703
    %v3236 = vunpack.c.l.b16 %v2704
    %v3237 = vunpack.c.l.b16 %v2705
    %v3238 = vunpack.c.l.b16 %v2706
    %v3239 = vunpack.c.l.b16 %v2707
    %v3240 = vunpack.c.l.b16 %v2708
    %v3241 = vunpack.c.l.b16 %v2709
    %v3242 = vunpack.c.l.b16 %v2710
    %v3243 = vunpack.c.l.b16 %v2711
    %v3244 = vunpack.c.l.b16 %v2712
    %v3245 = vunpack.c.l.b16 %v2713
    %v3246 = vunpack.c.l.b16 %v2714
    %v3247 = vunpack.c.l.b16 %v2715
    %v3248 = vunpack.c.l.b16 %v2716
    %v3249 = vunpack.c.l.b16 %v2717
    %v3250 = vunpack.c.l.b16 %v2718
    %v3251 = vunpack.c.l.b16 %v2719
    %v3252 = vunpack.c.l.b16 %v2720
    %v3253 = vunpack.c.l.b16 %v2721
    %v3254 = vunpack.c.l.b16 %v2722
    %v3255 = vunpack.c.l.b16 %v2723
    %v3256 = vunpack.c.l.b16 %v2724
    %v3257 = vunpack.c.l.b16 %v2725
    %v3258 = vunpack.c.l.b16 %v2726
    %v3259 = vunpack.c.l.b16 %v2727
    %v3260 = vunpack.c.l.b16 %v2728
    %v3261 = vunpack.c.l.b16 %v2729
    %v3262 = vunpack.c.l.b16 %v2730
    %v3263 = vunpack.c.l.b16 %v2731
    %v3264 = vunpack.c.l.b16 %v2732
    %v3265 = vunpack.c.l.b16 %v2733
    %v3266 = vunpack.c.l.b16 %v2734
    %v3267 = vunpack.c.l.b16 %v2735
    %v3268 = vunpack.c.l.b16 %v2736
    %v3269 = vunpack.c.l.b16 %v2737
    %v3270 = vunpack.c.l.b16 %v2738
    %v3271 = vunpack.c.l.b16 %v2739
    %v3272 = vunpack.c.l.b16 %v2740
    %v3273 = vunpack.c.l.b16 %v2741
    %v3274 = vunpack.c.l.b16 %v2742
    %v3275 = vunpack.c.l.b16 %v2743
    %v3276 = vunpack.c.l.b16 %v2744
    %v3277 = vunpack.c.l.b16 %v2745
    %v3278 = vunpack.c.l.b16 %v2746
    %v3279 = vunpack.c.l.b16 %v2747
    %v3280 = vunpack.c.l.b16 %v2748
    %v3281 = vunpack.c.l.b16 %v2749
    %v3282 = vunpack.c.l.b16 %v2750
    %v3283 = vunpack.c.l.b16 %v2751
    %v3284 = vunpack.c.l.b16 %v2752
    %v3285 = vunpack.c.l.b16 %v2753
    %v3286 = vunpack.c.l.b16 %v2754
    %v3287 = vunpack.c.l.b16 %v2755
    %v3288 = vunpack.c.l.b16 %v2756
    %v3289 = vunpack.c.l.b16 %v2757
    %v3290 = vunpack.c.l.b16 %v2758
    %v3291 = vunpack.c.l.b16 %v2759
    %v3292 = vunpack.c.l.b16 %v2760
    %v3293 = vunpack.c.l.b16 %v2761
    %v3294 = vunpack.c.l.b16 %v2762
    %v3295 = vunpack.c.l.b16 %v2763
    %v3296 = vunpack.c.l.b16 %v2764
    %v3297 = vunpack.c.l.b16 %v2765
    %v3298 = vunpack.c.l.b16 %v2766
    %v3299 = vunpack.c.l.b16 %v2767
    %v3300 = vunpack.c.l.b16 %v2768
    %v3301 = vunpack.c.l.b16 %v2769
    %v3302 = vunpack.c.l.b16 %v2770
    %v3303 = vunpack.c.l.b16 %v2771
    %v3304 = vunpack.c.l.b16 %v2772
    %v3305 = vunpack.c.l.b16 %v2773
    %v3306 = vunpack.c.l.b16 %v2774
    %v3307 = vunpack.c.l.b16 %v2775
    %v3308 = vunpack.c.l.b16 %v2776
    %v3309 = vunpack.c.l.b16 %v2777
    %v3310 = vunpack.c.l.b16 %v2778
    %v3311 = vunpack.c.l.b16 %v2779
    %v3312 = vunpack.c.l.b16 %v2780
    %v3313 = vunpack.c.l.b16 %v2781
    %v3314 = vunpack.c.l.b16 %v2782
    %v3315 = vunpack.c.l.b16 %v2783
    %v3316 = vunpack.c.l.b16 %v2784
    %v3317 = vunpack.c.l.b16 %v2785
    %v3318 = vunpack.c.l.b16 %v2786
    %v3319 = vunpack.c.l.b16 %v2787
    %v3320 = vunpack.c.l.b16 %v2788
    %v3321 = vunpack.c.l.b16 %v2789
    %v3322 = vunpack.c.l.b16 %v2790
    %v3323 = vunpack.c.l.b16 %v2791
    %v3324 = vunpack.c.l.b16 %v2792
    %v3325 = vunpack.c.l.b16 %v2793
    %v3326 = vunpack.c.l.b16 %v2794
    %v3327 = vunpack.c.l.b16 %v2795
    %v3328 = vunpack.c.l.b16 %v2796
    %v3329 = vunpack.c.l.b16 %v2797
    %v3330 = vunpack.c.l.b16 %v2798
    %v3331 = vunpack.c.l.b16 %v2799
    %v3332 = vunpack.c.l.b16 %v2800
    %v3333 = vunpack.c.l.b16 %v2801
    %v3334 = vunpack.c.l.b16 %v2802
    %v3335 = vunpack.c.l.b16 %v2803
    %v3336 = vunpack.c.l.b16 %v2804
    %v3337 = vunpack.c.l.b16 %v2805
    %v3338 = vunpack.c.l.b16 %v2806
    %v3339 = vunpack.c.l.b16 %v2807
    %v3340 = vunpack.c.l.b16 %v2808
    %v3341 = vunpack.c.l.b16 %v2809
    %v3342 = vunpack.c.l.b16 %v2810
    %v3343 = vunpack.c.l.b16 %v2811
    %v3344 = vunpack.c.l.b16 %v2812
    %v3345 = vunpack.c.l.b16 %v2813
    %v3346 = vunpack.c.l.b16 %v2814
    %v3347 = vunpack.c.l.b16 %v2815
    %v3348 = vunpack.c.l.b16 %v2816
    %v3349 = vunpack.c.l.b16 %v2817
    %v3350 = vunpack.c.l.b16 %v2818
    %v3351 = vunpack.c.l.b16 %v2819
    %v3352 = vunpack.c.l.b16 %v2820
    %v3353 = vunpack.c.l.b16 %v2821
    %v3354 = vunpack.c.l.b16 %v2822
    %v3355 = vunpack.c.l.b16 %v2823
    %v3356 = vunpack.c.l.b16 %v2824
    %v3357 = vpack.c.b16 %v3102, %v3101
    %v3358 = vpack.c.b16 %v3104, %v3103
    %v3359 = vpack.c.b16 %v3106, %v3105
    %v3360 = vpack.c.b16 %v3108, %v3107
    %v3361 = vpack.c.b16 %v3110, %v3109
    %v3362 = vpack.c.b16 %v3112, %v3111
    %v3363 = vpack.c.b16 %v3114, %v3113
    %v3364 = vpack.c.b16 %v3116, %v3115
    %v3365 = vpack.c.b16 %v3118, %v3117
    %v3366 = vpack.c.b16 %v3120, %v3119
    %v3367 = vpack.c.b16 %v3122, %v3121
    %v3368 = vpack.c.b16 %v3124, %v3123
    %v3369 = vpack.c.b16 %v3126, %v3125
    %v3370 = vpack.c.b16 %v3128, %v3127
    %v3371 = vpack.c.b16 %v3130, %v3129
    %v3372 = vpack.c.b16 %v3132, %v3131
    %v3373 = vpack.c.b16 %v3134, %v3133
    %v3374 = vpack.c.b16 %v3136, %v3135
    %v3375 = vpack.c.b16 %v3138, %v3137
    %v3376 = vpack.c.b16 %v3140, %v3139
    %v3377 = vpack.c.b16 %v3142, %v3141
    %v3378 = vpack.c.b16 %v3144, %v3143
    %v3379 = vpack.c.b16 %v3146, %v3145
    %v3380 = vpack.c.b16 %v3148, %v3147
    %v3381 = vpack.c.b16 %v3150, %v3149
    %v3382 = vpack.c.b16 %v3152, %v3151
    %v3383 = vpack.c.b16 %v3154, %v3153
    %v3384 = vpack.c.b16 %v3156, %v3155
    %v3385 = vpack.c.b16 %v3158, %v3157
    %v3386 = vpack.c.b16 %v3160, %v3159
    %v3387 = vpack.c.b16 %v3162, %v3161
    %v3388 = vpack.c.b16 %v3164, %v3163
    %v3389 = vpack.c.b16 %v3166, %v3165
    %v3390 = vpack.c.b16 %v3168, %v3167
    %v3391 = vpack.c.b16 %v3170, %v3169
    %v3392 = vpack.c.b16 %v3172, %v3171
    %v3393 = vpack.c.b16 %v3174, %v3173
    %v3394 = vpack.c.b16 %v3176, %v3175
    %v3395 = vpack.c.b16 %v3178, %v3177
    %v3396 = vpack.c.b16 %v3180, %v3179
    %v3397 = vpack.c.b16 %v3182, %v3181
    %v3398 = vpack.c.b16 %v3184, %v3183
    %v3399 = vpack.c.b16 %v3186, %v3185
    %v3400 = vpack.c.b16 %v3188, %v3187
    %v3401 = vpack.c.b16 %v3190, %v3189
    %v3402 = vpack.c.b16 %v3192, %v3191
    %v3403 = vpack.c.b16 %v3194, %v3193
    %v3404 = vpack.c.b16 %v3196, %v3195
    %v3405 = vpack.c.b16 %v3198, %v3197
    %v3406 = vpack.c.b16 %v3200, %v3199
    %v3407 = vpack.c.b16 %v3202, %v3201
    %v3408 = vpack.c.b16 %v3204, %v3203
    %v3409 = vpack.c.b16 %v3206, %v3205
    %v3410 = vpack.c.b16 %v3208, %v3207
    %v3411 = vpack.c.b16 %v3210, %v3209
    %v3412 = vpack.c.b16 %v3212, %v3211
    %v3413 = vpack.c.b16 %v3214, %v3213
    %v3414 = vpack.c.b16 %v3216, %v3215
    %v3415 = vpack.c.b16 %v3218, %v3217
    %v3416 = vpack.c.b16 %v3220, %v3219
    %v3417 = vpack.c.b16 %v3222, %v3221
    %v3418 = vpack.c.b16 %v3224, %v3223
    %v3419 = vpack.c.b16 %v3226, %v3225
    %v3420 = vpack.c.b16 %v3228, %v3227
    %v3421 = vpack.c.b16 %v3230, %v3229
    %v3422 = vpack.c.b16 %v3232, %v3231
    %v3423 = vpack.c.b16 %v3234, %v3233
    %v3424 = vpack.c.b16 %v3236, %v3235
    %v3425 = vpack.c.b16 %v3238, %v3237
    %v3426 = vpack.c.b16 %v3240, %v3239
    %v3427 = vpack.c.b16 %v3242, %v3241
    %v3428 = vpack.c.b16 %v3244, %v3243
    %v3429 = vpack.c.b16 %v3246, %v3245
    %v3430 = vpack.c.b16 %v3248, %v3247
    %v3431 = vpack.c.b16 %v3250, %v3249
    %v3432 = vpack.c.b16 %v3252, %v3251
    %v3433 = vpack.c.b16 %v3254, %v3253
    %v3434 = vpack.c.b16 %v3256, %v3255
    %v3435 = vpack.c.b16 %v3258, %v3257
    %v3436 = vpack.c.b16 %v3260, %v3259
    %v3437 = vpack.c.b16 %v3262, %v3261
    %v3438 = vpack.c.b16 %v3264, %v3263
    %v3439 = vpack.c.b16 %v3266, %v3265
    %v3440 = vpack.c.b16 %v3268, %v3267
    %v3441 = vpack.c.b16 %v3270, %v3269
    %v3442 = vpack.c.b16 %v3272, %v3271
    %v3443 = vpack.c.b16 %v3274, %v3273
    %v3444 = vpack.c.b16 %v3276, %v3275
    %v3445 = vpack.c.b16 %v3278, %v3277
    %v3446 = vpack.c.b16 %v3280, %v3279
    %v3447 = vpack.c.b16 %v3282, %v3281
    %v3448 = vpack.c.b16 %v3284, %v3283
    %v3449 = vpack.c.b16 %v3286, %v3285
    %v3450 = vpack.c.b16 %v3288, %v3287
    %v3451 = vpack.c.b16 %v3290, %v3289
    %v3452 = vpack.c.b16 %v3292, %v3291
    %v3453 = vpack.c.b16 %v3294, %v3293
    %v3454 = vpack.c.b16 %v3296, %v3295
    %v3455 = vpack.c.b16 %v3298, %v3297
    %v3456 = vpack.c.b16 %v3300, %v3299
    %v3457 = vpack.c.b16 %v3302, %v3301
    %v3458 = vpack.c.b16 %v3304, %v3303
    %v3459 = vpack.c.b16 %v3306, %v3305
    %v3460 = vpack.c.b16 %v3308, %v3307
    %v3461 = vpack.c.b16 %v3310, %v3309
    %v3462 = vpack.c.b16 %v3312, %v3311
    %v3463 = vpack.c.b16 %v3314, %v3313
    %v3464 = vpack.c.b16 %v3316, %v3315
    %v3465 = vpack.c.b16 %v3318, %v3317
    %v3466 = vpack.c.b16 %v3320, %v3319
    %v3467 = vpack.c.b16 %v3322, %v3321
    %v3468 = vpack.c.b16 %v3324, %v3323
    %v3469 = vpack.c.b16 %v3326, %v3325
    %v3470 = vpack.c.b16 %v3328, %v3327
    %v3471 = vpack.c.b16 %v3330, %v3329
    %v3472 = vpack.c.b16 %v3332, %v3331
    %v3473 = vpack.c.b16 %v3334, %v3333
    %v3474 = vpack.c.b16 %v3336, %v3335
    %v3475 = vpack.c.b16 %v3338, %v3337
    %v3476 = vpack.c.b16 %v3340, %v3339
    %v3477 = vpack.c.b16 %v3342, %v3341
    %v3478 = vpack.c.b16 %v3344, %v3343
    %v3479 = vpack.c.b16 %v3346, %v3345
    %v3480 = vpack.c.b16 %v3348, %v3347
    %v3481 = vpack.c.b16 %v3350, %v3349
    %v3482 = vpack.c.b16 %v3352, %v3351
    %v3483 = vpack.c.b16 %v3354, %v3353
    %v3484 = vpack.c.b16 %v3356, %v3355
    %3613 = vmatprep.subr.bf16.mxu0 0
    %3614 = vmatpush1.bf16.msra.mxu0 %v3357
    %3615 = vmatprep.subr.bf16.mxu0 0
    %3616 = vmatpush1.bf16.msra.mxu0 %v3358
    %3617 = vmatprep.subr.bf16.mxu0 0
    %3618 = vmatpush1.bf16.msra.mxu0 %v3359
    %3619 = vmatprep.subr.bf16.mxu0 0
    %3620 = vmatpush1.bf16.msra.mxu0 %v3360
    %3621 = vmatprep.subr.bf16.mxu0 0
    %3622 = vmatpush1.bf16.msra.mxu0 %v3361
    %3623 = vmatprep.subr.bf16.mxu0 0
    %3624 = vmatpush1.bf16.msra.mxu0 %v3362
    %3625 = vmatprep.subr.bf16.mxu0 0
    %3626 = vmatpush1.bf16.msra.mxu0 %v3363
    %3627 = vmatprep.subr.bf16.mxu0 0
    %3628 = vmatpush1.bf16.msra.mxu0 %v3364
    %3629 = vmatprep.subr.bf16.mxu0 0
    %3630 = vmatpush1.bf16.msra.mxu0 %v3365
    %3631 = vmatprep.subr.bf16.mxu0 0
    %3632 = vmatpush1.bf16.msra.mxu0 %v3366
    %3633 = vmatprep.subr.bf16.mxu0 0
    %3634 = vmatpush1.bf16.msra.mxu0 %v3367
    %3635 = vmatprep.subr.bf16.mxu0 0
    %3636 = vmatpush1.bf16.msra.mxu0 %v3368
    %3637 = vmatprep.subr.bf16.mxu0 0
    %3638 = vmatpush1.bf16.msra.mxu0 %v3369
    %3639 = vmatprep.subr.bf16.mxu0 0
    %3640 = vmatpush1.bf16.msra.mxu0 %v3370
    %3641 = vmatprep.subr.bf16.mxu0 0
    %3642 = vmatpush1.bf16.msra.mxu0 %v3371
    %3643 = vmatprep.subr.bf16.mxu0 0
    %3644 = vmatpush1.bf16.msra.mxu0 %v3372
    %3645 = vmatprep.mubr.bf16.mxu0 %v2826
    %3646 = vmatmul.mubr.bf16.gmra.mrb[0].mxu0 %v2825
    %v3647 = vpop.f32.mrb[0].mxu0
    %v3648 = vadd.f32 %v2844, %v3647
    %v3649 = vpop.f32.mrb[0].mxu0
    %v3650 = vpop.f32.mrb[0].mxu0
    %v3651 = vadd.f32 %v2844, %v3650
    %v3652 = vpop.f32.mrb[0].mxu0
    %3653 = vdwg.mxu0
    %3654 = vmatprep.subr.bf16.mxu0 0
    %3655 = vmatpush1.bf16.msra.mxu0 %v3373
    %3656 = vmatprep.subr.bf16.mxu0 0
    %3657 = vmatpush1.bf16.msra.mxu0 %v3374
    %3658 = vmatprep.subr.bf16.mxu0 0
    %3659 = vmatpush1.bf16.msra.mxu0 %v3375
    %3660 = vmatprep.subr.bf16.mxu0 0
    %3661 = vmatpush1.bf16.msra.mxu0 %v3376
    %3662 = vmatprep.subr.bf16.mxu0 0
    %3663 = vmatpush1.bf16.msra.mxu0 %v3377
    %3664 = vmatprep.subr.bf16.mxu0 0
    %3665 = vmatpush1.bf16.msra.mxu0 %v3378
    %3666 = vmatprep.subr.bf16.mxu0 0
    %3667 = vmatpush1.bf16.msra.mxu0 %v3379
    %3668 = vmatprep.subr.bf16.mxu0 0
    %3669 = vmatpush1.bf16.msra.mxu0 %v3380
    %3670 = vmatprep.subr.bf16.mxu0 0
    %3671 = vmatpush1.bf16.msra.mxu0 %v3381
    %3672 = vmatprep.subr.bf16.mxu0 0
    %3673 = vmatpush1.bf16.msra.mxu0 %v3382
    %3674 = vmatprep.subr.bf16.mxu0 0
    %3675 = vmatpush1.bf16.msra.mxu0 %v3383
    %3676 = vmatprep.subr.bf16.mxu0 0
    %3677 = vmatpush1.bf16.msra.mxu0 %v3384
    %3678 = vmatprep.subr.bf16.mxu0 0
    %3679 = vmatpush1.bf16.msra.mxu0 %v3385
    %3680 = vmatprep.subr.bf16.mxu0 0
    %3681 = vmatpush1.bf16.msra.mxu0 %v3386
    %3682 = vmatprep.subr.bf16.mxu0 0
    %3683 = vmatpush1.bf16.msra.mxu0 %v3387
    %3684 = vmatprep.subr.bf16.mxu0 0
    %3685 = vmatpush1.bf16.msra.mxu0 %v3388
    %3686 = vmatprep.mubr.bf16.mxu0 %v2828
    %3687 = vmatmul.mubr.bf16.gmra.mrb[0].mxu0 %v2827
    %v3688 = vpop.f32.mrb[0].mxu0
    %v3689 = vadd.f32 %v3648, %v3688
    %v3690 = vpop.f32.mrb[0].mxu0
    %v3691 = vpop.f32.mrb[0].mxu0
    %v3692 = vadd.f32 %v3651, %v3691
    %v3693 = vpop.f32.mrb[0].mxu0
    %3694 = vdwg.mxu0
    %3695 = vmatprep.subr.bf16.mxu0 0
    %3696 = vmatpush1.bf16.msra.mxu0 %v3389
    %3697 = vmatprep.subr.bf16.mxu0 0
    %3698 = vmatpush1.bf16.msra.mxu0 %v3390
    %3699 = vmatprep.subr.bf16.mxu0 0
    %3700 = vmatpush1.bf16.msra.mxu0 %v3391
    %3701 = vmatprep.subr.bf16.mxu0 0
    %3702 = vmatpush1.bf16.msra.mxu0 %v3392
    %3703 = vmatprep.subr.bf16.mxu0 0
    %3704 = vmatpush1.bf16.msra.mxu0 %v3393
    %3705 = vmatprep.subr.bf16.mxu0 0
    %3706 = vmatpush1.bf16.msra.mxu0 %v3394
    %3707 = vmatprep.subr.bf16.mxu0 0
    %3708 = vmatpush1.bf16.msra.mxu0 %v3395
    %3709 = vmatprep.subr.bf16.mxu0 0
    %3710 = vmatpush1.bf16.msra.mxu0 %v3396
    %3711 = vmatprep.subr.bf16.mxu0 0
    %3712 = vmatpush1.bf16.msra.mxu0 %v3397
    %3713 = vmatprep.subr.bf16.mxu0 0
    %3714 = vmatpush1.bf16.msra.mxu0 %v3398
    %3715 = vmatprep.subr.bf16.mxu0 0
    %3716 = vmatpush1.bf16.msra.mxu0 %v3399
    %3717 = vmatprep.subr.bf16.mxu0 0
    %3718 = vmatpush1.bf16.msra.mxu0 %v3400
    %3719 = vmatprep.subr.bf16.mxu0 0
    %3720 = vmatpush1.bf16.msra.mxu0 %v3401
    %3721 = vmatprep.subr.bf16.mxu0 0
    %3722 = vmatpush1.bf16.msra.mxu0 %v3402
    %3723 = vmatprep.subr.bf16.mxu0 0
    %3724 = vmatpush1.bf16.msra.mxu0 %v3403
    %3725 = vmatprep.subr.bf16.mxu0 0
    %3726 = vmatpush1.bf16.msra.mxu0 %v3404
    %3727 = vmatprep.mubr.bf16.mxu0 %v2830
    %3728 = vmatmul.mubr.bf16.gmra.mrb[0].mxu0 %v2829
    %v3729 = vpop.f32.mrb[0].mxu0
    %v3730 = vadd.f32 %v3689, %v3729
    %v3731 = vpop.f32.mrb[0].mxu0
    %v3732 = vpop.f32.mrb[0].mxu0
    %v3733 = vadd.f32 %v3692, %v3732
    %v3734 = vpop.f32.mrb[0].mxu0
    %3735 = vdwg.mxu0
    %3736 = vmatprep.subr.bf16.mxu0 0
    %3737 = vmatpush1.bf16.msra.mxu0 %v3405
    %3738 = vmatprep.subr.bf16.mxu0 0
    %3739 = vmatpush1.bf16.msra.mxu0 %v3406
    %3740 = vmatprep.subr.bf16.mxu0 0
    %3741 = vmatpush1.bf16.msra.mxu0 %v3407
    %3742 = vmatprep.subr.bf16.mxu0 0
    %3743 = vmatpush1.bf16.msra.mxu0 %v3408
    %3744 = vmatprep.subr.bf16.mxu0 0
    %3745 = vmatpush1.bf16.msra.mxu0 %v3409
    %3746 = vmatprep.subr.bf16.mxu0 0
    %3747 = vmatpush1.bf16.msra.mxu0 %v3410
    %3748 = vmatprep.subr.bf16.mxu0 0
    %3749 = vmatpush1.bf16.msra.mxu0 %v3411
    %3750 = vmatprep.subr.bf16.mxu0 0
    %3751 = vmatpush1.bf16.msra.mxu0 %v3412
    %3752 = vmatprep.subr.bf16.mxu0 0
    %3753 = vmatpush1.bf16.msra.mxu0 %v3413
    %3754 = vmatprep.subr.bf16.mxu0 0
    %3755 = vmatpush1.bf16.msra.mxu0 %v3414
    %3756 = vmatprep.subr.bf16.mxu0 0
    %3757 = vmatpush1.bf16.msra.mxu0 %v3415
    %3758 = vmatprep.subr.bf16.mxu0 0
    %3759 = vmatpush1.bf16.msra.mxu0 %v3416
    %3760 = vmatprep.subr.bf16.mxu0 0
    %3761 = vmatpush1.bf16.msra.mxu0 %v3417
    %3762 = vmatprep.subr.bf16.mxu0 0
    %3763 = vmatpush1.bf16.msra.mxu0 %v3418
    %3764 = vmatprep.subr.bf16.mxu0 0
    %3765 = vmatpush1.bf16.msra.mxu0 %v3419
    %3766 = vmatprep.subr.bf16.mxu0 0
    %3767 = vmatpush1.bf16.msra.mxu0 %v3420
    %3768 = vmatprep.mubr.bf16.mxu0 %v2832
    %3769 = vmatmul.mubr.bf16.gmra.mrb[0].mxu0 %v2831
    %v3770 = vpop.f32.mrb[0].mxu0
    %v3771 = vadd.f32 %v3730, %v3770
    %v3772 = vpop.f32.mrb[0].mxu0
    %v3773 = vpop.f32.mrb[0].mxu0
    %v3774 = vadd.f32 %v3733, %v3773
    %v3775 = vpop.f32.mrb[0].mxu0
    %3776 = vdwg.mxu0
    %3777 = vmatprep.subr.bf16.mxu0 0
    %3778 = vmatpush1.bf16.msra.mxu0 %v3421
    %3779 = vmatprep.subr.bf16.mxu0 0
    %3780 = vmatpush1.bf16.msra.mxu0 %v3422
    %3781 = vmatprep.subr.bf16.mxu0 0
    %3782 = vmatpush1.bf16.msra.mxu0 %v3423
    %3783 = vmatprep.subr.bf16.mxu0 0
    %3784 = vmatpush1.bf16.msra.mxu0 %v3424
    %3785 = vmatprep.subr.bf16.mxu0 0
    %3786 = vmatpush1.bf16.msra.mxu0 %v3425
    %3787 = vmatprep.subr.bf16.mxu0 0
    %3788 = vmatpush1.bf16.msra.mxu0 %v3426
    %3789 = vmatprep.subr.bf16.mxu0 0
    %3790 = vmatpush1.bf16.msra.mxu0 %v3427
    %3791 = vmatprep.subr.bf16.mxu0 0
    %3792 = vmatpush1.bf16.msra.mxu0 %v3428
    %3793 = vmatprep.subr.bf16.mxu0 0
    %3794 = vmatpush1.bf16.msra.mxu0 %v3429
    %3795 = vmatprep.subr.bf16.mxu0 0
    %3796 = vmatpush1.bf16.msra.mxu0 %v3430
    %3797 = vmatprep.subr.bf16.mxu0 0
    %3798 = vmatpush1.bf16.msra.mxu0 %v3431
    %3799 = vmatprep.subr.bf16.mxu0 0
    %3800 = vmatpush1.bf16.msra.mxu0 %v3432
    %3801 = vmatprep.subr.bf16.mxu0 0
    %3802 = vmatpush1.bf16.msra.mxu0 %v3433
    %3803 = vmatprep.subr.bf16.mxu0 0
    %3804 = vmatpush1.bf16.msra.mxu0 %v3434
    %3805 = vmatprep.subr.bf16.mxu0 0
    %3806 = vmatpush1.bf16.msra.mxu0 %v3435
    %3807 = vmatprep.subr.bf16.mxu0 0
    %3808 = vmatpush1.bf16.msra.mxu0 %v3436
    %3809 = vmatprep.mubr.bf16.mxu0 %v2834
    %3810 = vmatmul.mubr.bf16.gmra.mrb[0].mxu0 %v2833
    %v3811 = vpop.f32.mrb[0].mxu0
    %v3812 = vadd.f32 %v3771, %v3811
    %v3813 = vpop.f32.mrb[0].mxu0
    %v3814 = vpop.f32.mrb[0].mxu0
    %v3815 = vadd.f32 %v3774, %v3814
    %v3816 = vpop.f32.mrb[0].mxu0
    %3817 = vdwg.mxu0
    %3818 = vmatprep.subr.bf16.mxu0 0
    %3819 = vmatpush1.bf16.msra.mxu0 %v3437
    %3820 = vmatprep.subr.bf16.mxu0 0
    %3821 = vmatpush1.bf16.msra.mxu0 %v3438
    %3822 = vmatprep.subr.bf16.mxu0 0
    %3823 = vmatpush1.bf16.msra.mxu0 %v3439
    %3824 = vmatprep.subr.bf16.mxu0 0
    %3825 = vmatpush1.bf16.msra.mxu0 %v3440
    %3826 = vmatprep.subr.bf16.mxu0 0
    %3827 = vmatpush1.bf16.msra.mxu0 %v3441
    %3828 = vmatprep.subr.bf16.mxu0 0
    %3829 = vmatpush1.bf16.msra.mxu0 %v3442
    %3830 = vmatprep.subr.bf16.mxu0 0
    %3831 = vmatpush1.bf16.msra.mxu0 %v3443
    %3832 = vmatprep.subr.bf16.mxu0 0
    %3833 = vmatpush1.bf16.msra.mxu0 %v3444
    %3834 = vmatprep.subr.bf16.mxu0 0
    %3835 = vmatpush1.bf16.msra.mxu0 %v3445
    %3836 = vmatprep.subr.bf16.mxu0 0
    %3837 = vmatpush1.bf16.msra.mxu0 %v3446
    %3838 = vmatprep.subr.bf16.mxu0 0
    %3839 = vmatpush1.bf16.msra.mxu0 %v3447
    %3840 = vmatprep.subr.bf16.mxu0 0
    %3841 = vmatpush1.bf16.msra.mxu0 %v3448
    %3842 = vmatprep.subr.bf16.mxu0 0
    %3843 = vmatpush1.bf16.msra.mxu0 %v3449
    %3844 = vmatprep.subr.bf16.mxu0 0
    %3845 = vmatpush1.bf16.msra.mxu0 %v3450
    %3846 = vmatprep.subr.bf16.mxu0 0
    %3847 = vmatpush1.bf16.msra.mxu0 %v3451
    %3848 = vmatprep.subr.bf16.mxu0 0
    %3849 = vmatpush1.bf16.msra.mxu0 %v3452
    %3850 = vmatprep.mubr.bf16.mxu0 %v2836
    %3851 = vmatmul.mubr.bf16.gmra.mrb[0].mxu0 %v2835
    %v3852 = vpop.f32.mrb[0].mxu0
    %v3853 = vadd.f32 %v3812, %v3852
    %v3854 = vpop.f32.mrb[0].mxu0
    %v3855 = vpop.f32.mrb[0].mxu0
    %v3856 = vadd.f32 %v3815, %v3855
    %v3857 = vpop.f32.mrb[0].mxu0
    %3858 = vdwg.mxu0
    %3859 = vmatprep.subr.bf16.mxu0 0
    %3860 = vmatpush1.bf16.msra.mxu0 %v3453
    %3861 = vmatprep.subr.bf16.mxu0 0
    %3862 = vmatpush1.bf16.msra.mxu0 %v3454
    %3863 = vmatprep.subr.bf16.mxu0 0
    %3864 = vmatpush1.bf16.msra.mxu0 %v3455
    %3865 = vmatprep.subr.bf16.mxu0 0
    %3866 = vmatpush1.bf16.msra.mxu0 %v3456
    %3867 = vmatprep.subr.bf16.mxu0 0
    %3868 = vmatpush1.bf16.msra.mxu0 %v3457
    %3869 = vmatprep.subr.bf16.mxu0 0
    %3870 = vmatpush1.bf16.msra.mxu0 %v3458
    %3871 = vmatprep.subr.bf16.mxu0 0
    %3872 = vmatpush1.bf16.msra.mxu0 %v3459
    %3873 = vmatprep.subr.bf16.mxu0 0
    %3874 = vmatpush1.bf16.msra.mxu0 %v3460
    %3875 = vmatprep.subr.bf16.mxu0 0
    %3876 = vmatpush1.bf16.msra.mxu0 %v3461
    %3877 = vmatprep.subr.bf16.mxu0 0
    %3878 = vmatpush1.bf16.msra.mxu0 %v3462
    %3879 = vmatprep.subr.bf16.mxu0 0
    %3880 = vmatpush1.bf16.msra.mxu0 %v3463
    %3881 = vmatprep.subr.bf16.mxu0 0
    %3882 = vmatpush1.bf16.msra.mxu0 %v3464
    %3883 = vmatprep.subr.bf16.mxu0 0
    %3884 = vmatpush1.bf16.msra.mxu0 %v3465
    %3885 = vmatprep.subr.bf16.mxu0 0
    %3886 = vmatpush1.bf16.msra.mxu0 %v3466
    %3887 = vmatprep.subr.bf16.mxu0 0
    %3888 = vmatpush1.bf16.msra.mxu0 %v3467
    %3889 = vmatprep.subr.bf16.mxu0 0
    %3890 = vmatpush1.bf16.msra.mxu0 %v3468
    %3891 = vmatprep.mubr.bf16.mxu0 %v2838
    %3892 = vmatmul.mubr.bf16.gmra.mrb[0].mxu0 %v2837
    %v3893 = vpop.f32.mrb[0].mxu0
    %v3894 = vadd.f32 %v3853, %v3893
    %v3895 = vpop.f32.mrb[0].mxu0
    %v3896 = vpop.f32.mrb[0].mxu0
    %v3897 = vadd.f32 %v3856, %v3896
    %v3898 = vpop.f32.mrb[0].mxu0
    %3899 = vdwg.mxu0
    %3900 = vmatprep.subr.bf16.mxu0 0
    %3901 = vmatpush1.bf16.msra.mxu0 %v3469
    %3902 = vmatprep.subr.bf16.mxu0 0
    %3903 = vmatpush1.bf16.msra.mxu0 %v3470
    %3904 = vmatprep.subr.bf16.mxu0 0
    %3905 = vmatpush1.bf16.msra.mxu0 %v3471
    %3906 = vmatprep.subr.bf16.mxu0 0
    %3907 = vmatpush1.bf16.msra.mxu0 %v3472
    %3908 = vmatprep.subr.bf16.mxu0 0
    %3909 = vmatpush1.bf16.msra.mxu0 %v3473
    %3910 = vmatprep.subr.bf16.mxu0 0
    %3911 = vmatpush1.bf16.msra.mxu0 %v3474
    %3912 = vmatprep.subr.bf16.mxu0 0
    %3913 = vmatpush1.bf16.msra.mxu0 %v3475
    %3914 = vmatprep.subr.bf16.mxu0 0
    %3915 = vmatpush1.bf16.msra.mxu0 %v3476
    %3916 = vmatprep.subr.bf16.mxu0 0
    %3917 = vmatpush1.bf16.msra.mxu0 %v3477
    %3918 = vmatprep.subr.bf16.mxu0 0
    %3919 = vmatpush1.bf16.msra.mxu0 %v3478
    %3920 = vmatprep.subr.bf16.mxu0 0
    %3921 = vmatpush1.bf16.msra.mxu0 %v3479
    %3922 = vmatprep.subr.bf16.mxu0 0
    %3923 = vmatpush1.bf16.msra.mxu0 %v3480
    %3924 = vmatprep.subr.bf16.mxu0 0
    %3925 = vmatpush1.bf16.msra.mxu0 %v3481
    %3926 = vmatprep.subr.bf16.mxu0 0
    %3927 = vmatpush1.bf16.msra.mxu0 %v3482
    %3928 = vmatprep.subr.bf16.mxu0 0
    %3929 = vmatpush1.bf16.msra.mxu0 %v3483
    %3930 = vmatprep.subr.bf16.mxu0 0
    %3931 = vmatpush1.bf16.msra.mxu0 %v3484
    %3932 = vmatprep.mubr.bf16.mxu0 %v2840
    %3933 = vmatmul.mubr.bf16.gmra.mrb[0].mxu0 %v2839
    %v3934 = vpop.f32.mrb[0].mxu0
    %v3935 = vadd.f32 %v3894, %v3934
    %v3936 = vpop.f32.mrb[0].mxu0
    %v3937 = vpop.f32.mrb[0].mxu0
    %v3938 = vadd.f32 %v3897, %v3937
    %v3939 = vpop.f32.mrb[0].mxu0
    %3940 = vdwg.mxu0
    %v3941 = vadd.f32 %v1337, %v3935
    %v3942 = vadd.f32 %v1338, %v3938
    %3943 = vadd.xlane.f32.xlu0 %v3941
    %v3944 = vpop.xlane.xlu0 %3943
    %3945 = vadd.xlane.f32.xlu0 %v3942
    %v3946 = vpop.xlane.xlu0 %3945
    %v3947 = vmul.f32 %v3944, %v1308
    %v3948 = vmul.f32 %v3946, %v1308
    %v3949 = vsub.f32 %v3941, %v3947
    %v3950 = vsub.f32 %v3942, %v3948
    %v3951 = vmul.f32 %v3949, %v3949
    %v3952 = vmul.f32 %v3950, %v3950
    %3953 = vadd.xlane.f32.xlu0 %v3951
    %v3954 = vpop.xlane.xlu0 %3953
    %3955 = vadd.xlane.f32.xlu0 %v3952
    %v3956 = vpop.xlane.xlu0 %3955
    %v3957 = vmul.f32 %v3954, %v1308
    %v3958 = vmul.f32 %v3956, %v1308
    %v3959 = vadd.f32 %v3957, 1e-05
    %v3960 = vadd.f32 %v3958, 1e-05
    %v3961 = vrsqrt.pop %v3959
    %v3962 = vrsqrt.pop %v3960
    %v3963 = vmul.f32 %v3949, %v3961
    %v3964 = vmul.f32 %v3950, %v3962
    %v3965 = vlaneseq
    %v3966 = vshrl.u32 %v3965, 7
    %v3967 = vsub.s32 0, %v3966
    %v3968 = vrot.slane %v142, %v3967
    %v3969 = vmul.f32 %v3963, %v3968
    %v3970 = vmul.f32 %v3964, %v3968
    %v3971 = vlaneseq
    %v3972 = vshrl.u32 %v3971, 7
    %v3973 = vsub.s32 1, %v3972
    %v3974 = vrot.slane %v142, %v3973
    %v3975 = vadd.f32 %v3969, %v3974
    %v3976 = vadd.f32 %v3970, %v3974
    %s3977 = scalar_lea.vmem [#allocation8], 192
    %v3978 = vld [vmem:[%s3977] sm:$0xff]
    %v3979 = vld [vmem:[%s3977 + $0x8] sm:$0xf]
    %v3980 = vld [vmem:[%s3977 + $0xc] sm:$0xff]
    %v3981 = vld [vmem:[%s3977 + $0x14] sm:$0xf]
    %v3982 = vld [vmem:[%s3977 + $0x18] sm:$0xff]
    %v3983 = vld [vmem:[%s3977 + $0x20] sm:$0xf]
    %v3984 = vld [vmem:[%s3977 + $0x24] sm:$0xff]
    %v3985 = vld [vmem:[%s3977 + $0x2c] sm:$0xf]
    %v3986 = vld [vmem:[%s3977 + $0x30] sm:$0xff]
    %v3987 = vld [vmem:[%s3977 + $0x38] sm:$0xf]
    %v3988 = vld [vmem:[%s3977 + $0x3c] sm:$0xff]
    %v3989 = vld [vmem:[%s3977 + $0x44] sm:$0xf]
    %v3990 = vld [vmem:[%s3977 + $0x48] sm:$0xff]
    %v3991 = vld [vmem:[%s3977 + $0x50] sm:$0xf]
    %v3992 = vld [vmem:[%s3977 + $0x54] sm:$0xff]
    %v3993 = vld [vmem:[%s3977 + $0x5c] sm:$0xf]
    %v3994 = vld [vmem:[%s3977 + $0x60] sm:$0xff]
    %v3995 = vld [vmem:[%s3977 + $0x68] sm:$0xf]
    %v3996 = vld [vmem:[%s3977 + $0x6c] sm:$0xff]
    %v3997 = vld [vmem:[%s3977 + $0x74] sm:$0xf]
    %v3998 = vld [vmem:[%s3977 + $0x78] sm:$0xff]
    %v3999 = vld [vmem:[%s3977 + $0x80] sm:$0xf]
    %v4000 = vld [vmem:[%s3977 + $0x84] sm:$0xff]
    %v4001 = vld [vmem:[%s3977 + $0x8c] sm:$0xf]
    %v4002 = vld [vmem:[%s3977 + $0x90] sm:$0xff]
    %v4003 = vld [vmem:[%s3977 + $0x98] sm:$0xf]
    %v4004 = vld [vmem:[%s3977 + $0x9c] sm:$0xff]
    %v4005 = vld [vmem:[%s3977 + $0xa4] sm:$0xf]
    %v4006 = vld [vmem:[%s3977 + $0xa8] sm:$0xff]
    %v4007 = vld [vmem:[%s3977 + $0xb0] sm:$0xf]
    %v4008 = vld [vmem:[%s3977 + $0xb4] sm:$0xff]
    %v4009 = vld [vmem:[%s3977 + $0xbc] sm:$0xf]
    %v4010 = vpack.c.bf16 %v3976, %v3975
    %v4043 = vunpack.c.l.b16 %v3978
    %v4044 = vunpack.c.h.b16 %v3978
    %v4045 = vunpack.c.l.b16 %v3979
    %v4046 = vunpack.c.l.b16 %v3980
    %v4047 = vunpack.c.h.b16 %v3980
    %v4048 = vunpack.c.l.b16 %v3981
    %v4049 = vunpack.c.l.b16 %v3982
    %v4050 = vunpack.c.h.b16 %v3982
    %v4051 = vunpack.c.l.b16 %v3983
    %v4052 = vunpack.c.l.b16 %v3984
    %v4053 = vunpack.c.h.b16 %v3984
    %v4054 = vunpack.c.l.b16 %v3985
    %v4055 = vunpack.c.l.b16 %v3986
    %v4056 = vunpack.c.h.b16 %v3986
    %v4057 = vunpack.c.l.b16 %v3987
    %v4058 = vunpack.c.l.b16 %v3988
    %v4059 = vunpack.c.h.b16 %v3988
    %v4060 = vunpack.c.l.b16 %v3989
    %v4061 = vunpack.c.l.b16 %v3990
    %v4062 = vunpack.c.h.b16 %v3990
    %v4063 = vunpack.c.l.b16 %v3991
    %v4064 = vunpack.c.l.b16 %v3992
    %v4065 = vunpack.c.h.b16 %v3992
    %v4066 = vunpack.c.l.b16 %v3993
    %v4067 = vunpack.c.l.b16 %v3994
    %v4068 = vunpack.c.h.b16 %v3994
    %v4069 = vunpack.c.l.b16 %v3995
    %v4070 = vunpack.c.l.b16 %v3996
    %v4071 = vunpack.c.h.b16 %v3996
    %v4072 = vunpack.c.l.b16 %v3997
    %v4073 = vunpack.c.l.b16 %v3998
    %v4074 = vunpack.c.h.b16 %v3998
    %v4075 = vunpack.c.l.b16 %v3999
    %v4076 = vunpack.c.l.b16 %v4000
    %v4077 = vunpack.c.h.b16 %v4000
    %v4078 = vunpack.c.l.b16 %v4001
    %v4079 = vunpack.c.l.b16 %v4002
    %v4080 = vunpack.c.h.b16 %v4002
    %v4081 = vunpack.c.l.b16 %v4003
    %v4082 = vunpack.c.l.b16 %v4004
    %v4083 = vunpack.c.h.b16 %v4004
    %v4084 = vunpack.c.l.b16 %v4005
    %v4085 = vunpack.c.l.b16 %v4006
    %v4086 = vunpack.c.h.b16 %v4006
    %v4087 = vunpack.c.l.b16 %v4007
    %v4088 = vunpack.c.l.b16 %v4008
    %v4089 = vunpack.c.h.b16 %v4008
    %v4090 = vunpack.c.l.b16 %v4009
    %v4091 = vpack.c.b16 %v4046, %v4043
    %v4092 = vpack.c.b16 %v4047, %v4044
    %v4093 = vpack.c.b16 %v4048, %v4045
    %v4094 = vpack.c.b16 %v4052, %v4049
    %v4095 = vpack.c.b16 %v4053, %v4050
    %v4096 = vpack.c.b16 %v4054, %v4051
    %v4097 = vpack.c.b16 %v4058, %v4055
    %v4098 = vpack.c.b16 %v4059, %v4056
    %v4099 = vpack.c.b16 %v4060, %v4057
    %v4100 = vpack.c.b16 %v4064, %v4061
    %v4101 = vpack.c.b16 %v4065, %v4062
    %v4102 = vpack.c.b16 %v4066, %v4063
    %v4103 = vpack.c.b16 %v4070, %v4067
    %v4104 = vpack.c.b16 %v4071, %v4068
    %v4105 = vpack.c.b16 %v4072, %v4069
    %v4106 = vpack.c.b16 %v4076, %v4073
    %v4107 = vpack.c.b16 %v4077, %v4074
    %v4108 = vpack.c.b16 %v4078, %v4075
    %v4109 = vpack.c.b16 %v4082, %v4079
    %v4110 = vpack.c.b16 %v4083, %v4080
    %v4111 = vpack.c.b16 %v4084, %v4081
    %v4112 = vpack.c.b16 %v4088, %v4085
    %v4113 = vpack.c.b16 %v4089, %v4086
    %v4114 = vpack.c.b16 %v4090, %v4087
    %4139 = vmatprep.subr.bf16.mxu0 %v4092
    %4140 = vmatpush1.bf16.msra.mxu0 %v4091
    %4141 = vmatprep.subr.bf16.mxu0 %v4095
    %4142 = vmatpush1.bf16.msra.mxu0 %v4094
    %4143 = vmatprep.subr.bf16.mxu0 %v4098
    %4144 = vmatpush1.bf16.msra.mxu0 %v4097
    %4145 = vmatprep.subr.bf16.mxu0 %v4101
    %4146 = vmatpush1.bf16.msra.mxu0 %v4100
    %4147 = vmatprep.subr.bf16.mxu0 %v4104
    %4148 = vmatpush1.bf16.msra.mxu0 %v4103
    %4149 = vmatprep.subr.bf16.mxu0 %v4107
    %4150 = vmatpush1.bf16.msra.mxu0 %v4106
    %4151 = vmatprep.subr.bf16.mxu0 %v4110
    %4152 = vmatpush1.bf16.msra.mxu0 %v4109
    %4153 = vmatprep.subr.bf16.mxu0 %v4113
    %4154 = vmatpush1.bf16.msra.mxu0 %v4112
    %4155 = vmatprep.subr.bf16.mxu0 0
    %4156 = vmatpush1.bf16.msra.mxu0 0
    %4157 = vmatprep.subr.bf16.mxu0 0
    %4158 = vmatpush1.bf16.msra.mxu0 0
    %4159 = vmatprep.subr.bf16.mxu0 0
    %4160 = vmatpush1.bf16.msra.mxu0 0
    %4161 = vmatprep.subr.bf16.mxu0 0
    %4162 = vmatpush1.bf16.msra.mxu0 0
    %4163 = vmatprep.subr.bf16.mxu0 0
    %4164 = vmatpush1.bf16.msra.mxu0 0
    %4165 = vmatprep.subr.bf16.mxu0 0
    %4166 = vmatpush1.bf16.msra.mxu0 0
    %4167 = vmatprep.subr.bf16.mxu0 0
    %4168 = vmatpush1.bf16.msra.mxu0 0
    %4169 = vmatprep.subr.bf16.mxu0 0
    %4170 = vmatpush1.bf16.msra.mxu0 0
    %4171 = vmatprep.mubr.bf16.mxu0 0
    %4172 = vmatmul.mubr.bf16.gmra.mrb[0].mxu0 %v4010
    %v4173 = vpop.f32.mrb[0].mxu0
    %v4174 = vadd.f32 0.0, %v4173
    %v4175 = vpop.f32.mrb[0].mxu0
    %v4176 = vadd.f32 0.0, %v4175
    %v4177 = vpop.f32.mrb[0].mxu0
    %v4178 = vadd.f32 0.0, %v4177
    %v4179 = vpop.f32.mrb[0].mxu0
    %v4180 = vadd.f32 0.0, %v4179
    %4181 = vdwg.mxu0
    %4182 = vmatprep.subr.bf16.mxu0 0
    %4183 = vmatpush1.bf16.msra.mxu0 %v4093
    %4184 = vmatprep.subr.bf16.mxu0 0
    %4185 = vmatpush1.bf16.msra.mxu0 %v4096
    %4186 = vmatprep.subr.bf16.mxu0 0
    %4187 = vmatpush1.bf16.msra.mxu0 %v4099
    %4188 = vmatprep.subr.bf16.mxu0 0
    %4189 = vmatpush1.bf16.msra.mxu0 %v4102
    %4190 = vmatprep.subr.bf16.mxu0 0
    %4191 = vmatpush1.bf16.msra.mxu0 %v4105
    %4192 = vmatprep.subr.bf16.mxu0 0
    %4193 = vmatpush1.bf16.msra.mxu0 %v4108
    %4194 = vmatprep.subr.bf16.mxu0 0
    %4195 = vmatpush1.bf16.msra.mxu0 %v4111
    %4196 = vmatprep.subr.bf16.mxu0 0
    %4197 = vmatpush1.bf16.msra.mxu0 %v4114
    %4198 = vmatprep.subr.bf16.mxu0 0
    %4199 = vmatpush1.bf16.msra.mxu0 0
    %4200 = vmatprep.subr.bf16.mxu0 0
    %4201 = vmatpush1.bf16.msra.mxu0 0
    %4202 = vmatprep.subr.bf16.mxu0 0
    %4203 = vmatpush1.bf16.msra.mxu0 0
    %4204 = vmatprep.subr.bf16.mxu0 0
    %4205 = vmatpush1.bf16.msra.mxu0 0
    %4206 = vmatprep.subr.bf16.mxu0 0
    %4207 = vmatpush1.bf16.msra.mxu0 0
    %4208 = vmatprep.subr.bf16.mxu0 0
    %4209 = vmatpush1.bf16.msra.mxu0 0
    %4210 = vmatprep.subr.bf16.mxu0 0
    %4211 = vmatpush1.bf16.msra.mxu0 0
    %4212 = vmatprep.subr.bf16.mxu0 0
    %4213 = vmatpush1.bf16.msra.mxu0 0
    %4214 = vmatprep.mubr.bf16.mxu0 0
    %4215 = vmatmul.mubr.bf16.gmra.mrb[0].mxu0 %v4010
    %v4216 = vpop.f32.mrb[0].mxu0
    %v4217 = vadd.f32 0.0, %v4216
    %v4218 = vpop.f32.mrb[0].mxu0
    %v4219 = vpop.f32.mrb[0].mxu0
    %v4220 = vadd.f32 0.0, %v4219
    %v4221 = vpop.f32.mrb[0].mxu0
    %4222 = vdwg.mxu0
    %v4223 = vlaneseq
    %v4224 = vshrl.u32 %v4223, 7
    %v4225 = vsub.s32 2, %v4224
    %v4226 = vrot.slane %v142, %v4225
    %v4227 = vadd.f32 %v4174, %v4226
    %v4228 = vadd.f32 %v4178, %v4226
    %v4229 = vlaneseq
    %v4230 = vshrl.u32 %v4229, 7
    %v4231 = vsub.s32 3, %v4230
    %v4232 = vrot.slane %v142, %v4231
    %v4233 = vadd.f32 %v4176, %v4232
    %v4234 = vadd.f32 %v4180, %v4232
    %v4235 = vlaneseq
    %v4236 = vshrl.u32 %v4235, 7
    %v4237 = vsub.s32 4, %v4236
    %v4238 = vrot.slane %v142, %v4237
    %v4239 = vadd.f32 %v4217, %v4238
    %v4240 = vadd.f32 %v4220, %v4238
    %v4242 = vsel %vm519, %v4227, 0
    %v4245 = vsel %vm519, %v4233, 0
    %4247 = vmatprep.subr.mxu0 0.0
    %4248 = vmatpush1.xpose.msra.mxu0 %v4245
    %4249 = vmatprep.subr.mxu0 0.0
    %4250 = vmatpush1.xpose.msra.mxu0 0.0
    %4251 = vmatprep.subr.mxu0 0.0
    %4252 = vmatpush1.xpose.msra.mxu0 0.0
    %4253 = vmatprep.subr.mxu0 0.0
    %4254 = vmatpush1.xpose.msra.mxu0 0.0
    %4255 = vmatprep.subr.mxu0 0.0
    %4256 = vmatpush1.xpose.msra.mxu0 0.0
    %4257 = vmatprep.subr.mxu0 0.0
    %4258 = vmatpush1.xpose.msra.mxu0 0.0
    %4259 = vmatprep.subr.mxu0 0.0
    %4260 = vmatpush1.xpose.msra.mxu0 0.0
    %4261 = vmatprep.subr.mxu0 0.0
    %4262 = vmatpush1.xpose.msra.mxu0 0.0
    %4263 = vmatprep.subr.mxu0 0.0
    %4264 = vmatpush1.xpose.msra.mxu0 0.0
    %4265 = vmatprep.subr.mxu0 0.0
    %4266 = vmatpush1.xpose.msra.mxu0 0.0
    %4267 = vmatprep.subr.mxu0 0.0
    %4268 = vmatpush1.xpose.msra.mxu0 0.0
    %4269 = vmatprep.subr.mxu0 0.0
    %4270 = vmatpush1.xpose.msra.mxu0 0.0
    %4271 = vmatprep.subr.mxu0 0.0
    %4272 = vmatpush1.xpose.msra.mxu0 0.0
    %4273 = vmatprep.subr.mxu0 0.0
    %4274 = vmatpush1.xpose.msra.mxu0 0.0
    %4275 = vmatprep.subr.mxu0 0.0
    %4276 = vmatpush1.xpose.msra.mxu0 0.0
    %4277 = vmatprep.subr.mxu0 0.0
    %4278 = vmatpush1.xpose.msra.mxu0 0.0
    %4279 = vmatprep.subr.mxu0 0.0
    %4280 = vmatpush1.xpose.msra.mxu0 0.0
    %4281 = vmatprep.subr.mxu0 0.0
    %4282 = vmatpush1.xpose.msra.mxu0 0.0
    %4283 = vmatprep.subr.mxu0 0.0
    %4284 = vmatpush1.xpose.msra.mxu0 0.0
    %4285 = vmatprep.subr.mxu0 0.0
    %4286 = vmatpush1.xpose.msra.mxu0 0.0
    %4287 = vmatprep.subr.mxu0 0.0
    %4288 = vmatpush1.xpose.msra.mxu0 0.0
    %4289 = vmatprep.subr.mxu0 0.0
    %4290 = vmatpush1.xpose.msra.mxu0 0.0
    %4291 = vmatprep.subr.mxu0 0.0
    %4292 = vmatpush1.xpose.msra.mxu0 0.0
    %4293 = vmatprep.subr.mxu0 0.0
    %4294 = vmatpush1.xpose.msra.mxu0 0.0
    %4295 = vmatprep.subr.mxu0 0.0
    %4296 = vmatpush1.xpose.msra.mxu0 0.0
    %4297 = vmatprep.subr.mxu0 0.0
    %4298 = vmatpush1.xpose.msra.mxu0 0.0
    %4299 = vmatprep.subr.mxu0 0.0
    %4300 = vmatpush1.xpose.msra.mxu0 0.0
    %4301 = vmatprep.subr.mxu0 0.0
    %4302 = vmatpush1.xpose.msra.mxu0 0.0
    %4303 = vmatprep.subr.mxu0 0.0
    %4304 = vmatpush1.xpose.msra.mxu0 0.0
    %4305 = vmatprep.subr.mxu0 0.0
    %4306 = vmatpush1.xpose.msra.mxu0 0.0
    %4307 = vmatprep.subr.mxu0 0.0
    %4308 = vmatpush1.xpose.msra.mxu0 0.0
    %4309 = vmatprep.subr.mxu0 0.0
    %4310 = vmatpush1.xpose.msra.mxu0 0.0
    %4311 = vmatprep.mubr.f32.mxu0 0.0
    %4312 = vmatmul.mubr.f32.gmra.mrb[0].mxu0 %v4242
    %v4313 = vpop.f32.mrb[0].mxu0
    %v4314 = vadd.f32 0.0, %v4313
    %v4315 = vpop.f32.mrb[0].mxu0
    %4316 = vdwg.mxu0
    %v4317 = vmul.f32 %v4314, 0.125
    %v4318 = vsel %vm597, %v4317, -inf
    %4319 = vmax.xlane.f32.xlu0 %v4318
    %v4320 = vpop.xlane.xlu0 %4319
    %v4321 = vsub.f32 %v4317, %v4320
    %v4322 = vmul.f32 %v4321, 1.442695
    %v4323 = vpow.pop %v4322
    %v4324 = vsel %vm597, %v4323, 0.0
    %4325 = vadd.xlane.f32.xlu0 %v4324
    %v4326 = vpop.xlane.xlu0 %4325
    %v4327 = vrcp.pop %v4326
    %v4328 = vmul.f32 %v4323, %v4327
    %v4330 = vsel %vm597, %v4328, 0
    %4332 = vmatprep.subr.mxu0 0.0
    %4333 = vmatpush1.msra.mxu0 %v4239
    %4334 = vmatprep.subr.mxu0 0.0
    %4335 = vmatpush1.msra.mxu0 0.0
    %4336 = vmatprep.subr.mxu0 0.0
    %4337 = vmatpush1.msra.mxu0 0.0
    %4338 = vmatprep.subr.mxu0 0.0
    %4339 = vmatpush1.msra.mxu0 0.0
    %4340 = vmatprep.subr.mxu0 0.0
    %4341 = vmatpush1.msra.mxu0 0.0
    %4342 = vmatprep.subr.mxu0 0.0
    %4343 = vmatpush1.msra.mxu0 0.0
    %4344 = vmatprep.subr.mxu0 0.0
    %4345 = vmatpush1.msra.mxu0 0.0
    %4346 = vmatprep.subr.mxu0 0.0
    %4347 = vmatpush1.msra.mxu0 0.0
    %4348 = vmatprep.subr.mxu0 0.0
    %4349 = vmatpush1.msra.mxu0 0.0
    %4350 = vmatprep.subr.mxu0 0.0
    %4351 = vmatpush1.msra.mxu0 0.0
    %4352 = vmatprep.subr.mxu0 0.0
    %4353 = vmatpush1.msra.mxu0 0.0
    %4354 = vmatprep.subr.mxu0 0.0
    %4355 = vmatpush1.msra.mxu0 0.0
    %4356 = vmatprep.subr.mxu0 0.0
    %4357 = vmatpush1.msra.mxu0 0.0
    %4358 = vmatprep.subr.mxu0 0.0
    %4359 = vmatpush1.msra.mxu0 0.0
    %4360 = vmatprep.subr.mxu0 0.0
    %4361 = vmatpush1.msra.mxu0 0.0
    %4362 = vmatprep.subr.mxu0 0.0
    %4363 = vmatpush1.msra.mxu0 0.0
    %4364 = vmatprep.subr.mxu0 0.0
    %4365 = vmatpush1.msra.mxu0 0.0
    %4366 = vmatprep.subr.mxu0 0.0
    %4367 = vmatpush1.msra.mxu0 0.0
    %4368 = vmatprep.subr.mxu0 0.0
    %4369 = vmatpush1.msra.mxu0 0.0
    %4370 = vmatprep.subr.mxu0 0.0
    %4371 = vmatpush1.msra.mxu0 0.0
    %4372 = vmatprep.subr.mxu0 0.0
    %4373 = vmatpush1.msra.mxu0 0.0
    %4374 = vmatprep.subr.mxu0 0.0
    %4375 = vmatpush1.msra.mxu0 0.0
    %4376 = vmatprep.subr.mxu0 0.0
    %4377 = vmatpush1.msra.mxu0 0.0
    %4378 = vmatprep.subr.mxu0 0.0
    %4379 = vmatpush1.msra.mxu0 0.0
    %4380 = vmatprep.subr.mxu0 0.0
    %4381 = vmatpush1.msra.mxu0 0.0
    %4382 = vmatprep.subr.mxu0 0.0
    %4383 = vmatpush1.msra.mxu0 0.0
    %4384 = vmatprep.subr.mxu0 0.0
    %4385 = vmatpush1.msra.mxu0 0.0
    %4386 = vmatprep.subr.mxu0 0.0
    %4387 = vmatpush1.msra.mxu0 0.0
    %4388 = vmatprep.subr.mxu0 0.0
    %4389 = vmatpush1.msra.mxu0 0.0
    %4390 = vmatprep.subr.mxu0 0.0
    %4391 = vmatpush1.msra.mxu0 0.0
    %4392 = vmatprep.subr.mxu0 0.0
    %4393 = vmatpush1.msra.mxu0 0.0
    %4394 = vmatprep.subr.mxu0 0.0
    %4395 = vmatpush1.msra.mxu0 0.0
    %4396 = vmatprep.mubr.f32.mxu0 0.0
    %4397 = vmatmul.mubr.f32.gmra.mrb[0].mxu0 %v4330
    %v4398 = vpop.f32.mrb[0].mxu0
    %v4399 = vadd.f32 0.0, %v4398
    %v4400 = vpop.f32.mrb[0].mxu0
    %4401 = vdwg.mxu0
    %4402 = vst.msk [vmem:[#allocation2] sm:$0xff] %vm519, %v4399
    %4403 = vrot.lane.b32.xlu0 %v4227, 64
    %v4404 = vpop.permute.xlu0 %4403
    %4405 = vrot.lane.b32.xlu0 %v4233, 64
    %v4406 = vpop.permute.xlu0 %4405
    %v4407 = vsel %vm519, %v4404, 0
    %v4409 = vsel %vm519, %v4406, 0
    %4411 = vmatprep.subr.mxu0 0.0
    %4412 = vmatpush1.xpose.msra.mxu0 %v4409
    %4413 = vmatprep.subr.mxu0 0.0
    %4414 = vmatpush1.xpose.msra.mxu0 0.0
    %4415 = vmatprep.subr.mxu0 0.0
    %4416 = vmatpush1.xpose.msra.mxu0 0.0
    %4417 = vmatprep.subr.mxu0 0.0
    %4418 = vmatpush1.xpose.msra.mxu0 0.0
    %4419 = vmatprep.subr.mxu0 0.0
    %4420 = vmatpush1.xpose.msra.mxu0 0.0
    %4421 = vmatprep.subr.mxu0 0.0
    %4422 = vmatpush1.xpose.msra.mxu0 0.0
    %4423 = vmatprep.subr.mxu0 0.0
    %4424 = vmatpush1.xpose.msra.mxu0 0.0
    %4425 = vmatprep.subr.mxu0 0.0
    %4426 = vmatpush1.xpose.msra.mxu0 0.0
    %4427 = vmatprep.subr.mxu0 0.0
    %4428 = vmatpush1.xpose.msra.mxu0 0.0
    %4429 = vmatprep.subr.mxu0 0.0
    %4430 = vmatpush1.xpose.msra.mxu0 0.0
    %4431 = vmatprep.subr.mxu0 0.0
    %4432 = vmatpush1.xpose.msra.mxu0 0.0
    %4433 = vmatprep.subr.mxu0 0.0
    %4434 = vmatpush1.xpose.msra.mxu0 0.0
    %4435 = vmatprep.subr.mxu0 0.0
    %4436 = vmatpush1.xpose.msra.mxu0 0.0
    %4437 = vmatprep.subr.mxu0 0.0
    %4438 = vmatpush1.xpose.msra.mxu0 0.0
    %4439 = vmatprep.subr.mxu0 0.0
    %4440 = vmatpush1.xpose.msra.mxu0 0.0
    %4441 = vmatprep.subr.mxu0 0.0
    %4442 = vmatpush1.xpose.msra.mxu0 0.0
    %4443 = vmatprep.subr.mxu0 0.0
    %4444 = vmatpush1.xpose.msra.mxu0 0.0
    %4445 = vmatprep.subr.mxu0 0.0
    %4446 = vmatpush1.xpose.msra.mxu0 0.0
    %4447 = vmatprep.subr.mxu0 0.0
    %4448 = vmatpush1.xpose.msra.mxu0 0.0
    %4449 = vmatprep.subr.mxu0 0.0
    %4450 = vmatpush1.xpose.msra.mxu0 0.0
    %4451 = vmatprep.subr.mxu0 0.0
    %4452 = vmatpush1.xpose.msra.mxu0 0.0
    %4453 = vmatprep.subr.mxu0 0.0
    %4454 = vmatpush1.xpose.msra.mxu0 0.0
    %4455 = vmatprep.subr.mxu0 0.0
    %4456 = vmatpush1.xpose.msra.mxu0 0.0
    %4457 = vmatprep.subr.mxu0 0.0
    %4458 = vmatpush1.xpose.msra.mxu0 0.0
    %4459 = vmatprep.subr.mxu0 0.0
    %4460 = vmatpush1.xpose.msra.mxu0 0.0
    %4461 = vmatprep.subr.mxu0 0.0
    %4462 = vmatpush1.xpose.msra.mxu0 0.0
    %4463 = vmatprep.subr.mxu0 0.0
    %4464 = vmatpush1.xpose.msra.mxu0 0.0
    %4465 = vmatprep.subr.mxu0 0.0
    %4466 = vmatpush1.xpose.msra.mxu0 0.0
    %4467 = vmatprep.subr.mxu0 0.0
    %4468 = vmatpush1.xpose.msra.mxu0 0.0
    %4469 = vmatprep.subr.mxu0 0.0
    %4470 = vmatpush1.xpose.msra.mxu0 0.0
    %4471 = vmatprep.subr.mxu0 0.0
    %4472 = vmatpush1.xpose.msra.mxu0 0.0
    %4473 = vmatprep.subr.mxu0 0.0
    %4474 = vmatpush1.xpose.msra.mxu0 0.0
    %4475 = vmatprep.mubr.f32.mxu0 0.0
    %4476 = vmatmul.mubr.f32.gmra.mrb[0].mxu0 %v4407
    %v4477 = vpop.f32.mrb[0].mxu0
    %v4478 = vadd.f32 0.0, %v4477
    %v4479 = vpop.f32.mrb[0].mxu0
    %4480 = vdwg.mxu0
    %v4481 = vmul.f32 %v4478, 0.125
    %v4482 = vsel %vm597, %v4481, -inf
    %4483 = vmax.xlane.f32.xlu0 %v4482
    %v4484 = vpop.xlane.xlu0 %4483
    %v4485 = vsub.f32 %v4481, %v4484
    %v4486 = vmul.f32 %v4485, 1.442695
    %v4487 = vpow.pop %v4486
    %v4488 = vsel %vm597, %v4487, 0.0
    %4489 = vadd.xlane.f32.xlu0 %v4488
    %v4490 = vpop.xlane.xlu0 %4489
    %v4491 = vrcp.pop %v4490
    %v4492 = vmul.f32 %v4487, %v4491
    %4494 = vrot.lane.b32.xlu0 %v4239, 64
    %v4495 = vpop.permute.xlu0 %4494
    %v4498 = vsel %vm597, %v4492, 0
    %4500 = vmatprep.subr.mxu0 0.0
    %4501 = vmatpush1.msra.mxu0 %v4495
    %4502 = vmatprep.subr.mxu0 0.0
    %4503 = vmatpush1.msra.mxu0 0.0
    %4504 = vmatprep.subr.mxu0 0.0
    %4505 = vmatpush1.msra.mxu0 0.0
    %4506 = vmatprep.subr.mxu0 0.0
    %4507 = vmatpush1.msra.mxu0 0.0
    %4508 = vmatprep.subr.mxu0 0.0
    %4509 = vmatpush1.msra.mxu0 0.0
    %4510 = vmatprep.subr.mxu0 0.0
    %4511 = vmatpush1.msra.mxu0 0.0
    %4512 = vmatprep.subr.mxu0 0.0
    %4513 = vmatpush1.msra.mxu0 0.0
    %4514 = vmatprep.subr.mxu0 0.0
    %4515 = vmatpush1.msra.mxu0 0.0
    %4516 = vmatprep.subr.mxu0 0.0
    %4517 = vmatpush1.msra.mxu0 0.0
    %4518 = vmatprep.subr.mxu0 0.0
    %4519 = vmatpush1.msra.mxu0 0.0
    %4520 = vmatprep.subr.mxu0 0.0
    %4521 = vmatpush1.msra.mxu0 0.0
    %4522 = vmatprep.subr.mxu0 0.0
    %4523 = vmatpush1.msra.mxu0 0.0
    %4524 = vmatprep.subr.mxu0 0.0
    %4525 = vmatpush1.msra.mxu0 0.0
    %4526 = vmatprep.subr.mxu0 0.0
    %4527 = vmatpush1.msra.mxu0 0.0
    %4528 = vmatprep.subr.mxu0 0.0
    %4529 = vmatpush1.msra.mxu0 0.0
    %4530 = vmatprep.subr.mxu0 0.0
    %4531 = vmatpush1.msra.mxu0 0.0
    %4532 = vmatprep.subr.mxu0 0.0
    %4533 = vmatpush1.msra.mxu0 0.0
    %4534 = vmatprep.subr.mxu0 0.0
    %4535 = vmatpush1.msra.mxu0 0.0
    %4536 = vmatprep.subr.mxu0 0.0
    %4537 = vmatpush1.msra.mxu0 0.0
    %4538 = vmatprep.subr.mxu0 0.0
    %4539 = vmatpush1.msra.mxu0 0.0
    %4540 = vmatprep.subr.mxu0 0.0
    %4541 = vmatpush1.msra.mxu0 0.0
    %4542 = vmatprep.subr.mxu0 0.0
    %4543 = vmatpush1.msra.mxu0 0.0
    %4544 = vmatprep.subr.mxu0 0.0
    %4545 = vmatpush1.msra.mxu0 0.0
    %4546 = vmatprep.subr.mxu0 0.0
    %4547 = vmatpush1.msra.mxu0 0.0
    %4548 = vmatprep.subr.mxu0 0.0
    %4549 = vmatpush1.msra.mxu0 0.0
    %4550 = vmatprep.subr.mxu0 0.0
    %4551 = vmatpush1.msra.mxu0 0.0
    %4552 = vmatprep.subr.mxu0 0.0
    %4553 = vmatpush1.msra.mxu0 0.0
    %4554 = vmatprep.subr.mxu0 0.0
    %4555 = vmatpush1.msra.mxu0 0.0
    %4556 = vmatprep.subr.mxu0 0.0
    %4557 = vmatpush1.msra.mxu0 0.0
    %4558 = vmatprep.subr.mxu0 0.0
    %4559 = vmatpush1.msra.mxu0 0.0
    %4560 = vmatprep.subr.mxu0 0.0
    %4561 = vmatpush1.msra.mxu0 0.0
    %4562 = vmatprep.subr.mxu0 0.0
    %4563 = vmatpush1.msra.mxu0 0.0
    %4564 = vmatprep.mubr.f32.mxu0 0.0
    %4565 = vmatmul.mubr.f32.gmra.mrb[0].mxu0 %v4498
    %v4566 = vpop.f32.mrb[0].mxu0
    %v4567 = vadd.f32 0.0, %v4566
    %v4568 = vpop.f32.mrb[0].mxu0
    %4569 = vdwg.mxu0
    %4571 = vrot.lane.b32.xlu0 %v4567, 64
    %v4572 = vpop.permute.xlu0 %4571
    %4574 = vst.msk [vmem:[#allocation2] sm:$0xff] %vm854, %v4572
    %v4576 = vsel %vm519, %v4228, 0
    %v4579 = vsel %vm519, %v4234, 0
    %4581 = vmatprep.subr.mxu0 0.0
    %4582 = vmatpush1.xpose.msra.mxu0 %v4579
    %4583 = vmatprep.subr.mxu0 0.0
    %4584 = vmatpush1.xpose.msra.mxu0 0.0
    %4585 = vmatprep.subr.mxu0 0.0
    %4586 = vmatpush1.xpose.msra.mxu0 0.0
    %4587 = vmatprep.subr.mxu0 0.0
    %4588 = vmatpush1.xpose.msra.mxu0 0.0
    %4589 = vmatprep.subr.mxu0 0.0
    %4590 = vmatpush1.xpose.msra.mxu0 0.0
    %4591 = vmatprep.subr.mxu0 0.0
    %4592 = vmatpush1.xpose.msra.mxu0 0.0
    %4593 = vmatprep.subr.mxu0 0.0
    %4594 = vmatpush1.xpose.msra.mxu0 0.0
    %4595 = vmatprep.subr.mxu0 0.0
    %4596 = vmatpush1.xpose.msra.mxu0 0.0
    %4597 = vmatprep.subr.mxu0 0.0
    %4598 = vmatpush1.xpose.msra.mxu0 0.0
    %4599 = vmatprep.subr.mxu0 0.0
    %4600 = vmatpush1.xpose.msra.mxu0 0.0
    %4601 = vmatprep.subr.mxu0 0.0
    %4602 = vmatpush1.xpose.msra.mxu0 0.0
    %4603 = vmatprep.subr.mxu0 0.0
    %4604 = vmatpush1.xpose.msra.mxu0 0.0
    %4605 = vmatprep.subr.mxu0 0.0
    %4606 = vmatpush1.xpose.msra.mxu0 0.0
    %4607 = vmatprep.subr.mxu0 0.0
    %4608 = vmatpush1.xpose.msra.mxu0 0.0
    %4609 = vmatprep.subr.mxu0 0.0
    %4610 = vmatpush1.xpose.msra.mxu0 0.0
    %4611 = vmatprep.subr.mxu0 0.0
    %4612 = vmatpush1.xpose.msra.mxu0 0.0
    %4613 = vmatprep.subr.mxu0 0.0
    %4614 = vmatpush1.xpose.msra.mxu0 0.0
    %4615 = vmatprep.subr.mxu0 0.0
    %4616 = vmatpush1.xpose.msra.mxu0 0.0
    %4617 = vmatprep.subr.mxu0 0.0
    %4618 = vmatpush1.xpose.msra.mxu0 0.0
    %4619 = vmatprep.subr.mxu0 0.0
    %4620 = vmatpush1.xpose.msra.mxu0 0.0
    %4621 = vmatprep.subr.mxu0 0.0
    %4622 = vmatpush1.xpose.msra.mxu0 0.0
    %4623 = vmatprep.subr.mxu0 0.0
    %4624 = vmatpush1.xpose.msra.mxu0 0.0
    %4625 = vmatprep.subr.mxu0 0.0
    %4626 = vmatpush1.xpose.msra.mxu0 0.0
    %4627 = vmatprep.subr.mxu0 0.0
    %4628 = vmatpush1.xpose.msra.mxu0 0.0
    %4629 = vmatprep.subr.mxu0 0.0
    %4630 = vmatpush1.xpose.msra.mxu0 0.0
    %4631 = vmatprep.subr.mxu0 0.0
    %4632 = vmatpush1.xpose.msra.mxu0 0.0
    %4633 = vmatprep.subr.mxu0 0.0
    %4634 = vmatpush1.xpose.msra.mxu0 0.0
    %4635 = vmatprep.subr.mxu0 0.0
    %4636 = vmatpush1.xpose.msra.mxu0 0.0
    %4637 = vmatprep.subr.mxu0 0.0
    %4638 = vmatpush1.xpose.msra.mxu0 0.0
    %4639 = vmatprep.subr.mxu0 0.0
    %4640 = vmatpush1.xpose.msra.mxu0 0.0
    %4641 = vmatprep.subr.mxu0 0.0
    %4642 = vmatpush1.xpose.msra.mxu0 0.0
    %4643 = vmatprep.subr.mxu0 0.0
    %4644 = vmatpush1.xpose.msra.mxu0 0.0
    %4645 = vmatprep.mubr.f32.mxu0 0.0
    %4646 = vmatmul.mubr.f32.gmra.mrb[0].mxu0 %v4576
    %v4647 = vpop.f32.mrb[0].mxu0
    %v4648 = vadd.f32 0.0, %v4647
    %v4649 = vpop.f32.mrb[0].mxu0
    %4650 = vdwg.mxu0
    %v4651 = vmul.f32 %v4648, 0.125
    %v4652 = vsel %vm597, %v4651, -inf
    %4653 = vmax.xlane.f32.xlu0 %v4652
    %v4654 = vpop.xlane.xlu0 %4653
    %v4655 = vsub.f32 %v4651, %v4654
    %v4656 = vmul.f32 %v4655, 1.442695
    %v4657 = vpow.pop %v4656
    %v4658 = vsel %vm597, %v4657, 0.0
    %4659 = vadd.xlane.f32.xlu0 %v4658
    %v4660 = vpop.xlane.xlu0 %4659
    %v4661 = vrcp.pop %v4660
    %v4662 = vmul.f32 %v4657, %v4661
    %v4664 = vsel %vm597, %v4662, 0
    %4666 = vmatprep.subr.mxu0 0.0
    %4667 = vmatpush1.msra.mxu0 %v4240
    %4668 = vmatprep.subr.mxu0 0.0
    %4669 = vmatpush1.msra.mxu0 0.0
    %4670 = vmatprep.subr.mxu0 0.0
    %4671 = vmatpush1.msra.mxu0 0.0
    %4672 = vmatprep.subr.mxu0 0.0
    %4673 = vmatpush1.msra.mxu0 0.0
    %4674 = vmatprep.subr.mxu0 0.0
    %4675 = vmatpush1.msra.mxu0 0.0
    %4676 = vmatprep.subr.mxu0 0.0
    %4677 = vmatpush1.msra.mxu0 0.0
    %4678 = vmatprep.subr.mxu0 0.0
    %4679 = vmatpush1.msra.mxu0 0.0
    %4680 = vmatprep.subr.mxu0 0.0
    %4681 = vmatpush1.msra.mxu0 0.0
    %4682 = vmatprep.subr.mxu0 0.0
    %4683 = vmatpush1.msra.mxu0 0.0
    %4684 = vmatprep.subr.mxu0 0.0
    %4685 = vmatpush1.msra.mxu0 0.0
    %4686 = vmatprep.subr.mxu0 0.0
    %4687 = vmatpush1.msra.mxu0 0.0
    %4688 = vmatprep.subr.mxu0 0.0
    %4689 = vmatpush1.msra.mxu0 0.0
    %4690 = vmatprep.subr.mxu0 0.0
    %4691 = vmatpush1.msra.mxu0 0.0
    %4692 = vmatprep.subr.mxu0 0.0
    %4693 = vmatpush1.msra.mxu0 0.0
    %4694 = vmatprep.subr.mxu0 0.0
    %4695 = vmatpush1.msra.mxu0 0.0
    %4696 = vmatprep.subr.mxu0 0.0
    %4697 = vmatpush1.msra.mxu0 0.0
    %4698 = vmatprep.subr.mxu0 0.0
    %4699 = vmatpush1.msra.mxu0 0.0
    %4700 = vmatprep.subr.mxu0 0.0
    %4701 = vmatpush1.msra.mxu0 0.0
    %4702 = vmatprep.subr.mxu0 0.0
    %4703 = vmatpush1.msra.mxu0 0.0
    %4704 = vmatprep.subr.mxu0 0.0
    %4705 = vmatpush1.msra.mxu0 0.0
    %4706 = vmatprep.subr.mxu0 0.0
    %4707 = vmatpush1.msra.mxu0 0.0
    %4708 = vmatprep.subr.mxu0 0.0
    %4709 = vmatpush1.msra.mxu0 0.0
    %4710 = vmatprep.subr.mxu0 0.0
    %4711 = vmatpush1.msra.mxu0 0.0
    %4712 = vmatprep.subr.mxu0 0.0
    %4713 = vmatpush1.msra.mxu0 0.0
    %4714 = vmatprep.subr.mxu0 0.0
    %4715 = vmatpush1.msra.mxu0 0.0
    %4716 = vmatprep.subr.mxu0 0.0
    %4717 = vmatpush1.msra.mxu0 0.0
    %4718 = vmatprep.subr.mxu0 0.0
    %4719 = vmatpush1.msra.mxu0 0.0
    %4720 = vmatprep.subr.mxu0 0.0
    %4721 = vmatpush1.msra.mxu0 0.0
    %4722 = vmatprep.subr.mxu0 0.0
    %4723 = vmatpush1.msra.mxu0 0.0
    %4724 = vmatprep.subr.mxu0 0.0
    %4725 = vmatpush1.msra.mxu0 0.0
    %4726 = vmatprep.subr.mxu0 0.0
    %4727 = vmatpush1.msra.mxu0 0.0
    %4728 = vmatprep.subr.mxu0 0.0
    %4729 = vmatpush1.msra.mxu0 0.0
    %4730 = vmatprep.mubr.f32.mxu0 0.0
    %4731 = vmatmul.mubr.f32.gmra.mrb[0].mxu0 %v4664
    %v4732 = vpop.f32.mrb[0].mxu0
    %v4733 = vadd.f32 0.0, %v4732
    %v4734 = vpop.f32.mrb[0].mxu0
    %4735 = vdwg.mxu0
    %4736 = vst.msk [vmem:[#allocation2 + $0x8] sm:$0xff] %vm519, %v4733
    %4737 = vrot.lane.b32.xlu0 %v4228, 64
    %v4738 = vpop.permute.xlu0 %4737
    %4739 = vrot.lane.b32.xlu0 %v4234, 64
    %v4740 = vpop.permute.xlu0 %4739
    %v4741 = vsel %vm519, %v4738, 0
    %v4743 = vsel %vm519, %v4740, 0
    %4745 = vmatprep.subr.mxu0 0.0
    %4746 = vmatpush1.xpose.msra.mxu0 %v4743
    %4747 = vmatprep.subr.mxu0 0.0
    %4748 = vmatpush1.xpose.msra.mxu0 0.0
    %4749 = vmatprep.subr.mxu0 0.0
    %4750 = vmatpush1.xpose.msra.mxu0 0.0
    %4751 = vmatprep.subr.mxu0 0.0
    %4752 = vmatpush1.xpose.msra.mxu0 0.0
    %4753 = vmatprep.subr.mxu0 0.0
    %4754 = vmatpush1.xpose.msra.mxu0 0.0
    %4755 = vmatprep.subr.mxu0 0.0
    %4756 = vmatpush1.xpose.msra.mxu0 0.0
    %4757 = vmatprep.subr.mxu0 0.0
    %4758 = vmatpush1.xpose.msra.mxu0 0.0
    %4759 = vmatprep.subr.mxu0 0.0
    %4760 = vmatpush1.xpose.msra.mxu0 0.0
    %4761 = vmatprep.subr.mxu0 0.0
    %4762 = vmatpush1.xpose.msra.mxu0 0.0
    %4763 = vmatprep.subr.mxu0 0.0
    %4764 = vmatpush1.xpose.msra.mxu0 0.0
    %4765 = vmatprep.subr.mxu0 0.0
    %4766 = vmatpush1.xpose.msra.mxu0 0.0
    %4767 = vmatprep.subr.mxu0 0.0
    %4768 = vmatpush1.xpose.msra.mxu0 0.0
    %4769 = vmatprep.subr.mxu0 0.0
    %4770 = vmatpush1.xpose.msra.mxu0 0.0
    %4771 = vmatprep.subr.mxu0 0.0
    %4772 = vmatpush1.xpose.msra.mxu0 0.0
    %4773 = vmatprep.subr.mxu0 0.0
    %4774 = vmatpush1.xpose.msra.mxu0 0.0
    %4775 = vmatprep.subr.mxu0 0.0
    %4776 = vmatpush1.xpose.msra.mxu0 0.0
    %4777 = vmatprep.subr.mxu0 0.0
    %4778 = vmatpush1.xpose.msra.mxu0 0.0
    %4779 = vmatprep.subr.mxu0 0.0
    %4780 = vmatpush1.xpose.msra.mxu0 0.0
    %4781 = vmatprep.subr.mxu0 0.0
    %4782 = vmatpush1.xpose.msra.mxu0 0.0
    %4783 = vmatprep.subr.mxu0 0.0
    %4784 = vmatpush1.xpose.msra.mxu0 0.0
    %4785 = vmatprep.subr.mxu0 0.0
    %4786 = vmatpush1.xpose.msra.mxu0 0.0
    %4787 = vmatprep.subr.mxu0 0.0
    %4788 = vmatpush1.xpose.msra.mxu0 0.0
    %4789 = vmatprep.subr.mxu0 0.0
    %4790 = vmatpush1.xpose.msra.mxu0 0.0
    %4791 = vmatprep.subr.mxu0 0.0
    %4792 = vmatpush1.xpose.msra.mxu0 0.0
    %4793 = vmatprep.subr.mxu0 0.0
    %4794 = vmatpush1.xpose.msra.mxu0 0.0
    %4795 = vmatprep.subr.mxu0 0.0
    %4796 = vmatpush1.xpose.msra.mxu0 0.0
    %4797 = vmatprep.subr.mxu0 0.0
    %4798 = vmatpush1.xpose.msra.mxu0 0.0
    %4799 = vmatprep.subr.mxu0 0.0
    %4800 = vmatpush1.xpose.msra.mxu0 0.0
    %4801 = vmatprep.subr.mxu0 0.0
    %4802 = vmatpush1.xpose.msra.mxu0 0.0
    %4803 = vmatprep.subr.mxu0 0.0
    %4804 = vmatpush1.xpose.msra.mxu0 0.0
    %4805 = vmatprep.subr.mxu0 0.0
    %4806 = vmatpush1.xpose.msra.mxu0 0.0
    %4807 = vmatprep.subr.mxu0 0.0
    %4808 = vmatpush1.xpose.msra.mxu0 0.0
    %4809 = vmatprep.mubr.f32.mxu0 0.0
    %4810 = vmatmul.mubr.f32.gmra.mrb[0].mxu0 %v4741
    %v4811 = vpop.f32.mrb[0].mxu0
    %v4812 = vadd.f32 0.0, %v4811
    %v4813 = vpop.f32.mrb[0].mxu0
    %4814 = vdwg.mxu0
    %v4815 = vmul.f32 %v4812, 0.125
    %v4816 = vsel %vm597, %v4815, -inf
    %4817 = vmax.xlane.f32.xlu0 %v4816
    %v4818 = vpop.xlane.xlu0 %4817
    %v4819 = vsub.f32 %v4815, %v4818
    %v4820 = vmul.f32 %v4819, 1.442695
    %v4821 = vpow.pop %v4820
    %v4822 = vsel %vm597, %v4821, 0.0
    %4823 = vadd.xlane.f32.xlu0 %v4822
    %v4824 = vpop.xlane.xlu0 %4823
    %v4825 = vrcp.pop %v4824
    %v4826 = vmul.f32 %v4821, %v4825
    %4828 = vrot.lane.b32.xlu0 %v4240, 64
    %v4829 = vpop.permute.xlu0 %4828
    %v4832 = vsel %vm597, %v4826, 0
    %4834 = vmatprep.subr.mxu0 0.0
    %4835 = vmatpush1.msra.mxu0 %v4829
    %4836 = vmatprep.subr.mxu0 0.0
    %4837 = vmatpush1.msra.mxu0 0.0
    %4838 = vmatprep.subr.mxu0 0.0
    %4839 = vmatpush1.msra.mxu0 0.0
    %4840 = vmatprep.subr.mxu0 0.0
    %4841 = vmatpush1.msra.mxu0 0.0
    %4842 = vmatprep.subr.mxu0 0.0
    %4843 = vmatpush1.msra.mxu0 0.0
    %4844 = vmatprep.subr.mxu0 0.0
    %4845 = vmatpush1.msra.mxu0 0.0
    %4846 = vmatprep.subr.mxu0 0.0
    %4847 = vmatpush1.msra.mxu0 0.0
    %4848 = vmatprep.subr.mxu0 0.0
    %4849 = vmatpush1.msra.mxu0 0.0
    %4850 = vmatprep.subr.mxu0 0.0
    %4851 = vmatpush1.msra.mxu0 0.0
    %4852 = vmatprep.subr.mxu0 0.0
    %4853 = vmatpush1.msra.mxu0 0.0
    %4854 = vmatprep.subr.mxu0 0.0
    %4855 = vmatpush1.msra.mxu0 0.0
    %4856 = vmatprep.subr.mxu0 0.0
    %4857 = vmatpush1.msra.mxu0 0.0
    %4858 = vmatprep.subr.mxu0 0.0
    %4859 = vmatpush1.msra.mxu0 0.0
    %4860 = vmatprep.subr.mxu0 0.0
    %4861 = vmatpush1.msra.mxu0 0.0
    %4862 = vmatprep.subr.mxu0 0.0
    %4863 = vmatpush1.msra.mxu0 0.0
    %4864 = vmatprep.subr.mxu0 0.0
    %4865 = vmatpush1.msra.mxu0 0.0
    %4866 = vmatprep.subr.mxu0 0.0
    %4867 = vmatpush1.msra.mxu0 0.0
    %4868 = vmatprep.subr.mxu0 0.0
    %4869 = vmatpush1.msra.mxu0 0.0
    %4870 = vmatprep.subr.mxu0 0.0
    %4871 = vmatpush1.msra.mxu0 0.0
    %4872 = vmatprep.subr.mxu0 0.0
    %4873 = vmatpush1.msra.mxu0 0.0
    %4874 = vmatprep.subr.mxu0 0.0
    %4875 = vmatpush1.msra.mxu0 0.0
    %4876 = vmatprep.subr.mxu0 0.0
    %4877 = vmatpush1.msra.mxu0 0.0
    %4878 = vmatprep.subr.mxu0 0.0
    %4879 = vmatpush1.msra.mxu0 0.0
    %4880 = vmatprep.subr.mxu0 0.0
    %4881 = vmatpush1.msra.mxu0 0.0
    %4882 = vmatprep.subr.mxu0 0.0
    %4883 = vmatpush1.msra.mxu0 0.0
    %4884 = vmatprep.subr.mxu0 0.0
    %4885 = vmatpush1.msra.mxu0 0.0
    %4886 = vmatprep.subr.mxu0 0.0
    %4887 = vmatpush1.msra.mxu0 0.0
    %4888 = vmatprep.subr.mxu0 0.0
    %4889 = vmatpush1.msra.mxu0 0.0
    %4890 = vmatprep.subr.mxu0 0.0
    %4891 = vmatpush1.msra.mxu0 0.0
    %4892 = vmatprep.subr.mxu0 0.0
    %4893 = vmatpush1.msra.mxu0 0.0
    %4894 = vmatprep.subr.mxu0 0.0
    %4895 = vmatpush1.msra.mxu0 0.0
    %4896 = vmatprep.subr.mxu0 0.0
    %4897 = vmatpush1.msra.mxu0 0.0
    %4898 = vmatprep.mubr.f32.mxu0 0.0
    %4899 = vmatmul.mubr.f32.gmra.mrb[0].mxu0 %v4832
    %v4900 = vpop.f32.mrb[0].mxu0
    %v4901 = vadd.f32 0.0, %v4900
    %v4902 = vpop.f32.mrb[0].mxu0
    %4903 = vdwg.mxu0
    %4905 = vrot.lane.b32.xlu0 %v4901, 64
    %v4906 = vpop.permute.xlu0 %4905
    %4908 = vst.msk [vmem:[#allocation2 + $0x8] sm:$0xff] %vm854, %v4906
    %v4909 = vld [vmem:[#allocation2] sm:$0xff]
    %v4910 = vld [vmem:[#allocation2 + $0x8] sm:$0xff]
    %s4911 = scalar_lea.vmem [#allocation9], 64
    %v4912 = vld [vmem:[%s4911] sm:$0xf]
    %v4913 = vld [vmem:[%s4911 + $0x4] sm:$0xf]
    %v4914 = vld [vmem:[%s4911 + $0x8] sm:$0xf]
    %v4915 = vld [vmem:[%s4911 + $0xc] sm:$0xf]
    %v4916 = vld [vmem:[%s4911 + $0x10] sm:$0xf]
    %v4917 = vld [vmem:[%s4911 + $0x14] sm:$0xf]
    %v4918 = vld [vmem:[%s4911 + $0x18] sm:$0xf]
    %v4919 = vld [vmem:[%s4911 + $0x1c] sm:$0xf]
    %v4920 = vld [vmem:[%s4911 + $0x20] sm:$0xf]
    %v4921 = vld [vmem:[%s4911 + $0x24] sm:$0xf]
    %v4922 = vld [vmem:[%s4911 + $0x28] sm:$0xf]
    %v4923 = vld [vmem:[%s4911 + $0x2c] sm:$0xf]
    %v4924 = vld [vmem:[%s4911 + $0x30] sm:$0xf]
    %v4925 = vld [vmem:[%s4911 + $0x34] sm:$0xf]
    %v4926 = vld [vmem:[%s4911 + $0x38] sm:$0xf]
    %v4927 = vld [vmem:[%s4911 + $0x3c] sm:$0xf]
    %v4928 = vpack.c.bf16 %v4910, %v4909
    %v4929 = vlaneseq
    %v4930 = vshrl.u32 %v4929, 7
    %v4931 = vsub.s32 5, %v4930
    %v4932 = vrot.slane %v142, %v4931
    %v4949 = vunpack.c.l.b16 %v4912
    %v4950 = vunpack.c.l.b16 %v4913
    %v4951 = vunpack.c.l.b16 %v4914
    %v4952 = vunpack.c.l.b16 %v4915
    %v4953 = vunpack.c.l.b16 %v4916
    %v4954 = vunpack.c.l.b16 %v4917
    %v4955 = vunpack.c.l.b16 %v4918
    %v4956 = vunpack.c.l.b16 %v4919
    %v4957 = vunpack.c.l.b16 %v4920
    %v4958 = vunpack.c.l.b16 %v4921
    %v4959 = vunpack.c.l.b16 %v4922
    %v4960 = vunpack.c.l.b16 %v4923
    %v4961 = vunpack.c.l.b16 %v4924
    %v4962 = vunpack.c.l.b16 %v4925
    %v4963 = vunpack.c.l.b16 %v4926
    %v4964 = vunpack.c.l.b16 %v4927
    %v4965 = vpack.c.b16 %v4950, %v4949
    %v4966 = vpack.c.b16 %v4952, %v4951
    %v4967 = vpack.c.b16 %v4954, %v4953
    %v4968 = vpack.c.b16 %v4956, %v4955
    %v4969 = vpack.c.b16 %v4958, %v4957
    %v4970 = vpack.c.b16 %v4960, %v4959
    %v4971 = vpack.c.b16 %v4962, %v4961
    %v4972 = vpack.c.b16 %v4964, %v4963
    %4981 = vmatprep.subr.bf16.mxu0 0
    %4982 = vmatpush1.bf16.msra.mxu0 %v4965
    %4983 = vmatprep.subr.bf16.mxu0 0
    %4984 = vmatpush1.bf16.msra.mxu0 %v4966
    %4985 = vmatprep.subr.bf16.mxu0 0
    %4986 = vmatpush1.bf16.msra.mxu0 %v4967
    %4987 = vmatprep.subr.bf16.mxu0 0
    %4988 = vmatpush1.bf16.msra.mxu0 %v4968
    %4989 = vmatprep.subr.bf16.mxu0 0
    %4990 = vmatpush1.bf16.msra.mxu0 %v4969
    %4991 = vmatprep.subr.bf16.mxu0 0
    %4992 = vmatpush1.bf16.msra.mxu0 %v4970
    %4993 = vmatprep.subr.bf16.mxu0 0
    %4994 = vmatpush1.bf16.msra.mxu0 %v4971
    %4995 = vmatprep.subr.bf16.mxu0 0
    %4996 = vmatpush1.bf16.msra.mxu0 %v4972
    %4997 = vmatprep.subr.bf16.mxu0 0
    %4998 = vmatpush1.bf16.msra.mxu0 0
    %4999 = vmatprep.subr.bf16.mxu0 0
    %5000 = vmatpush1.bf16.msra.mxu0 0
    %5001 = vmatprep.subr.bf16.mxu0 0
    %5002 = vmatpush1.bf16.msra.mxu0 0
    %5003 = vmatprep.subr.bf16.mxu0 0
    %5004 = vmatpush1.bf16.msra.mxu0 0
    %5005 = vmatprep.subr.bf16.mxu0 0
    %5006 = vmatpush1.bf16.msra.mxu0 0
    %5007 = vmatprep.subr.bf16.mxu0 0
    %5008 = vmatpush1.bf16.msra.mxu0 0
    %5009 = vmatprep.subr.bf16.mxu0 0
    %5010 = vmatpush1.bf16.msra.mxu0 0
    %5011 = vmatprep.subr.bf16.mxu0 0
    %5012 = vmatpush1.bf16.msra.mxu0 0
    %5013 = vmatprep.mubr.bf16.mxu0 0
    %5014 = vmatmul.mubr.bf16.gmra.mrb[0].mxu0 %v4928
    %v5015 = vpop.f32.mrb[0].mxu0
    %v5016 = vadd.f32 %v4932, %v5015
    %v5017 = vpop.f32.mrb[0].mxu0
    %v5018 = vpop.f32.mrb[0].mxu0
    %v5019 = vadd.f32 %v4932, %v5018
    %v5020 = vpop.f32.mrb[0].mxu0
    %5021 = vdwg.mxu0
    %v5022 = vadd.f32 %v3975, %v5016
    %v5023 = vadd.f32 %v3976, %v5019
    %5024 = vadd.xlane.f32.xlu0 %v5022
    %v5025 = vpop.xlane.xlu0 %5024
    %5026 = vadd.xlane.f32.xlu0 %v5023
    %v5027 = vpop.xlane.xlu0 %5026
    %v5028 = vmul.f32 %v5025, %v1308
    %v5029 = vmul.f32 %v5027, %v1308
    %v5030 = vsub.f32 %v5022, %v5028
    %v5031 = vsub.f32 %v5023, %v5029
    %v5032 = vmul.f32 %v5030, %v5030
    %v5033 = vmul.f32 %v5031, %v5031
    %5034 = vadd.xlane.f32.xlu0 %v5032
    %v5035 = vpop.xlane.xlu0 %5034
    %5036 = vadd.xlane.f32.xlu0 %v5033
    %v5037 = vpop.xlane.xlu0 %5036
    %v5038 = vmul.f32 %v5035, %v1308
    %v5039 = vmul.f32 %v5037, %v1308
    %v5040 = vadd.f32 %v5038, 1e-05
    %v5041 = vadd.f32 %v5039, 1e-05
    %v5042 = vrsqrt.pop %v5040
    %v5043 = vrsqrt.pop %v5041
    %v5044 = vmul.f32 %v5030, %v5042
    %v5045 = vmul.f32 %v5031, %v5043
    %v5046 = vlaneseq
    %v5047 = vshrl.u32 %v5046, 7
    %v5048 = vsub.s32 6, %v5047
    %v5049 = vrot.slane %v142, %v5048
    %v5050 = vmul.f32 %v5044, %v5049
    %v5051 = vmul.f32 %v5045, %v5049
    %v5052 = vlaneseq
    %v5053 = vshrl.u32 %v5052, 7
    %v5054 = vsub.s32 7, %v5053
    %v5055 = vrot.slane %v142, %v5054
    %v5056 = vadd.f32 %v5050, %v5055
    %v5057 = vadd.f32 %v5051, %v5055
    %s5058 = scalar_lea.vmem [#allocation11], 1024
    %v5059 = vld [vmem:[%s5058] sm:$0xff]
    %v5060 = vld [vmem:[%s5058 + $0x8] sm:$0xff]
    %v5061 = vld [vmem:[%s5058 + $0x10] sm:$0xff]
    %v5062 = vld [vmem:[%s5058 + $0x18] sm:$0xff]
    %v5063 = vld [vmem:[%s5058 + $0x20] sm:$0xff]
    %v5064 = vld [vmem:[%s5058 + $0x28] sm:$0xff]
    %v5065 = vld [vmem:[%s5058 + $0x30] sm:$0xff]
    %v5066 = vld [vmem:[%s5058 + $0x38] sm:$0xff]
    %v5067 = vld [vmem:[%s5058 + $0x40] sm:$0xff]
    %v5068 = vld [vmem:[%s5058 + $0x48] sm:$0xff]
    %v5069 = vld [vmem:[%s5058 + $0x50] sm:$0xff]
    %v5070 = vld [vmem:[%s5058 + $0x58] sm:$0xff]
    %v5071 = vld [vmem:[%s5058 + $0x60] sm:$0xff]
    %v5072 = vld [vmem:[%s5058 + $0x68] sm:$0xff]
    %v5073 = vld [vmem:[%s5058 + $0x70] sm:$0xff]
    %v5074 = vld [vmem:[%s5058 + $0x78] sm:$0xff]
    %v5075 = vld [vmem:[%s5058 + $0x80] sm:$0xff]
    %v5076 = vld [vmem:[%s5058 + $0x88] sm:$0xff]
    %v5077 = vld [vmem:[%s5058 + $0x90] sm:$0xff]
    %v5078 = vld [vmem:[%s5058 + $0x98] sm:$0xff]
    %v5079 = vld [vmem:[%s5058 + $0xa0] sm:$0xff]
    %v5080 = vld [vmem:[%s5058 + $0xa8] sm:$0xff]
    %v5081 = vld [vmem:[%s5058 + $0xb0] sm:$0xff]
    %v5082 = vld [vmem:[%s5058 + $0xb8] sm:$0xff]
    %v5083 = vld [vmem:[%s5058 + $0xc0] sm:$0xff]
    %v5084 = vld [vmem:[%s5058 + $0xc8] sm:$0xff]
    %v5085 = vld [vmem:[%s5058 + $0xd0] sm:$0xff]
    %v5086 = vld [vmem:[%s5058 + $0xd8] sm:$0xff]
    %v5087 = vld [vmem:[%s5058 + $0xe0] sm:$0xff]
    %v5088 = vld [vmem:[%s5058 + $0xe8] sm:$0xff]
    %v5089 = vld [vmem:[%s5058 + $0xf0] sm:$0xff]
    %v5090 = vld [vmem:[%s5058 + $0xf8] sm:$0xff]
    %v5091 = vld [vmem:[%s5058 + $0x100] sm:$0xff]
    %v5092 = vld [vmem:[%s5058 + $0x108] sm:$0xff]
    %v5093 = vld [vmem:[%s5058 + $0x110] sm:$0xff]
    %v5094 = vld [vmem:[%s5058 + $0x118] sm:$0xff]
    %v5095 = vld [vmem:[%s5058 + $0x120] sm:$0xff]
    %v5096 = vld [vmem:[%s5058 + $0x128] sm:$0xff]
    %v5097 = vld [vmem:[%s5058 + $0x130] sm:$0xff]
    %v5098 = vld [vmem:[%s5058 + $0x138] sm:$0xff]
    %v5099 = vld [vmem:[%s5058 + $0x140] sm:$0xff]
    %v5100 = vld [vmem:[%s5058 + $0x148] sm:$0xff]
    %v5101 = vld [vmem:[%s5058 + $0x150] sm:$0xff]
    %v5102 = vld [vmem:[%s5058 + $0x158] sm:$0xff]
    %v5103 = vld [vmem:[%s5058 + $0x160] sm:$0xff]
    %v5104 = vld [vmem:[%s5058 + $0x168] sm:$0xff]
    %v5105 = vld [vmem:[%s5058 + $0x170] sm:$0xff]
    %v5106 = vld [vmem:[%s5058 + $0x178] sm:$0xff]
    %v5107 = vld [vmem:[%s5058 + $0x180] sm:$0xff]
    %v5108 = vld [vmem:[%s5058 + $0x188] sm:$0xff]
    %v5109 = vld [vmem:[%s5058 + $0x190] sm:$0xff]
    %v5110 = vld [vmem:[%s5058 + $0x198] sm:$0xff]
    %v5111 = vld [vmem:[%s5058 + $0x1a0] sm:$0xff]
    %v5112 = vld [vmem:[%s5058 + $0x1a8] sm:$0xff]
    %v5113 = vld [vmem:[%s5058 + $0x1b0] sm:$0xff]
    %v5114 = vld [vmem:[%s5058 + $0x1b8] sm:$0xff]
    %v5115 = vld [vmem:[%s5058 + $0x1c0] sm:$0xff]
    %v5116 = vld [vmem:[%s5058 + $0x1c8] sm:$0xff]
    %v5117 = vld [vmem:[%s5058 + $0x1d0] sm:$0xff]
    %v5118 = vld [vmem:[%s5058 + $0x1d8] sm:$0xff]
    %v5119 = vld [vmem:[%s5058 + $0x1e0] sm:$0xff]
    %v5120 = vld [vmem:[%s5058 + $0x1e8] sm:$0xff]
    %v5121 = vld [vmem:[%s5058 + $0x1f0] sm:$0xff]
    %v5122 = vld [vmem:[%s5058 + $0x1f8] sm:$0xff]
    %v5123 = vld [vmem:[%s5058 + $0x200] sm:$0xff]
    %v5124 = vld [vmem:[%s5058 + $0x208] sm:$0xff]
    %v5125 = vld [vmem:[%s5058 + $0x210] sm:$0xff]
    %v5126 = vld [vmem:[%s5058 + $0x218] sm:$0xff]
    %v5127 = vld [vmem:[%s5058 + $0x220] sm:$0xff]
    %v5128 = vld [vmem:[%s5058 + $0x228] sm:$0xff]
    %v5129 = vld [vmem:[%s5058 + $0x230] sm:$0xff]
    %v5130 = vld [vmem:[%s5058 + $0x238] sm:$0xff]
    %v5131 = vld [vmem:[%s5058 + $0x240] sm:$0xff]
    %v5132 = vld [vmem:[%s5058 + $0x248] sm:$0xff]
    %v5133 = vld [vmem:[%s5058 + $0x250] sm:$0xff]
    %v5134 = vld [vmem:[%s5058 + $0x258] sm:$0xff]
    %v5135 = vld [vmem:[%s5058 + $0x260] sm:$0xff]
    %v5136 = vld [vmem:[%s5058 + $0x268] sm:$0xff]
    %v5137 = vld [vmem:[%s5058 + $0x270] sm:$0xff]
    %v5138 = vld [vmem:[%s5058 + $0x278] sm:$0xff]
    %v5139 = vld [vmem:[%s5058 + $0x280] sm:$0xff]
    %v5140 = vld [vmem:[%s5058 + $0x288] sm:$0xff]
    %v5141 = vld [vmem:[%s5058 + $0x290] sm:$0xff]
    %v5142 = vld [vmem:[%s5058 + $0x298] sm:$0xff]
    %v5143 = vld [vmem:[%s5058 + $0x2a0] sm:$0xff]
    %v5144 = vld [vmem:[%s5058 + $0x2a8] sm:$0xff]
    %v5145 = vld [vmem:[%s5058 + $0x2b0] sm:$0xff]
    %v5146 = vld [vmem:[%s5058 + $0x2b8] sm:$0xff]
    %v5147 = vld [vmem:[%s5058 + $0x2c0] sm:$0xff]
    %v5148 = vld [vmem:[%s5058 + $0x2c8] sm:$0xff]
    %v5149 = vld [vmem:[%s5058 + $0x2d0] sm:$0xff]
    %v5150 = vld [vmem:[%s5058 + $0x2d8] sm:$0xff]
    %v5151 = vld [vmem:[%s5058 + $0x2e0] sm:$0xff]
    %v5152 = vld [vmem:[%s5058 + $0x2e8] sm:$0xff]
    %v5153 = vld [vmem:[%s5058 + $0x2f0] sm:$0xff]
    %v5154 = vld [vmem:[%s5058 + $0x2f8] sm:$0xff]
    %v5155 = vld [vmem:[%s5058 + $0x300] sm:$0xff]
    %v5156 = vld [vmem:[%s5058 + $0x308] sm:$0xff]
    %v5157 = vld [vmem:[%s5058 + $0x310] sm:$0xff]
    %v5158 = vld [vmem:[%s5058 + $0x318] sm:$0xff]
    %v5159 = vld [vmem:[%s5058 + $0x320] sm:$0xff]
    %v5160 = vld [vmem:[%s5058 + $0x328] sm:$0xff]
    %v5161 = vld [vmem:[%s5058 + $0x330] sm:$0xff]
    %v5162 = vld [vmem:[%s5058 + $0x338] sm:$0xff]
    %v5163 = vld [vmem:[%s5058 + $0x340] sm:$0xff]
    %v5164 = vld [vmem:[%s5058 + $0x348] sm:$0xff]
    %v5165 = vld [vmem:[%s5058 + $0x350] sm:$0xff]
    %v5166 = vld [vmem:[%s5058 + $0x358] sm:$0xff]
    %v5167 = vld [vmem:[%s5058 + $0x360] sm:$0xff]
    %v5168 = vld [vmem:[%s5058 + $0x368] sm:$0xff]
    %v5169 = vld [vmem:[%s5058 + $0x370] sm:$0xff]
    %v5170 = vld [vmem:[%s5058 + $0x378] sm:$0xff]
    %v5171 = vld [vmem:[%s5058 + $0x380] sm:$0xff]
    %v5172 = vld [vmem:[%s5058 + $0x388] sm:$0xff]
    %v5173 = vld [vmem:[%s5058 + $0x390] sm:$0xff]
    %v5174 = vld [vmem:[%s5058 + $0x398] sm:$0xff]
    %v5175 = vld [vmem:[%s5058 + $0x3a0] sm:$0xff]
    %v5176 = vld [vmem:[%s5058 + $0x3a8] sm:$0xff]
    %v5177 = vld [vmem:[%s5058 + $0x3b0] sm:$0xff]
    %v5178 = vld [vmem:[%s5058 + $0x3b8] sm:$0xff]
    %v5179 = vld [vmem:[%s5058 + $0x3c0] sm:$0xff]
    %v5180 = vld [vmem:[%s5058 + $0x3c8] sm:$0xff]
    %v5181 = vld [vmem:[%s5058 + $0x3d0] sm:$0xff]
    %v5182 = vld [vmem:[%s5058 + $0x3d8] sm:$0xff]
    %v5183 = vld [vmem:[%s5058 + $0x3e0] sm:$0xff]
    %v5184 = vld [vmem:[%s5058 + $0x3e8] sm:$0xff]
    %v5185 = vld [vmem:[%s5058 + $0x3f0] sm:$0xff]
    %v5186 = vld [vmem:[%s5058 + $0x3f8] sm:$0xff]
    %v5187 = vpack.c.bf16 %v5057, %v5056
    %s5188 = scalar_lea.vmem [#allocation15], 1
    %v5189 = vld [vmem:[%s5188] ss:$2 sm:$0xff]
    %s5190 = scalar_lea.vmem [#allocation15], 17
    %v5191 = vld [vmem:[%s5190] ss:$2 sm:$0xff]
    %v5194 = vlaneseq
    %v5195 = vshrl.u32 %v5194, 7
    %v5196 = vsub.s32 0, %v5195
    %v5197 = vrot.slane %v5189, %v5196
    %v5198 = vlaneseq
    %v5199 = vshrl.u32 %v5198, 7
    %v5200 = vsub.s32 1, %v5199
    %v5201 = vrot.slane %v5189, %v5200
    %v5202 = vlaneseq
    %v5203 = vshrl.u32 %v5202, 7
    %v5204 = vsub.s32 2, %v5203
    %v5205 = vrot.slane %v5189, %v5204
    %v5206 = vlaneseq
    %v5207 = vshrl.u32 %v5206, 7
    %v5208 = vsub.s32 3, %v5207
    %v5209 = vrot.slane %v5189, %v5208
    %v5210 = vlaneseq
    %v5211 = vshrl.u32 %v5210, 7
    %v5212 = vsub.s32 4, %v5211
    %v5213 = vrot.slane %v5189, %v5212
    %v5214 = vlaneseq
    %v5215 = vshrl.u32 %v5214, 7
    %v5216 = vsub.s32 5, %v5215
    %v5217 = vrot.slane %v5189, %v5216
    %v5218 = vlaneseq
    %v5219 = vshrl.u32 %v5218, 7
    %v5220 = vsub.s32 6, %v5219
    %v5221 = vrot.slane %v5189, %v5220
    %v5222 = vlaneseq
    %v5223 = vshrl.u32 %v5222, 7
    %v5224 = vsub.s32 7, %v5223
    %v5225 = vrot.slane %v5189, %v5224
    %v5226 = vlaneseq
    %v5227 = vshrl.u32 %v5226, 7
    %v5228 = vsub.s32 0, %v5227
    %v5229 = vrot.slane %v5191, %v5228
    %v5230 = vlaneseq
    %v5231 = vshrl.u32 %v5230, 7
    %v5232 = vsub.s32 1, %v5231
    %v5233 = vrot.slane %v5191, %v5232
    %v5234 = vlaneseq
    %v5235 = vshrl.u32 %v5234, 7
    %v5236 = vsub.s32 2, %v5235
    %v5237 = vrot.slane %v5191, %v5236
    %v5238 = vlaneseq
    %v5239 = vshrl.u32 %v5238, 7
    %v5240 = vsub.s32 3, %v5239
    %v5241 = vrot.slane %v5191, %v5240
    %v5242 = vlaneseq
    %v5243 = vshrl.u32 %v5242, 7
    %v5244 = vsub.s32 4, %v5243
    %v5245 = vrot.slane %v5191, %v5244
    %v5246 = vlaneseq
    %v5247 = vshrl.u32 %v5246, 7
    %v5248 = vsub.s32 5, %v5247
    %v5249 = vrot.slane %v5191, %v5248
    %v5250 = vlaneseq
    %v5251 = vshrl.u32 %v5250, 7
    %v5252 = vsub.s32 6, %v5251
    %v5253 = vrot.slane %v5191, %v5252
    %v5254 = vlaneseq
    %v5255 = vshrl.u32 %v5254, 7
    %v5256 = vsub.s32 7, %v5255
    %v5257 = vrot.slane %v5191, %v5256
    %v5402 = vunpack.c.l.b16 %v5059
    %v5403 = vunpack.c.h.b16 %v5059
    %v5404 = vunpack.c.l.b16 %v5060
    %v5405 = vunpack.c.h.b16 %v5060
    %v5406 = vunpack.c.l.b16 %v5061
    %v5407 = vunpack.c.h.b16 %v5061
    %v5408 = vunpack.c.l.b16 %v5062
    %v5409 = vunpack.c.h.b16 %v5062
    %v5410 = vunpack.c.l.b16 %v5063
    %v5411 = vunpack.c.h.b16 %v5063
    %v5412 = vunpack.c.l.b16 %v5064
    %v5413 = vunpack.c.h.b16 %v5064
    %v5414 = vunpack.c.l.b16 %v5065
    %v5415 = vunpack.c.h.b16 %v5065
    %v5416 = vunpack.c.l.b16 %v5066
    %v5417 = vunpack.c.h.b16 %v5066
    %v5418 = vunpack.c.l.b16 %v5067
    %v5419 = vunpack.c.h.b16 %v5067
    %v5420 = vunpack.c.l.b16 %v5068
    %v5421 = vunpack.c.h.b16 %v5068
    %v5422 = vunpack.c.l.b16 %v5069
    %v5423 = vunpack.c.h.b16 %v5069
    %v5424 = vunpack.c.l.b16 %v5070
    %v5425 = vunpack.c.h.b16 %v5070
    %v5426 = vunpack.c.l.b16 %v5071
    %v5427 = vunpack.c.h.b16 %v5071
    %v5428 = vunpack.c.l.b16 %v5072
    %v5429 = vunpack.c.h.b16 %v5072
    %v5430 = vunpack.c.l.b16 %v5073
    %v5431 = vunpack.c.h.b16 %v5073
    %v5432 = vunpack.c.l.b16 %v5074
    %v5433 = vunpack.c.h.b16 %v5074
    %v5434 = vunpack.c.l.b16 %v5075
    %v5435 = vunpack.c.h.b16 %v5075
    %v5436 = vunpack.c.l.b16 %v5076
    %v5437 = vunpack.c.h.b16 %v5076
    %v5438 = vunpack.c.l.b16 %v5077
    %v5439 = vunpack.c.h.b16 %v5077
    %v5440 = vunpack.c.l.b16 %v5078
    %v5441 = vunpack.c.h.b16 %v5078
    %v5442 = vunpack.c.l.b16 %v5079
    %v5443 = vunpack.c.h.b16 %v5079
    %v5444 = vunpack.c.l.b16 %v5080
    %v5445 = vunpack.c.h.b16 %v5080
    %v5446 = vunpack.c.l.b16 %v5081
    %v5447 = vunpack.c.h.b16 %v5081
    %v5448 = vunpack.c.l.b16 %v5082
    %v5449 = vunpack.c.h.b16 %v5082
    %v5450 = vunpack.c.l.b16 %v5083
    %v5451 = vunpack.c.h.b16 %v5083
    %v5452 = vunpack.c.l.b16 %v5084
    %v5453 = vunpack.c.h.b16 %v5084
    %v5454 = vunpack.c.l.b16 %v5085
    %v5455 = vunpack.c.h.b16 %v5085
    %v5456 = vunpack.c.l.b16 %v5086
    %v5457 = vunpack.c.h.b16 %v5086
    %v5458 = vunpack.c.l.b16 %v5087
    %v5459 = vunpack.c.h.b16 %v5087
    %v5460 = vunpack.c.l.b16 %v5088
    %v5461 = vunpack.c.h.b16 %v5088
    %v5462 = vunpack.c.l.b16 %v5089
    %v5463 = vunpack.c.h.b16 %v5089
    %v5464 = vunpack.c.l.b16 %v5090
    %v5465 = vunpack.c.h.b16 %v5090
    %v5466 = vunpack.c.l.b16 %v5091
    %v5467 = vunpack.c.h.b16 %v5091
    %v5468 = vunpack.c.l.b16 %v5092
    %v5469 = vunpack.c.h.b16 %v5092
    %v5470 = vunpack.c.l.b16 %v5093
    %v5471 = vunpack.c.h.b16 %v5093
    %v5472 = vunpack.c.l.b16 %v5094
    %v5473 = vunpack.c.h.b16 %v5094
    %v5474 = vunpack.c.l.b16 %v5095
    %v5475 = vunpack.c.h.b16 %v5095
    %v5476 = vunpack.c.l.b16 %v5096
    %v5477 = vunpack.c.h.b16 %v5096
    %v5478 = vunpack.c.l.b16 %v5097
    %v5479 = vunpack.c.h.b16 %v5097
    %v5480 = vunpack.c.l.b16 %v5098
    %v5481 = vunpack.c.h.b16 %v5098
    %v5482 = vunpack.c.l.b16 %v5099
    %v5483 = vunpack.c.h.b16 %v5099
    %v5484 = vunpack.c.l.b16 %v5100
    %v5485 = vunpack.c.h.b16 %v5100
    %v5486 = vunpack.c.l.b16 %v5101
    %v5487 = vunpack.c.h.b16 %v5101
    %v5488 = vunpack.c.l.b16 %v5102
    %v5489 = vunpack.c.h.b16 %v5102
    %v5490 = vunpack.c.l.b16 %v5103
    %v5491 = vunpack.c.h.b16 %v5103
    %v5492 = vunpack.c.l.b16 %v5104
    %v5493 = vunpack.c.h.b16 %v5104
    %v5494 = vunpack.c.l.b16 %v5105
    %v5495 = vunpack.c.h.b16 %v5105
    %v5496 = vunpack.c.l.b16 %v5106
    %v5497 = vunpack.c.h.b16 %v5106
    %v5498 = vunpack.c.l.b16 %v5107
    %v5499 = vunpack.c.h.b16 %v5107
    %v5500 = vunpack.c.l.b16 %v5108
    %v5501 = vunpack.c.h.b16 %v5108
    %v5502 = vunpack.c.l.b16 %v5109
    %v5503 = vunpack.c.h.b16 %v5109
    %v5504 = vunpack.c.l.b16 %v5110
    %v5505 = vunpack.c.h.b16 %v5110
    %v5506 = vunpack.c.l.b16 %v5111
    %v5507 = vunpack.c.h.b16 %v5111
    %v5508 = vunpack.c.l.b16 %v5112
    %v5509 = vunpack.c.h.b16 %v5112
    %v5510 = vunpack.c.l.b16 %v5113
    %v5511 = vunpack.c.h.b16 %v5113
    %v5512 = vunpack.c.l.b16 %v5114
    %v5513 = vunpack.c.h.b16 %v5114
    %v5514 = vunpack.c.l.b16 %v5115
    %v5515 = vunpack.c.h.b16 %v5115
    %v5516 = vunpack.c.l.b16 %v5116
    %v5517 = vunpack.c.h.b16 %v5116
    %v5518 = vunpack.c.l.b16 %v5117
    %v5519 = vunpack.c.h.b16 %v5117
    %v5520 = vunpack.c.l.b16 %v5118
    %v5521 = vunpack.c.h.b16 %v5118
    %v5522 = vunpack.c.l.b16 %v5119
    %v5523 = vunpack.c.h.b16 %v5119
    %v5524 = vunpack.c.l.b16 %v5120
    %v5525 = vunpack.c.h.b16 %v5120
    %v5526 = vunpack.c.l.b16 %v5121
    %v5527 = vunpack.c.h.b16 %v5121
    %v5528 = vunpack.c.l.b16 %v5122
    %v5529 = vunpack.c.h.b16 %v5122
    %v5530 = vunpack.c.l.b16 %v5123
    %v5531 = vunpack.c.h.b16 %v5123
    %v5532 = vunpack.c.l.b16 %v5124
    %v5533 = vunpack.c.h.b16 %v5124
    %v5534 = vunpack.c.l.b16 %v5125
    %v5535 = vunpack.c.h.b16 %v5125
    %v5536 = vunpack.c.l.b16 %v5126
    %v5537 = vunpack.c.h.b16 %v5126
    %v5538 = vunpack.c.l.b16 %v5127
    %v5539 = vunpack.c.h.b16 %v5127
    %v5540 = vunpack.c.l.b16 %v5128
    %v5541 = vunpack.c.h.b16 %v5128
    %v5542 = vunpack.c.l.b16 %v5129
    %v5543 = vunpack.c.h.b16 %v5129
    %v5544 = vunpack.c.l.b16 %v5130
    %v5545 = vunpack.c.h.b16 %v5130
    %v5546 = vunpack.c.l.b16 %v5131
    %v5547 = vunpack.c.h.b16 %v5131
    %v5548 = vunpack.c.l.b16 %v5132
    %v5549 = vunpack.c.h.b16 %v5132
    %v5550 = vunpack.c.l.b16 %v5133
    %v5551 = vunpack.c.h.b16 %v5133
    %v5552 = vunpack.c.l.b16 %v5134
    %v5553 = vunpack.c.h.b16 %v5134
    %v5554 = vunpack.c.l.b16 %v5135
    %v5555 = vunpack.c.h.b16 %v5135
    %v5556 = vunpack.c.l.b16 %v5136
    %v5557 = vunpack.c.h.b16 %v5136
    %v5558 = vunpack.c.l.b16 %v5137
    %v5559 = vunpack.c.h.b16 %v5137
    %v5560 = vunpack.c.l.b16 %v5138
    %v5561 = vunpack.c.h.b16 %v5138
    %v5562 = vunpack.c.l.b16 %v5139
    %v5563 = vunpack.c.h.b16 %v5139
    %v5564 = vunpack.c.l.b16 %v5140
    %v5565 = vunpack.c.h.b16 %v5140
    %v5566 = vunpack.c.l.b16 %v5141
    %v5567 = vunpack.c.h.b16 %v5141
    %v5568 = vunpack.c.l.b16 %v5142
    %v5569 = vunpack.c.h.b16 %v5142
    %v5570 = vunpack.c.l.b16 %v5143
    %v5571 = vunpack.c.h.b16 %v5143
    %v5572 = vunpack.c.l.b16 %v5144
    %v5573 = vunpack.c.h.b16 %v5144
    %v5574 = vunpack.c.l.b16 %v5145
    %v5575 = vunpack.c.h.b16 %v5145
    %v5576 = vunpack.c.l.b16 %v5146
    %v5577 = vunpack.c.h.b16 %v5146
    %v5578 = vunpack.c.l.b16 %v5147
    %v5579 = vunpack.c.h.b16 %v5147
    %v5580 = vunpack.c.l.b16 %v5148
    %v5581 = vunpack.c.h.b16 %v5148
    %v5582 = vunpack.c.l.b16 %v5149
    %v5583 = vunpack.c.h.b16 %v5149
    %v5584 = vunpack.c.l.b16 %v5150
    %v5585 = vunpack.c.h.b16 %v5150
    %v5586 = vunpack.c.l.b16 %v5151
    %v5587 = vunpack.c.h.b16 %v5151
    %v5588 = vunpack.c.l.b16 %v5152
    %v5589 = vunpack.c.h.b16 %v5152
    %v5590 = vunpack.c.l.b16 %v5153
    %v5591 = vunpack.c.h.b16 %v5153
    %v5592 = vunpack.c.l.b16 %v5154
    %v5593 = vunpack.c.h.b16 %v5154
    %v5594 = vunpack.c.l.b16 %v5155
    %v5595 = vunpack.c.h.b16 %v5155
    %v5596 = vunpack.c.l.b16 %v5156
    %v5597 = vunpack.c.h.b16 %v5156
    %v5598 = vunpack.c.l.b16 %v5157
    %v5599 = vunpack.c.h.b16 %v5157
    %v5600 = vunpack.c.l.b16 %v5158
    %v5601 = vunpack.c.h.b16 %v5158
    %v5602 = vunpack.c.l.b16 %v5159
    %v5603 = vunpack.c.h.b16 %v5159
    %v5604 = vunpack.c.l.b16 %v5160
    %v5605 = vunpack.c.h.b16 %v5160
    %v5606 = vunpack.c.l.b16 %v5161
    %v5607 = vunpack.c.h.b16 %v5161
    %v5608 = vunpack.c.l.b16 %v5162
    %v5609 = vunpack.c.h.b16 %v5162
    %v5610 = vunpack.c.l.b16 %v5163
    %v5611 = vunpack.c.h.b16 %v5163
    %v5612 = vunpack.c.l.b16 %v5164
    %v5613 = vunpack.c.h.b16 %v5164
    %v5614 = vunpack.c.l.b16 %v5165
    %v5615 = vunpack.c.h.b16 %v5165
    %v5616 = vunpack.c.l.b16 %v5166
    %v5617 = vunpack.c.h.b16 %v5166
    %v5618 = vunpack.c.l.b16 %v5167
    %v5619 = vunpack.c.h.b16 %v5167
    %v5620 = vunpack.c.l.b16 %v5168
    %v5621 = vunpack.c.h.b16 %v5168
    %v5622 = vunpack.c.l.b16 %v5169
    %v5623 = vunpack.c.h.b16 %v5169
    %v5624 = vunpack.c.l.b16 %v5170
    %v5625 = vunpack.c.h.b16 %v5170
    %v5626 = vunpack.c.l.b16 %v5171
    %v5627 = vunpack.c.h.b16 %v5171
    %v5628 = vunpack.c.l.b16 %v5172
    %v5629 = vunpack.c.h.b16 %v5172
    %v5630 = vunpack.c.l.b16 %v5173
    %v5631 = vunpack.c.h.b16 %v5173
    %v5632 = vunpack.c.l.b16 %v5174
    %v5633 = vunpack.c.h.b16 %v5174
    %v5634 = vunpack.c.l.b16 %v5175
    %v5635 = vunpack.c.h.b16 %v5175
    %v5636 = vunpack.c.l.b16 %v5176
    %v5637 = vunpack.c.h.b16 %v5176
    %v5638 = vunpack.c.l.b16 %v5177
    %v5639 = vunpack.c.h.b16 %v5177
    %v5640 = vunpack.c.l.b16 %v5178
    %v5641 = vunpack.c.h.b16 %v5178
    %v5642 = vunpack.c.l.b16 %v5179
    %v5643 = vunpack.c.h.b16 %v5179
    %v5644 = vunpack.c.l.b16 %v5180
    %v5645 = vunpack.c.h.b16 %v5180
    %v5646 = vunpack.c.l.b16 %v5181
    %v5647 = vunpack.c.h.b16 %v5181
    %v5648 = vunpack.c.l.b16 %v5182
    %v5649 = vunpack.c.h.b16 %v5182
    %v5650 = vunpack.c.l.b16 %v5183
    %v5651 = vunpack.c.h.b16 %v5183
    %v5652 = vunpack.c.l.b16 %v5184
    %v5653 = vunpack.c.h.b16 %v5184
    %v5654 = vunpack.c.l.b16 %v5185
    %v5655 = vunpack.c.h.b16 %v5185
    %v5656 = vunpack.c.l.b16 %v5186
    %v5657 = vunpack.c.h.b16 %v5186
    %v5658 = vpack.c.b16 %v5418, %v5402
    %v5659 = vpack.c.b16 %v5419, %v5403
    %v5660 = vpack.c.b16 %v5420, %v5404
    %v5661 = vpack.c.b16 %v5421, %v5405
    %v5662 = vpack.c.b16 %v5422, %v5406
    %v5663 = vpack.c.b16 %v5423, %v5407
    %v5664 = vpack.c.b16 %v5424, %v5408
    %v5665 = vpack.c.b16 %v5425, %v5409
    %v5666 = vpack.c.b16 %v5426, %v5410
    %v5667 = vpack.c.b16 %v5427, %v5411
    %v5668 = vpack.c.b16 %v5428, %v5412
    %v5669 = vpack.c.b16 %v5429, %v5413
    %v5670 = vpack.c.b16 %v5430, %v5414
    %v5671 = vpack.c.b16 %v5431, %v5415
    %v5672 = vpack.c.b16 %v5432, %v5416
    %v5673 = vpack.c.b16 %v5433, %v5417
    %v5674 = vpack.c.b16 %v5450, %v5434
    %v5675 = vpack.c.b16 %v5451, %v5435
    %v5676 = vpack.c.b16 %v5452, %v5436
    %v5677 = vpack.c.b16 %v5453, %v5437
    %v5678 = vpack.c.b16 %v5454, %v5438
    %v5679 = vpack.c.b16 %v5455, %v5439
    %v5680 = vpack.c.b16 %v5456, %v5440
    %v5681 = vpack.c.b16 %v5457, %v5441
    %v5682 = vpack.c.b16 %v5458, %v5442
    %v5683 = vpack.c.b16 %v5459, %v5443
    %v5684 = vpack.c.b16 %v5460, %v5444
    %v5685 = vpack.c.b16 %v5461, %v5445
    %v5686 = vpack.c.b16 %v5462, %v5446
    %v5687 = vpack.c.b16 %v5463, %v5447
    %v5688 = vpack.c.b16 %v5464, %v5448
    %v5689 = vpack.c.b16 %v5465, %v5449
    %v5690 = vpack.c.b16 %v5482, %v5466
    %v5691 = vpack.c.b16 %v5483, %v5467
    %v5692 = vpack.c.b16 %v5484, %v5468
    %v5693 = vpack.c.b16 %v5485, %v5469
    %v5694 = vpack.c.b16 %v5486, %v5470
    %v5695 = vpack.c.b16 %v5487, %v5471
    %v5696 = vpack.c.b16 %v5488, %v5472
    %v5697 = vpack.c.b16 %v5489, %v5473
    %v5698 = vpack.c.b16 %v5490, %v5474
    %v5699 = vpack.c.b16 %v5491, %v5475
    %v5700 = vpack.c.b16 %v5492, %v5476
    %v5701 = vpack.c.b16 %v5493, %v5477
    %v5702 = vpack.c.b16 %v5494, %v5478
    %v5703 = vpack.c.b16 %v5495, %v5479
    %v5704 = vpack.c.b16 %v5496, %v5480
    %v5705 = vpack.c.b16 %v5497, %v5481
    %v5706 = vpack.c.b16 %v5514, %v5498
    %v5707 = vpack.c.b16 %v5515, %v5499
    %v5708 = vpack.c.b16 %v5516, %v5500
    %v5709 = vpack.c.b16 %v5517, %v5501
    %v5710 = vpack.c.b16 %v5518, %v5502
    %v5711 = vpack.c.b16 %v5519, %v5503
    %v5712 = vpack.c.b16 %v5520, %v5504
    %v5713 = vpack.c.b16 %v5521, %v5505
    %v5714 = vpack.c.b16 %v5522, %v5506
    %v5715 = vpack.c.b16 %v5523, %v5507
    %v5716 = vpack.c.b16 %v5524, %v5508
    %v5717 = vpack.c.b16 %v5525, %v5509
    %v5718 = vpack.c.b16 %v5526, %v5510
    %v5719 = vpack.c.b16 %v5527, %v5511
    %v5720 = vpack.c.b16 %v5528, %v5512
    %v5721 = vpack.c.b16 %v5529, %v5513
    %v5722 = vpack.c.b16 %v5546, %v5530
    %v5723 = vpack.c.b16 %v5547, %v5531
    %v5724 = vpack.c.b16 %v5548, %v5532
    %v5725 = vpack.c.b16 %v5549, %v5533
    %v5726 = vpack.c.b16 %v5550, %v5534
    %v5727 = vpack.c.b16 %v5551, %v5535
    %v5728 = vpack.c.b16 %v5552, %v5536
    %v5729 = vpack.c.b16 %v5553, %v5537
    %v5730 = vpack.c.b16 %v5554, %v5538
    %v5731 = vpack.c.b16 %v5555, %v5539
    %v5732 = vpack.c.b16 %v5556, %v5540
    %v5733 = vpack.c.b16 %v5557, %v5541
    %v5734 = vpack.c.b16 %v5558, %v5542
    %v5735 = vpack.c.b16 %v5559, %v5543
    %v5736 = vpack.c.b16 %v5560, %v5544
    %v5737 = vpack.c.b16 %v5561, %v5545
    %v5738 = vpack.c.b16 %v5578, %v5562
    %v5739 = vpack.c.b16 %v5579, %v5563
    %v5740 = vpack.c.b16 %v5580, %v5564
    %v5741 = vpack.c.b16 %v5581, %v5565
    %v5742 = vpack.c.b16 %v5582, %v5566
    %v5743 = vpack.c.b16 %v5583, %v5567
    %v5744 = vpack.c.b16 %v5584, %v5568
    %v5745 = vpack.c.b16 %v5585, %v5569
    %v5746 = vpack.c.b16 %v5586, %v5570
    %v5747 = vpack.c.b16 %v5587, %v5571
    %v5748 = vpack.c.b16 %v5588, %v5572
    %v5749 = vpack.c.b16 %v5589, %v5573
    %v5750 = vpack.c.b16 %v5590, %v5574
    %v5751 = vpack.c.b16 %v5591, %v5575
    %v5752 = vpack.c.b16 %v5592, %v5576
    %v5753 = vpack.c.b16 %v5593, %v5577
    %v5754 = vpack.c.b16 %v5610, %v5594
    %v5755 = vpack.c.b16 %v5611, %v5595
    %v5756 = vpack.c.b16 %v5612, %v5596
    %v5757 = vpack.c.b16 %v5613, %v5597
    %v5758 = vpack.c.b16 %v5614, %v5598
    %v5759 = vpack.c.b16 %v5615, %v5599
    %v5760 = vpack.c.b16 %v5616, %v5600
    %v5761 = vpack.c.b16 %v5617, %v5601
    %v5762 = vpack.c.b16 %v5618, %v5602
    %v5763 = vpack.c.b16 %v5619, %v5603
    %v5764 = vpack.c.b16 %v5620, %v5604
    %v5765 = vpack.c.b16 %v5621, %v5605
    %v5766 = vpack.c.b16 %v5622, %v5606
    %v5767 = vpack.c.b16 %v5623, %v5607
    %v5768 = vpack.c.b16 %v5624, %v5608
    %v5769 = vpack.c.b16 %v5625, %v5609
    %v5770 = vpack.c.b16 %v5642, %v5626
    %v5771 = vpack.c.b16 %v5643, %v5627
    %v5772 = vpack.c.b16 %v5644, %v5628
    %v5773 = vpack.c.b16 %v5645, %v5629
    %v5774 = vpack.c.b16 %v5646, %v5630
    %v5775 = vpack.c.b16 %v5647, %v5631
    %v5776 = vpack.c.b16 %v5648, %v5632
    %v5777 = vpack.c.b16 %v5649, %v5633
    %v5778 = vpack.c.b16 %v5650, %v5634
    %v5779 = vpack.c.b16 %v5651, %v5635
    %v5780 = vpack.c.b16 %v5652, %v5636
    %v5781 = vpack.c.b16 %v5653, %v5637
    %v5782 = vpack.c.b16 %v5654, %v5638
    %v5783 = vpack.c.b16 %v5655, %v5639
    %v5784 = vpack.c.b16 %v5656, %v5640
    %v5785 = vpack.c.b16 %v5657, %v5641
    %5914 = vmatprep.subr.bf16.mxu0 %v5659
    %5915 = vmatpush1.bf16.msra.mxu0 %v5658
    %5916 = vmatprep.subr.bf16.mxu0 %v5675
    %5917 = vmatpush1.bf16.msra.mxu0 %v5674
    %5918 = vmatprep.subr.bf16.mxu0 %v5691
    %5919 = vmatpush1.bf16.msra.mxu0 %v5690
    %5920 = vmatprep.subr.bf16.mxu0 %v5707
    %5921 = vmatpush1.bf16.msra.mxu0 %v5706
    %5922 = vmatprep.subr.bf16.mxu0 %v5723
    %5923 = vmatpush1.bf16.msra.mxu0 %v5722
    %5924 = vmatprep.subr.bf16.mxu0 %v5739
    %5925 = vmatpush1.bf16.msra.mxu0 %v5738
    %5926 = vmatprep.subr.bf16.mxu0 %v5755
    %5927 = vmatpush1.bf16.msra.mxu0 %v5754
    %5928 = vmatprep.subr.bf16.mxu0 %v5771
    %5929 = vmatpush1.bf16.msra.mxu0 %v5770
    %5930 = vmatprep.subr.bf16.mxu0 0
    %5931 = vmatpush1.bf16.msra.mxu0 0
    %5932 = vmatprep.subr.bf16.mxu0 0
    %5933 = vmatpush1.bf16.msra.mxu0 0
    %5934 = vmatprep.subr.bf16.mxu0 0
    %5935 = vmatpush1.bf16.msra.mxu0 0
    %5936 = vmatprep.subr.bf16.mxu0 0
    %5937 = vmatpush1.bf16.msra.mxu0 0
    %5938 = vmatprep.subr.bf16.mxu0 0
    %5939 = vmatpush1.bf16.msra.mxu0 0
    %5940 = vmatprep.subr.bf16.mxu0 0
    %5941 = vmatpush1.bf16.msra.mxu0 0
    %5942 = vmatprep.subr.bf16.mxu0 0
    %5943 = vmatpush1.bf16.msra.mxu0 0
    %5944 = vmatprep.subr.bf16.mxu0 0
    %5945 = vmatpush1.bf16.msra.mxu0 0
    %5946 = vmatprep.mubr.bf16.mxu0 0
    %5947 = vmatmul.mubr.bf16.gmra.mrb[0].mxu0 %v5187
    %v5948 = vpop.f32.mrb[0].mxu0
    %v5949 = vadd.f32 %v5197, %v5948
    %v5950 = vpop.f32.mrb[0].mxu0
    %v5951 = vadd.f32 %v5201, %v5950
    %v5952 = vpop.f32.mrb[0].mxu0
    %v5953 = vadd.f32 %v5197, %v5952
    %v5954 = vpop.f32.mrb[0].mxu0
    %v5955 = vadd.f32 %v5201, %v5954
    %5956 = vdwg.mxu0
    %5957 = vmatprep.subr.bf16.mxu0 %v5661
    %5958 = vmatpush1.bf16.msra.mxu0 %v5660
    %5959 = vmatprep.subr.bf16.mxu0 %v5677
    %5960 = vmatpush1.bf16.msra.mxu0 %v5676
    %5961 = vmatprep.subr.bf16.mxu0 %v5693
    %5962 = vmatpush1.bf16.msra.mxu0 %v5692
    %5963 = vmatprep.subr.bf16.mxu0 %v5709
    %5964 = vmatpush1.bf16.msra.mxu0 %v5708
    %5965 = vmatprep.subr.bf16.mxu0 %v5725
    %5966 = vmatpush1.bf16.msra.mxu0 %v5724
    %5967 = vmatprep.subr.bf16.mxu0 %v5741
    %5968 = vmatpush1.bf16.msra.mxu0 %v5740
    %5969 = vmatprep.subr.bf16.mxu0 %v5757
    %5970 = vmatpush1.bf16.msra.mxu0 %v5756
    %5971 = vmatprep.subr.bf16.mxu0 %v5773
    %5972 = vmatpush1.bf16.msra.mxu0 %v5772
    %5973 = vmatprep.subr.bf16.mxu0 0
    %5974 = vmatpush1.bf16.msra.mxu0 0
    %5975 = vmatprep.subr.bf16.mxu0 0
    %5976 = vmatpush1.bf16.msra.mxu0 0
    %5977 = vmatprep.subr.bf16.mxu0 0
    %5978 = vmatpush1.bf16.msra.mxu0 0
    %5979 = vmatprep.subr.bf16.mxu0 0
    %5980 = vmatpush1.bf16.msra.mxu0 0
    %5981 = vmatprep.subr.bf16.mxu0 0
    %5982 = vmatpush1.bf16.msra.mxu0 0
    %5983 = vmatprep.subr.bf16.mxu0 0
    %5984 = vmatpush1.bf16.msra.mxu0 0
    %5985 = vmatprep.subr.bf16.mxu0 0
    %5986 = vmatpush1.bf16.msra.mxu0 0
    %5987 = vmatprep.subr.bf16.mxu0 0
    %5988 = vmatpush1.bf16.msra.mxu0 0
    %5989 = vmatprep.mubr.bf16.mxu0 0
    %5990 = vmatmul.mubr.bf16.gmra.mrb[0].mxu0 %v5187
    %v5991 = vpop.f32.mrb[0].mxu0
    %v5992 = vadd.f32 %v5205, %v5991
    %v5993 = vpop.f32.mrb[0].mxu0
    %v5994 = vadd.f32 %v5209, %v5993
    %v5995 = vpop.f32.mrb[0].mxu0
    %v5996 = vadd.f32 %v5205, %v5995
    %v5997 = vpop.f32.mrb[0].mxu0
    %v5998 = vadd.f32 %v5209, %v5997
    %5999 = vdwg.mxu0
    %6000 = vmatprep.subr.bf16.mxu0 %v5663
    %6001 = vmatpush1.bf16.msra.mxu0 %v5662
    %6002 = vmatprep.subr.bf16.mxu0 %v5679
    %6003 = vmatpush1.bf16.msra.mxu0 %v5678
    %6004 = vmatprep.subr.bf16.mxu0 %v5695
    %6005 = vmatpush1.bf16.msra.mxu0 %v5694
    %6006 = vmatprep.subr.bf16.mxu0 %v5711
    %6007 = vmatpush1.bf16.msra.mxu0 %v5710
    %6008 = vmatprep.subr.bf16.mxu0 %v5727
    %6009 = vmatpush1.bf16.msra.mxu0 %v5726
    %6010 = vmatprep.subr.bf16.mxu0 %v5743
    %6011 = vmatpush1.bf16.msra.mxu0 %v5742
    %6012 = vmatprep.subr.bf16.mxu0 %v5759
    %6013 = vmatpush1.bf16.msra.mxu0 %v5758
    %6014 = vmatprep.subr.bf16.mxu0 %v5775
    %6015 = vmatpush1.bf16.msra.mxu0 %v5774
    %6016 = vmatprep.subr.bf16.mxu0 0
    %6017 = vmatpush1.bf16.msra.mxu0 0
    %6018 = vmatprep.subr.bf16.mxu0 0
    %6019 = vmatpush1.bf16.msra.mxu0 0
    %6020 = vmatprep.subr.bf16.mxu0 0
    %6021 = vmatpush1.bf16.msra.mxu0 0
    %6022 = vmatprep.subr.bf16.mxu0 0
    %6023 = vmatpush1.bf16.msra.mxu0 0
    %6024 = vmatprep.subr.bf16.mxu0 0
    %6025 = vmatpush1.bf16.msra.mxu0 0
    %6026 = vmatprep.subr.bf16.mxu0 0
    %6027 = vmatpush1.bf16.msra.mxu0 0
    %6028 = vmatprep.subr.bf16.mxu0 0
    %6029 = vmatpush1.bf16.msra.mxu0 0
    %6030 = vmatprep.subr.bf16.mxu0 0
    %6031 = vmatpush1.bf16.msra.mxu0 0
    %6032 = vmatprep.mubr.bf16.mxu0 0
    %6033 = vmatmul.mubr.bf16.gmra.mrb[0].mxu0 %v5187
    %v6034 = vpop.f32.mrb[0].mxu0
    %v6035 = vadd.f32 %v5213, %v6034
    %v6036 = vpop.f32.mrb[0].mxu0
    %v6037 = vadd.f32 %v5217, %v6036
    %v6038 = vpop.f32.mrb[0].mxu0
    %v6039 = vadd.f32 %v5213, %v6038
    %v6040 = vpop.f32.mrb[0].mxu0
    %v6041 = vadd.f32 %v5217, %v6040
    %6042 = vdwg.mxu0
    %6043 = vmatprep.subr.bf16.mxu0 %v5665
    %6044 = vmatpush1.bf16.msra.mxu0 %v5664
    %6045 = vmatprep.subr.bf16.mxu0 %v5681
    %6046 = vmatpush1.bf16.msra.mxu0 %v5680
    %6047 = vmatprep.subr.bf16.mxu0 %v5697
    %6048 = vmatpush1.bf16.msra.mxu0 %v5696
    %6049 = vmatprep.subr.bf16.mxu0 %v5713
    %6050 = vmatpush1.bf16.msra.mxu0 %v5712
    %6051 = vmatprep.subr.bf16.mxu0 %v5729
    %6052 = vmatpush1.bf16.msra.mxu0 %v5728
    %6053 = vmatprep.subr.bf16.mxu0 %v5745
    %6054 = vmatpush1.bf16.msra.mxu0 %v5744
    %6055 = vmatprep.subr.bf16.mxu0 %v5761
    %6056 = vmatpush1.bf16.msra.mxu0 %v5760
    %6057 = vmatprep.subr.bf16.mxu0 %v5777
    %6058 = vmatpush1.bf16.msra.mxu0 %v5776
    %6059 = vmatprep.subr.bf16.mxu0 0
    %6060 = vmatpush1.bf16.msra.mxu0 0
    %6061 = vmatprep.subr.bf16.mxu0 0
    %6062 = vmatpush1.bf16.msra.mxu0 0
    %6063 = vmatprep.subr.bf16.mxu0 0
    %6064 = vmatpush1.bf16.msra.mxu0 0
    %6065 = vmatprep.subr.bf16.mxu0 0
    %6066 = vmatpush1.bf16.msra.mxu0 0
    %6067 = vmatprep.subr.bf16.mxu0 0
    %6068 = vmatpush1.bf16.msra.mxu0 0
    %6069 = vmatprep.subr.bf16.mxu0 0
    %6070 = vmatpush1.bf16.msra.mxu0 0
    %6071 = vmatprep.subr.bf16.mxu0 0
    %6072 = vmatpush1.bf16.msra.mxu0 0
    %6073 = vmatprep.subr.bf16.mxu0 0
    %6074 = vmatpush1.bf16.msra.mxu0 0
    %6075 = vmatprep.mubr.bf16.mxu0 0
    %6076 = vmatmul.mubr.bf16.gmra.mrb[0].mxu0 %v5187
    %v6077 = vpop.f32.mrb[0].mxu0
    %v6078 = vadd.f32 %v5221, %v6077
    %v6079 = vpop.f32.mrb[0].mxu0
    %v6080 = vadd.f32 %v5225, %v6079
    %v6081 = vpop.f32.mrb[0].mxu0
    %v6082 = vadd.f32 %v5221, %v6081
    %v6083 = vpop.f32.mrb[0].mxu0
    %v6084 = vadd.f32 %v5225, %v6083
    %6085 = vdwg.mxu0
    %6086 = vmatprep.subr.bf16.mxu0 %v5667
    %6087 = vmatpush1.bf16.msra.mxu0 %v5666
    %6088 = vmatprep.subr.bf16.mxu0 %v5683
    %6089 = vmatpush1.bf16.msra.mxu0 %v5682
    %6090 = vmatprep.subr.bf16.mxu0 %v5699
    %6091 = vmatpush1.bf16.msra.mxu0 %v5698
    %6092 = vmatprep.subr.bf16.mxu0 %v5715
    %6093 = vmatpush1.bf16.msra.mxu0 %v5714
    %6094 = vmatprep.subr.bf16.mxu0 %v5731
    %6095 = vmatpush1.bf16.msra.mxu0 %v5730
    %6096 = vmatprep.subr.bf16.mxu0 %v5747
    %6097 = vmatpush1.bf16.msra.mxu0 %v5746
    %6098 = vmatprep.subr.bf16.mxu0 %v5763
    %6099 = vmatpush1.bf16.msra.mxu0 %v5762
    %6100 = vmatprep.subr.bf16.mxu0 %v5779
    %6101 = vmatpush1.bf16.msra.mxu0 %v5778
    %6102 = vmatprep.subr.bf16.mxu0 0
    %6103 = vmatpush1.bf16.msra.mxu0 0
    %6104 = vmatprep.subr.bf16.mxu0 0
    %6105 = vmatpush1.bf16.msra.mxu0 0
    %6106 = vmatprep.subr.bf16.mxu0 0
    %6107 = vmatpush1.bf16.msra.mxu0 0
    %6108 = vmatprep.subr.bf16.mxu0 0
    %6109 = vmatpush1.bf16.msra.mxu0 0
    %6110 = vmatprep.subr.bf16.mxu0 0
    %6111 = vmatpush1.bf16.msra.mxu0 0
    %6112 = vmatprep.subr.bf16.mxu0 0
    %6113 = vmatpush1.bf16.msra.mxu0 0
    %6114 = vmatprep.subr.bf16.mxu0 0
    %6115 = vmatpush1.bf16.msra.mxu0 0
    %6116 = vmatprep.subr.bf16.mxu0 0
    %6117 = vmatpush1.bf16.msra.mxu0 0
    %6118 = vmatprep.mubr.bf16.mxu0 0
    %6119 = vmatmul.mubr.bf16.gmra.mrb[0].mxu0 %v5187
    %v6120 = vpop.f32.mrb[0].mxu0
    %v6121 = vadd.f32 %v5229, %v6120
    %v6122 = vpop.f32.mrb[0].mxu0
    %v6123 = vadd.f32 %v5233, %v6122
    %v6124 = vpop.f32.mrb[0].mxu0
    %v6125 = vadd.f32 %v5229, %v6124
    %v6126 = vpop.f32.mrb[0].mxu0
    %v6127 = vadd.f32 %v5233, %v6126
    %6128 = vdwg.mxu0
    %6129 = vmatprep.subr.bf16.mxu0 %v5669
    %6130 = vmatpush1.bf16.msra.mxu0 %v5668
    %6131 = vmatprep.subr.bf16.mxu0 %v5685
    %6132 = vmatpush1.bf16.msra.mxu0 %v5684
    %6133 = vmatprep.subr.bf16.mxu0 %v5701
    %6134 = vmatpush1.bf16.msra.mxu0 %v5700
    %6135 = vmatprep.subr.bf16.mxu0 %v5717
    %6136 = vmatpush1.bf16.msra.mxu0 %v5716
    %6137 = vmatprep.subr.bf16.mxu0 %v5733
    %6138 = vmatpush1.bf16.msra.mxu0 %v5732
    %6139 = vmatprep.subr.bf16.mxu0 %v5749
    %6140 = vmatpush1.bf16.msra.mxu0 %v5748
    %6141 = vmatprep.subr.bf16.mxu0 %v5765
    %6142 = vmatpush1.bf16.msra.mxu0 %v5764
    %6143 = vmatprep.subr.bf16.mxu0 %v5781
    %6144 = vmatpush1.bf16.msra.mxu0 %v5780
    %6145 = vmatprep.subr.bf16.mxu0 0
    %6146 = vmatpush1.bf16.msra.mxu0 0
    %6147 = vmatprep.subr.bf16.mxu0 0
    %6148 = vmatpush1.bf16.msra.mxu0 0
    %6149 = vmatprep.subr.bf16.mxu0 0
    %6150 = vmatpush1.bf16.msra.mxu0 0
    %6151 = vmatprep.subr.bf16.mxu0 0
    %6152 = vmatpush1.bf16.msra.mxu0 0
    %6153 = vmatprep.subr.bf16.mxu0 0
    %6154 = vmatpush1.bf16.msra.mxu0 0
    %6155 = vmatprep.subr.bf16.mxu0 0
    %6156 = vmatpush1.bf16.msra.mxu0 0
    %6157 = vmatprep.subr.bf16.mxu0 0
    %6158 = vmatpush1.bf16.msra.mxu0 0
    %6159 = vmatprep.subr.bf16.mxu0 0
    %6160 = vmatpush1.bf16.msra.mxu0 0
    %6161 = vmatprep.mubr.bf16.mxu0 0
    %6162 = vmatmul.mubr.bf16.gmra.mrb[0].mxu0 %v5187
    %v6163 = vpop.f32.mrb[0].mxu0
    %v6164 = vadd.f32 %v5237, %v6163
    %v6165 = vpop.f32.mrb[0].mxu0
    %v6166 = vadd.f32 %v5241, %v6165
    %v6167 = vpop.f32.mrb[0].mxu0
    %v6168 = vadd.f32 %v5237, %v6167
    %v6169 = vpop.f32.mrb[0].mxu0
    %v6170 = vadd.f32 %v5241, %v6169
    %6171 = vdwg.mxu0
    %6172 = vmatprep.subr.bf16.mxu0 %v5671
    %6173 = vmatpush1.bf16.msra.mxu0 %v5670
    %6174 = vmatprep.subr.bf16.mxu0 %v5687
    %6175 = vmatpush1.bf16.msra.mxu0 %v5686
    %6176 = vmatprep.subr.bf16.mxu0 %v5703
    %6177 = vmatpush1.bf16.msra.mxu0 %v5702
    %6178 = vmatprep.subr.bf16.mxu0 %v5719
    %6179 = vmatpush1.bf16.msra.mxu0 %v5718
    %6180 = vmatprep.subr.bf16.mxu0 %v5735
    %6181 = vmatpush1.bf16.msra.mxu0 %v5734
    %6182 = vmatprep.subr.bf16.mxu0 %v5751
    %6183 = vmatpush1.bf16.msra.mxu0 %v5750
    %6184 = vmatprep.subr.bf16.mxu0 %v5767
    %6185 = vmatpush1.bf16.msra.mxu0 %v5766
    %6186 = vmatprep.subr.bf16.mxu0 %v5783
    %6187 = vmatpush1.bf16.msra.mxu0 %v5782
    %6188 = vmatprep.subr.bf16.mxu0 0
    %6189 = vmatpush1.bf16.msra.mxu0 0
    %6190 = vmatprep.subr.bf16.mxu0 0
    %6191 = vmatpush1.bf16.msra.mxu0 0
    %6192 = vmatprep.subr.bf16.mxu0 0
    %6193 = vmatpush1.bf16.msra.mxu0 0
    %6194 = vmatprep.subr.bf16.mxu0 0
    %6195 = vmatpush1.bf16.msra.mxu0 0
    %6196 = vmatprep.subr.bf16.mxu0 0
    %6197 = vmatpush1.bf16.msra.mxu0 0
    %6198 = vmatprep.subr.bf16.mxu0 0
    %6199 = vmatpush1.bf16.msra.mxu0 0
    %6200 = vmatprep.subr.bf16.mxu0 0
    %6201 = vmatpush1.bf16.msra.mxu0 0
    %6202 = vmatprep.subr.bf16.mxu0 0
    %6203 = vmatpush1.bf16.msra.mxu0 0
    %6204 = vmatprep.mubr.bf16.mxu0 0
    %6205 = vmatmul.mubr.bf16.gmra.mrb[0].mxu0 %v5187
    %v6206 = vpop.f32.mrb[0].mxu0
    %v6207 = vadd.f32 %v5245, %v6206
    %v6208 = vpop.f32.mrb[0].mxu0
    %v6209 = vadd.f32 %v5249, %v6208
    %v6210 = vpop.f32.mrb[0].mxu0
    %v6211 = vadd.f32 %v5245, %v6210
    %v6212 = vpop.f32.mrb[0].mxu0
    %v6213 = vadd.f32 %v5249, %v6212
    %6214 = vdwg.mxu0
    %6215 = vmatprep.subr.bf16.mxu0 %v5673
    %6216 = vmatpush1.bf16.msra.mxu0 %v5672
    %6217 = vmatprep.subr.bf16.mxu0 %v5689
    %6218 = vmatpush1.bf16.msra.mxu0 %v5688
    %6219 = vmatprep.subr.bf16.mxu0 %v5705
    %6220 = vmatpush1.bf16.msra.mxu0 %v5704
    %6221 = vmatprep.subr.bf16.mxu0 %v5721
    %6222 = vmatpush1.bf16.msra.mxu0 %v5720
    %6223 = vmatprep.subr.bf16.mxu0 %v5737
    %6224 = vmatpush1.bf16.msra.mxu0 %v5736
    %6225 = vmatprep.subr.bf16.mxu0 %v5753
    %6226 = vmatpush1.bf16.msra.mxu0 %v5752
    %6227 = vmatprep.subr.bf16.mxu0 %v5769
    %6228 = vmatpush1.bf16.msra.mxu0 %v5768
    %6229 = vmatprep.subr.bf16.mxu0 %v5785
    %6230 = vmatpush1.bf16.msra.mxu0 %v5784
    %6231 = vmatprep.subr.bf16.mxu0 0
    %6232 = vmatpush1.bf16.msra.mxu0 0
    %6233 = vmatprep.subr.bf16.mxu0 0
    %6234 = vmatpush1.bf16.msra.mxu0 0
    %6235 = vmatprep.subr.bf16.mxu0 0
    %6236 = vmatpush1.bf16.msra.mxu0 0
    %6237 = vmatprep.subr.bf16.mxu0 0
    %6238 = vmatpush1.bf16.msra.mxu0 0
    %6239 = vmatprep.subr.bf16.mxu0 0
    %6240 = vmatpush1.bf16.msra.mxu0 0
    %6241 = vmatprep.subr.bf16.mxu0 0
    %6242 = vmatpush1.bf16.msra.mxu0 0
    %6243 = vmatprep.subr.bf16.mxu0 0
    %6244 = vmatpush1.bf16.msra.mxu0 0
    %6245 = vmatprep.subr.bf16.mxu0 0
    %6246 = vmatpush1.bf16.msra.mxu0 0
    %6247 = vmatprep.mubr.bf16.mxu0 0
    %6248 = vmatmul.mubr.bf16.gmra.mrb[0].mxu0 %v5187
    %v6249 = vpop.f32.mrb[0].mxu0
    %v6250 = vadd.f32 %v5253, %v6249
    %v6251 = vpop.f32.mrb[0].mxu0
    %v6252 = vadd.f32 %v5257, %v6251
    %v6253 = vpop.f32.mrb[0].mxu0
    %v6254 = vadd.f32 %v5253, %v6253
    %v6255 = vpop.f32.mrb[0].mxu0
    %v6256 = vadd.f32 %v5257, %v6255
    %6257 = vdwg.mxu0
    %v6258 = vmax.f32 %v5949, 0.0
    %v6259 = vmax.f32 %v5951, 0.0
    %v6260 = vmax.f32 %v5992, 0.0
    %v6261 = vmax.f32 %v5994, 0.0
    %v6262 = vmax.f32 %v6035, 0.0
    %v6263 = vmax.f32 %v6037, 0.0
    %v6264 = vmax.f32 %v6078, 0.0
    %v6265 = vmax.f32 %v6080, 0.0
    %v6266 = vmax.f32 %v6121, 0.0
    %v6267 = vmax.f32 %v6123, 0.0
    %v6268 = vmax.f32 %v6164, 0.0
    %v6269 = vmax.f32 %v6166, 0.0
    %v6270 = vmax.f32 %v6207, 0.0
    %v6271 = vmax.f32 %v6209, 0.0
    %v6272 = vmax.f32 %v6250, 0.0
    %v6273 = vmax.f32 %v6252, 0.0
    %v6274 = vmax.f32 %v5953, 0.0
    %v6275 = vmax.f32 %v5955, 0.0
    %v6276 = vmax.f32 %v5996, 0.0
    %v6277 = vmax.f32 %v5998, 0.0
    %v6278 = vmax.f32 %v6039, 0.0
    %v6279 = vmax.f32 %v6041, 0.0
    %v6280 = vmax.f32 %v6082, 0.0
    %v6281 = vmax.f32 %v6084, 0.0
    %v6282 = vmax.f32 %v6125, 0.0
    %v6283 = vmax.f32 %v6127, 0.0
    %v6284 = vmax.f32 %v6168, 0.0
    %v6285 = vmax.f32 %v6170, 0.0
    %v6286 = vmax.f32 %v6211, 0.0
    %v6287 = vmax.f32 %v6213, 0.0
    %v6288 = vmax.f32 %v6254, 0.0
    %v6289 = vmax.f32 %v6256, 0.0
    %s6290 = scalar_lea.vmem [#allocation12], 1024
    %v6291 = vld [vmem:[%s6290] sm:$0xf]
    %v6292 = vld [vmem:[%s6290 + $0x4] sm:$0xf]
    %v6293 = vld [vmem:[%s6290 + $0x8] sm:$0xf]
    %v6294 = vld [vmem:[%s6290 + $0xc] sm:$0xf]
    %v6295 = vld [vmem:[%s6290 + $0x10] sm:$0xf]
    %v6296 = vld [vmem:[%s6290 + $0x14] sm:$0xf]
    %v6297 = vld [vmem:[%s6290 + $0x18] sm:$0xf]
    %v6298 = vld [vmem:[%s6290 + $0x1c] sm:$0xf]
    %v6299 = vld [vmem:[%s6290 + $0x20] sm:$0xf]
    %v6300 = vld [vmem:[%s6290 + $0x24] sm:$0xf]
    %v6301 = vld [vmem:[%s6290 + $0x28] sm:$0xf]
    %v6302 = vld [vmem:[%s6290 + $0x2c] sm:$0xf]
    %v6303 = vld [vmem:[%s6290 + $0x30] sm:$0xf]
    %v6304 = vld [vmem:[%s6290 + $0x34] sm:$0xf]
    %v6305 = vld [vmem:[%s6290 + $0x38] sm:$0xf]
    %v6306 = vld [vmem:[%s6290 + $0x3c] sm:$0xf]
    %v6307 = vld [vmem:[%s6290 + $0x40] sm:$0xf]
    %v6308 = vld [vmem:[%s6290 + $0x44] sm:$0xf]
    %v6309 = vld [vmem:[%s6290 + $0x48] sm:$0xf]
    %v6310 = vld [vmem:[%s6290 + $0x4c] sm:$0xf]
    %v6311 = vld [vmem:[%s6290 + $0x50] sm:$0xf]
    %v6312 = vld [vmem:[%s6290 + $0x54] sm:$0xf]
    %v6313 = vld [vmem:[%s6290 + $0x58] sm:$0xf]
    %v6314 = vld [vmem:[%s6290 + $0x5c] sm:$0xf]
    %v6315 = vld [vmem:[%s6290 + $0x60] sm:$0xf]
    %v6316 = vld [vmem:[%s6290 + $0x64] sm:$0xf]
    %v6317 = vld [vmem:[%s6290 + $0x68] sm:$0xf]
    %v6318 = vld [vmem:[%s6290 + $0x6c] sm:$0xf]
    %v6319 = vld [vmem:[%s6290 + $0x70] sm:$0xf]
    %v6320 = vld [vmem:[%s6290 + $0x74] sm:$0xf]
    %v6321 = vld [vmem:[%s6290 + $0x78] sm:$0xf]
    %v6322 = vld [vmem:[%s6290 + $0x7c] sm:$0xf]
    %v6323 = vld [vmem:[%s6290 + $0x80] sm:$0xf]
    %v6324 = vld [vmem:[%s6290 + $0x84] sm:$0xf]
    %v6325 = vld [vmem:[%s6290 + $0x88] sm:$0xf]
    %v6326 = vld [vmem:[%s6290 + $0x8c] sm:$0xf]
    %v6327 = vld [vmem:[%s6290 + $0x90] sm:$0xf]
    %v6328 = vld [vmem:[%s6290 + $0x94] sm:$0xf]
    %v6329 = vld [vmem:[%s6290 + $0x98] sm:$0xf]
    %v6330 = vld [vmem:[%s6290 + $0x9c] sm:$0xf]
    %v6331 = vld [vmem:[%s6290 + $0xa0] sm:$0xf]
    %v6332 = vld [vmem:[%s6290 + $0xa4] sm:$0xf]
    %v6333 = vld [vmem:[%s6290 + $0xa8] sm:$0xf]
    %v6334 = vld [vmem:[%s6290 + $0xac] sm:$0xf]
    %v6335 = vld [vmem:[%s6290 + $0xb0] sm:$0xf]
    %v6336 = vld [vmem:[%s6290 + $0xb4] sm:$0xf]
    %v6337 = vld [vmem:[%s6290 + $0xb8] sm:$0xf]
    %v6338 = vld [vmem:[%s6290 + $0xbc] sm:$0xf]
    %v6339 = vld [vmem:[%s6290 + $0xc0] sm:$0xf]
    %v6340 = vld [vmem:[%s6290 + $0xc4] sm:$0xf]
    %v6341 = vld [vmem:[%s6290 + $0xc8] sm:$0xf]
    %v6342 = vld [vmem:[%s6290 + $0xcc] sm:$0xf]
    %v6343 = vld [vmem:[%s6290 + $0xd0] sm:$0xf]
    %v6344 = vld [vmem:[%s6290 + $0xd4] sm:$0xf]
    %v6345 = vld [vmem:[%s6290 + $0xd8] sm:$0xf]
    %v6346 = vld [vmem:[%s6290 + $0xdc] sm:$0xf]
    %v6347 = vld [vmem:[%s6290 + $0xe0] sm:$0xf]
    %v6348 = vld [vmem:[%s6290 + $0xe4] sm:$0xf]
    %v6349 = vld [vmem:[%s6290 + $0xe8] sm:$0xf]
    %v6350 = vld [vmem:[%s6290 + $0xec] sm:$0xf]
    %v6351 = vld [vmem:[%s6290 + $0xf0] sm:$0xf]
    %v6352 = vld [vmem:[%s6290 + $0xf4] sm:$0xf]
    %v6353 = vld [vmem:[%s6290 + $0xf8] sm:$0xf]
    %v6354 = vld [vmem:[%s6290 + $0xfc] sm:$0xf]
    %v6355 = vld [vmem:[%s6290 + $0x100] sm:$0xf]
    %v6356 = vld [vmem:[%s6290 + $0x104] sm:$0xf]
    %v6357 = vld [vmem:[%s6290 + $0x108] sm:$0xf]
    %v6358 = vld [vmem:[%s6290 + $0x10c] sm:$0xf]
    %v6359 = vld [vmem:[%s6290 + $0x110] sm:$0xf]
    %v6360 = vld [vmem:[%s6290 + $0x114] sm:$0xf]
    %v6361 = vld [vmem:[%s6290 + $0x118] sm:$0xf]
    %v6362 = vld [vmem:[%s6290 + $0x11c] sm:$0xf]
    %v6363 = vld [vmem:[%s6290 + $0x120] sm:$0xf]
    %v6364 = vld [vmem:[%s6290 + $0x124] sm:$0xf]
    %v6365 = vld [vmem:[%s6290 + $0x128] sm:$0xf]
    %v6366 = vld [vmem:[%s6290 + $0x12c] sm:$0xf]
    %v6367 = vld [vmem:[%s6290 + $0x130] sm:$0xf]
    %v6368 = vld [vmem:[%s6290 + $0x134] sm:$0xf]
    %v6369 = vld [vmem:[%s6290 + $0x138] sm:$0xf]
    %v6370 = vld [vmem:[%s6290 + $0x13c] sm:$0xf]
    %v6371 = vld [vmem:[%s6290 + $0x140] sm:$0xf]
    %v6372 = vld [vmem:[%s6290 + $0x144] sm:$0xf]
    %v6373 = vld [vmem:[%s6290 + $0x148] sm:$0xf]
    %v6374 = vld [vmem:[%s6290 + $0x14c] sm:$0xf]
    %v6375 = vld [vmem:[%s6290 + $0x150] sm:$0xf]
    %v6376 = vld [vmem:[%s6290 + $0x154] sm:$0xf]
    %v6377 = vld [vmem:[%s6290 + $0x158] sm:$0xf]
    %v6378 = vld [vmem:[%s6290 + $0x15c] sm:$0xf]
    %v6379 = vld [vmem:[%s6290 + $0x160] sm:$0xf]
    %v6380 = vld [vmem:[%s6290 + $0x164] sm:$0xf]
    %v6381 = vld [vmem:[%s6290 + $0x168] sm:$0xf]
    %v6382 = vld [vmem:[%s6290 + $0x16c] sm:$0xf]
    %v6383 = vld [vmem:[%s6290 + $0x170] sm:$0xf]
    %v6384 = vld [vmem:[%s6290 + $0x174] sm:$0xf]
    %v6385 = vld [vmem:[%s6290 + $0x178] sm:$0xf]
    %v6386 = vld [vmem:[%s6290 + $0x17c] sm:$0xf]
    %v6387 = vld [vmem:[%s6290 + $0x180] sm:$0xf]
    %v6388 = vld [vmem:[%s6290 + $0x184] sm:$0xf]
    %v6389 = vld [vmem:[%s6290 + $0x188] sm:$0xf]
    %v6390 = vld [vmem:[%s6290 + $0x18c] sm:$0xf]
    %v6391 = vld [vmem:[%s6290 + $0x190] sm:$0xf]
    %v6392 = vld [vmem:[%s6290 + $0x194] sm:$0xf]
    %v6393 = vld [vmem:[%s6290 + $0x198] sm:$0xf]
    %v6394 = vld [vmem:[%s6290 + $0x19c] sm:$0xf]
    %v6395 = vld [vmem:[%s6290 + $0x1a0] sm:$0xf]
    %v6396 = vld [vmem:[%s6290 + $0x1a4] sm:$0xf]
    %v6397 = vld [vmem:[%s6290 + $0x1a8] sm:$0xf]
    %v6398 = vld [vmem:[%s6290 + $0x1ac] sm:$0xf]
    %v6399 = vld [vmem:[%s6290 + $0x1b0] sm:$0xf]
    %v6400 = vld [vmem:[%s6290 + $0x1b4] sm:$0xf]
    %v6401 = vld [vmem:[%s6290 + $0x1b8] sm:$0xf]
    %v6402 = vld [vmem:[%s6290 + $0x1bc] sm:$0xf]
    %v6403 = vld [vmem:[%s6290 + $0x1c0] sm:$0xf]
    %v6404 = vld [vmem:[%s6290 + $0x1c4] sm:$0xf]
    %v6405 = vld [vmem:[%s6290 + $0x1c8] sm:$0xf]
    %v6406 = vld [vmem:[%s6290 + $0x1cc] sm:$0xf]
    %v6407 = vld [vmem:[%s6290 + $0x1d0] sm:$0xf]
    %v6408 = vld [vmem:[%s6290 + $0x1d4] sm:$0xf]
    %v6409 = vld [vmem:[%s6290 + $0x1d8] sm:$0xf]
    %v6410 = vld [vmem:[%s6290 + $0x1dc] sm:$0xf]
    %v6411 = vld [vmem:[%s6290 + $0x1e0] sm:$0xf]
    %v6412 = vld [vmem:[%s6290 + $0x1e4] sm:$0xf]
    %v6413 = vld [vmem:[%s6290 + $0x1e8] sm:$0xf]
    %v6414 = vld [vmem:[%s6290 + $0x1ec] sm:$0xf]
    %v6415 = vld [vmem:[%s6290 + $0x1f0] sm:$0xf]
    %v6416 = vld [vmem:[%s6290 + $0x1f4] sm:$0xf]
    %v6417 = vld [vmem:[%s6290 + $0x1f8] sm:$0xf]
    %v6418 = vld [vmem:[%s6290 + $0x1fc] sm:$0xf]
    %v6419 = vld [vmem:[%s6290 + $0x200] sm:$0xf]
    %v6420 = vld [vmem:[%s6290 + $0x204] sm:$0xf]
    %v6421 = vld [vmem:[%s6290 + $0x208] sm:$0xf]
    %v6422 = vld [vmem:[%s6290 + $0x20c] sm:$0xf]
    %v6423 = vld [vmem:[%s6290 + $0x210] sm:$0xf]
    %v6424 = vld [vmem:[%s6290 + $0x214] sm:$0xf]
    %v6425 = vld [vmem:[%s6290 + $0x218] sm:$0xf]
    %v6426 = vld [vmem:[%s6290 + $0x21c] sm:$0xf]
    %v6427 = vld [vmem:[%s6290 + $0x220] sm:$0xf]
    %v6428 = vld [vmem:[%s6290 + $0x224] sm:$0xf]
    %v6429 = vld [vmem:[%s6290 + $0x228] sm:$0xf]
    %v6430 = vld [vmem:[%s6290 + $0x22c] sm:$0xf]
    %v6431 = vld [vmem:[%s6290 + $0x230] sm:$0xf]
    %v6432 = vld [vmem:[%s6290 + $0x234] sm:$0xf]
    %v6433 = vld [vmem:[%s6290 + $0x238] sm:$0xf]
    %v6434 = vld [vmem:[%s6290 + $0x23c] sm:$0xf]
    %v6435 = vld [vmem:[%s6290 + $0x240] sm:$0xf]
    %v6436 = vld [vmem:[%s6290 + $0x244] sm:$0xf]
    %v6437 = vld [vmem:[%s6290 + $0x248] sm:$0xf]
    %v6438 = vld [vmem:[%s6290 + $0x24c] sm:$0xf]
    %v6439 = vld [vmem:[%s6290 + $0x250] sm:$0xf]
    %v6440 = vld [vmem:[%s6290 + $0x254] sm:$0xf]
    %v6441 = vld [vmem:[%s6290 + $0x258] sm:$0xf]
    %v6442 = vld [vmem:[%s6290 + $0x25c] sm:$0xf]
    %v6443 = vld [vmem:[%s6290 + $0x260] sm:$0xf]
    %v6444 = vld [vmem:[%s6290 + $0x264] sm:$0xf]
    %v6445 = vld [vmem:[%s6290 + $0x268] sm:$0xf]
    %v6446 = vld [vmem:[%s6290 + $0x26c] sm:$0xf]
    %v6447 = vld [vmem:[%s6290 + $0x270] sm:$0xf]
    %v6448 = vld [vmem:[%s6290 + $0x274] sm:$0xf]
    %v6449 = vld [vmem:[%s6290 + $0x278] sm:$0xf]
    %v6450 = vld [vmem:[%s6290 + $0x27c] sm:$0xf]
    %v6451 = vld [vmem:[%s6290 + $0x280] sm:$0xf]
    %v6452 = vld [vmem:[%s6290 + $0x284] sm:$0xf]
    %v6453 = vld [vmem:[%s6290 + $0x288] sm:$0xf]
    %v6454 = vld [vmem:[%s6290 + $0x28c] sm:$0xf]
    %v6455 = vld [vmem:[%s6290 + $0x290] sm:$0xf]
    %v6456 = vld [vmem:[%s6290 + $0x294] sm:$0xf]
    %v6457 = vld [vmem:[%s6290 + $0x298] sm:$0xf]
    %v6458 = vld [vmem:[%s6290 + $0x29c] sm:$0xf]
    %v6459 = vld [vmem:[%s6290 + $0x2a0] sm:$0xf]
    %v6460 = vld [vmem:[%s6290 + $0x2a4] sm:$0xf]
    %v6461 = vld [vmem:[%s6290 + $0x2a8] sm:$0xf]
    %v6462 = vld [vmem:[%s6290 + $0x2ac] sm:$0xf]
    %v6463 = vld [vmem:[%s6290 + $0x2b0] sm:$0xf]
    %v6464 = vld [vmem:[%s6290 + $0x2b4] sm:$0xf]
    %v6465 = vld [vmem:[%s6290 + $0x2b8] sm:$0xf]
    %v6466 = vld [vmem:[%s6290 + $0x2bc] sm:$0xf]
    %v6467 = vld [vmem:[%s6290 + $0x2c0] sm:$0xf]
    %v6468 = vld [vmem:[%s6290 + $0x2c4] sm:$0xf]
    %v6469 = vld [vmem:[%s6290 + $0x2c8] sm:$0xf]
    %v6470 = vld [vmem:[%s6290 + $0x2cc] sm:$0xf]
    %v6471 = vld [vmem:[%s6290 + $0x2d0] sm:$0xf]
    %v6472 = vld [vmem:[%s6290 + $0x2d4] sm:$0xf]
    %v6473 = vld [vmem:[%s6290 + $0x2d8] sm:$0xf]
    %v6474 = vld [vmem:[%s6290 + $0x2dc] sm:$0xf]
    %v6475 = vld [vmem:[%s6290 + $0x2e0] sm:$0xf]
    %v6476 = vld [vmem:[%s6290 + $0x2e4] sm:$0xf]
    %v6477 = vld [vmem:[%s6290 + $0x2e8] sm:$0xf]
    %v6478 = vld [vmem:[%s6290 + $0x2ec] sm:$0xf]
    %v6479 = vld [vmem:[%s6290 + $0x2f0] sm:$0xf]
    %v6480 = vld [vmem:[%s6290 + $0x2f4] sm:$0xf]
    %v6481 = vld [vmem:[%s6290 + $0x2f8] sm:$0xf]
    %v6482 = vld [vmem:[%s6290 + $0x2fc] sm:$0xf]
    %v6483 = vld [vmem:[%s6290 + $0x300] sm:$0xf]
    %v6484 = vld [vmem:[%s6290 + $0x304] sm:$0xf]
    %v6485 = vld [vmem:[%s6290 + $0x308] sm:$0xf]
    %v6486 = vld [vmem:[%s6290 + $0x30c] sm:$0xf]
    %v6487 = vld [vmem:[%s6290 + $0x310] sm:$0xf]
    %v6488 = vld [vmem:[%s6290 + $0x314] sm:$0xf]
    %v6489 = vld [vmem:[%s6290 + $0x318] sm:$0xf]
    %v6490 = vld [vmem:[%s6290 + $0x31c] sm:$0xf]
    %v6491 = vld [vmem:[%s6290 + $0x320] sm:$0xf]
    %v6492 = vld [vmem:[%s6290 + $0x324] sm:$0xf]
    %v6493 = vld [vmem:[%s6290 + $0x328] sm:$0xf]
    %v6494 = vld [vmem:[%s6290 + $0x32c] sm:$0xf]
    %v6495 = vld [vmem:[%s6290 + $0x330] sm:$0xf]
    %v6496 = vld [vmem:[%s6290 + $0x334] sm:$0xf]
    %v6497 = vld [vmem:[%s6290 + $0x338] sm:$0xf]
    %v6498 = vld [vmem:[%s6290 + $0x33c] sm:$0xf]
    %v6499 = vld [vmem:[%s6290 + $0x340] sm:$0xf]
    %v6500 = vld [vmem:[%s6290 + $0x344] sm:$0xf]
    %v6501 = vld [vmem:[%s6290 + $0x348] sm:$0xf]
    %v6502 = vld [vmem:[%s6290 + $0x34c] sm:$0xf]
    %v6503 = vld [vmem:[%s6290 + $0x350] sm:$0xf]
    %v6504 = vld [vmem:[%s6290 + $0x354] sm:$0xf]
    %v6505 = vld [vmem:[%s6290 + $0x358] sm:$0xf]
    %v6506 = vld [vmem:[%s6290 + $0x35c] sm:$0xf]
    %v6507 = vld [vmem:[%s6290 + $0x360] sm:$0xf]
    %v6508 = vld [vmem:[%s6290 + $0x364] sm:$0xf]
    %v6509 = vld [vmem:[%s6290 + $0x368] sm:$0xf]
    %v6510 = vld [vmem:[%s6290 + $0x36c] sm:$0xf]
    %v6511 = vld [vmem:[%s6290 + $0x370] sm:$0xf]
    %v6512 = vld [vmem:[%s6290 + $0x374] sm:$0xf]
    %v6513 = vld [vmem:[%s6290 + $0x378] sm:$0xf]
    %v6514 = vld [vmem:[%s6290 + $0x37c] sm:$0xf]
    %v6515 = vld [vmem:[%s6290 + $0x380] sm:$0xf]
    %v6516 = vld [vmem:[%s6290 + $0x384] sm:$0xf]
    %v6517 = vld [vmem:[%s6290 + $0x388] sm:$0xf]
    %v6518 = vld [vmem:[%s6290 + $0x38c] sm:$0xf]
    %v6519 = vld [vmem:[%s6290 + $0x390] sm:$0xf]
    %v6520 = vld [vmem:[%s6290 + $0x394] sm:$0xf]
    %v6521 = vld [vmem:[%s6290 + $0x398] sm:$0xf]
    %v6522 = vld [vmem:[%s6290 + $0x39c] sm:$0xf]
    %v6523 = vld [vmem:[%s6290 + $0x3a0] sm:$0xf]
    %v6524 = vld [vmem:[%s6290 + $0x3a4] sm:$0xf]
    %v6525 = vld [vmem:[%s6290 + $0x3a8] sm:$0xf]
    %v6526 = vld [vmem:[%s6290 + $0x3ac] sm:$0xf]
    %v6527 = vld [vmem:[%s6290 + $0x3b0] sm:$0xf]
    %v6528 = vld [vmem:[%s6290 + $0x3b4] sm:$0xf]
    %v6529 = vld [vmem:[%s6290 + $0x3b8] sm:$0xf]
    %v6530 = vld [vmem:[%s6290 + $0x3bc] sm:$0xf]
    %v6531 = vld [vmem:[%s6290 + $0x3c0] sm:$0xf]
    %v6532 = vld [vmem:[%s6290 + $0x3c4] sm:$0xf]
    %v6533 = vld [vmem:[%s6290 + $0x3c8] sm:$0xf]
    %v6534 = vld [vmem:[%s6290 + $0x3cc] sm:$0xf]
    %v6535 = vld [vmem:[%s6290 + $0x3d0] sm:$0xf]
    %v6536 = vld [vmem:[%s6290 + $0x3d4] sm:$0xf]
    %v6537 = vld [vmem:[%s6290 + $0x3d8] sm:$0xf]
    %v6538 = vld [vmem:[%s6290 + $0x3dc] sm:$0xf]
    %v6539 = vld [vmem:[%s6290 + $0x3e0] sm:$0xf]
    %v6540 = vld [vmem:[%s6290 + $0x3e4] sm:$0xf]
    %v6541 = vld [vmem:[%s6290 + $0x3e8] sm:$0xf]
    %v6542 = vld [vmem:[%s6290 + $0x3ec] sm:$0xf]
    %v6543 = vld [vmem:[%s6290 + $0x3f0] sm:$0xf]
    %v6544 = vld [vmem:[%s6290 + $0x3f4] sm:$0xf]
    %v6545 = vld [vmem:[%s6290 + $0x3f8] sm:$0xf]
    %v6546 = vld [vmem:[%s6290 + $0x3fc] sm:$0xf]
    %v6547 = vpack.c.bf16 %v6274, %v6258
    %v6548 = vpack.c.bf16 %v6275, %v6259
    %v6549 = vpack.c.bf16 %v6276, %v6260
    %v6550 = vpack.c.bf16 %v6277, %v6261
    %v6551 = vpack.c.bf16 %v6278, %v6262
    %v6552 = vpack.c.bf16 %v6279, %v6263
    %v6553 = vpack.c.bf16 %v6280, %v6264
    %v6554 = vpack.c.bf16 %v6281, %v6265
    %v6555 = vpack.c.bf16 %v6282, %v6266
    %v6556 = vpack.c.bf16 %v6283, %v6267
    %v6557 = vpack.c.bf16 %v6284, %v6268
    %v6558 = vpack.c.bf16 %v6285, %v6269
    %v6559 = vpack.c.bf16 %v6286, %v6270
    %v6560 = vpack.c.bf16 %v6287, %v6271
    %v6561 = vpack.c.bf16 %v6288, %v6272
    %v6562 = vpack.c.bf16 %v6289, %v6273
    %v6563 = vlaneseq
    %v6564 = vshrl.u32 %v6563, 7
    %v6565 = vsub.s32 0, %v6564
    %v6566 = vrot.slane %v143, %v6565
    %v6823 = vunpack.c.l.b16 %v6291
    %v6824 = vunpack.c.l.b16 %v6292
    %v6825 = vunpack.c.l.b16 %v6293
    %v6826 = vunpack.c.l.b16 %v6294
    %v6827 = vunpack.c.l.b16 %v6295
    %v6828 = vunpack.c.l.b16 %v6296
    %v6829 = vunpack.c.l.b16 %v6297
    %v6830 = vunpack.c.l.b16 %v6298
    %v6831 = vunpack.c.l.b16 %v6299
    %v6832 = vunpack.c.l.b16 %v6300
    %v6833 = vunpack.c.l.b16 %v6301
    %v6834 = vunpack.c.l.b16 %v6302
    %v6835 = vunpack.c.l.b16 %v6303
    %v6836 = vunpack.c.l.b16 %v6304
    %v6837 = vunpack.c.l.b16 %v6305
    %v6838 = vunpack.c.l.b16 %v6306
    %v6839 = vunpack.c.l.b16 %v6307
    %v6840 = vunpack.c.l.b16 %v6308
    %v6841 = vunpack.c.l.b16 %v6309
    %v6842 = vunpack.c.l.b16 %v6310
    %v6843 = vunpack.c.l.b16 %v6311
    %v6844 = vunpack.c.l.b16 %v6312
    %v6845 = vunpack.c.l.b16 %v6313
    %v6846 = vunpack.c.l.b16 %v6314
    %v6847 = vunpack.c.l.b16 %v6315
    %v6848 = vunpack.c.l.b16 %v6316
    %v6849 = vunpack.c.l.b16 %v6317
    %v6850 = vunpack.c.l.b16 %v6318
    %v6851 = vunpack.c.l.b16 %v6319
    %v6852 = vunpack.c.l.b16 %v6320
    %v6853 = vunpack.c.l.b16 %v6321
    %v6854 = vunpack.c.l.b16 %v6322
    %v6855 = vunpack.c.l.b16 %v6323
    %v6856 = vunpack.c.l.b16 %v6324
    %v6857 = vunpack.c.l.b16 %v6325
    %v6858 = vunpack.c.l.b16 %v6326
    %v6859 = vunpack.c.l.b16 %v6327
    %v6860 = vunpack.c.l.b16 %v6328
    %v6861 = vunpack.c.l.b16 %v6329
    %v6862 = vunpack.c.l.b16 %v6330
    %v6863 = vunpack.c.l.b16 %v6331
    %v6864 = vunpack.c.l.b16 %v6332
    %v6865 = vunpack.c.l.b16 %v6333
    %v6866 = vunpack.c.l.b16 %v6334
    %v6867 = vunpack.c.l.b16 %v6335
    %v6868 = vunpack.c.l.b16 %v6336
    %v6869 = vunpack.c.l.b16 %v6337
    %v6870 = vunpack.c.l.b16 %v6338
    %v6871 = vunpack.c.l.b16 %v6339
    %v6872 = vunpack.c.l.b16 %v6340
    %v6873 = vunpack.c.l.b16 %v6341
    %v6874 = vunpack.c.l.b16 %v6342
    %v6875 = vunpack.c.l.b16 %v6343
    %v6876 = vunpack.c.l.b16 %v6344
    %v6877 = vunpack.c.l.b16 %v6345
    %v6878 = vunpack.c.l.b16 %v6346
    %v6879 = vunpack.c.l.b16 %v6347
    %v6880 = vunpack.c.l.b16 %v6348
    %v6881 = vunpack.c.l.b16 %v6349
    %v6882 = vunpack.c.l.b16 %v6350
    %v6883 = vunpack.c.l.b16 %v6351
    %v6884 = vunpack.c.l.b16 %v6352
    %v6885 = vunpack.c.l.b16 %v6353
    %v6886 = vunpack.c.l.b16 %v6354
    %v6887 = vunpack.c.l.b16 %v6355
    %v6888 = vunpack.c.l.b16 %v6356
    %v6889 = vunpack.c.l.b16 %v6357
    %v6890 = vunpack.c.l.b16 %v6358
    %v6891 = vunpack.c.l.b16 %v6359
    %v6892 = vunpack.c.l.b16 %v6360
    %v6893 = vunpack.c.l.b16 %v6361
    %v6894 = vunpack.c.l.b16 %v6362
    %v6895 = vunpack.c.l.b16 %v6363
    %v6896 = vunpack.c.l.b16 %v6364
    %v6897 = vunpack.c.l.b16 %v6365
    %v6898 = vunpack.c.l.b16 %v6366
    %v6899 = vunpack.c.l.b16 %v6367
    %v6900 = vunpack.c.l.b16 %v6368
    %v6901 = vunpack.c.l.b16 %v6369
    %v6902 = vunpack.c.l.b16 %v6370
    %v6903 = vunpack.c.l.b16 %v6371
    %v6904 = vunpack.c.l.b16 %v6372
    %v6905 = vunpack.c.l.b16 %v6373
    %v6906 = vunpack.c.l.b16 %v6374
    %v6907 = vunpack.c.l.b16 %v6375
    %v6908 = vunpack.c.l.b16 %v6376
    %v6909 = vunpack.c.l.b16 %v6377
    %v6910 = vunpack.c.l.b16 %v6378
    %v6911 = vunpack.c.l.b16 %v6379
    %v6912 = vunpack.c.l.b16 %v6380
    %v6913 = vunpack.c.l.b16 %v6381
    %v6914 = vunpack.c.l.b16 %v6382
    %v6915 = vunpack.c.l.b16 %v6383
    %v6916 = vunpack.c.l.b16 %v6384
    %v6917 = vunpack.c.l.b16 %v6385
    %v6918 = vunpack.c.l.b16 %v6386
    %v6919 = vunpack.c.l.b16 %v6387
    %v6920 = vunpack.c.l.b16 %v6388
    %v6921 = vunpack.c.l.b16 %v6389
    %v6922 = vunpack.c.l.b16 %v6390
    %v6923 = vunpack.c.l.b16 %v6391
    %v6924 = vunpack.c.l.b16 %v6392
    %v6925 = vunpack.c.l.b16 %v6393
    %v6926 = vunpack.c.l.b16 %v6394
    %v6927 = vunpack.c.l.b16 %v6395
    %v6928 = vunpack.c.l.b16 %v6396
    %v6929 = vunpack.c.l.b16 %v6397
    %v6930 = vunpack.c.l.b16 %v6398
    %v6931 = vunpack.c.l.b16 %v6399
    %v6932 = vunpack.c.l.b16 %v6400
    %v6933 = vunpack.c.l.b16 %v6401
    %v6934 = vunpack.c.l.b16 %v6402
    %v6935 = vunpack.c.l.b16 %v6403
    %v6936 = vunpack.c.l.b16 %v6404
    %v6937 = vunpack.c.l.b16 %v6405
    %v6938 = vunpack.c.l.b16 %v6406
    %v6939 = vunpack.c.l.b16 %v6407
    %v6940 = vunpack.c.l.b16 %v6408
    %v6941 = vunpack.c.l.b16 %v6409
    %v6942 = vunpack.c.l.b16 %v6410
    %v6943 = vunpack.c.l.b16 %v6411
    %v6944 = vunpack.c.l.b16 %v6412
    %v6945 = vunpack.c.l.b16 %v6413
    %v6946 = vunpack.c.l.b16 %v6414
    %v6947 = vunpack.c.l.b16 %v6415
    %v6948 = vunpack.c.l.b16 %v6416
    %v6949 = vunpack.c.l.b16 %v6417
    %v6950 = vunpack.c.l.b16 %v6418
    %v6951 = vunpack.c.l.b16 %v6419
    %v6952 = vunpack.c.l.b16 %v6420
    %v6953 = vunpack.c.l.b16 %v6421
    %v6954 = vunpack.c.l.b16 %v6422
    %v6955 = vunpack.c.l.b16 %v6423
    %v6956 = vunpack.c.l.b16 %v6424
    %v6957 = vunpack.c.l.b16 %v6425
    %v6958 = vunpack.c.l.b16 %v6426
    %v6959 = vunpack.c.l.b16 %v6427
    %v6960 = vunpack.c.l.b16 %v6428
    %v6961 = vunpack.c.l.b16 %v6429
    %v6962 = vunpack.c.l.b16 %v6430
    %v6963 = vunpack.c.l.b16 %v6431
    %v6964 = vunpack.c.l.b16 %v6432
    %v6965 = vunpack.c.l.b16 %v6433
    %v6966 = vunpack.c.l.b16 %v6434
    %v6967 = vunpack.c.l.b16 %v6435
    %v6968 = vunpack.c.l.b16 %v6436
    %v6969 = vunpack.c.l.b16 %v6437
    %v6970 = vunpack.c.l.b16 %v6438
    %v6971 = vunpack.c.l.b16 %v6439
    %v6972 = vunpack.c.l.b16 %v6440
    %v6973 = vunpack.c.l.b16 %v6441
    %v6974 = vunpack.c.l.b16 %v6442
    %v6975 = vunpack.c.l.b16 %v6443
    %v6976 = vunpack.c.l.b16 %v6444
    %v6977 = vunpack.c.l.b16 %v6445
    %v6978 = vunpack.c.l.b16 %v6446
    %v6979 = vunpack.c.l.b16 %v6447
    %v6980 = vunpack.c.l.b16 %v6448
    %v6981 = vunpack.c.l.b16 %v6449
    %v6982 = vunpack.c.l.b16 %v6450
    %v6983 = vunpack.c.l.b16 %v6451
    %v6984 = vunpack.c.l.b16 %v6452
    %v6985 = vunpack.c.l.b16 %v6453
    %v6986 = vunpack.c.l.b16 %v6454
    %v6987 = vunpack.c.l.b16 %v6455
    %v6988 = vunpack.c.l.b16 %v6456
    %v6989 = vunpack.c.l.b16 %v6457
    %v6990 = vunpack.c.l.b16 %v6458
    %v6991 = vunpack.c.l.b16 %v6459
    %v6992 = vunpack.c.l.b16 %v6460
    %v6993 = vunpack.c.l.b16 %v6461
    %v6994 = vunpack.c.l.b16 %v6462
    %v6995 = vunpack.c.l.b16 %v6463
    %v6996 = vunpack.c.l.b16 %v6464
    %v6997 = vunpack.c.l.b16 %v6465
    %v6998 = vunpack.c.l.b16 %v6466
    %v6999 = vunpack.c.l.b16 %v6467
    %v7000 = vunpack.c.l.b16 %v6468
    %v7001 = vunpack.c.l.b16 %v6469
    %v7002 = vunpack.c.l.b16 %v6470
    %v7003 = vunpack.c.l.b16 %v6471
    %v7004 = vunpack.c.l.b16 %v6472
    %v7005 = vunpack.c.l.b16 %v6473
    %v7006 = vunpack.c.l.b16 %v6474
    %v7007 = vunpack.c.l.b16 %v6475
    %v7008 = vunpack.c.l.b16 %v6476
    %v7009 = vunpack.c.l.b16 %v6477
    %v7010 = vunpack.c.l.b16 %v6478
    %v7011 = vunpack.c.l.b16 %v6479
    %v7012 = vunpack.c.l.b16 %v6480
    %v7013 = vunpack.c.l.b16 %v6481
    %v7014 = vunpack.c.l.b16 %v6482
    %v7015 = vunpack.c.l.b16 %v6483
    %v7016 = vunpack.c.l.b16 %v6484
    %v7017 = vunpack.c.l.b16 %v6485
    %v7018 = vunpack.c.l.b16 %v6486
    %v7019 = vunpack.c.l.b16 %v6487
    %v7020 = vunpack.c.l.b16 %v6488
    %v7021 = vunpack.c.l.b16 %v6489
    %v7022 = vunpack.c.l.b16 %v6490
    %v7023 = vunpack.c.l.b16 %v6491
    %v7024 = vunpack.c.l.b16 %v6492
    %v7025 = vunpack.c.l.b16 %v6493
    %v7026 = vunpack.c.l.b16 %v6494
    %v7027 = vunpack.c.l.b16 %v6495
    %v7028 = vunpack.c.l.b16 %v6496
    %v7029 = vunpack.c.l.b16 %v6497
    %v7030 = vunpack.c.l.b16 %v6498
    %v7031 = vunpack.c.l.b16 %v6499
    %v7032 = vunpack.c.l.b16 %v6500
    %v7033 = vunpack.c.l.b16 %v6501
    %v7034 = vunpack.c.l.b16 %v6502
    %v7035 = vunpack.c.l.b16 %v6503
    %v7036 = vunpack.c.l.b16 %v6504
    %v7037 = vunpack.c.l.b16 %v6505
    %v7038 = vunpack.c.l.b16 %v6506
    %v7039 = vunpack.c.l.b16 %v6507
    %v7040 = vunpack.c.l.b16 %v6508
    %v7041 = vunpack.c.l.b16 %v6509
    %v7042 = vunpack.c.l.b16 %v6510
    %v7043 = vunpack.c.l.b16 %v6511
    %v7044 = vunpack.c.l.b16 %v6512
    %v7045 = vunpack.c.l.b16 %v6513
    %v7046 = vunpack.c.l.b16 %v6514
    %v7047 = vunpack.c.l.b16 %v6515
    %v7048 = vunpack.c.l.b16 %v6516
    %v7049 = vunpack.c.l.b16 %v6517
    %v7050 = vunpack.c.l.b16 %v6518
    %v7051 = vunpack.c.l.b16 %v6519
    %v7052 = vunpack.c.l.b16 %v6520
    %v7053 = vunpack.c.l.b16 %v6521
    %v7054 = vunpack.c.l.b16 %v6522
    %v7055 = vunpack.c.l.b16 %v6523
    %v7056 = vunpack.c.l.b16 %v6524
    %v7057 = vunpack.c.l.b16 %v6525
    %v7058 = vunpack.c.l.b16 %v6526
    %v7059 = vunpack.c.l.b16 %v6527
    %v7060 = vunpack.c.l.b16 %v6528
    %v7061 = vunpack.c.l.b16 %v6529
    %v7062 = vunpack.c.l.b16 %v6530
    %v7063 = vunpack.c.l.b16 %v6531
    %v7064 = vunpack.c.l.b16 %v6532
    %v7065 = vunpack.c.l.b16 %v6533
    %v7066 = vunpack.c.l.b16 %v6534
    %v7067 = vunpack.c.l.b16 %v6535
    %v7068 = vunpack.c.l.b16 %v6536
    %v7069 = vunpack.c.l.b16 %v6537
    %v7070 = vunpack.c.l.b16 %v6538
    %v7071 = vunpack.c.l.b16 %v6539
    %v7072 = vunpack.c.l.b16 %v6540
    %v7073 = vunpack.c.l.b16 %v6541
    %v7074 = vunpack.c.l.b16 %v6542
    %v7075 = vunpack.c.l.b16 %v6543
    %v7076 = vunpack.c.l.b16 %v6544
    %v7077 = vunpack.c.l.b16 %v6545
    %v7078 = vunpack.c.l.b16 %v6546
    %v7079 = vpack.c.b16 %v6824, %v6823
    %v7080 = vpack.c.b16 %v6826, %v6825
    %v7081 = vpack.c.b16 %v6828, %v6827
    %v7082 = vpack.c.b16 %v6830, %v6829
    %v7083 = vpack.c.b16 %v6832, %v6831
    %v7084 = vpack.c.b16 %v6834, %v6833
    %v7085 = vpack.c.b16 %v6836, %v6835
    %v7086 = vpack.c.b16 %v6838, %v6837
    %v7087 = vpack.c.b16 %v6840, %v6839
    %v7088 = vpack.c.b16 %v6842, %v6841
    %v7089 = vpack.c.b16 %v6844, %v6843
    %v7090 = vpack.c.b16 %v6846, %v6845
    %v7091 = vpack.c.b16 %v6848, %v6847
    %v7092 = vpack.c.b16 %v6850, %v6849
    %v7093 = vpack.c.b16 %v6852, %v6851
    %v7094 = vpack.c.b16 %v6854, %v6853
    %v7095 = vpack.c.b16 %v6856, %v6855
    %v7096 = vpack.c.b16 %v6858, %v6857
    %v7097 = vpack.c.b16 %v6860, %v6859
    %v7098 = vpack.c.b16 %v6862, %v6861
    %v7099 = vpack.c.b16 %v6864, %v6863
    %v7100 = vpack.c.b16 %v6866, %v6865
    %v7101 = vpack.c.b16 %v6868, %v6867
    %v7102 = vpack.c.b16 %v6870, %v6869
    %v7103 = vpack.c.b16 %v6872, %v6871
    %v7104 = vpack.c.b16 %v6874, %v6873
    %v7105 = vpack.c.b16 %v6876, %v6875
    %v7106 = vpack.c.b16 %v6878, %v6877
    %v7107 = vpack.c.b16 %v6880, %v6879
    %v7108 = vpack.c.b16 %v6882, %v6881
    %v7109 = vpack.c.b16 %v6884, %v6883
    %v7110 = vpack.c.b16 %v6886, %v6885
    %v7111 = vpack.c.b16 %v6888, %v6887
    %v7112 = vpack.c.b16 %v6890, %v6889
    %v7113 = vpack.c.b16 %v6892, %v6891
    %v7114 = vpack.c.b16 %v6894, %v6893
    %v7115 = vpack.c.b16 %v6896, %v6895
    %v7116 = vpack.c.b16 %v6898, %v6897
    %v7117 = vpack.c.b16 %v6900, %v6899
    %v7118 = vpack.c.b16 %v6902, %v6901
    %v7119 = vpack.c.b16 %v6904, %v6903
    %v7120 = vpack.c.b16 %v6906, %v6905
    %v7121 = vpack.c.b16 %v6908, %v6907
    %v7122 = vpack.c.b16 %v6910, %v6909
    %v7123 = vpack.c.b16 %v6912, %v6911
    %v7124 = vpack.c.b16 %v6914, %v6913
    %v7125 = vpack.c.b16 %v6916, %v6915
    %v7126 = vpack.c.b16 %v6918, %v6917
    %v7127 = vpack.c.b16 %v6920, %v6919
    %v7128 = vpack.c.b16 %v6922, %v6921
    %v7129 = vpack.c.b16 %v6924, %v6923
    %v7130 = vpack.c.b16 %v6926, %v6925
    %v7131 = vpack.c.b16 %v6928, %v6927
    %v7132 = vpack.c.b16 %v6930, %v6929
    %v7133 = vpack.c.b16 %v6932, %v6931
    %v7134 = vpack.c.b16 %v6934, %v6933
    %v7135 = vpack.c.b16 %v6936, %v6935
    %v7136 = vpack.c.b16 %v6938, %v6937
    %v7137 = vpack.c.b16 %v6940, %v6939
    %v7138 = vpack.c.b16 %v6942, %v6941
    %v7139 = vpack.c.b16 %v6944, %v6943
    %v7140 = vpack.c.b16 %v6946, %v6945
    %v7141 = vpack.c.b16 %v6948, %v6947
    %v7142 = vpack.c.b16 %v6950, %v6949
    %v7143 = vpack.c.b16 %v6952, %v6951
    %v7144 = vpack.c.b16 %v6954, %v6953
    %v7145 = vpack.c.b16 %v6956, %v6955
    %v7146 = vpack.c.b16 %v6958, %v6957
    %v7147 = vpack.c.b16 %v6960, %v6959
    %v7148 = vpack.c.b16 %v6962, %v6961
    %v7149 = vpack.c.b16 %v6964, %v6963
    %v7150 = vpack.c.b16 %v6966, %v6965
    %v7151 = vpack.c.b16 %v6968, %v6967
    %v7152 = vpack.c.b16 %v6970, %v6969
    %v7153 = vpack.c.b16 %v6972, %v6971
    %v7154 = vpack.c.b16 %v6974, %v6973
    %v7155 = vpack.c.b16 %v6976, %v6975
    %v7156 = vpack.c.b16 %v6978, %v6977
    %v7157 = vpack.c.b16 %v6980, %v6979
    %v7158 = vpack.c.b16 %v6982, %v6981
    %v7159 = vpack.c.b16 %v6984, %v6983
    %v7160 = vpack.c.b16 %v6986, %v6985
    %v7161 = vpack.c.b16 %v6988, %v6987
    %v7162 = vpack.c.b16 %v6990, %v6989
    %v7163 = vpack.c.b16 %v6992, %v6991
    %v7164 = vpack.c.b16 %v6994, %v6993
    %v7165 = vpack.c.b16 %v6996, %v6995
    %v7166 = vpack.c.b16 %v6998, %v6997
    %v7167 = vpack.c.b16 %v7000, %v6999
    %v7168 = vpack.c.b16 %v7002, %v7001
    %v7169 = vpack.c.b16 %v7004, %v7003
    %v7170 = vpack.c.b16 %v7006, %v7005
    %v7171 = vpack.c.b16 %v7008, %v7007
    %v7172 = vpack.c.b16 %v7010, %v7009
    %v7173 = vpack.c.b16 %v7012, %v7011
    %v7174 = vpack.c.b16 %v7014, %v7013
    %v7175 = vpack.c.b16 %v7016, %v7015
    %v7176 = vpack.c.b16 %v7018, %v7017
    %v7177 = vpack.c.b16 %v7020, %v7019
    %v7178 = vpack.c.b16 %v7022, %v7021
    %v7179 = vpack.c.b16 %v7024, %v7023
    %v7180 = vpack.c.b16 %v7026, %v7025
    %v7181 = vpack.c.b16 %v7028, %v7027
    %v7182 = vpack.c.b16 %v7030, %v7029
    %v7183 = vpack.c.b16 %v7032, %v7031
    %v7184 = vpack.c.b16 %v7034, %v7033
    %v7185 = vpack.c.b16 %v7036, %v7035
    %v7186 = vpack.c.b16 %v7038, %v7037
    %v7187 = vpack.c.b16 %v7040, %v7039
    %v7188 = vpack.c.b16 %v7042, %v7041
    %v7189 = vpack.c.b16 %v7044, %v7043
    %v7190 = vpack.c.b16 %v7046, %v7045
    %v7191 = vpack.c.b16 %v7048, %v7047
    %v7192 = vpack.c.b16 %v7050, %v7049
    %v7193 = vpack.c.b16 %v7052, %v7051
    %v7194 = vpack.c.b16 %v7054, %v7053
    %v7195 = vpack.c.b16 %v7056, %v7055
    %v7196 = vpack.c.b16 %v7058, %v7057
    %v7197 = vpack.c.b16 %v7060, %v7059
    %v7198 = vpack.c.b16 %v7062, %v7061
    %v7199 = vpack.c.b16 %v7064, %v7063
    %v7200 = vpack.c.b16 %v7066, %v7065
    %v7201 = vpack.c.b16 %v7068, %v7067
    %v7202 = vpack.c.b16 %v7070, %v7069
    %v7203 = vpack.c.b16 %v7072, %v7071
    %v7204 = vpack.c.b16 %v7074, %v7073
    %v7205 = vpack.c.b16 %v7076, %v7075
    %v7206 = vpack.c.b16 %v7078, %v7077
    %7335 = vmatprep.subr.bf16.mxu0 0
    %7336 = vmatpush1.bf16.msra.mxu0 %v7079
    %7337 = vmatprep.subr.bf16.mxu0 0
    %7338 = vmatpush1.bf16.msra.mxu0 %v7080
    %7339 = vmatprep.subr.bf16.mxu0 0
    %7340 = vmatpush1.bf16.msra.mxu0 %v7081
    %7341 = vmatprep.subr.bf16.mxu0 0
    %7342 = vmatpush1.bf16.msra.mxu0 %v7082
    %7343 = vmatprep.subr.bf16.mxu0 0
    %7344 = vmatpush1.bf16.msra.mxu0 %v7083
    %7345 = vmatprep.subr.bf16.mxu0 0
    %7346 = vmatpush1.bf16.msra.mxu0 %v7084
    %7347 = vmatprep.subr.bf16.mxu0 0
    %7348 = vmatpush1.bf16.msra.mxu0 %v7085
    %7349 = vmatprep.subr.bf16.mxu0 0
    %7350 = vmatpush1.bf16.msra.mxu0 %v7086
    %7351 = vmatprep.subr.bf16.mxu0 0
    %7352 = vmatpush1.bf16.msra.mxu0 %v7087
    %7353 = vmatprep.subr.bf16.mxu0 0
    %7354 = vmatpush1.bf16.msra.mxu0 %v7088
    %7355 = vmatprep.subr.bf16.mxu0 0
    %7356 = vmatpush1.bf16.msra.mxu0 %v7089
    %7357 = vmatprep.subr.bf16.mxu0 0
    %7358 = vmatpush1.bf16.msra.mxu0 %v7090
    %7359 = vmatprep.subr.bf16.mxu0 0
    %7360 = vmatpush1.bf16.msra.mxu0 %v7091
    %7361 = vmatprep.subr.bf16.mxu0 0
    %7362 = vmatpush1.bf16.msra.mxu0 %v7092
    %7363 = vmatprep.subr.bf16.mxu0 0
    %7364 = vmatpush1.bf16.msra.mxu0 %v7093
    %7365 = vmatprep.subr.bf16.mxu0 0
    %7366 = vmatpush1.bf16.msra.mxu0 %v7094
    %7367 = vmatprep.mubr.bf16.mxu0 %v6548
    %7368 = vmatmul.mubr.bf16.gmra.mrb[0].mxu0 %v6547
    %v7369 = vpop.f32.mrb[0].mxu0
    %v7370 = vadd.f32 %v6566, %v7369
    %v7371 = vpop.f32.mrb[0].mxu0
    %v7372 = vpop.f32.mrb[0].mxu0
    %v7373 = vadd.f32 %v6566, %v7372
    %v7374 = vpop.f32.mrb[0].mxu0
    %7375 = vdwg.mxu0
    %7376 = vmatprep.subr.bf16.mxu0 0
    %7377 = vmatpush1.bf16.msra.mxu0 %v7095
    %7378 = vmatprep.subr.bf16.mxu0 0
    %7379 = vmatpush1.bf16.msra.mxu0 %v7096
    %7380 = vmatprep.subr.bf16.mxu0 0
    %7381 = vmatpush1.bf16.msra.mxu0 %v7097
    %7382 = vmatprep.subr.bf16.mxu0 0
    %7383 = vmatpush1.bf16.msra.mxu0 %v7098
    %7384 = vmatprep.subr.bf16.mxu0 0
    %7385 = vmatpush1.bf16.msra.mxu0 %v7099
    %7386 = vmatprep.subr.bf16.mxu0 0
    %7387 = vmatpush1.bf16.msra.mxu0 %v7100
    %7388 = vmatprep.subr.bf16.mxu0 0
    %7389 = vmatpush1.bf16.msra.mxu0 %v7101
    %7390 = vmatprep.subr.bf16.mxu0 0
    %7391 = vmatpush1.bf16.msra.mxu0 %v7102
    %7392 = vmatprep.subr.bf16.mxu0 0
    %7393 = vmatpush1.bf16.msra.mxu0 %v7103
    %7394 = vmatprep.subr.bf16.mxu0 0
    %7395 = vmatpush1.bf16.msra.mxu0 %v7104
    %7396 = vmatprep.subr.bf16.mxu0 0
    %7397 = vmatpush1.bf16.msra.mxu0 %v7105
    %7398 = vmatprep.subr.bf16.mxu0 0
    %7399 = vmatpush1.bf16.msra.mxu0 %v7106
    %7400 = vmatprep.subr.bf16.mxu0 0
    %7401 = vmatpush1.bf16.msra.mxu0 %v7107
    %7402 = vmatprep.subr.bf16.mxu0 0
    %7403 = vmatpush1.bf16.msra.mxu0 %v7108
    %7404 = vmatprep.subr.bf16.mxu0 0
    %7405 = vmatpush1.bf16.msra.mxu0 %v7109
    %7406 = vmatprep.subr.bf16.mxu0 0
    %7407 = vmatpush1.bf16.msra.mxu0 %v7110
    %7408 = vmatprep.mubr.bf16.mxu0 %v6550
    %7409 = vmatmul.mubr.bf16.gmra.mrb[0].mxu0 %v6549
    %v7410 = vpop.f32.mrb[0].mxu0
    %v7411 = vadd.f32 %v7370, %v7410
    %v7412 = vpop.f32.mrb[0].mxu0
    %v7413 = vpop.f32.mrb[0].mxu0
    %v7414 = vadd.f32 %v7373, %v7413
    %v7415 = vpop.f32.mrb[0].mxu0
    %7416 = vdwg.mxu0
    %7417 = vmatprep.subr.bf16.mxu0 0
    %7418 = vmatpush1.bf16.msra.mxu0 %v7111
    %7419 = vmatprep.subr.bf16.mxu0 0
    %7420 = vmatpush1.bf16.msra.mxu0 %v7112
    %7421 = vmatprep.subr.bf16.mxu0 0
    %7422 = vmatpush1.bf16.msra.mxu0 %v7113
    %7423 = vmatprep.subr.bf16.mxu0 0
    %7424 = vmatpush1.bf16.msra.mxu0 %v7114
    %7425 = vmatprep.subr.bf16.mxu0 0
    %7426 = vmatpush1.bf16.msra.mxu0 %v7115
    %7427 = vmatprep.subr.bf16.mxu0 0
    %7428 = vmatpush1.bf16.msra.mxu0 %v7116
    %7429 = vmatprep.subr.bf16.mxu0 0
    %7430 = vmatpush1.bf16.msra.mxu0 %v7117
    %7431 = vmatprep.subr.bf16.mxu0 0
    %7432 = vmatpush1.bf16.msra.mxu0 %v7118
    %7433 = vmatprep.subr.bf16.mxu0 0
    %7434 = vmatpush1.bf16.msra.mxu0 %v7119
    %7435 = vmatprep.subr.bf16.mxu0 0
    %7436 = vmatpush1.bf16.msra.mxu0 %v7120
    %7437 = vmatprep.subr.bf16.mxu0 0
    %7438 = vmatpush1.bf16.msra.mxu0 %v7121
    %7439 = vmatprep.subr.bf16.mxu0 0
    %7440 = vmatpush1.bf16.msra.mxu0 %v7122
    %7441 = vmatprep.subr.bf16.mxu0 0
    %7442 = vmatpush1.bf16.msra.mxu0 %v7123
    %7443 = vmatprep.subr.bf16.mxu0 0
    %7444 = vmatpush1.bf16.msra.mxu0 %v7124
    %7445 = vmatprep.subr.bf16.mxu0 0
    %7446 = vmatpush1.bf16.msra.mxu0 %v7125
    %7447 = vmatprep.subr.bf16.mxu0 0
    %7448 = vmatpush1.bf16.msra.mxu0 %v7126
    %7449 = vmatprep.mubr.bf16.mxu0 %v6552
    %7450 = vmatmul.mubr.bf16.gmra.mrb[0].mxu0 %v6551
    %v7451 = vpop.f32.mrb[0].mxu0
    %v7452 = vadd.f32 %v7411, %v7451
    %v7453 = vpop.f32.mrb[0].mxu0
    %v7454 = vpop.f32.mrb[0].mxu0
    %v7455 = vadd.f32 %v7414, %v7454
    %v7456 = vpop.f32.mrb[0].mxu0
    %7457 = vdwg.mxu0
    %7458 = vmatprep.subr.bf16.mxu0 0
    %7459 = vmatpush1.bf16.msra.mxu0 %v7127
    %7460 = vmatprep.subr.bf16.mxu0 0
    %7461 = vmatpush1.bf16.msra.mxu0 %v7128
    %7462 = vmatprep.subr.bf16.mxu0 0
    %7463 = vmatpush1.bf16.msra.mxu0 %v7129
    %7464 = vmatprep.subr.bf16.mxu0 0
    %7465 = vmatpush1.bf16.msra.mxu0 %v7130
    %7466 = vmatprep.subr.bf16.mxu0 0
    %7467 = vmatpush1.bf16.msra.mxu0 %v7131
    %7468 = vmatprep.subr.bf16.mxu0 0
    %7469 = vmatpush1.bf16.msra.mxu0 %v7132
    %7470 = vmatprep.subr.bf16.mxu0 0
    %7471 = vmatpush1.bf16.msra.mxu0 %v7133
    %7472 = vmatprep.subr.bf16.mxu0 0
    %7473 = vmatpush1.bf16.msra.mxu0 %v7134
    %7474 = vmatprep.subr.bf16.mxu0 0
    %7475 = vmatpush1.bf16.msra.mxu0 %v7135
    %7476 = vmatprep.subr.bf16.mxu0 0
    %7477 = vmatpush1.bf16.msra.mxu0 %v7136
    %7478 = vmatprep.subr.bf16.mxu0 0
    %7479 = vmatpush1.bf16.msra.mxu0 %v7137
    %7480 = vmatprep.subr.bf16.mxu0 0
    %7481 = vmatpush1.bf16.msra.mxu0 %v7138
    %7482 = vmatprep.subr.bf16.mxu0 0
    %7483 = vmatpush1.bf16.msra.mxu0 %v7139
    %7484 = vmatprep.subr.bf16.mxu0 0
    %7485 = vmatpush1.bf16.msra.mxu0 %v7140
    %7486 = vmatprep.subr.bf16.mxu0 0
    %7487 = vmatpush1.bf16.msra.mxu0 %v7141
    %7488 = vmatprep.subr.bf16.mxu0 0
    %7489 = vmatpush1.bf16.msra.mxu0 %v7142
    %7490 = vmatprep.mubr.bf16.mxu0 %v6554
    %7491 = vmatmul.mubr.bf16.gmra.mrb[0].mxu0 %v6553
    %v7492 = vpop.f32.mrb[0].mxu0
    %v7493 = vadd.f32 %v7452, %v7492
    %v7494 = vpop.f32.mrb[0].mxu0
    %v7495 = vpop.f32.mrb[0].mxu0
    %v7496 = vadd.f32 %v7455, %v7495
    %v7497 = vpop.f32.mrb[0].mxu0
    %7498 = vdwg.mxu0
    %7499 = vmatprep.subr.bf16.mxu0 0
    %7500 = vmatpush1.bf16.msra.mxu0 %v7143
    %7501 = vmatprep.subr.bf16.mxu0 0
    %7502 = vmatpush1.bf16.msra.mxu0 %v7144
    %7503 = vmatprep.subr.bf16.mxu0 0
    %7504 = vmatpush1.bf16.msra.mxu0 %v7145
    %7505 = vmatprep.subr.bf16.mxu0 0
    %7506 = vmatpush1.bf16.msra.mxu0 %v7146
    %7507 = vmatprep.subr.bf16.mxu0 0
    %7508 = vmatpush1.bf16.msra.mxu0 %v7147
    %7509 = vmatprep.subr.bf16.mxu0 0
    %7510 = vmatpush1.bf16.msra.mxu0 %v7148
    %7511 = vmatprep.subr.bf16.mxu0 0
    %7512 = vmatpush1.bf16.msra.mxu0 %v7149
    %7513 = vmatprep.subr.bf16.mxu0 0
    %7514 = vmatpush1.bf16.msra.mxu0 %v7150
    %7515 = vmatprep.subr.bf16.mxu0 0
    %7516 = vmatpush1.bf16.msra.mxu0 %v7151
    %7517 = vmatprep.subr.bf16.mxu0 0
    %7518 = vmatpush1.bf16.msra.mxu0 %v7152
    %7519 = vmatprep.subr.bf16.mxu0 0
    %7520 = vmatpush1.bf16.msra.mxu0 %v7153
    %7521 = vmatprep.subr.bf16.mxu0 0
    %7522 = vmatpush1.bf16.msra.mxu0 %v7154
    %7523 = vmatprep.subr.bf16.mxu0 0
    %7524 = vmatpush1.bf16.msra.mxu0 %v7155
    %7525 = vmatprep.subr.bf16.mxu0 0
    %7526 = vmatpush1.bf16.msra.mxu0 %v7156
    %7527 = vmatprep.subr.bf16.mxu0 0
    %7528 = vmatpush1.bf16.msra.mxu0 %v7157
    %7529 = vmatprep.subr.bf16.mxu0 0
    %7530 = vmatpush1.bf16.msra.mxu0 %v7158
    %7531 = vmatprep.mubr.bf16.mxu0 %v6556
    %7532 = vmatmul.mubr.bf16.gmra.mrb[0].mxu0 %v6555
    %v7533 = vpop.f32.mrb[0].mxu0
    %v7534 = vadd.f32 %v7493, %v7533
    %v7535 = vpop.f32.mrb[0].mxu0
    %v7536 = vpop.f32.mrb[0].mxu0
    %v7537 = vadd.f32 %v7496, %v7536
    %v7538 = vpop.f32.mrb[0].mxu0
    %7539 = vdwg.mxu0
    %7540 = vmatprep.subr.bf16.mxu0 0
    %7541 = vmatpush1.bf16.msra.mxu0 %v7159
    %7542 = vmatprep.subr.bf16.mxu0 0
    %7543 = vmatpush1.bf16.msra.mxu0 %v7160
    %7544 = vmatprep.subr.bf16.mxu0 0
    %7545 = vmatpush1.bf16.msra.mxu0 %v7161
    %7546 = vmatprep.subr.bf16.mxu0 0
    %7547 = vmatpush1.bf16.msra.mxu0 %v7162
    %7548 = vmatprep.subr.bf16.mxu0 0
    %7549 = vmatpush1.bf16.msra.mxu0 %v7163
    %7550 = vmatprep.subr.bf16.mxu0 0
    %7551 = vmatpush1.bf16.msra.mxu0 %v7164
    %7552 = vmatprep.subr.bf16.mxu0 0
    %7553 = vmatpush1.bf16.msra.mxu0 %v7165
    %7554 = vmatprep.subr.bf16.mxu0 0
    %7555 = vmatpush1.bf16.msra.mxu0 %v7166
    %7556 = vmatprep.subr.bf16.mxu0 0
    %7557 = vmatpush1.bf16.msra.mxu0 %v7167
    %7558 = vmatprep.subr.bf16.mxu0 0
    %7559 = vmatpush1.bf16.msra.mxu0 %v7168
    %7560 = vmatprep.subr.bf16.mxu0 0
    %7561 = vmatpush1.bf16.msra.mxu0 %v7169
    %7562 = vmatprep.subr.bf16.mxu0 0
    %7563 = vmatpush1.bf16.msra.mxu0 %v7170
    %7564 = vmatprep.subr.bf16.mxu0 0
    %7565 = vmatpush1.bf16.msra.mxu0 %v7171
    %7566 = vmatprep.subr.bf16.mxu0 0
    %7567 = vmatpush1.bf16.msra.mxu0 %v7172
    %7568 = vmatprep.subr.bf16.mxu0 0
    %7569 = vmatpush1.bf16.msra.mxu0 %v7173
    %7570 = vmatprep.subr.bf16.mxu0 0
    %7571 = vmatpush1.bf16.msra.mxu0 %v7174
    %7572 = vmatprep.mubr.bf16.mxu0 %v6558
    %7573 = vmatmul.mubr.bf16.gmra.mrb[0].mxu0 %v6557
    %v7574 = vpop.f32.mrb[0].mxu0
    %v7575 = vadd.f32 %v7534, %v7574
    %v7576 = vpop.f32.mrb[0].mxu0
    %v7577 = vpop.f32.mrb[0].mxu0
    %v7578 = vadd.f32 %v7537, %v7577
    %v7579 = vpop.f32.mrb[0].mxu0
    %7580 = vdwg.mxu0
    %7581 = vmatprep.subr.bf16.mxu0 0
    %7582 = vmatpush1.bf16.msra.mxu0 %v7175
    %7583 = vmatprep.subr.bf16.mxu0 0
    %7584 = vmatpush1.bf16.msra.mxu0 %v7176
    %7585 = vmatprep.subr.bf16.mxu0 0
    %7586 = vmatpush1.bf16.msra.mxu0 %v7177
    %7587 = vmatprep.subr.bf16.mxu0 0
    %7588 = vmatpush1.bf16.msra.mxu0 %v7178
    %7589 = vmatprep.subr.bf16.mxu0 0
    %7590 = vmatpush1.bf16.msra.mxu0 %v7179
    %7591 = vmatprep.subr.bf16.mxu0 0
    %7592 = vmatpush1.bf16.msra.mxu0 %v7180
    %7593 = vmatprep.subr.bf16.mxu0 0
    %7594 = vmatpush1.bf16.msra.mxu0 %v7181
    %7595 = vmatprep.subr.bf16.mxu0 0
    %7596 = vmatpush1.bf16.msra.mxu0 %v7182
    %7597 = vmatprep.subr.bf16.mxu0 0
    %7598 = vmatpush1.bf16.msra.mxu0 %v7183
    %7599 = vmatprep.subr.bf16.mxu0 0
    %7600 = vmatpush1.bf16.msra.mxu0 %v7184
    %7601 = vmatprep.subr.bf16.mxu0 0
    %7602 = vmatpush1.bf16.msra.mxu0 %v7185
    %7603 = vmatprep.subr.bf16.mxu0 0
    %7604 = vmatpush1.bf16.msra.mxu0 %v7186
    %7605 = vmatprep.subr.bf16.mxu0 0
    %7606 = vmatpush1.bf16.msra.mxu0 %v7187
    %7607 = vmatprep.subr.bf16.mxu0 0
    %7608 = vmatpush1.bf16.msra.mxu0 %v7188
    %7609 = vmatprep.subr.bf16.mxu0 0
    %7610 = vmatpush1.bf16.msra.mxu0 %v7189
    %7611 = vmatprep.subr.bf16.mxu0 0
    %7612 = vmatpush1.bf16.msra.mxu0 %v7190
    %7613 = vmatprep.mubr.bf16.mxu0 %v6560
    %7614 = vmatmul.mubr.bf16.gmra.mrb[0].mxu0 %v6559
    %v7615 = vpop.f32.mrb[0].mxu0
    %v7616 = vadd.f32 %v7575, %v7615
    %v7617 = vpop.f32.mrb[0].mxu0
    %v7618 = vpop.f32.mrb[0].mxu0
    %v7619 = vadd.f32 %v7578, %v7618
    %v7620 = vpop.f32.mrb[0].mxu0
    %7621 = vdwg.mxu0
    %7622 = vmatprep.subr.bf16.mxu0 0
    %7623 = vmatpush1.bf16.msra.mxu0 %v7191
    %7624 = vmatprep.subr.bf16.mxu0 0
    %7625 = vmatpush1.bf16.msra.mxu0 %v7192
    %7626 = vmatprep.subr.bf16.mxu0 0
    %7627 = vmatpush1.bf16.msra.mxu0 %v7193
    %7628 = vmatprep.subr.bf16.mxu0 0
    %7629 = vmatpush1.bf16.msra.mxu0 %v7194
    %7630 = vmatprep.subr.bf16.mxu0 0
    %7631 = vmatpush1.bf16.msra.mxu0 %v7195
    %7632 = vmatprep.subr.bf16.mxu0 0
    %7633 = vmatpush1.bf16.msra.mxu0 %v7196
    %7634 = vmatprep.subr.bf16.mxu0 0
    %7635 = vmatpush1.bf16.msra.mxu0 %v7197
    %7636 = vmatprep.subr.bf16.mxu0 0
    %7637 = vmatpush1.bf16.msra.mxu0 %v7198
    %7638 = vmatprep.subr.bf16.mxu0 0
    %7639 = vmatpush1.bf16.msra.mxu0 %v7199
    %7640 = vmatprep.subr.bf16.mxu0 0
    %7641 = vmatpush1.bf16.msra.mxu0 %v7200
    %7642 = vmatprep.subr.bf16.mxu0 0
    %7643 = vmatpush1.bf16.msra.mxu0 %v7201
    %7644 = vmatprep.subr.bf16.mxu0 0
    %7645 = vmatpush1.bf16.msra.mxu0 %v7202
    %7646 = vmatprep.subr.bf16.mxu0 0
    %7647 = vmatpush1.bf16.msra.mxu0 %v7203
    %7648 = vmatprep.subr.bf16.mxu0 0
    %7649 = vmatpush1.bf16.msra.mxu0 %v7204
    %7650 = vmatprep.subr.bf16.mxu0 0
    %7651 = vmatpush1.bf16.msra.mxu0 %v7205
    %7652 = vmatprep.subr.bf16.mxu0 0
    %7653 = vmatpush1.bf16.msra.mxu0 %v7206
    %7654 = vmatprep.mubr.bf16.mxu0 %v6562
    %7655 = vmatmul.mubr.bf16.gmra.mrb[0].mxu0 %v6561
    %v7656 = vpop.f32.mrb[0].mxu0
    %v7657 = vadd.f32 %v7616, %v7656
    %v7658 = vpop.f32.mrb[0].mxu0
    %v7659 = vpop.f32.mrb[0].mxu0
    %v7660 = vadd.f32 %v7619, %v7659
    %v7661 = vpop.f32.mrb[0].mxu0
    %7662 = vdwg.mxu0
    %v7663 = vadd.f32 %v5056, %v7657
    %v7664 = vadd.f32 %v5057, %v7660
    %7665 = vadd.xlane.f32.xlu0 %v7663
    %v7666 = vpop.xlane.xlu0 %7665
    %7667 = vadd.xlane.f32.xlu0 %v7664
    %v7668 = vpop.xlane.xlu0 %7667
    %v7669 = vmul.f32 %v7666, %v1308
    %v7670 = vmul.f32 %v7668, %v1308
    %v7671 = vsub.f32 %v7663, %v7669
    %v7672 = vsub.f32 %v7664, %v7670
    %v7673 = vmul.f32 %v7671, %v7671
    %v7674 = vmul.f32 %v7672, %v7672
    %7675 = vadd.xlane.f32.xlu0 %v7673
    %v7676 = vpop.xlane.xlu0 %7675
    %7677 = vadd.xlane.f32.xlu0 %v7674
    %v7678 = vpop.xlane.xlu0 %7677
    %v7679 = vmul.f32 %v7676, %v1308
    %v7680 = vmul.f32 %v7678, %v1308
    %v7681 = vadd.f32 %v7679, 1e-05
    %v7682 = vadd.f32 %v7680, 1e-05
    %v7683 = vrsqrt.pop %v7681
    %v7684 = vrsqrt.pop %v7682
    %v7685 = vmul.f32 %v7671, %v7683
    %v7686 = vmul.f32 %v7672, %v7684
    %v7687 = vlaneseq
    %v7688 = vshrl.u32 %v7687, 7
    %v7689 = vsub.s32 1, %v7688
    %v7690 = vrot.slane %v143, %v7689
    %v7691 = vmul.f32 %v7685, %v7690
    %v7692 = vmul.f32 %v7686, %v7690
    %v7693 = vlaneseq
    %v7694 = vshrl.u32 %v7693, 7
    %v7695 = vsub.s32 2, %v7694
    %v7696 = vrot.slane %v143, %v7695
    %v7697 = vadd.f32 %v7691, %v7696
    %v7698 = vadd.f32 %v7692, %v7696
    %v7699 = vld [vmem:[#allocation14] sm:$0xf]
    %v7700 = vld [vmem:[#allocation14 + $0x4] sm:$0xf]
    %v7701 = vld [vmem:[#allocation14 + $0x8] sm:$0xf]
    %v7702 = vld [vmem:[#allocation14 + $0xc] sm:$0xf]
    %v7703 = vld [vmem:[#allocation14 + $0x10] sm:$0xf]
    %v7704 = vld [vmem:[#allocation14 + $0x14] sm:$0xf]
    %v7705 = vld [vmem:[#allocation14 + $0x18] sm:$0xf]
    %v7706 = vld [vmem:[#allocation14 + $0x1c] sm:$0xf]
    %v7707 = vld [vmem:[#allocation14 + $0x20] sm:$0xf]
    %v7708 = vld [vmem:[#allocation14 + $0x24] sm:$0xf]
    %v7709 = vld [vmem:[#allocation14 + $0x28] sm:$0xf]
    %v7710 = vld [vmem:[#allocation14 + $0x2c] sm:$0xf]
    %v7711 = vld [vmem:[#allocation14 + $0x30] sm:$0xf]
    %v7712 = vld [vmem:[#allocation14 + $0x34] sm:$0xf]
    %v7713 = vld [vmem:[#allocation14 + $0x38] sm:$0xf]
    %v7714 = vld [vmem:[#allocation14 + $0x3c] sm:$0xf]
    %v7715 = vpack.c.bf16 %v7698, %v7697
    %v7716 = vlaneseq
    %v7717 = vshrl.u32 %v7716, 7
    %v7718 = vsub.s32 3, %v7717
    %v7719 = vrot.slane %v143, %v7718
    %v7736 = vunpack.c.l.b16 %v7699
    %v7737 = vunpack.c.l.b16 %v7700
    %v7738 = vunpack.c.l.b16 %v7701
    %v7739 = vunpack.c.l.b16 %v7702
    %v7740 = vunpack.c.l.b16 %v7703
    %v7741 = vunpack.c.l.b16 %v7704
    %v7742 = vunpack.c.l.b16 %v7705
    %v7743 = vunpack.c.l.b16 %v7706
    %v7744 = vunpack.c.l.b16 %v7707
    %v7745 = vunpack.c.l.b16 %v7708
    %v7746 = vunpack.c.l.b16 %v7709
    %v7747 = vunpack.c.l.b16 %v7710
    %v7748 = vunpack.c.l.b16 %v7711
    %v7749 = vunpack.c.l.b16 %v7712
    %v7750 = vunpack.c.l.b16 %v7713
    %v7751 = vunpack.c.l.b16 %v7714
    %v7752 = vpack.c.b16 %v7737, %v7736
    %v7753 = vpack.c.b16 %v7739, %v7738
    %v7754 = vpack.c.b16 %v7741, %v7740
    %v7755 = vpack.c.b16 %v7743, %v7742
    %v7756 = vpack.c.b16 %v7745, %v7744
    %v7757 = vpack.c.b16 %v7747, %v7746
    %v7758 = vpack.c.b16 %v7749, %v7748
    %v7759 = vpack.c.b16 %v7751, %v7750
    %7768 = vmatprep.subr.bf16.mxu0 0
    %7769 = vmatpush1.bf16.msra.mxu0 %v7752
    %7770 = vmatprep.subr.bf16.mxu0 0
    %7771 = vmatpush1.bf16.msra.mxu0 %v7753
    %7772 = vmatprep.subr.bf16.mxu0 0
    %7773 = vmatpush1.bf16.msra.mxu0 %v7754
    %7774 = vmatprep.subr.bf16.mxu0 0
    %7775 = vmatpush1.bf16.msra.mxu0 %v7755
    %7776 = vmatprep.subr.bf16.mxu0 0
    %7777 = vmatpush1.bf16.msra.mxu0 %v7756
    %7778 = vmatprep.subr.bf16.mxu0 0
    %7779 = vmatpush1.bf16.msra.mxu0 %v7757
    %7780 = vmatprep.subr.bf16.mxu0 0
    %7781 = vmatpush1.bf16.msra.mxu0 %v7758
    %7782 = vmatprep.subr.bf16.mxu0 0
    %7783 = vmatpush1.bf16.msra.mxu0 %v7759
    %7784 = vmatprep.subr.bf16.mxu0 0
    %7785 = vmatpush1.bf16.msra.mxu0 0
    %7786 = vmatprep.subr.bf16.mxu0 0
    %7787 = vmatpush1.bf16.msra.mxu0 0
    %7788 = vmatprep.subr.bf16.mxu0 0
    %7789 = vmatpush1.bf16.msra.mxu0 0
    %7790 = vmatprep.subr.bf16.mxu0 0
    %7791 = vmatpush1.bf16.msra.mxu0 0
    %7792 = vmatprep.subr.bf16.mxu0 0
    %7793 = vmatpush1.bf16.msra.mxu0 0
    %7794 = vmatprep.subr.bf16.mxu0 0
    %7795 = vmatpush1.bf16.msra.mxu0 0
    %7796 = vmatprep.subr.bf16.mxu0 0
    %7797 = vmatpush1.bf16.msra.mxu0 0
    %7798 = vmatprep.subr.bf16.mxu0 0
    %7799 = vmatpush1.bf16.msra.mxu0 0
    %7800 = vmatprep.mubr.bf16.mxu0 0
    %7801 = vmatmul.mubr.bf16.gmra.mrb[0].mxu0 %v7715
    %v7802 = vpop.f32.mrb[0].mxu0
    %v7803 = vadd.f32 %v7719, %v7802
    %v7804 = vpop.f32.mrb[0].mxu0
    %v7805 = vpop.f32.mrb[0].mxu0
    %v7806 = vadd.f32 %v7719, %v7805
    %v7807 = vpop.f32.mrb[0].mxu0
    %7808 = vdwg.mxu0
    %7809 = vst [vmem:[#allocation17] sm:$0xff] %v7803
    %7810 = vst [vmem:[#allocation17 + $0x8] sm:$0xff] %v7806
    // Predicated region
    $region70: #{tpu_custom_call.1} parent=1 // pred_check
      _
    $region71: #{tpu_custom_call.1} parent=1 // pred_check_branch
      %7812 = sbr.rel (0) target = $region73
    $region72: #{tpu_custom_call.1} parent=1 // pred_region
      %s7814 = ssub.s32 256, 256
      %7815 = vsyncadd [#allocation5], %s7814
      %s7816 = sshll.u32 [#allocation17], 4
      %s7817 = int_to_ptr.vmem [resolvable:$true] %s7816
      %7822 = dma.vmem_to_hbm [thread:$0]  %s7817, 256, %s9, [#allocation5], 128, 128, 8
    $region73: #{tpu_custom_call.1} parent=1 // pred_fallthru
      _
    // Predicated region
    $region74: #{tpu_custom_call.1} parent=1 // pred_check
      _
    $region75: #{tpu_custom_call.1} parent=1 // pred_check_branch
      %7824 = sbr.rel (0) target = $region77
    $region76: #{tpu_custom_call.1} parent=1 // pred_region
      %7825 = dma.done [#allocation5], 256
    $region77: #{tpu_custom_call.1} parent=1 // pred_fallthru
      _
    %7826 = vsyncpa [#allocation4], 1
    %7827 = vsyncpa [#allocation7], 1
    %7828 = vsyncpa [#allocation10], 1
    %7829 = vsyncpa [#allocation13], 1
    %7830 = vsyncpa [#allocation16], 1
    %7831 = vsyncpa [#allocation5], 1

</llo_original>
